<compile_context>
chip_gen: v7x
topology: tpu7x:2x2x1
jax: 0.10.0
libtpu: 0.0.40
codegen_flags: <defaults>
</compile_context>

<pallas_src>
import functools

import jax
import jax.numpy as jnp
from jax.experimental import pallas as pl
from jax.experimental.pallas import tpu as pltpu


# ---------------------------------------------------------------------------
# Fused conv stack kernel: all Conv3x3(pad=1)+ReLU layers, VMEM-resident.
# ---------------------------------------------------------------------------
def _fused_conv_stack_kernel(x_ref, w_ref, b_ref, o_ref, act_ref):
    # x_ref  : (b_blk, H, W, C)         input tile, channels already padded to C
    # w_ref  : (L*9, C, C)              per-layer, per-tap weights (tap-major)
    # b_ref  : (L, 1, C)                per-layer biases
    # o_ref  : (b_blk, H*W, C)          last layer activation (NHWC, flattened H*W)
    # act_ref: (b_blk, H+2, W+2, C)     VMEM scratch, zero halo + current activation
    b_blk, Hp2, Wp2, C = act_ref.shape
    H, W = Hp2 - 2, Wp2 - 2
    L = b_ref.shape[0]
    M = b_blk * H * W
    cdt = w_ref.dtype  # matmul compute dtype (f32, or bf16 on v6e/v7x)

    # In-kernel zero padding: memset the halo buffer, write the input interior.
    act_ref[...] = jnp.zeros_like(act_ref)
    act_ref[:, 1:H + 1, 1:W + 1, :] = x_ref[...]

    for l in range(L):                      # static unroll over layers
        acc = jnp.zeros((M, C), jnp.float32)
        for dy in range(3):                 # 9 shifted-window MXU matmuls,
            for dx in range(3):             # K = C, M = b_blk*H*W
                patch = act_ref[:, dy:dy + H, dx:dx + W, :].reshape(M, C)
                acc += jnp.dot(patch.astype(cdt),
                               w_ref[l * 9 + dy * 3 + dx],
                               preferred_element_type=jnp.float32)
        acc = jnp.maximum(acc + b_ref[l], 0.0)          # bias + ReLU in f32
        if l + 1 < L:
            # write back into the interior; halo stays zero
            act_ref[:, 1:H + 1, 1:W + 1, :] = acc.reshape(b_blk, H, W, C)
        else:
            o_ref[...] = acc.reshape(b_blk, H * W, C)


def _pick_batch_block(B):
    # Small batches: one grid step.  Larger batches: a divisor so each step's
    # matmul M dimension stays big and the parallel axis spans both v7x cores.
    if B <= 8:
        return B
    for cand in (8, 4, 2):
        if B % cand == 0:
            return cand
    return 1


def conv_stack(x_nhwc, conv_w, conv_b):
    """x_nhwc: (B, H, W, C) f32 (channels pre-padded to C); returns (B, H*W, C) f32."""
    B, H, W, C = x_nhwc.shape
    L = conv_b.shape[0]
    b_blk = _pick_batch_block(B)
    assert B % b_blk == 0
    n_blocks = B // b_blk

    return pl.pallas_call(
        _fused_conv_stack_kernel,
        out_shape=jax.ShapeDtypeStruct((B, H * W, C), jnp.float32),
        grid_spec=pltpu.PrefetchScalarGridSpec(
            num_scalar_prefetch=0,
            grid=(n_blocks,),
            in_specs=[
                pl.BlockSpec((b_blk, H, W, C), lambda i: (i, 0, 0, 0)),
                pl.BlockSpec((L * 9, C, C), lambda i: (0, 0, 0)),
                pl.BlockSpec((L, 1, C), lambda i: (0, 0, 0)),
            ],
            out_specs=pl.BlockSpec((b_blk, H * W, C), lambda i: (i, 0, 0)),
            scratch_shapes=[pltpu.VMEM((b_blk, H + 2, W + 2, C), jnp.float32)],
        ),
        compiler_params=pltpu.CompilerParams(
            dimension_semantics=("parallel",)),
    )(x_nhwc, conv_w, conv_b)


# ---------------------------------------------------------------------------
# Linear head kernel: (B, F) @ (F, n_pad) + bias, lane-dense (n_pad = k*128).
# ---------------------------------------------------------------------------
def _linear_kernel(x_ref, w_ref, b_ref, o_ref):
    o_ref[...] = (jnp.dot(x_ref[...].astype(w_ref.dtype), w_ref[...],
                          preferred_element_type=jnp.float32)
                  + b_ref[...])


def linear_head(x_flat, w, b):
    """x_flat: (B, F) f32; w: (F, n_pad); b: (1, n_pad) -> (B, n_pad) f32."""
    B, F = x_flat.shape
    Np = w.shape[-1]
    return pl.pallas_call(
        _linear_kernel,
        out_shape=jax.ShapeDtypeStruct((B, Np), jnp.float32),
        grid_spec=pltpu.PrefetchScalarGridSpec(
            num_scalar_prefetch=0,
            grid=(1,),
            in_specs=[
                pl.BlockSpec((B, F), lambda i: (0, 0)),
                pl.BlockSpec((F, Np), lambda i: (0, 0)),
                pl.BlockSpec((1, Np), lambda i: (0, 0)),
            ],
            out_specs=pl.BlockSpec((B, Np), lambda i: (0, 0)),
        ),
    )(x_flat, w, b)


# ---------------------------------------------------------------------------
# Parameter init (deterministic), matching the module's _initialize_weights:
#   conv weight ~ N(0, sqrt(sigma_w / Cin)), conv bias ~ N(0, sqrt(sigma_b))
#   linear weight ~ N(0, sqrt(sigma_w / F)), linear bias ~ N(0, sqrt(sigma_b))
# The NCHW flatten-order permutation and the n_class lane padding are folded
# into the (synthetic) linear weight here, at zero runtime cost.
# ---------------------------------------------------------------------------
def init_cnn_params(key, *, n_class, num_layers, input_size, conv_width,
                    sigma_w, sigma_b, use_bf16=False):
    H = W = input_size
    C = conv_width
    cdt = jnp.bfloat16 if use_bf16 else jnp.float32

    ws, bs = [], []
    cin = 3
    for _ in range(num_layers):
        key, kw, kb = jax.random.split(key, 3)
        std_w = (sigma_w / cin) ** 0.5
        std_b = sigma_b ** 0.5
        w = std_w * jax.random.normal(kw, (3, 3, cin, C), jnp.float32)
        if cin < C:  # first layer: pad Cin -> C with zeros (input channels padded too)
            w = jnp.pad(w, ((0, 0), (0, 0), (0, C - cin), (0, 0)))
        b = std_b * jax.random.normal(kb, (C,), jnp.float32)
        ws.append(w)
        bs.append(b)
        cin = C

    conv_w = jnp.stack(ws).reshape(num_layers * 9, C, C).astype(cdt)  # tap-major
    conv_b = jnp.stack(bs).reshape(num_layers, 1, C).astype(jnp.float32)

    F = H * W * C
    key, kw, kb = jax.random.split(key, 3)
    std_w = (sigma_w / F) ** 0.5
    std_b = sigma_b ** 0.5
    # Semantics: logits = flatten_NCHW(act) @ w_lin + b_lin
    w_lin = std_w * jax.random.normal(kw, (F, n_class), jnp.float32)
    b_lin = std_b * jax.random.normal(kb, (n_class,), jnp.float32)
    # Fold the NCHW->NHWC flatten-order permutation into the weight rows.
    w_lin = w_lin.reshape(C, H, W, n_class).transpose(1, 2, 0, 3).reshape(F, n_class)
    # Pad n_class up to a multiple of 128 for lane-dense compute/stores.
    n_pad = ((n_class + 127) // 128) * 128
    w_lin = jnp.pad(w_lin, ((0, 0), (0, n_pad - n_class))).astype(cdt)
    b_lin = jnp.pad(b_lin, (0, n_pad - n_class)).reshape(1, n_pad).astype(jnp.float32)

    return {"conv_w": conv_w, "conv_b": conv_b, "lin_w": w_lin, "lin_b": b_lin}


# ---------------------------------------------------------------------------
# Forward: matches CNN.forward (conv backbone -> flatten(1) over NCHW -> linear)
# ---------------------------------------------------------------------------
@functools.partial(jax.jit, static_argnames=("n_class",))
def cnn_forward(params, x_nchw, *, n_class):
    conv_w, conv_b = params["conv_w"], params["conv_b"]
    lin_w, lin_b = params["lin_w"], params["lin_b"]
    C = conv_b.shape[-1]
    B, cin, H, W = x_nchw.shape

    # One tiny boundary op: NCHW -> NHWC + zero-pad channels to conv_width.
    x = jnp.transpose(x_nchw, (0, 2, 3, 1)).astype(jnp.float32)
    if cin < C:
        x = jnp.pad(x, ((0, 0), (0, 0), (0, 0), (0, C - cin)))

    feats = conv_stack(x, conv_w, conv_b)        # (B, H*W, C), NHWC order
    feats = feats.reshape(B, H * W * C)          # free row-major flatten (weight is permuted)
    logits = linear_head(feats, lin_w, lin_b)    # (B, n_pad)
    return logits[:, :n_class]


if __name__ == "__main__":
    # Small configuration consistent with the module's constructor
    n_class = 10
    num_layers = 3
    input_size = 8
    conv_width = 32
    sigma_w = 2.0
    sigma_b = 0.1
    batch = 2
    # Set True on v6e/v7x to feed the MXU bf16 operands (f32 accumulation);
    # keep False for exact f32 semantics and for v5e.
    use_bf16 = False

    key = jax.random.PRNGKey(0)
    key, pkey, xkey = jax.random.split(key, 3)

    params = init_cnn_params(
        pkey, n_class=n_class, num_layers=num_layers, input_size=input_size,
        conv_width=conv_width, sigma_w=sigma_w, sigma_b=sigma_b,
        use_bf16=use_bf16)

    # PyTorch-style NCHW input
    x = jax.random.normal(xkey, (batch, 3, input_size, input_size), jnp.float32)

    out = cnn_forward(params, x, n_class=n_class)
    out = jax.block_until_ready(out)
    assert out.shape == (batch, n_class), out.shape
    print("KERNEL_OK")
</pallas_src>

<mosaic_0001>
module attributes {stable_mosaic.version = 11 : i64} {
  func.func @_fused_conv_stack_kernel(%arg0: i32, %arg1: memref<2x8x8x32xf32, #tpu.memory_space<vmem>>, %arg2: memref<27x32x32xf32, #tpu.memory_space<vmem>>, %arg3: memref<3x1x32xf32, #tpu.memory_space<vmem>>, %arg4: memref<2x64x32xf32, #tpu.memory_space<vmem>>, %arg5: memref<2x10x10x32xf32, #tpu.memory_space<vmem>>) attributes {dimension_semantics = [#tpu.dimension_semantics<parallel>], iteration_bounds = array<i64: 1>, scalar_prefetch = 0 : i64, scratch_operands = 1 : i64, tpu.core_type = #tpu.core_type<tc>, window_params = [{transform_indices = @transform_0, window_bounds = array<i64: 2, 8, 8, 32>}, {pipeline_mode = #tpu.pipeline_mode<synchronous>, transform_indices = @transform_1, window_bounds = array<i64: 27, 32, 32>}, {pipeline_mode = #tpu.pipeline_mode<synchronous>, transform_indices = @transform_2, window_bounds = array<i64: 3, 1, 32>}, {transform_indices = @transform_3, window_bounds = array<i64: 2, 64, 32>}]} {
    %cst = arith.constant 0.000000e+00 : f32
    %0 = vector.broadcast %cst : f32 to vector<2x10x10x32xf32>
    %c0 = arith.constant 0 : index
    %c0_0 = arith.constant 0 : index
    %c0_1 = arith.constant 0 : index
    %c0_2 = arith.constant 0 : index
    %1 = vector.load %arg5[%c0, %c0_0, %c0_1, %c0_2] : memref<2x10x10x32xf32, #tpu.memory_space<vmem>>, vector<2x10x10x32xf32>
    tpu.vector_store %arg5[%c0, %c0_0, %c0_1, %c0_2], %0 {strides = array<i32>} : memref<2x10x10x32xf32, #tpu.memory_space<vmem>>, vector<2x10x10x32xf32>,
    %c0_3 = arith.constant 0 : index
    %c0_4 = arith.constant 0 : index
    %c0_5 = arith.constant 0 : index
    %c0_6 = arith.constant 0 : index
    %2 = vector.load %arg1[%c0_3, %c0_4, %c0_5, %c0_6] : memref<2x8x8x32xf32, #tpu.memory_space<vmem>>, vector<2x8x8x32xf32>
    %c0_7 = arith.constant 0 : index
    %c1 = arith.constant 1 : index
    %c1_8 = arith.constant 1 : index
    %c0_9 = arith.constant 0 : index
    %3 = vector.load %arg5[%c0_7, %c1, %c1_8, %c0_9] : memref<2x10x10x32xf32, #tpu.memory_space<vmem>>, vector<2x8x8x32xf32>
    tpu.vector_store %arg5[%c0_7, %c1, %c1_8, %c0_9], %2 {strides = array<i32>} : memref<2x10x10x32xf32, #tpu.memory_space<vmem>>, vector<2x8x8x32xf32>,
    %cst_10 = arith.constant 0.000000e+00 : f32
    %4 = vector.broadcast %cst_10 : f32 to vector<128x32xf32>
    %c0_11 = arith.constant 0 : index
    %c0_12 = arith.constant 0 : index
    %c0_13 = arith.constant 0 : index
    %c0_14 = arith.constant 0 : index
    %5 = vector.load %arg5[%c0_11, %c0_12, %c0_13, %c0_14] : memref<2x10x10x32xf32, #tpu.memory_space<vmem>>, vector<2x8x8x32xf32>
    %6 = vector.shape_cast %5 : vector<2x8x8x32xf32> to vector<128x32xf32>
    %c0_15 = arith.constant 0 : index
    %c0_16 = arith.constant 0 : index
    %c0_17 = arith.constant 0 : index
    %7 = vector.load %arg2[%c0_15, %c0_16, %c0_17] : memref<27x32x32xf32, #tpu.memory_space<vmem>>, vector<1x32x32xf32>
    %8 = vector.shape_cast %7 : vector<1x32x32xf32> to vector<32x32xf32>
    %cst_18 = arith.constant dense<0.000000e+00> : vector<128x32xf32>
    %9 = tpu.matmul %6, %8, %cst_18 {dimension_numbers = #tpu.dot_dimension_numbers<[1], [0], [0], [1], [0, 0, 1, 1], [], []>} : vector<128x32xf32>, vector<32x32xf32>, vector<128x32xf32> -> vector<128x32xf32>
    %10 = arith.addf %4, %9 : vector<128x32xf32>
    %c0_19 = arith.constant 0 : index
    %c0_20 = arith.constant 0 : index
    %c1_21 = arith.constant 1 : index
    %c0_22 = arith.constant 0 : index
    %11 = vector.load %arg5[%c0_19, %c0_20, %c1_21, %c0_22] : memref<2x10x10x32xf32, #tpu.memory_space<vmem>>, vector<2x8x8x32xf32>
    %12 = vector.shape_cast %11 : vector<2x8x8x32xf32> to vector<128x32xf32>
    %c1_23 = arith.constant 1 : index
    %c0_24 = arith.constant 0 : index
    %c0_25 = arith.constant 0 : index
    %13 = vector.load %arg2[%c1_23, %c0_24, %c0_25] : memref<27x32x32xf32, #tpu.memory_space<vmem>>, vector<1x32x32xf32>
    %14 = vector.shape_cast %13 : vector<1x32x32xf32> to vector<32x32xf32>
    %cst_26 = arith.constant dense<0.000000e+00> : vector<128x32xf32>
    %15 = tpu.matmul %12, %14, %cst_26 {dimension_numbers = #tpu.dot_dimension_numbers<[1], [0], [0], [1], [0, 0, 1, 1], [], []>} : vector<128x32xf32>, vector<32x32xf32>, vector<128x32xf32> -> vector<128x32xf32>
    %16 = arith.addf %10, %15 : vector<128x32xf32>
    %c0_27 = arith.constant 0 : index
    %c0_28 = arith.constant 0 : index
    %c2 = arith.constant 2 : index
    %c0_29 = arith.constant 0 : index
    %17 = vector.load %arg5[%c0_27, %c0_28, %c2, %c0_29] : memref<2x10x10x32xf32, #tpu.memory_space<vmem>>, vector<2x8x8x32xf32>
    %18 = vector.shape_cast %17 : vector<2x8x8x32xf32> to vector<128x32xf32>
    %c2_30 = arith.constant 2 : index
    %c0_31 = arith.constant 0 : index
    %c0_32 = arith.constant 0 : index
    %19 = vector.load %arg2[%c2_30, %c0_31, %c0_32] : memref<27x32x32xf32, #tpu.memory_space<vmem>>, vector<1x32x32xf32>
    %20 = vector.shape_cast %19 : vector<1x32x32xf32> to vector<32x32xf32>
    %cst_33 = arith.constant dense<0.000000e+00> : vector<128x32xf32>
    %21 = tpu.matmul %18, %20, %cst_33 {dimension_numbers = #tpu.dot_dimension_numbers<[1], [0], [0], [1], [0, 0, 1, 1], [], []>} : vector<128x32xf32>, vector<32x32xf32>, vector<128x32xf32> -> vector<128x32xf32>
    %22 = arith.addf %16, %21 : vector<128x32xf32>
    %c0_34 = arith.constant 0 : index
    %c1_35 = arith.constant 1 : index
    %c0_36 = arith.constant 0 : index
    %c0_37 = arith.constant 0 : index
    %23 = vector.load %arg5[%c0_34, %c1_35, %c0_36, %c0_37] : memref<2x10x10x32xf32, #tpu.memory_space<vmem>>, vector<2x8x8x32xf32>
    %24 = vector.shape_cast %23 : vector<2x8x8x32xf32> to vector<128x32xf32>
    %c3 = arith.constant 3 : index
    %c0_38 = arith.constant 0 : index
    %c0_39 = arith.constant 0 : index
    %25 = vector.load %arg2[%c3, %c0_38, %c0_39] : memref<27x32x32xf32, #tpu.memory_space<vmem>>, vector<1x32x32xf32>
    %26 = vector.shape_cast %25 : vector<1x32x32xf32> to vector<32x32xf32>
    %cst_40 = arith.constant dense<0.000000e+00> : vector<128x32xf32>
    %27 = tpu.matmul %24, %26, %cst_40 {dimension_numbers = #tpu.dot_dimension_numbers<[1], [0], [0], [1], [0, 0, 1, 1], [], []>} : vector<128x32xf32>, vector<32x32xf32>, vector<128x32xf32> -> vector<128x32xf32>
    %28 = arith.addf %22, %27 : vector<128x32xf32>
    %c0_41 = arith.constant 0 : index
    %c1_42 = arith.constant 1 : index
    %c1_43 = arith.constant 1 : index
    %c0_44 = arith.constant 0 : index
    %29 = vector.load %arg5[%c0_41, %c1_42, %c1_43, %c0_44] : memref<2x10x10x32xf32, #tpu.memory_space<vmem>>, vector<2x8x8x32xf32>
    %30 = vector.shape_cast %29 : vector<2x8x8x32xf32> to vector<128x32xf32>
    %c4 = arith.constant 4 : index
    %c0_45 = arith.constant 0 : index
    %c0_46 = arith.constant 0 : index
    %31 = vector.load %arg2[%c4, %c0_45, %c0_46] : memref<27x32x32xf32, #tpu.memory_space<vmem>>, vector<1x32x32xf32>
    %32 = vector.shape_cast %31 : vector<1x32x32xf32> to vector<32x32xf32>
    %cst_47 = arith.constant dense<0.000000e+00> : vector<128x32xf32>
    %33 = tpu.matmul %30, %32, %cst_47 {dimension_numbers = #tpu.dot_dimension_numbers<[1], [0], [0], [1], [0, 0, 1, 1], [], []>} : vector<128x32xf32>, vector<32x32xf32>, vector<128x32xf32> -> vector<128x32xf32>
    %34 = arith.addf %28, %33 : vector<128x32xf32>
    %c0_48 = arith.constant 0 : index
    %c1_49 = arith.constant 1 : index
    %c2_50 = arith.constant 2 : index
    %c0_51 = arith.constant 0 : index
    %35 = vector.load %arg5[%c0_48, %c1_49, %c2_50, %c0_51] : memref<2x10x10x32xf32, #tpu.memory_space<vmem>>, vector<2x8x8x32xf32>
    %36 = vector.shape_cast %35 : vector<2x8x8x32xf32> to vector<128x32xf32>
    %c5 = arith.constant 5 : index
    %c0_52 = arith.constant 0 : index
    %c0_53 = arith.constant 0 : index
    %37 = vector.load %arg2[%c5, %c0_52, %c0_53] : memref<27x32x32xf32, #tpu.memory_space<vmem>>, vector<1x32x32xf32>
    %38 = vector.shape_cast %37 : vector<1x32x32xf32> to vector<32x32xf32>
    %cst_54 = arith.constant dense<0.000000e+00> : vector<128x32xf32>
    %39 = tpu.matmul %36, %38, %cst_54 {dimension_numbers = #tpu.dot_dimension_numbers<[1], [0], [0], [1], [0, 0, 1, 1], [], []>} : vector<128x32xf32>, vector<32x32xf32>, vector<128x32xf32> -> vector<128x32xf32>
    %40 = arith.addf %34, %39 : vector<128x32xf32>
    %c0_55 = arith.constant 0 : index
    %c2_56 = arith.constant 2 : index
    %c0_57 = arith.constant 0 : index
    %c0_58 = arith.constant 0 : index
    %41 = vector.load %arg5[%c0_55, %c2_56, %c0_57, %c0_58] : memref<2x10x10x32xf32, #tpu.memory_space<vmem>>, vector<2x8x8x32xf32>
    %42 = vector.shape_cast %41 : vector<2x8x8x32xf32> to vector<128x32xf32>
    %c6 = arith.constant 6 : index
    %c0_59 = arith.constant 0 : index
    %c0_60 = arith.constant 0 : index
    %43 = vector.load %arg2[%c6, %c0_59, %c0_60] : memref<27x32x32xf32, #tpu.memory_space<vmem>>, vector<1x32x32xf32>
    %44 = vector.shape_cast %43 : vector<1x32x32xf32> to vector<32x32xf32>
    %cst_61 = arith.constant dense<0.000000e+00> : vector<128x32xf32>
    %45 = tpu.matmul %42, %44, %cst_61 {dimension_numbers = #tpu.dot_dimension_numbers<[1], [0], [0], [1], [0, 0, 1, 1], [], []>} : vector<128x32xf32>, vector<32x32xf32>, vector<128x32xf32> -> vector<128x32xf32>
    %46 = arith.addf %40, %45 : vector<128x32xf32>
    %c0_62 = arith.constant 0 : index
    %c2_63 = arith.constant 2 : index
    %c1_64 = arith.constant 1 : index
    %c0_65 = arith.constant 0 : index
    %47 = vector.load %arg5[%c0_62, %c2_63, %c1_64, %c0_65] : memref<2x10x10x32xf32, #tpu.memory_space<vmem>>, vector<2x8x8x32xf32>
    %48 = vector.shape_cast %47 : vector<2x8x8x32xf32> to vector<128x32xf32>
    %c7 = arith.constant 7 : index
    %c0_66 = arith.constant 0 : index
    %c0_67 = arith.constant 0 : index
    %49 = vector.load %arg2[%c7, %c0_66, %c0_67] : memref<27x32x32xf32, #tpu.memory_space<vmem>>, vector<1x32x32xf32>
    %50 = vector.shape_cast %49 : vector<1x32x32xf32> to vector<32x32xf32>
    %cst_68 = arith.constant dense<0.000000e+00> : vector<128x32xf32>
    %51 = tpu.matmul %48, %50, %cst_68 {dimension_numbers = #tpu.dot_dimension_numbers<[1], [0], [0], [1], [0, 0, 1, 1], [], []>} : vector<128x32xf32>, vector<32x32xf32>, vector<128x32xf32> -> vector<128x32xf32>
    %52 = arith.addf %46, %51 : vector<128x32xf32>
    %c0_69 = arith.constant 0 : index
    %c2_70 = arith.constant 2 : index
    %c2_71 = arith.constant 2 : index
    %c0_72 = arith.constant 0 : index
    %53 = vector.load %arg5[%c0_69, %c2_70, %c2_71, %c0_72] : memref<2x10x10x32xf32, #tpu.memory_space<vmem>>, vector<2x8x8x32xf32>
    %54 = vector.shape_cast %53 : vector<2x8x8x32xf32> to vector<128x32xf32>
    %c8 = arith.constant 8 : index
    %c0_73 = arith.constant 0 : index
    %c0_74 = arith.constant 0 : index
    %55 = vector.load %arg2[%c8, %c0_73, %c0_74] : memref<27x32x32xf32, #tpu.memory_space<vmem>>, vector<1x32x32xf32>
    %56 = vector.shape_cast %55 : vector<1x32x32xf32> to vector<32x32xf32>
    %cst_75 = arith.constant dense<0.000000e+00> : vector<128x32xf32>
    %57 = tpu.matmul %54, %56, %cst_75 {dimension_numbers = #tpu.dot_dimension_numbers<[1], [0], [0], [1], [0, 0, 1, 1], [], []>} : vector<128x32xf32>, vector<32x32xf32>, vector<128x32xf32> -> vector<128x32xf32>
    %58 = arith.addf %52, %57 : vector<128x32xf32>
    %c0_76 = arith.constant 0 : index
    %c0_77 = arith.constant 0 : index
    %c0_78 = arith.constant 0 : index
    %59 = vector.load %arg3[%c0_76, %c0_77, %c0_78] : memref<3x1x32xf32, #tpu.memory_space<vmem>>, vector<1x1x32xf32>
    %60 = vector.shape_cast %59 : vector<1x1x32xf32> to vector<1x32xf32>
    %61 = vector.broadcast %60 : vector<1x32xf32> to vector<128x32xf32>
    %62 = arith.addf %58, %61 : vector<128x32xf32>
    %cst_79 = arith.constant 0.000000e+00 : f32
    %63 = vector.broadcast %cst_79 : f32 to vector<128x32xf32>
    %64 = arith.maximumf %62, %63 : vector<128x32xf32>
    %65 = vector.shape_cast %64 : vector<128x32xf32> to vector<2x8x8x32xf32>
    %c0_80 = arith.constant 0 : index
    %c1_81 = arith.constant 1 : index
    %c1_82 = arith.constant 1 : index
    %c0_83 = arith.constant 0 : index
    %66 = vector.load %arg5[%c0_80, %c1_81, %c1_82, %c0_83] : memref<2x10x10x32xf32, #tpu.memory_space<vmem>>, vector<2x8x8x32xf32>
    tpu.vector_store %arg5[%c0_80, %c1_81, %c1_82, %c0_83], %65 {strides = array<i32>} : memref<2x10x10x32xf32, #tpu.memory_space<vmem>>, vector<2x8x8x32xf32>,
    %cst_84 = arith.constant 0.000000e+00 : f32
    %67 = vector.broadcast %cst_84 : f32 to vector<128x32xf32>
    %c0_85 = arith.constant 0 : index
    %c0_86 = arith.constant 0 : index
    %c0_87 = arith.constant 0 : index
    %c0_88 = arith.constant 0 : index
    %68 = vector.load %arg5[%c0_85, %c0_86, %c0_87, %c0_88] : memref<2x10x10x32xf32, #tpu.memory_space<vmem>>, vector<2x8x8x32xf32>
    %69 = vector.shape_cast %68 : vector<2x8x8x32xf32> to vector<128x32xf32>
    %c9 = arith.constant 9 : index
    %c0_89 = arith.constant 0 : index
    %c0_90 = arith.constant 0 : index
    %70 = vector.load %arg2[%c9, %c0_89, %c0_90] : memref<27x32x32xf32, #tpu.memory_space<vmem>>, vector<1x32x32xf32>
    %71 = vector.shape_cast %70 : vector<1x32x32xf32> to vector<32x32xf32>
    %cst_91 = arith.constant dense<0.000000e+00> : vector<128x32xf32>
    %72 = tpu.matmul %69, %71, %cst_91 {dimension_numbers = #tpu.dot_dimension_numbers<[1], [0], [0], [1], [0, 0, 1, 1], [], []>} : vector<128x32xf32>, vector<32x32xf32>, vector<128x32xf32> -> vector<128x32xf32>
    %73 = arith.addf %67, %72 : vector<128x32xf32>
    %c0_92 = arith.constant 0 : index
    %c0_93 = arith.constant 0 : index
    %c1_94 = arith.constant 1 : index
    %c0_95 = arith.constant 0 : index
    %74 = vector.load %arg5[%c0_92, %c0_93, %c1_94, %c0_95] : memref<2x10x10x32xf32, #tpu.memory_space<vmem>>, vector<2x8x8x32xf32>
    %75 = vector.shape_cast %74 : vector<2x8x8x32xf32> to vector<128x32xf32>
    %c10 = arith.constant 10 : index
    %c0_96 = arith.constant 0 : index
    %c0_97 = arith.constant 0 : index
    %76 = vector.load %arg2[%c10, %c0_96, %c0_97] : memref<27x32x32xf32, #tpu.memory_space<vmem>>, vector<1x32x32xf32>
    %77 = vector.shape_cast %76 : vector<1x32x32xf32> to vector<32x32xf32>
    %cst_98 = arith.constant dense<0.000000e+00> : vector<128x32xf32>
    %78 = tpu.matmul %75, %77, %cst_98 {dimension_numbers = #tpu.dot_dimension_numbers<[1], [0], [0], [1], [0, 0, 1, 1], [], []>} : vector<128x32xf32>, vector<32x32xf32>, vector<128x32xf32> -> vector<128x32xf32>
    %79 = arith.addf %73, %78 : vector<128x32xf32>
    %c0_99 = arith.constant 0 : index
    %c0_100 = arith.constant 0 : index
    %c2_101 = arith.constant 2 : index
    %c0_102 = arith.constant 0 : index
    %80 = vector.load %arg5[%c0_99, %c0_100, %c2_101, %c0_102] : memref<2x10x10x32xf32, #tpu.memory_space<vmem>>, vector<2x8x8x32xf32>
    %81 = vector.shape_cast %80 : vector<2x8x8x32xf32> to vector<128x32xf32>
    %c11 = arith.constant 11 : index
    %c0_103 = arith.constant 0 : index
    %c0_104 = arith.constant 0 : index
    %82 = vector.load %arg2[%c11, %c0_103, %c0_104] : memref<27x32x32xf32, #tpu.memory_space<vmem>>, vector<1x32x32xf32>
    %83 = vector.shape_cast %82 : vector<1x32x32xf32> to vector<32x32xf32>
    %cst_105 = arith.constant dense<0.000000e+00> : vector<128x32xf32>
    %84 = tpu.matmul %81, %83, %cst_105 {dimension_numbers = #tpu.dot_dimension_numbers<[1], [0], [0], [1], [0, 0, 1, 1], [], []>} : vector<128x32xf32>, vector<32x32xf32>, vector<128x32xf32> -> vector<128x32xf32>
    %85 = arith.addf %79, %84 : vector<128x32xf32>
    %c0_106 = arith.constant 0 : index
    %c1_107 = arith.constant 1 : index
    %c0_108 = arith.constant 0 : index
    %c0_109 = arith.constant 0 : index
    %86 = vector.load %arg5[%c0_106, %c1_107, %c0_108, %c0_109] : memref<2x10x10x32xf32, #tpu.memory_space<vmem>>, vector<2x8x8x32xf32>
    %87 = vector.shape_cast %86 : vector<2x8x8x32xf32> to vector<128x32xf32>
    %c12 = arith.constant 12 : index
    %c0_110 = arith.constant 0 : index
    %c0_111 = arith.constant 0 : index
    %88 = vector.load %arg2[%c12, %c0_110, %c0_111] : memref<27x32x32xf32, #tpu.memory_space<vmem>>, vector<1x32x32xf32>
    %89 = vector.shape_cast %88 : vector<1x32x32xf32> to vector<32x32xf32>
    %cst_112 = arith.constant dense<0.000000e+00> : vector<128x32xf32>
    %90 = tpu.matmul %87, %89, %cst_112 {dimension_numbers = #tpu.dot_dimension_numbers<[1], [0], [0], [1], [0, 0, 1, 1], [], []>} : vector<128x32xf32>, vector<32x32xf32>, vector<128x32xf32> -> vector<128x32xf32>
    %91 = arith.addf %85, %90 : vector<128x32xf32>
    %c0_113 = arith.constant 0 : index
    %c1_114 = arith.constant 1 : index
    %c1_115 = arith.constant 1 : index
    %c0_116 = arith.constant 0 : index
    %92 = vector.load %arg5[%c0_113, %c1_114, %c1_115, %c0_116] : memref<2x10x10x32xf32, #tpu.memory_space<vmem>>, vector<2x8x8x32xf32>
    %93 = vector.shape_cast %92 : vector<2x8x8x32xf32> to vector<128x32xf32>
    %c13 = arith.constant 13 : index
    %c0_117 = arith.constant 0 : index
    %c0_118 = arith.constant 0 : index
    %94 = vector.load %arg2[%c13, %c0_117, %c0_118] : memref<27x32x32xf32, #tpu.memory_space<vmem>>, vector<1x32x32xf32>
    %95 = vector.shape_cast %94 : vector<1x32x32xf32> to vector<32x32xf32>
    %cst_119 = arith.constant dense<0.000000e+00> : vector<128x32xf32>
    %96 = tpu.matmul %93, %95, %cst_119 {dimension_numbers = #tpu.dot_dimension_numbers<[1], [0], [0], [1], [0, 0, 1, 1], [], []>} : vector<128x32xf32>, vector<32x32xf32>, vector<128x32xf32> -> vector<128x32xf32>
    %97 = arith.addf %91, %96 : vector<128x32xf32>
    %c0_120 = arith.constant 0 : index
    %c1_121 = arith.constant 1 : index
    %c2_122 = arith.constant 2 : index
    %c0_123 = arith.constant 0 : index
    %98 = vector.load %arg5[%c0_120, %c1_121, %c2_122, %c0_123] : memref<2x10x10x32xf32, #tpu.memory_space<vmem>>, vector<2x8x8x32xf32>
    %99 = vector.shape_cast %98 : vector<2x8x8x32xf32> to vector<128x32xf32>
    %c14 = arith.constant 14 : index
    %c0_124 = arith.constant 0 : index
    %c0_125 = arith.constant 0 : index
    %100 = vector.load %arg2[%c14, %c0_124, %c0_125] : memref<27x32x32xf32, #tpu.memory_space<vmem>>, vector<1x32x32xf32>
    %101 = vector.shape_cast %100 : vector<1x32x32xf32> to vector<32x32xf32>
    %cst_126 = arith.constant dense<0.000000e+00> : vector<128x32xf32>
    %102 = tpu.matmul %99, %101, %cst_126 {dimension_numbers = #tpu.dot_dimension_numbers<[1], [0], [0], [1], [0, 0, 1, 1], [], []>} : vector<128x32xf32>, vector<32x32xf32>, vector<128x32xf32> -> vector<128x32xf32>
    %103 = arith.addf %97, %102 : vector<128x32xf32>
    %c0_127 = arith.constant 0 : index
    %c2_128 = arith.constant 2 : index
    %c0_129 = arith.constant 0 : index
    %c0_130 = arith.constant 0 : index
    %104 = vector.load %arg5[%c0_127, %c2_128, %c0_129, %c0_130] : memref<2x10x10x32xf32, #tpu.memory_space<vmem>>, vector<2x8x8x32xf32>
    %105 = vector.shape_cast %104 : vector<2x8x8x32xf32> to vector<128x32xf32>
    %c15 = arith.constant 15 : index
    %c0_131 = arith.constant 0 : index
    %c0_132 = arith.constant 0 : index
    %106 = vector.load %arg2[%c15, %c0_131, %c0_132] : memref<27x32x32xf32, #tpu.memory_space<vmem>>, vector<1x32x32xf32>
    %107 = vector.shape_cast %106 : vector<1x32x32xf32> to vector<32x32xf32>
    %cst_133 = arith.constant dense<0.000000e+00> : vector<128x32xf32>
    %108 = tpu.matmul %105, %107, %cst_133 {dimension_numbers = #tpu.dot_dimension_numbers<[1], [0], [0], [1], [0, 0, 1, 1], [], []>} : vector<128x32xf32>, vector<32x32xf32>, vector<128x32xf32> -> vector<128x32xf32>
    %109 = arith.addf %103, %108 : vector<128x32xf32>
    %c0_134 = arith.constant 0 : index
    %c2_135 = arith.constant 2 : index
    %c1_136 = arith.constant 1 : index
    %c0_137 = arith.constant 0 : index
    %110 = vector.load %arg5[%c0_134, %c2_135, %c1_136, %c0_137] : memref<2x10x10x32xf32, #tpu.memory_space<vmem>>, vector<2x8x8x32xf32>
    %111 = vector.shape_cast %110 : vector<2x8x8x32xf32> to vector<128x32xf32>
    %c16 = arith.constant 16 : index
    %c0_138 = arith.constant 0 : index
    %c0_139 = arith.constant 0 : index
    %112 = vector.load %arg2[%c16, %c0_138, %c0_139] : memref<27x32x32xf32, #tpu.memory_space<vmem>>, vector<1x32x32xf32>
    %113 = vector.shape_cast %112 : vector<1x32x32xf32> to vector<32x32xf32>
    %cst_140 = arith.constant dense<0.000000e+00> : vector<128x32xf32>
    %114 = tpu.matmul %111, %113, %cst_140 {dimension_numbers = #tpu.dot_dimension_numbers<[1], [0], [0], [1], [0, 0, 1, 1], [], []>} : vector<128x32xf32>, vector<32x32xf32>, vector<128x32xf32> -> vector<128x32xf32>
    %115 = arith.addf %109, %114 : vector<128x32xf32>
    %c0_141 = arith.constant 0 : index
    %c2_142 = arith.constant 2 : index
    %c2_143 = arith.constant 2 : index
    %c0_144 = arith.constant 0 : index
    %116 = vector.load %arg5[%c0_141, %c2_142, %c2_143, %c0_144] : memref<2x10x10x32xf32, #tpu.memory_space<vmem>>, vector<2x8x8x32xf32>
    %117 = vector.shape_cast %116 : vector<2x8x8x32xf32> to vector<128x32xf32>
    %c17 = arith.constant 17 : index
    %c0_145 = arith.constant 0 : index
    %c0_146 = arith.constant 0 : index
    %118 = vector.load %arg2[%c17, %c0_145, %c0_146] : memref<27x32x32xf32, #tpu.memory_space<vmem>>, vector<1x32x32xf32>
    %119 = vector.shape_cast %118 : vector<1x32x32xf32> to vector<32x32xf32>
    %cst_147 = arith.constant dense<0.000000e+00> : vector<128x32xf32>
    %120 = tpu.matmul %117, %119, %cst_147 {dimension_numbers = #tpu.dot_dimension_numbers<[1], [0], [0], [1], [0, 0, 1, 1], [], []>} : vector<128x32xf32>, vector<32x32xf32>, vector<128x32xf32> -> vector<128x32xf32>
    %121 = arith.addf %115, %120 : vector<128x32xf32>
    %c1_148 = arith.constant 1 : index
    %c0_149 = arith.constant 0 : index
    %c0_150 = arith.constant 0 : index
    %122 = vector.load %arg3[%c1_148, %c0_149, %c0_150] : memref<3x1x32xf32, #tpu.memory_space<vmem>>, vector<1x1x32xf32>
    %123 = vector.shape_cast %122 : vector<1x1x32xf32> to vector<1x32xf32>
    %124 = vector.broadcast %123 : vector<1x32xf32> to vector<128x32xf32>
    %125 = arith.addf %121, %124 : vector<128x32xf32>
    %cst_151 = arith.constant 0.000000e+00 : f32
    %126 = vector.broadcast %cst_151 : f32 to vector<128x32xf32>
    %127 = arith.maximumf %125, %126 : vector<128x32xf32>
    %128 = vector.shape_cast %127 : vector<128x32xf32> to vector<2x8x8x32xf32>
    %c0_152 = arith.constant 0 : index
    %c1_153 = arith.constant 1 : index
    %c1_154 = arith.constant 1 : index
    %c0_155 = arith.constant 0 : index
    %129 = vector.load %arg5[%c0_152, %c1_153, %c1_154, %c0_155] : memref<2x10x10x32xf32, #tpu.memory_space<vmem>>, vector<2x8x8x32xf32>
    tpu.vector_store %arg5[%c0_152, %c1_153, %c1_154, %c0_155], %128 {strides = array<i32>} : memref<2x10x10x32xf32, #tpu.memory_space<vmem>>, vector<2x8x8x32xf32>,
    %cst_156 = arith.constant 0.000000e+00 : f32
    %130 = vector.broadcast %cst_156 : f32 to vector<128x32xf32>
    %c0_157 = arith.constant 0 : index
    %c0_158 = arith.constant 0 : index
    %c0_159 = arith.constant 0 : index
    %c0_160 = arith.constant 0 : index
    %131 = vector.load %arg5[%c0_157, %c0_158, %c0_159, %c0_160] : memref<2x10x10x32xf32, #tpu.memory_space<vmem>>, vector<2x8x8x32xf32>
    %132 = vector.shape_cast %131 : vector<2x8x8x32xf32> to vector<128x32xf32>
    %c18 = arith.constant 18 : index
    %c0_161 = arith.constant 0 : index
    %c0_162 = arith.constant 0 : index
    %133 = vector.load %arg2[%c18, %c0_161, %c0_162] : memref<27x32x32xf32, #tpu.memory_space<vmem>>, vector<1x32x32xf32>
    %134 = vector.shape_cast %133 : vector<1x32x32xf32> to vector<32x32xf32>
    %cst_163 = arith.constant dense<0.000000e+00> : vector<128x32xf32>
    %135 = tpu.matmul %132, %134, %cst_163 {dimension_numbers = #tpu.dot_dimension_numbers<[1], [0], [0], [1], [0, 0, 1, 1], [], []>} : vector<128x32xf32>, vector<32x32xf32>, vector<128x32xf32> -> vector<128x32xf32>
    %136 = arith.addf %130, %135 : vector<128x32xf32>
    %c0_164 = arith.constant 0 : index
    %c0_165 = arith.constant 0 : index
    %c1_166 = arith.constant 1 : index
    %c0_167 = arith.constant 0 : index
    %137 = vector.load %arg5[%c0_164, %c0_165, %c1_166, %c0_167] : memref<2x10x10x32xf32, #tpu.memory_space<vmem>>, vector<2x8x8x32xf32>
    %138 = vector.shape_cast %137 : vector<2x8x8x32xf32> to vector<128x32xf32>
    %c19 = arith.constant 19 : index
    %c0_168 = arith.constant 0 : index
    %c0_169 = arith.constant 0 : index
    %139 = vector.load %arg2[%c19, %c0_168, %c0_169] : memref<27x32x32xf32, #tpu.memory_space<vmem>>, vector<1x32x32xf32>
    %140 = vector.shape_cast %139 : vector<1x32x32xf32> to vector<32x32xf32>
    %cst_170 = arith.constant dense<0.000000e+00> : vector<128x32xf32>
    %141 = tpu.matmul %138, %140, %cst_170 {dimension_numbers = #tpu.dot_dimension_numbers<[1], [0], [0], [1], [0, 0, 1, 1], [], []>} : vector<128x32xf32>, vector<32x32xf32>, vector<128x32xf32> -> vector<128x32xf32>
    %142 = arith.addf %136, %141 : vector<128x32xf32>
    %c0_171 = arith.constant 0 : index
    %c0_172 = arith.constant 0 : index
    %c2_173 = arith.constant 2 : index
    %c0_174 = arith.constant 0 : index
    %143 = vector.load %arg5[%c0_171, %c0_172, %c2_173, %c0_174] : memref<2x10x10x32xf32, #tpu.memory_space<vmem>>, vector<2x8x8x32xf32>
    %144 = vector.shape_cast %143 : vector<2x8x8x32xf32> to vector<128x32xf32>
    %c20 = arith.constant 20 : index
    %c0_175 = arith.constant 0 : index
    %c0_176 = arith.constant 0 : index
    %145 = vector.load %arg2[%c20, %c0_175, %c0_176] : memref<27x32x32xf32, #tpu.memory_space<vmem>>, vector<1x32x32xf32>
    %146 = vector.shape_cast %145 : vector<1x32x32xf32> to vector<32x32xf32>
    %cst_177 = arith.constant dense<0.000000e+00> : vector<128x32xf32>
    %147 = tpu.matmul %144, %146, %cst_177 {dimension_numbers = #tpu.dot_dimension_numbers<[1], [0], [0], [1], [0, 0, 1, 1], [], []>} : vector<128x32xf32>, vector<32x32xf32>, vector<128x32xf32> -> vector<128x32xf32>
    %148 = arith.addf %142, %147 : vector<128x32xf32>
    %c0_178 = arith.constant 0 : index
    %c1_179 = arith.constant 1 : index
    %c0_180 = arith.constant 0 : index
    %c0_181 = arith.constant 0 : index
    %149 = vector.load %arg5[%c0_178, %c1_179, %c0_180, %c0_181] : memref<2x10x10x32xf32, #tpu.memory_space<vmem>>, vector<2x8x8x32xf32>
    %150 = vector.shape_cast %149 : vector<2x8x8x32xf32> to vector<128x32xf32>
    %c21 = arith.constant 21 : index
    %c0_182 = arith.constant 0 : index
    %c0_183 = arith.constant 0 : index
    %151 = vector.load %arg2[%c21, %c0_182, %c0_183] : memref<27x32x32xf32, #tpu.memory_space<vmem>>, vector<1x32x32xf32>
    %152 = vector.shape_cast %151 : vector<1x32x32xf32> to vector<32x32xf32>
    %cst_184 = arith.constant dense<0.000000e+00> : vector<128x32xf32>
    %153 = tpu.matmul %150, %152, %cst_184 {dimension_numbers = #tpu.dot_dimension_numbers<[1], [0], [0], [1], [0, 0, 1, 1], [], []>} : vector<128x32xf32>, vector<32x32xf32>, vector<128x32xf32> -> vector<128x32xf32>
    %154 = arith.addf %148, %153 : vector<128x32xf32>
    %c0_185 = arith.constant 0 : index
    %c1_186 = arith.constant 1 : index
    %c1_187 = arith.constant 1 : index
    %c0_188 = arith.constant 0 : index
    %155 = vector.load %arg5[%c0_185, %c1_186, %c1_187, %c0_188] : memref<2x10x10x32xf32, #tpu.memory_space<vmem>>, vector<2x8x8x32xf32>
    %156 = vector.shape_cast %155 : vector<2x8x8x32xf32> to vector<128x32xf32>
    %c22 = arith.constant 22 : index
    %c0_189 = arith.constant 0 : index
    %c0_190 = arith.constant 0 : index
    %157 = vector.load %arg2[%c22, %c0_189, %c0_190] : memref<27x32x32xf32, #tpu.memory_space<vmem>>, vector<1x32x32xf32>
    %158 = vector.shape_cast %157 : vector<1x32x32xf32> to vector<32x32xf32>
    %cst_191 = arith.constant dense<0.000000e+00> : vector<128x32xf32>
    %159 = tpu.matmul %156, %158, %cst_191 {dimension_numbers = #tpu.dot_dimension_numbers<[1], [0], [0], [1], [0, 0, 1, 1], [], []>} : vector<128x32xf32>, vector<32x32xf32>, vector<128x32xf32> -> vector<128x32xf32>
    %160 = arith.addf %154, %159 : vector<128x32xf32>
    %c0_192 = arith.constant 0 : index
    %c1_193 = arith.constant 1 : index
    %c2_194 = arith.constant 2 : index
    %c0_195 = arith.constant 0 : index
    %161 = vector.load %arg5[%c0_192, %c1_193, %c2_194, %c0_195] : memref<2x10x10x32xf32, #tpu.memory_space<vmem>>, vector<2x8x8x32xf32>
    %162 = vector.shape_cast %161 : vector<2x8x8x32xf32> to vector<128x32xf32>
    %c23 = arith.constant 23 : index
    %c0_196 = arith.constant 0 : index
    %c0_197 = arith.constant 0 : index
    %163 = vector.load %arg2[%c23, %c0_196, %c0_197] : memref<27x32x32xf32, #tpu.memory_space<vmem>>, vector<1x32x32xf32>
    %164 = vector.shape_cast %163 : vector<1x32x32xf32> to vector<32x32xf32>
    %cst_198 = arith.constant dense<0.000000e+00> : vector<128x32xf32>
    %165 = tpu.matmul %162, %164, %cst_198 {dimension_numbers = #tpu.dot_dimension_numbers<[1], [0], [0], [1], [0, 0, 1, 1], [], []>} : vector<128x32xf32>, vector<32x32xf32>, vector<128x32xf32> -> vector<128x32xf32>
    %166 = arith.addf %160, %165 : vector<128x32xf32>
    %c0_199 = arith.constant 0 : index
    %c2_200 = arith.constant 2 : index
    %c0_201 = arith.constant 0 : index
    %c0_202 = arith.constant 0 : index
    %167 = vector.load %arg5[%c0_199, %c2_200, %c0_201, %c0_202] : memref<2x10x10x32xf32, #tpu.memory_space<vmem>>, vector<2x8x8x32xf32>
    %168 = vector.shape_cast %167 : vector<2x8x8x32xf32> to vector<128x32xf32>
    %c24 = arith.constant 24 : index
    %c0_203 = arith.constant 0 : index
    %c0_204 = arith.constant 0 : index
    %169 = vector.load %arg2[%c24, %c0_203, %c0_204] : memref<27x32x32xf32, #tpu.memory_space<vmem>>, vector<1x32x32xf32>
    %170 = vector.shape_cast %169 : vector<1x32x32xf32> to vector<32x32xf32>
    %cst_205 = arith.constant dense<0.000000e+00> : vector<128x32xf32>
    %171 = tpu.matmul %168, %170, %cst_205 {dimension_numbers = #tpu.dot_dimension_numbers<[1], [0], [0], [1], [0, 0, 1, 1], [], []>} : vector<128x32xf32>, vector<32x32xf32>, vector<128x32xf32> -> vector<128x32xf32>
    %172 = arith.addf %166, %171 : vector<128x32xf32>
    %c0_206 = arith.constant 0 : index
    %c2_207 = arith.constant 2 : index
    %c1_208 = arith.constant 1 : index
    %c0_209 = arith.constant 0 : index
    %173 = vector.load %arg5[%c0_206, %c2_207, %c1_208, %c0_209] : memref<2x10x10x32xf32, #tpu.memory_space<vmem>>, vector<2x8x8x32xf32>
    %174 = vector.shape_cast %173 : vector<2x8x8x32xf32> to vector<128x32xf32>
    %c25 = arith.constant 25 : index
    %c0_210 = arith.constant 0 : index
    %c0_211 = arith.constant 0 : index
    %175 = vector.load %arg2[%c25, %c0_210, %c0_211] : memref<27x32x32xf32, #tpu.memory_space<vmem>>, vector<1x32x32xf32>
    %176 = vector.shape_cast %175 : vector<1x32x32xf32> to vector<32x32xf32>
    %cst_212 = arith.constant dense<0.000000e+00> : vector<128x32xf32>
    %177 = tpu.matmul %174, %176, %cst_212 {dimension_numbers = #tpu.dot_dimension_numbers<[1], [0], [0], [1], [0, 0, 1, 1], [], []>} : vector<128x32xf32>, vector<32x32xf32>, vector<128x32xf32> -> vector<128x32xf32>
    %178 = arith.addf %172, %177 : vector<128x32xf32>
    %c0_213 = arith.constant 0 : index
    %c2_214 = arith.constant 2 : index
    %c2_215 = arith.constant 2 : index
    %c0_216 = arith.constant 0 : index
    %179 = vector.load %arg5[%c0_213, %c2_214, %c2_215, %c0_216] : memref<2x10x10x32xf32, #tpu.memory_space<vmem>>, vector<2x8x8x32xf32>
    %180 = vector.shape_cast %179 : vector<2x8x8x32xf32> to vector<128x32xf32>
    %c26 = arith.constant 26 : index
    %c0_217 = arith.constant 0 : index
    %c0_218 = arith.constant 0 : index
    %181 = vector.load %arg2[%c26, %c0_217, %c0_218] : memref<27x32x32xf32, #tpu.memory_space<vmem>>, vector<1x32x32xf32>
    %182 = vector.shape_cast %181 : vector<1x32x32xf32> to vector<32x32xf32>
    %cst_219 = arith.constant dense<0.000000e+00> : vector<128x32xf32>
    %183 = tpu.matmul %180, %182, %cst_219 {dimension_numbers = #tpu.dot_dimension_numbers<[1], [0], [0], [1], [0, 0, 1, 1], [], []>} : vector<128x32xf32>, vector<32x32xf32>, vector<128x32xf32> -> vector<128x32xf32>
    %184 = arith.addf %178, %183 : vector<128x32xf32>
    %c2_220 = arith.constant 2 : index
    %c0_221 = arith.constant 0 : index
    %c0_222 = arith.constant 0 : index
    %185 = vector.load %arg3[%c2_220, %c0_221, %c0_222] : memref<3x1x32xf32, #tpu.memory_space<vmem>>, vector<1x1x32xf32>
    %186 = vector.shape_cast %185 : vector<1x1x32xf32> to vector<1x32xf32>
    %187 = vector.broadcast %186 : vector<1x32xf32> to vector<128x32xf32>
    %188 = arith.addf %184, %187 : vector<128x32xf32>
    %cst_223 = arith.constant 0.000000e+00 : f32
    %189 = vector.broadcast %cst_223 : f32 to vector<128x32xf32>
    %190 = arith.maximumf %188, %189 : vector<128x32xf32>
    %191 = vector.shape_cast %190 : vector<128x32xf32> to vector<2x64x32xf32>
    %c0_224 = arith.constant 0 : index
    %c0_225 = arith.constant 0 : index
    %c0_226 = arith.constant 0 : index
    %192 = vector.load %arg4[%c0_224, %c0_225, %c0_226] : memref<2x64x32xf32, #tpu.memory_space<vmem>>, vector<2x64x32xf32>
    tpu.vector_store %arg4[%c0_224, %c0_225, %c0_226], %191 {strides = array<i32>} : memref<2x64x32xf32, #tpu.memory_space<vmem>>, vector<2x64x32xf32>,
    return
  }
  func.func @transform_0(%arg0: i32) -> (i32, i32, i32, i32) {
    %c0_i32 = arith.constant 0 : i32
    %c0_i32_0 = arith.constant 0 : i32
    %c0_i32_1 = arith.constant 0 : i32
    %c0_i32_2 = arith.constant 0 : i32
    return %arg0, %c0_i32, %c0_i32_0, %c0_i32_1 : i32, i32, i32, i32
  }
  func.func @transform_1(%arg0: i32) -> (i32, i32, i32) {
    %c0_i32 = arith.constant 0 : i32
    %c0_i32_0 = arith.constant 0 : i32
    %c0_i32_1 = arith.constant 0 : i32
    %c0_i32_2 = arith.constant 0 : i32
    return %c0_i32, %c0_i32_0, %c0_i32_1 : i32, i32, i32
  }
  func.func @transform_2(%arg0: i32) -> (i32, i32, i32) {
    %c0_i32 = arith.constant 0 : i32
    %c0_i32_0 = arith.constant 0 : i32
    %c0_i32_1 = arith.constant 0 : i32
    %c0_i32_2 = arith.constant 0 : i32
    return %c0_i32, %c0_i32_0, %c0_i32_1 : i32, i32, i32
  }
  func.func @transform_3(%arg0: i32) -> (i32, i32, i32) {
    %c0_i32 = arith.constant 0 : i32
    %c0_i32_0 = arith.constant 0 : i32
    %c0_i32_1 = arith.constant 0 : i32
    return %arg0, %c0_i32, %c0_i32_0 : i32, i32, i32
  }
}

module attributes {stable_mosaic.version = 11 : i64} {
  func.func @_linear_kernel(%arg0: i32, %arg1: memref<2x2048xf32, #tpu.memory_space<vmem>>, %arg2: memref<2048x128xf32, #tpu.memory_space<vmem>>, %arg3: memref<1x128xf32, #tpu.memory_space<vmem>>, %arg4: memref<2x128xf32, #tpu.memory_space<vmem>>) attributes {dimension_semantics = [#tpu.dimension_semantics<arbitrary>], iteration_bounds = array<i64: 1>, scalar_prefetch = 0 : i64, scratch_operands = 0 : i64, tpu.core_type = #tpu.core_type<tc>, window_params = [{pipeline_mode = #tpu.pipeline_mode<synchronous>, transform_indices = @transform_0, window_bounds = array<i64: 2, 2048>}, {pipeline_mode = #tpu.pipeline_mode<synchronous>, transform_indices = @transform_1, window_bounds = array<i64: 2048, 128>}, {pipeline_mode = #tpu.pipeline_mode<synchronous>, transform_indices = @transform_2, window_bounds = array<i64: 1, 128>}, {pipeline_mode = #tpu.pipeline_mode<synchronous>, transform_indices = @transform_3, window_bounds = array<i64: 2, 128>}]} {
    %c0 = arith.constant 0 : index
    %c0_0 = arith.constant 0 : index
    %0 = vector.load %arg1[%c0, %c0_0] : memref<2x2048xf32, #tpu.memory_space<vmem>>, vector<2x2048xf32>
    %c0_1 = arith.constant 0 : index
    %c0_2 = arith.constant 0 : index
    %1 = vector.load %arg2[%c0_1, %c0_2] : memref<2048x128xf32, #tpu.memory_space<vmem>>, vector<2048x128xf32>
    %cst = arith.constant dense<0.000000e+00> : vector<2x128xf32>
    %2 = tpu.matmul %0, %1, %cst {dimension_numbers = #tpu.dot_dimension_numbers<[1], [0], [0], [1], [0, 0, 1, 1], [], []>} : vector<2x2048xf32>, vector<2048x128xf32>, vector<2x128xf32> -> vector<2x128xf32>
    %c0_3 = arith.constant 0 : index
    %c0_4 = arith.constant 0 : index
    %3 = vector.load %arg3[%c0_3, %c0_4] : memref<1x128xf32, #tpu.memory_space<vmem>>, vector<1x128xf32>
    %4 = vector.broadcast %3 : vector<1x128xf32> to vector<2x128xf32>
    %5 = arith.addf %2, %4 : vector<2x128xf32>
    %c0_5 = arith.constant 0 : index
    %c0_6 = arith.constant 0 : index
    %6 = vector.load %arg4[%c0_5, %c0_6] : memref<2x128xf32, #tpu.memory_space<vmem>>, vector<2x128xf32>
    tpu.vector_store %arg4[%c0_5, %c0_6], %5 {strides = array<i32>} : memref<2x128xf32, #tpu.memory_space<vmem>>, vector<2x128xf32>,
    return
  }
  func.func @transform_0(%arg0: i32) -> (i32, i32) {
    %c0_i32 = arith.constant 0 : i32
    %c0_i32_0 = arith.constant 0 : i32
    %c0_i32_1 = arith.constant 0 : i32
    return %c0_i32, %c0_i32_0 : i32, i32
  }
  func.func @transform_1(%arg0: i32) -> (i32, i32) {
    %c0_i32 = arith.constant 0 : i32
    %c0_i32_0 = arith.constant 0 : i32
    %c0_i32_1 = arith.constant 0 : i32
    return %c0_i32, %c0_i32_0 : i32, i32
  }
  func.func @transform_2(%arg0: i32) -> (i32, i32) {
    %c0_i32 = arith.constant 0 : i32
    %c0_i32_0 = arith.constant 0 : i32
    %c0_i32_1 = arith.constant 0 : i32
    return %c0_i32, %c0_i32_0 : i32, i32
  }
  func.func @transform_3(%arg0: i32) -> (i32, i32) {
    %c0_i32 = arith.constant 0 : i32
    %c0_i32_0 = arith.constant 0 : i32
    %c0_i32_1 = arith.constant 0 : i32
    return %c0_i32, %c0_i32_0 : i32, i32
  }
}

</mosaic_0001>

<llo_original>
// kernel: cnn_forward.3
$region0: #{cnn_forward.3}
  #allocation0 [shape = 'u32[]', space=smem, size = 0x4, offset = 0x4, fixed_abs, tag = 'smem constant byte address 0x4 - core index']
  #allocation1 [shape = 'u32[144,128]{1,0:T(1,128)}', space=vmem, size = 0x12000, scoped, tag = 'internal scratch']
  %s0 = inlined_call_operand.vmem [shape: f32[2,2048], index: 0, kind: input, shape index: {}]
  %s1 = inlined_call_operand.hbm [shape: f32[2048,128], index: 1, kind: input, shape index: {}]
  %s2 = inlined_call_operand.vmem [shape: f32[1,128], index: 2, kind: input, shape index: {}]
  %s3 = inlined_call_operand.hbm [shape: f32[2,128], index: 3, kind: output, shape index: {}]
  %s4 = sld [smem:[#allocation0]]
  $region26: #{cnn_forward.3} parent=0
    _
  %s6 = ssub.s32 1, %s4
  %s7 = scalar_select 0, %s6, %s4
  $region1: #{cnn_forward.3} parent=0
    #allocation2 [shape = 'u8[1048576]{0}', space=vmem, size = 0x100000, scoped, tag = 'input window, operand 1, single buffered']
    #allocation3 [shape = 's32[1]{0}', space=sflag, size = 0x4, scoped, tag = 'scoped memory for cnn_forward.3']
    #allocation4 [shape = 's32[1]{0}', space=sflag, size = 0x4, scoped, tag = 'scoped memory for cnn_forward.3']
    #allocation5 [shape = 'u8[1024]{0}', space=vmem, size = 0x400, scoped, tag = 'output window, operand 0, single buffered']
    %8 = vsyncpa [#allocation3], 0
    %9 = vsyncpa [#allocation4], 0
    // Predicated region
    $region2: #{cnn_forward.3} parent=1 // pred_check
      _
    $region3: #{cnn_forward.3} parent=1 // pred_check_branch
      %11 = sbr.rel (0) target = $region5
    $region4: #{cnn_forward.3} parent=1 // pred_region
      _
    $region5: #{cnn_forward.3} parent=1 // pred_fallthru
      _
    // Predicated region
    $region6: #{cnn_forward.3} parent=1 // pred_check
      _
    $region7: #{cnn_forward.3} parent=1 // pred_check_branch
      %13 = sbr.rel (0) target = $region9
    $region8: #{cnn_forward.3} parent=1 // pred_region
      %s15 = ssub.s32 32768, 32768
      %16 = vsyncadd [#allocation3], %s15
      %s17 = sshll.u32 [#allocation2], 4
      %s18 = int_to_ptr.vmem [resolvable:$true] %s17
      %23 = dma.hbm_to_vmem [thread:$0]  %s1, 32768, %s18, [#allocation3], 128, 128, 8
    $region9: #{cnn_forward.3} parent=1 // pred_fallthru
      _
    // Predicated region
    $region10: #{cnn_forward.3} parent=1 // pred_check
      _
    $region11: #{cnn_forward.3} parent=1 // pred_check_branch
      %25 = sbr.rel (0) target = $region13
    $region12: #{cnn_forward.3} parent=1 // pred_region
      _
    $region13: #{cnn_forward.3} parent=1 // pred_fallthru
      _
    // Predicated region
    $region14: #{cnn_forward.3} parent=1 // pred_check
      _
    $region15: #{cnn_forward.3} parent=1 // pred_check_branch
      %27 = sbr.rel (0) target = $region17
    $region16: #{cnn_forward.3} parent=1 // pred_region
      %28 = dma.done [#allocation3], 32768
    $region17: #{cnn_forward.3} parent=1 // pred_fallthru
      _
    %v29 = vld [vmem:[%s0] sm:$0xff]
    %v30 = vld [vmem:[%s0 + $0x8] sm:$0xff]
    %v31 = vld [vmem:[%s0 + $0x10] sm:$0xff]
    %v32 = vld [vmem:[%s0 + $0x18] sm:$0xff]
    %v33 = vld [vmem:[#allocation2] sm:$0xff]
    %v34 = vld [vmem:[#allocation2 + $0x8] sm:$0xff]
    %v35 = vld [vmem:[#allocation2 + $0x10] sm:$0xff]
    %v36 = vld [vmem:[#allocation2 + $0x18] sm:$0xff]
    %v37 = vld [vmem:[#allocation2 + $0x20] sm:$0xff]
    %v38 = vld [vmem:[#allocation2 + $0x28] sm:$0xff]
    %v39 = vld [vmem:[#allocation2 + $0x30] sm:$0xff]
    %v40 = vld [vmem:[#allocation2 + $0x38] sm:$0xff]
    %v41 = vld [vmem:[#allocation2 + $0x40] sm:$0xff]
    %v42 = vld [vmem:[#allocation2 + $0x48] sm:$0xff]
    %v43 = vld [vmem:[#allocation2 + $0x50] sm:$0xff]
    %v44 = vld [vmem:[#allocation2 + $0x58] sm:$0xff]
    %v45 = vld [vmem:[#allocation2 + $0x60] sm:$0xff]
    %v46 = vld [vmem:[#allocation2 + $0x68] sm:$0xff]
    %v47 = vld [vmem:[#allocation2 + $0x70] sm:$0xff]
    %v48 = vld [vmem:[#allocation2 + $0x78] sm:$0xff]
    %v49 = vld [vmem:[#allocation2 + $0x80] sm:$0xff]
    %v50 = vld [vmem:[#allocation2 + $0x88] sm:$0xff]
    %v51 = vld [vmem:[#allocation2 + $0x90] sm:$0xff]
    %v52 = vld [vmem:[#allocation2 + $0x98] sm:$0xff]
    %v53 = vld [vmem:[#allocation2 + $0xa0] sm:$0xff]
    %v54 = vld [vmem:[#allocation2 + $0xa8] sm:$0xff]
    %v55 = vld [vmem:[#allocation2 + $0xb0] sm:$0xff]
    %v56 = vld [vmem:[#allocation2 + $0xb8] sm:$0xff]
    %v57 = vld [vmem:[#allocation2 + $0xc0] sm:$0xff]
    %v58 = vld [vmem:[#allocation2 + $0xc8] sm:$0xff]
    %v59 = vld [vmem:[#allocation2 + $0xd0] sm:$0xff]
    %v60 = vld [vmem:[#allocation2 + $0xd8] sm:$0xff]
    %v61 = vld [vmem:[#allocation2 + $0xe0] sm:$0xff]
    %v62 = vld [vmem:[#allocation2 + $0xe8] sm:$0xff]
    %v63 = vld [vmem:[#allocation2 + $0xf0] sm:$0xff]
    %v64 = vld [vmem:[#allocation2 + $0xf8] sm:$0xff]
    %v65 = vld [vmem:[#allocation2 + $0x100] sm:$0xff]
    %v66 = vld [vmem:[#allocation2 + $0x108] sm:$0xff]
    %v67 = vld [vmem:[#allocation2 + $0x110] sm:$0xff]
    %v68 = vld [vmem:[#allocation2 + $0x118] sm:$0xff]
    %v69 = vld [vmem:[#allocation2 + $0x120] sm:$0xff]
    %v70 = vld [vmem:[#allocation2 + $0x128] sm:$0xff]
    %v71 = vld [vmem:[#allocation2 + $0x130] sm:$0xff]
    %v72 = vld [vmem:[#allocation2 + $0x138] sm:$0xff]
    %v73 = vld [vmem:[#allocation2 + $0x140] sm:$0xff]
    %v74 = vld [vmem:[#allocation2 + $0x148] sm:$0xff]
    %v75 = vld [vmem:[#allocation2 + $0x150] sm:$0xff]
    %v76 = vld [vmem:[#allocation2 + $0x158] sm:$0xff]
    %v77 = vld [vmem:[#allocation2 + $0x160] sm:$0xff]
    %v78 = vld [vmem:[#allocation2 + $0x168] sm:$0xff]
    %v79 = vld [vmem:[#allocation2 + $0x170] sm:$0xff]
    %v80 = vld [vmem:[#allocation2 + $0x178] sm:$0xff]
    %v81 = vld [vmem:[#allocation2 + $0x180] sm:$0xff]
    %v82 = vld [vmem:[#allocation2 + $0x188] sm:$0xff]
    %v83 = vld [vmem:[#allocation2 + $0x190] sm:$0xff]
    %v84 = vld [vmem:[#allocation2 + $0x198] sm:$0xff]
    %v85 = vld [vmem:[#allocation2 + $0x1a0] sm:$0xff]
    %v86 = vld [vmem:[#allocation2 + $0x1a8] sm:$0xff]
    %v87 = vld [vmem:[#allocation2 + $0x1b0] sm:$0xff]
    %v88 = vld [vmem:[#allocation2 + $0x1b8] sm:$0xff]
    %v89 = vld [vmem:[#allocation2 + $0x1c0] sm:$0xff]
    %v90 = vld [vmem:[#allocation2 + $0x1c8] sm:$0xff]
    %v91 = vld [vmem:[#allocation2 + $0x1d0] sm:$0xff]
    %v92 = vld [vmem:[#allocation2 + $0x1d8] sm:$0xff]
    %v93 = vld [vmem:[#allocation2 + $0x1e0] sm:$0xff]
    %v94 = vld [vmem:[#allocation2 + $0x1e8] sm:$0xff]
    %v95 = vld [vmem:[#allocation2 + $0x1f0] sm:$0xff]
    %v96 = vld [vmem:[#allocation2 + $0x1f8] sm:$0xff]
    %v97 = vld [vmem:[#allocation2 + $0x200] sm:$0xff]
    %v98 = vld [vmem:[#allocation2 + $0x208] sm:$0xff]
    %v99 = vld [vmem:[#allocation2 + $0x210] sm:$0xff]
    %v100 = vld [vmem:[#allocation2 + $0x218] sm:$0xff]
    %v101 = vld [vmem:[#allocation2 + $0x220] sm:$0xff]
    %v102 = vld [vmem:[#allocation2 + $0x228] sm:$0xff]
    %v103 = vld [vmem:[#allocation2 + $0x230] sm:$0xff]
    %v104 = vld [vmem:[#allocation2 + $0x238] sm:$0xff]
    %v105 = vld [vmem:[#allocation2 + $0x240] sm:$0xff]
    %v106 = vld [vmem:[#allocation2 + $0x248] sm:$0xff]
    %v107 = vld [vmem:[#allocation2 + $0x250] sm:$0xff]
    %v108 = vld [vmem:[#allocation2 + $0x258] sm:$0xff]
    %v109 = vld [vmem:[#allocation2 + $0x260] sm:$0xff]
    %v110 = vld [vmem:[#allocation2 + $0x268] sm:$0xff]
    %v111 = vld [vmem:[#allocation2 + $0x270] sm:$0xff]
    %v112 = vld [vmem:[#allocation2 + $0x278] sm:$0xff]
    %v113 = vld [vmem:[#allocation2 + $0x280] sm:$0xff]
    %v114 = vld [vmem:[#allocation2 + $0x288] sm:$0xff]
    %v115 = vld [vmem:[#allocation2 + $0x290] sm:$0xff]
    %v116 = vld [vmem:[#allocation2 + $0x298] sm:$0xff]
    %v117 = vld [vmem:[#allocation2 + $0x2a0] sm:$0xff]
    %v118 = vld [vmem:[#allocation2 + $0x2a8] sm:$0xff]
    %v119 = vld [vmem:[#allocation2 + $0x2b0] sm:$0xff]
    %v120 = vld [vmem:[#allocation2 + $0x2b8] sm:$0xff]
    %v121 = vld [vmem:[#allocation2 + $0x2c0] sm:$0xff]
    %v122 = vld [vmem:[#allocation2 + $0x2c8] sm:$0xff]
    %v123 = vld [vmem:[#allocation2 + $0x2d0] sm:$0xff]
    %v124 = vld [vmem:[#allocation2 + $0x2d8] sm:$0xff]
    %v125 = vld [vmem:[#allocation2 + $0x2e0] sm:$0xff]
    %v126 = vld [vmem:[#allocation2 + $0x2e8] sm:$0xff]
    %v127 = vld [vmem:[#allocation2 + $0x2f0] sm:$0xff]
    %v128 = vld [vmem:[#allocation2 + $0x2f8] sm:$0xff]
    %v129 = vld [vmem:[#allocation2 + $0x300] sm:$0xff]
    %v130 = vld [vmem:[#allocation2 + $0x308] sm:$0xff]
    %v131 = vld [vmem:[#allocation2 + $0x310] sm:$0xff]
    %v132 = vld [vmem:[#allocation2 + $0x318] sm:$0xff]
    %v133 = vld [vmem:[#allocation2 + $0x320] sm:$0xff]
    %v134 = vld [vmem:[#allocation2 + $0x328] sm:$0xff]
    %v135 = vld [vmem:[#allocation2 + $0x330] sm:$0xff]
    %v136 = vld [vmem:[#allocation2 + $0x338] sm:$0xff]
    %v137 = vld [vmem:[#allocation2 + $0x340] sm:$0xff]
    %v138 = vld [vmem:[#allocation2 + $0x348] sm:$0xff]
    %v139 = vld [vmem:[#allocation2 + $0x350] sm:$0xff]
    %v140 = vld [vmem:[#allocation2 + $0x358] sm:$0xff]
    %v141 = vld [vmem:[#allocation2 + $0x360] sm:$0xff]
    %v142 = vld [vmem:[#allocation2 + $0x368] sm:$0xff]
    %v143 = vld [vmem:[#allocation2 + $0x370] sm:$0xff]
    %v144 = vld [vmem:[#allocation2 + $0x378] sm:$0xff]
    %v145 = vld [vmem:[#allocation2 + $0x380] sm:$0xff]
    %v146 = vld [vmem:[#allocation2 + $0x388] sm:$0xff]
    %v147 = vld [vmem:[#allocation2 + $0x390] sm:$0xff]
    %v148 = vld [vmem:[#allocation2 + $0x398] sm:$0xff]
    %v149 = vld [vmem:[#allocation2 + $0x3a0] sm:$0xff]
    %v150 = vld [vmem:[#allocation2 + $0x3a8] sm:$0xff]
    %v151 = vld [vmem:[#allocation2 + $0x3b0] sm:$0xff]
    %v152 = vld [vmem:[#allocation2 + $0x3b8] sm:$0xff]
    %v153 = vld [vmem:[#allocation2 + $0x3c0] sm:$0xff]
    %v154 = vld [vmem:[#allocation2 + $0x3c8] sm:$0xff]
    %v155 = vld [vmem:[#allocation2 + $0x3d0] sm:$0xff]
    %v156 = vld [vmem:[#allocation2 + $0x3d8] sm:$0xff]
    %v157 = vld [vmem:[#allocation2 + $0x3e0] sm:$0xff]
    %v158 = vld [vmem:[#allocation2 + $0x3e8] sm:$0xff]
    %v159 = vld [vmem:[#allocation2 + $0x3f0] sm:$0xff]
    %v160 = vld [vmem:[#allocation2 + $0x3f8] sm:$0xff]
    %v161 = vld [vmem:[#allocation2 + $0x400] sm:$0xff]
    %v162 = vld [vmem:[#allocation2 + $0x408] sm:$0xff]
    %v163 = vld [vmem:[#allocation2 + $0x410] sm:$0xff]
    %v164 = vld [vmem:[#allocation2 + $0x418] sm:$0xff]
    %v165 = vld [vmem:[#allocation2 + $0x420] sm:$0xff]
    %v166 = vld [vmem:[#allocation2 + $0x428] sm:$0xff]
    %v167 = vld [vmem:[#allocation2 + $0x430] sm:$0xff]
    %v168 = vld [vmem:[#allocation2 + $0x438] sm:$0xff]
    %v169 = vld [vmem:[#allocation2 + $0x440] sm:$0xff]
    %v170 = vld [vmem:[#allocation2 + $0x448] sm:$0xff]
    %v171 = vld [vmem:[#allocation2 + $0x450] sm:$0xff]
    %v172 = vld [vmem:[#allocation2 + $0x458] sm:$0xff]
    %v173 = vld [vmem:[#allocation2 + $0x460] sm:$0xff]
    %v174 = vld [vmem:[#allocation2 + $0x468] sm:$0xff]
    %v175 = vld [vmem:[#allocation2 + $0x470] sm:$0xff]
    %v176 = vld [vmem:[#allocation2 + $0x478] sm:$0xff]
    %v177 = vld [vmem:[#allocation2 + $0x480] sm:$0xff]
    %v178 = vld [vmem:[#allocation2 + $0x488] sm:$0xff]
    %v179 = vld [vmem:[#allocation2 + $0x490] sm:$0xff]
    %v180 = vld [vmem:[#allocation2 + $0x498] sm:$0xff]
    %v181 = vld [vmem:[#allocation2 + $0x4a0] sm:$0xff]
    %v182 = vld [vmem:[#allocation2 + $0x4a8] sm:$0xff]
    %v183 = vld [vmem:[#allocation2 + $0x4b0] sm:$0xff]
    %v184 = vld [vmem:[#allocation2 + $0x4b8] sm:$0xff]
    %v185 = vld [vmem:[#allocation2 + $0x4c0] sm:$0xff]
    %v186 = vld [vmem:[#allocation2 + $0x4c8] sm:$0xff]
    %v187 = vld [vmem:[#allocation2 + $0x4d0] sm:$0xff]
    %v188 = vld [vmem:[#allocation2 + $0x4d8] sm:$0xff]
    %v189 = vld [vmem:[#allocation2 + $0x4e0] sm:$0xff]
    %v190 = vld [vmem:[#allocation2 + $0x4e8] sm:$0xff]
    %v191 = vld [vmem:[#allocation2 + $0x4f0] sm:$0xff]
    %v192 = vld [vmem:[#allocation2 + $0x4f8] sm:$0xff]
    %v193 = vld [vmem:[#allocation2 + $0x500] sm:$0xff]
    %v194 = vld [vmem:[#allocation2 + $0x508] sm:$0xff]
    %v195 = vld [vmem:[#allocation2 + $0x510] sm:$0xff]
    %v196 = vld [vmem:[#allocation2 + $0x518] sm:$0xff]
    %v197 = vld [vmem:[#allocation2 + $0x520] sm:$0xff]
    %v198 = vld [vmem:[#allocation2 + $0x528] sm:$0xff]
    %v199 = vld [vmem:[#allocation2 + $0x530] sm:$0xff]
    %v200 = vld [vmem:[#allocation2 + $0x538] sm:$0xff]
    %v201 = vld [vmem:[#allocation2 + $0x540] sm:$0xff]
    %v202 = vld [vmem:[#allocation2 + $0x548] sm:$0xff]
    %v203 = vld [vmem:[#allocation2 + $0x550] sm:$0xff]
    %v204 = vld [vmem:[#allocation2 + $0x558] sm:$0xff]
    %v205 = vld [vmem:[#allocation2 + $0x560] sm:$0xff]
    %v206 = vld [vmem:[#allocation2 + $0x568] sm:$0xff]
    %v207 = vld [vmem:[#allocation2 + $0x570] sm:$0xff]
    %v208 = vld [vmem:[#allocation2 + $0x578] sm:$0xff]
    %v209 = vld [vmem:[#allocation2 + $0x580] sm:$0xff]
    %v210 = vld [vmem:[#allocation2 + $0x588] sm:$0xff]
    %v211 = vld [vmem:[#allocation2 + $0x590] sm:$0xff]
    %v212 = vld [vmem:[#allocation2 + $0x598] sm:$0xff]
    %v213 = vld [vmem:[#allocation2 + $0x5a0] sm:$0xff]
    %v214 = vld [vmem:[#allocation2 + $0x5a8] sm:$0xff]
    %v215 = vld [vmem:[#allocation2 + $0x5b0] sm:$0xff]
    %v216 = vld [vmem:[#allocation2 + $0x5b8] sm:$0xff]
    %v217 = vld [vmem:[#allocation2 + $0x5c0] sm:$0xff]
    %v218 = vld [vmem:[#allocation2 + $0x5c8] sm:$0xff]
    %v219 = vld [vmem:[#allocation2 + $0x5d0] sm:$0xff]
    %v220 = vld [vmem:[#allocation2 + $0x5d8] sm:$0xff]
    %v221 = vld [vmem:[#allocation2 + $0x5e0] sm:$0xff]
    %v222 = vld [vmem:[#allocation2 + $0x5e8] sm:$0xff]
    %v223 = vld [vmem:[#allocation2 + $0x5f0] sm:$0xff]
    %v224 = vld [vmem:[#allocation2 + $0x5f8] sm:$0xff]
    %v225 = vld [vmem:[#allocation2 + $0x600] sm:$0xff]
    %v226 = vld [vmem:[#allocation2 + $0x608] sm:$0xff]
    %v227 = vld [vmem:[#allocation2 + $0x610] sm:$0xff]
    %v228 = vld [vmem:[#allocation2 + $0x618] sm:$0xff]
    %v229 = vld [vmem:[#allocation2 + $0x620] sm:$0xff]
    %v230 = vld [vmem:[#allocation2 + $0x628] sm:$0xff]
    %v231 = vld [vmem:[#allocation2 + $0x630] sm:$0xff]
    %v232 = vld [vmem:[#allocation2 + $0x638] sm:$0xff]
    %v233 = vld [vmem:[#allocation2 + $0x640] sm:$0xff]
    %v234 = vld [vmem:[#allocation2 + $0x648] sm:$0xff]
    %v235 = vld [vmem:[#allocation2 + $0x650] sm:$0xff]
    %v236 = vld [vmem:[#allocation2 + $0x658] sm:$0xff]
    %v237 = vld [vmem:[#allocation2 + $0x660] sm:$0xff]
    %v238 = vld [vmem:[#allocation2 + $0x668] sm:$0xff]
    %v239 = vld [vmem:[#allocation2 + $0x670] sm:$0xff]
    %v240 = vld [vmem:[#allocation2 + $0x678] sm:$0xff]
    %v241 = vld [vmem:[#allocation2 + $0x680] sm:$0xff]
    %v242 = vld [vmem:[#allocation2 + $0x688] sm:$0xff]
    %v243 = vld [vmem:[#allocation2 + $0x690] sm:$0xff]
    %v244 = vld [vmem:[#allocation2 + $0x698] sm:$0xff]
    %v245 = vld [vmem:[#allocation2 + $0x6a0] sm:$0xff]
    %v246 = vld [vmem:[#allocation2 + $0x6a8] sm:$0xff]
    %v247 = vld [vmem:[#allocation2 + $0x6b0] sm:$0xff]
    %v248 = vld [vmem:[#allocation2 + $0x6b8] sm:$0xff]
    %v249 = vld [vmem:[#allocation2 + $0x6c0] sm:$0xff]
    %v250 = vld [vmem:[#allocation2 + $0x6c8] sm:$0xff]
    %v251 = vld [vmem:[#allocation2 + $0x6d0] sm:$0xff]
    %v252 = vld [vmem:[#allocation2 + $0x6d8] sm:$0xff]
    %v253 = vld [vmem:[#allocation2 + $0x6e0] sm:$0xff]
    %v254 = vld [vmem:[#allocation2 + $0x6e8] sm:$0xff]
    %v255 = vld [vmem:[#allocation2 + $0x6f0] sm:$0xff]
    %v256 = vld [vmem:[#allocation2 + $0x6f8] sm:$0xff]
    %v257 = vld [vmem:[#allocation2 + $0x700] sm:$0xff]
    %v258 = vld [vmem:[#allocation2 + $0x708] sm:$0xff]
    %v259 = vld [vmem:[#allocation2 + $0x710] sm:$0xff]
    %v260 = vld [vmem:[#allocation2 + $0x718] sm:$0xff]
    %v261 = vld [vmem:[#allocation2 + $0x720] sm:$0xff]
    %v262 = vld [vmem:[#allocation2 + $0x728] sm:$0xff]
    %v263 = vld [vmem:[#allocation2 + $0x730] sm:$0xff]
    %v264 = vld [vmem:[#allocation2 + $0x738] sm:$0xff]
    %v265 = vld [vmem:[#allocation2 + $0x740] sm:$0xff]
    %v266 = vld [vmem:[#allocation2 + $0x748] sm:$0xff]
    %v267 = vld [vmem:[#allocation2 + $0x750] sm:$0xff]
    %v268 = vld [vmem:[#allocation2 + $0x758] sm:$0xff]
    %v269 = vld [vmem:[#allocation2 + $0x760] sm:$0xff]
    %v270 = vld [vmem:[#allocation2 + $0x768] sm:$0xff]
    %v271 = vld [vmem:[#allocation2 + $0x770] sm:$0xff]
    %v272 = vld [vmem:[#allocation2 + $0x778] sm:$0xff]
    %v273 = vld [vmem:[#allocation2 + $0x780] sm:$0xff]
    %v274 = vld [vmem:[#allocation2 + $0x788] sm:$0xff]
    %v275 = vld [vmem:[#allocation2 + $0x790] sm:$0xff]
    %v276 = vld [vmem:[#allocation2 + $0x798] sm:$0xff]
    %v277 = vld [vmem:[#allocation2 + $0x7a0] sm:$0xff]
    %v278 = vld [vmem:[#allocation2 + $0x7a8] sm:$0xff]
    %v279 = vld [vmem:[#allocation2 + $0x7b0] sm:$0xff]
    %v280 = vld [vmem:[#allocation2 + $0x7b8] sm:$0xff]
    %v281 = vld [vmem:[#allocation2 + $0x7c0] sm:$0xff]
    %v282 = vld [vmem:[#allocation2 + $0x7c8] sm:$0xff]
    %v283 = vld [vmem:[#allocation2 + $0x7d0] sm:$0xff]
    %v284 = vld [vmem:[#allocation2 + $0x7d8] sm:$0xff]
    %v285 = vld [vmem:[#allocation2 + $0x7e0] sm:$0xff]
    %v286 = vld [vmem:[#allocation2 + $0x7e8] sm:$0xff]
    %v287 = vld [vmem:[#allocation2 + $0x7f0] sm:$0xff]
    %v288 = vld [vmem:[#allocation2 + $0x7f8] sm:$0xff]
    %v289 = vld [vmem:[%s2] sm:$0x1]
    %v291 = vlaneseq
    %v292 = vshrl.u32 %v291, 7
    %v293 = vsub.s32 0, %v292
    %v294 = vrot.slane %v289, %v293
    %v300 = vcombine.high %v29, %v29
    %v302 = vunpack.c.l.s4 1983009808
    %v303 = vunpack.c.0.s8 %v302
    %v304 = vlaneseq
    %v305 = vshrl.u32 %v304, 7
    %v306 = vsub.s32 %v303, %v305
    %v307 = vrot.slane %v29, %v306
    %v309 = vunpack.c.l.s4 1983009808
    %v310 = vunpack.c.0.s8 %v309
    %v311 = vlaneseq
    %v312 = vshrl.u32 %v311, 7
    %v313 = vsub.s32 %v310, %v312
    %v314 = vrot.slane %v300, %v313
    %v315 = vcombine.high %v307, %v307
    %v316 = vcombine.high %v314, %v314
    %v317 = vcombine.high %v30, %v30
    %v319 = vunpack.c.l.s4 1983009808
    %v320 = vunpack.c.0.s8 %v319
    %v321 = vlaneseq
    %v322 = vshrl.u32 %v321, 7
    %v323 = vsub.s32 %v320, %v322
    %v324 = vrot.slane %v30, %v323
    %v326 = vunpack.c.l.s4 1983009808
    %v327 = vunpack.c.0.s8 %v326
    %v328 = vlaneseq
    %v329 = vshrl.u32 %v328, 7
    %v330 = vsub.s32 %v327, %v329
    %v331 = vrot.slane %v317, %v330
    %v332 = vcombine.high %v324, %v324
    %v333 = vcombine.high %v331, %v331
    %v334 = vcombine.high %v31, %v31
    %v336 = vunpack.c.l.s4 1983009808
    %v337 = vunpack.c.0.s8 %v336
    %v338 = vlaneseq
    %v339 = vshrl.u32 %v338, 7
    %v340 = vsub.s32 %v337, %v339
    %v341 = vrot.slane %v31, %v340
    %v343 = vunpack.c.l.s4 1983009808
    %v344 = vunpack.c.0.s8 %v343
    %v345 = vlaneseq
    %v346 = vshrl.u32 %v345, 7
    %v347 = vsub.s32 %v344, %v346
    %v348 = vrot.slane %v334, %v347
    %v349 = vcombine.high %v341, %v341
    %v350 = vcombine.high %v348, %v348
    %v351 = vcombine.high %v32, %v32
    %v353 = vunpack.c.l.s4 1983009808
    %v354 = vunpack.c.0.s8 %v353
    %v355 = vlaneseq
    %v356 = vshrl.u32 %v355, 7
    %v357 = vsub.s32 %v354, %v356
    %v358 = vrot.slane %v32, %v357
    %v360 = vunpack.c.l.s4 1983009808
    %v361 = vunpack.c.0.s8 %v360
    %v362 = vlaneseq
    %v363 = vshrl.u32 %v362, 7
    %v364 = vsub.s32 %v361, %v363
    %v365 = vrot.slane %v351, %v364
    %v366 = vcombine.high %v358, %v358
    %v367 = vcombine.high %v365, %v365
    %384 = vmatprep.subr.mxu0 0.0
    %385 = vmatpush1.msra.mxu0 %v33
    %386 = vmatprep.subr.mxu0 0.0
    %387 = vmatpush1.msra.mxu0 %v34
    %388 = vmatprep.subr.mxu0 0.0
    %389 = vmatpush1.msra.mxu0 %v35
    %390 = vmatprep.subr.mxu0 0.0
    %391 = vmatpush1.msra.mxu0 %v36
    %392 = vmatprep.subr.mxu0 0.0
    %393 = vmatpush1.msra.mxu0 %v37
    %394 = vmatprep.subr.mxu0 0.0
    %395 = vmatpush1.msra.mxu0 %v38
    %396 = vmatprep.subr.mxu0 0.0
    %397 = vmatpush1.msra.mxu0 %v39
    %398 = vmatprep.subr.mxu0 0.0
    %399 = vmatpush1.msra.mxu0 %v40
    %400 = vmatprep.subr.mxu0 0.0
    %401 = vmatpush1.msra.mxu0 %v41
    %402 = vmatprep.subr.mxu0 0.0
    %403 = vmatpush1.msra.mxu0 %v42
    %404 = vmatprep.subr.mxu0 0.0
    %405 = vmatpush1.msra.mxu0 %v43
    %406 = vmatprep.subr.mxu0 0.0
    %407 = vmatpush1.msra.mxu0 %v44
    %408 = vmatprep.subr.mxu0 0.0
    %409 = vmatpush1.msra.mxu0 %v45
    %410 = vmatprep.subr.mxu0 0.0
    %411 = vmatpush1.msra.mxu0 %v46
    %412 = vmatprep.subr.mxu0 0.0
    %413 = vmatpush1.msra.mxu0 %v47
    %414 = vmatprep.subr.mxu0 0.0
    %415 = vmatpush1.msra.mxu0 %v48
    %416 = vmatprep.subr.mxu0 0.0
    %417 = vmatpush1.msra.mxu0 %v49
    %418 = vmatprep.subr.mxu0 0.0
    %419 = vmatpush1.msra.mxu0 %v50
    %420 = vmatprep.subr.mxu0 0.0
    %421 = vmatpush1.msra.mxu0 %v51
    %422 = vmatprep.subr.mxu0 0.0
    %423 = vmatpush1.msra.mxu0 %v52
    %424 = vmatprep.subr.mxu0 0.0
    %425 = vmatpush1.msra.mxu0 %v53
    %426 = vmatprep.subr.mxu0 0.0
    %427 = vmatpush1.msra.mxu0 %v54
    %428 = vmatprep.subr.mxu0 0.0
    %429 = vmatpush1.msra.mxu0 %v55
    %430 = vmatprep.subr.mxu0 0.0
    %431 = vmatpush1.msra.mxu0 %v56
    %432 = vmatprep.subr.mxu0 0.0
    %433 = vmatpush1.msra.mxu0 %v57
    %434 = vmatprep.subr.mxu0 0.0
    %435 = vmatpush1.msra.mxu0 %v58
    %436 = vmatprep.subr.mxu0 0.0
    %437 = vmatpush1.msra.mxu0 %v59
    %438 = vmatprep.subr.mxu0 0.0
    %439 = vmatpush1.msra.mxu0 %v60
    %440 = vmatprep.subr.mxu0 0.0
    %441 = vmatpush1.msra.mxu0 %v61
    %442 = vmatprep.subr.mxu0 0.0
    %443 = vmatpush1.msra.mxu0 %v62
    %444 = vmatprep.subr.mxu0 0.0
    %445 = vmatpush1.msra.mxu0 %v63
    %446 = vmatprep.subr.mxu0 0.0
    %447 = vmatpush1.msra.mxu0 %v64
    %448 = vmatprep.mubr.f32.mxu0 %v315
    %449 = vmatmul.mubr.f32.gmra.mrb[0].mxu0 %v307
    %v450 = vpop.f32.mrb[0].mxu0
    %v451 = vadd.f32 %v294, %v450
    %v452 = vpop.f32.mrb[0].mxu0
    %453 = vdwg.mxu0
    %454 = vmatprep.subr.mxu0 0.0
    %455 = vmatpush1.msra.mxu0 %v65
    %456 = vmatprep.subr.mxu0 0.0
    %457 = vmatpush1.msra.mxu0 %v66
    %458 = vmatprep.subr.mxu0 0.0
    %459 = vmatpush1.msra.mxu0 %v67
    %460 = vmatprep.subr.mxu0 0.0
    %461 = vmatpush1.msra.mxu0 %v68
    %462 = vmatprep.subr.mxu0 0.0
    %463 = vmatpush1.msra.mxu0 %v69
    %464 = vmatprep.subr.mxu0 0.0
    %465 = vmatpush1.msra.mxu0 %v70
    %466 = vmatprep.subr.mxu0 0.0
    %467 = vmatpush1.msra.mxu0 %v71
    %468 = vmatprep.subr.mxu0 0.0
    %469 = vmatpush1.msra.mxu0 %v72
    %470 = vmatprep.subr.mxu0 0.0
    %471 = vmatpush1.msra.mxu0 %v73
    %472 = vmatprep.subr.mxu0 0.0
    %473 = vmatpush1.msra.mxu0 %v74
    %474 = vmatprep.subr.mxu0 0.0
    %475 = vmatpush1.msra.mxu0 %v75
    %476 = vmatprep.subr.mxu0 0.0
    %477 = vmatpush1.msra.mxu0 %v76
    %478 = vmatprep.subr.mxu0 0.0
    %479 = vmatpush1.msra.mxu0 %v77
    %480 = vmatprep.subr.mxu0 0.0
    %481 = vmatpush1.msra.mxu0 %v78
    %482 = vmatprep.subr.mxu0 0.0
    %483 = vmatpush1.msra.mxu0 %v79
    %484 = vmatprep.subr.mxu0 0.0
    %485 = vmatpush1.msra.mxu0 %v80
    %486 = vmatprep.subr.mxu0 0.0
    %487 = vmatpush1.msra.mxu0 %v81
    %488 = vmatprep.subr.mxu0 0.0
    %489 = vmatpush1.msra.mxu0 %v82
    %490 = vmatprep.subr.mxu0 0.0
    %491 = vmatpush1.msra.mxu0 %v83
    %492 = vmatprep.subr.mxu0 0.0
    %493 = vmatpush1.msra.mxu0 %v84
    %494 = vmatprep.subr.mxu0 0.0
    %495 = vmatpush1.msra.mxu0 %v85
    %496 = vmatprep.subr.mxu0 0.0
    %497 = vmatpush1.msra.mxu0 %v86
    %498 = vmatprep.subr.mxu0 0.0
    %499 = vmatpush1.msra.mxu0 %v87
    %500 = vmatprep.subr.mxu0 0.0
    %501 = vmatpush1.msra.mxu0 %v88
    %502 = vmatprep.subr.mxu0 0.0
    %503 = vmatpush1.msra.mxu0 %v89
    %504 = vmatprep.subr.mxu0 0.0
    %505 = vmatpush1.msra.mxu0 %v90
    %506 = vmatprep.subr.mxu0 0.0
    %507 = vmatpush1.msra.mxu0 %v91
    %508 = vmatprep.subr.mxu0 0.0
    %509 = vmatpush1.msra.mxu0 %v92
    %510 = vmatprep.subr.mxu0 0.0
    %511 = vmatpush1.msra.mxu0 %v93
    %512 = vmatprep.subr.mxu0 0.0
    %513 = vmatpush1.msra.mxu0 %v94
    %514 = vmatprep.subr.mxu0 0.0
    %515 = vmatpush1.msra.mxu0 %v95
    %516 = vmatprep.subr.mxu0 0.0
    %517 = vmatpush1.msra.mxu0 %v96
    %518 = vmatprep.mubr.f32.mxu0 %v316
    %519 = vmatmul.mubr.f32.gmra.mrb[0].mxu0 %v314
    %v520 = vpop.f32.mrb[0].mxu0
    %v521 = vadd.f32 %v451, %v520
    %v522 = vpop.f32.mrb[0].mxu0
    %523 = vdwg.mxu0
    %524 = vmatprep.subr.mxu0 0.0
    %525 = vmatpush1.msra.mxu0 %v97
    %526 = vmatprep.subr.mxu0 0.0
    %527 = vmatpush1.msra.mxu0 %v98
    %528 = vmatprep.subr.mxu0 0.0
    %529 = vmatpush1.msra.mxu0 %v99
    %530 = vmatprep.subr.mxu0 0.0
    %531 = vmatpush1.msra.mxu0 %v100
    %532 = vmatprep.subr.mxu0 0.0
    %533 = vmatpush1.msra.mxu0 %v101
    %534 = vmatprep.subr.mxu0 0.0
    %535 = vmatpush1.msra.mxu0 %v102
    %536 = vmatprep.subr.mxu0 0.0
    %537 = vmatpush1.msra.mxu0 %v103
    %538 = vmatprep.subr.mxu0 0.0
    %539 = vmatpush1.msra.mxu0 %v104
    %540 = vmatprep.subr.mxu0 0.0
    %541 = vmatpush1.msra.mxu0 %v105
    %542 = vmatprep.subr.mxu0 0.0
    %543 = vmatpush1.msra.mxu0 %v106
    %544 = vmatprep.subr.mxu0 0.0
    %545 = vmatpush1.msra.mxu0 %v107
    %546 = vmatprep.subr.mxu0 0.0
    %547 = vmatpush1.msra.mxu0 %v108
    %548 = vmatprep.subr.mxu0 0.0
    %549 = vmatpush1.msra.mxu0 %v109
    %550 = vmatprep.subr.mxu0 0.0
    %551 = vmatpush1.msra.mxu0 %v110
    %552 = vmatprep.subr.mxu0 0.0
    %553 = vmatpush1.msra.mxu0 %v111
    %554 = vmatprep.subr.mxu0 0.0
    %555 = vmatpush1.msra.mxu0 %v112
    %556 = vmatprep.subr.mxu0 0.0
    %557 = vmatpush1.msra.mxu0 %v113
    %558 = vmatprep.subr.mxu0 0.0
    %559 = vmatpush1.msra.mxu0 %v114
    %560 = vmatprep.subr.mxu0 0.0
    %561 = vmatpush1.msra.mxu0 %v115
    %562 = vmatprep.subr.mxu0 0.0
    %563 = vmatpush1.msra.mxu0 %v116
    %564 = vmatprep.subr.mxu0 0.0
    %565 = vmatpush1.msra.mxu0 %v117
    %566 = vmatprep.subr.mxu0 0.0
    %567 = vmatpush1.msra.mxu0 %v118
    %568 = vmatprep.subr.mxu0 0.0
    %569 = vmatpush1.msra.mxu0 %v119
    %570 = vmatprep.subr.mxu0 0.0
    %571 = vmatpush1.msra.mxu0 %v120
    %572 = vmatprep.subr.mxu0 0.0
    %573 = vmatpush1.msra.mxu0 %v121
    %574 = vmatprep.subr.mxu0 0.0
    %575 = vmatpush1.msra.mxu0 %v122
    %576 = vmatprep.subr.mxu0 0.0
    %577 = vmatpush1.msra.mxu0 %v123
    %578 = vmatprep.subr.mxu0 0.0
    %579 = vmatpush1.msra.mxu0 %v124
    %580 = vmatprep.subr.mxu0 0.0
    %581 = vmatpush1.msra.mxu0 %v125
    %582 = vmatprep.subr.mxu0 0.0
    %583 = vmatpush1.msra.mxu0 %v126
    %584 = vmatprep.subr.mxu0 0.0
    %585 = vmatpush1.msra.mxu0 %v127
    %586 = vmatprep.subr.mxu0 0.0
    %587 = vmatpush1.msra.mxu0 %v128
    %588 = vmatprep.mubr.f32.mxu0 %v332
    %589 = vmatmul.mubr.f32.gmra.mrb[0].mxu0 %v324
    %v590 = vpop.f32.mrb[0].mxu0
    %v591 = vadd.f32 %v521, %v590
    %v592 = vpop.f32.mrb[0].mxu0
    %593 = vdwg.mxu0
    %594 = vmatprep.subr.mxu0 0.0
    %595 = vmatpush1.msra.mxu0 %v129
    %596 = vmatprep.subr.mxu0 0.0
    %597 = vmatpush1.msra.mxu0 %v130
    %598 = vmatprep.subr.mxu0 0.0
    %599 = vmatpush1.msra.mxu0 %v131
    %600 = vmatprep.subr.mxu0 0.0
    %601 = vmatpush1.msra.mxu0 %v132
    %602 = vmatprep.subr.mxu0 0.0
    %603 = vmatpush1.msra.mxu0 %v133
    %604 = vmatprep.subr.mxu0 0.0
    %605 = vmatpush1.msra.mxu0 %v134
    %606 = vmatprep.subr.mxu0 0.0
    %607 = vmatpush1.msra.mxu0 %v135
    %608 = vmatprep.subr.mxu0 0.0
    %609 = vmatpush1.msra.mxu0 %v136
    %610 = vmatprep.subr.mxu0 0.0
    %611 = vmatpush1.msra.mxu0 %v137
    %612 = vmatprep.subr.mxu0 0.0
    %613 = vmatpush1.msra.mxu0 %v138
    %614 = vmatprep.subr.mxu0 0.0
    %615 = vmatpush1.msra.mxu0 %v139
    %616 = vmatprep.subr.mxu0 0.0
    %617 = vmatpush1.msra.mxu0 %v140
    %618 = vmatprep.subr.mxu0 0.0
    %619 = vmatpush1.msra.mxu0 %v141
    %620 = vmatprep.subr.mxu0 0.0
    %621 = vmatpush1.msra.mxu0 %v142
    %622 = vmatprep.subr.mxu0 0.0
    %623 = vmatpush1.msra.mxu0 %v143
    %624 = vmatprep.subr.mxu0 0.0
    %625 = vmatpush1.msra.mxu0 %v144
    %626 = vmatprep.subr.mxu0 0.0
    %627 = vmatpush1.msra.mxu0 %v145
    %628 = vmatprep.subr.mxu0 0.0
    %629 = vmatpush1.msra.mxu0 %v146
    %630 = vmatprep.subr.mxu0 0.0
    %631 = vmatpush1.msra.mxu0 %v147
    %632 = vmatprep.subr.mxu0 0.0
    %633 = vmatpush1.msra.mxu0 %v148
    %634 = vmatprep.subr.mxu0 0.0
    %635 = vmatpush1.msra.mxu0 %v149
    %636 = vmatprep.subr.mxu0 0.0
    %637 = vmatpush1.msra.mxu0 %v150
    %638 = vmatprep.subr.mxu0 0.0
    %639 = vmatpush1.msra.mxu0 %v151
    %640 = vmatprep.subr.mxu0 0.0
    %641 = vmatpush1.msra.mxu0 %v152
    %642 = vmatprep.subr.mxu0 0.0
    %643 = vmatpush1.msra.mxu0 %v153
    %644 = vmatprep.subr.mxu0 0.0
    %645 = vmatpush1.msra.mxu0 %v154
    %646 = vmatprep.subr.mxu0 0.0
    %647 = vmatpush1.msra.mxu0 %v155
    %648 = vmatprep.subr.mxu0 0.0
    %649 = vmatpush1.msra.mxu0 %v156
    %650 = vmatprep.subr.mxu0 0.0
    %651 = vmatpush1.msra.mxu0 %v157
    %652 = vmatprep.subr.mxu0 0.0
    %653 = vmatpush1.msra.mxu0 %v158
    %654 = vmatprep.subr.mxu0 0.0
    %655 = vmatpush1.msra.mxu0 %v159
    %656 = vmatprep.subr.mxu0 0.0
    %657 = vmatpush1.msra.mxu0 %v160
    %658 = vmatprep.mubr.f32.mxu0 %v333
    %659 = vmatmul.mubr.f32.gmra.mrb[0].mxu0 %v331
    %v660 = vpop.f32.mrb[0].mxu0
    %v661 = vadd.f32 %v591, %v660
    %v662 = vpop.f32.mrb[0].mxu0
    %663 = vdwg.mxu0
    %664 = vmatprep.subr.mxu0 0.0
    %665 = vmatpush1.msra.mxu0 %v161
    %666 = vmatprep.subr.mxu0 0.0
    %667 = vmatpush1.msra.mxu0 %v162
    %668 = vmatprep.subr.mxu0 0.0
    %669 = vmatpush1.msra.mxu0 %v163
    %670 = vmatprep.subr.mxu0 0.0
    %671 = vmatpush1.msra.mxu0 %v164
    %672 = vmatprep.subr.mxu0 0.0
    %673 = vmatpush1.msra.mxu0 %v165
    %674 = vmatprep.subr.mxu0 0.0
    %675 = vmatpush1.msra.mxu0 %v166
    %676 = vmatprep.subr.mxu0 0.0
    %677 = vmatpush1.msra.mxu0 %v167
    %678 = vmatprep.subr.mxu0 0.0
    %679 = vmatpush1.msra.mxu0 %v168
    %680 = vmatprep.subr.mxu0 0.0
    %681 = vmatpush1.msra.mxu0 %v169
    %682 = vmatprep.subr.mxu0 0.0
    %683 = vmatpush1.msra.mxu0 %v170
    %684 = vmatprep.subr.mxu0 0.0
    %685 = vmatpush1.msra.mxu0 %v171
    %686 = vmatprep.subr.mxu0 0.0
    %687 = vmatpush1.msra.mxu0 %v172
    %688 = vmatprep.subr.mxu0 0.0
    %689 = vmatpush1.msra.mxu0 %v173
    %690 = vmatprep.subr.mxu0 0.0
    %691 = vmatpush1.msra.mxu0 %v174
    %692 = vmatprep.subr.mxu0 0.0
    %693 = vmatpush1.msra.mxu0 %v175
    %694 = vmatprep.subr.mxu0 0.0
    %695 = vmatpush1.msra.mxu0 %v176
    %696 = vmatprep.subr.mxu0 0.0
    %697 = vmatpush1.msra.mxu0 %v177
    %698 = vmatprep.subr.mxu0 0.0
    %699 = vmatpush1.msra.mxu0 %v178
    %700 = vmatprep.subr.mxu0 0.0
    %701 = vmatpush1.msra.mxu0 %v179
    %702 = vmatprep.subr.mxu0 0.0
    %703 = vmatpush1.msra.mxu0 %v180
    %704 = vmatprep.subr.mxu0 0.0
    %705 = vmatpush1.msra.mxu0 %v181
    %706 = vmatprep.subr.mxu0 0.0
    %707 = vmatpush1.msra.mxu0 %v182
    %708 = vmatprep.subr.mxu0 0.0
    %709 = vmatpush1.msra.mxu0 %v183
    %710 = vmatprep.subr.mxu0 0.0
    %711 = vmatpush1.msra.mxu0 %v184
    %712 = vmatprep.subr.mxu0 0.0
    %713 = vmatpush1.msra.mxu0 %v185
    %714 = vmatprep.subr.mxu0 0.0
    %715 = vmatpush1.msra.mxu0 %v186
    %716 = vmatprep.subr.mxu0 0.0
    %717 = vmatpush1.msra.mxu0 %v187
    %718 = vmatprep.subr.mxu0 0.0
    %719 = vmatpush1.msra.mxu0 %v188
    %720 = vmatprep.subr.mxu0 0.0
    %721 = vmatpush1.msra.mxu0 %v189
    %722 = vmatprep.subr.mxu0 0.0
    %723 = vmatpush1.msra.mxu0 %v190
    %724 = vmatprep.subr.mxu0 0.0
    %725 = vmatpush1.msra.mxu0 %v191
    %726 = vmatprep.subr.mxu0 0.0
    %727 = vmatpush1.msra.mxu0 %v192
    %728 = vmatprep.mubr.f32.mxu0 %v349
    %729 = vmatmul.mubr.f32.gmra.mrb[0].mxu0 %v341
    %v730 = vpop.f32.mrb[0].mxu0
    %v731 = vadd.f32 %v661, %v730
    %v732 = vpop.f32.mrb[0].mxu0
    %733 = vdwg.mxu0
    %734 = vmatprep.subr.mxu0 0.0
    %735 = vmatpush1.msra.mxu0 %v193
    %736 = vmatprep.subr.mxu0 0.0
    %737 = vmatpush1.msra.mxu0 %v194
    %738 = vmatprep.subr.mxu0 0.0
    %739 = vmatpush1.msra.mxu0 %v195
    %740 = vmatprep.subr.mxu0 0.0
    %741 = vmatpush1.msra.mxu0 %v196
    %742 = vmatprep.subr.mxu0 0.0
    %743 = vmatpush1.msra.mxu0 %v197
    %744 = vmatprep.subr.mxu0 0.0
    %745 = vmatpush1.msra.mxu0 %v198
    %746 = vmatprep.subr.mxu0 0.0
    %747 = vmatpush1.msra.mxu0 %v199
    %748 = vmatprep.subr.mxu0 0.0
    %749 = vmatpush1.msra.mxu0 %v200
    %750 = vmatprep.subr.mxu0 0.0
    %751 = vmatpush1.msra.mxu0 %v201
    %752 = vmatprep.subr.mxu0 0.0
    %753 = vmatpush1.msra.mxu0 %v202
    %754 = vmatprep.subr.mxu0 0.0
    %755 = vmatpush1.msra.mxu0 %v203
    %756 = vmatprep.subr.mxu0 0.0
    %757 = vmatpush1.msra.mxu0 %v204
    %758 = vmatprep.subr.mxu0 0.0
    %759 = vmatpush1.msra.mxu0 %v205
    %760 = vmatprep.subr.mxu0 0.0
    %761 = vmatpush1.msra.mxu0 %v206
    %762 = vmatprep.subr.mxu0 0.0
    %763 = vmatpush1.msra.mxu0 %v207
    %764 = vmatprep.subr.mxu0 0.0
    %765 = vmatpush1.msra.mxu0 %v208
    %766 = vmatprep.subr.mxu0 0.0
    %767 = vmatpush1.msra.mxu0 %v209
    %768 = vmatprep.subr.mxu0 0.0
    %769 = vmatpush1.msra.mxu0 %v210
    %770 = vmatprep.subr.mxu0 0.0
    %771 = vmatpush1.msra.mxu0 %v211
    %772 = vmatprep.subr.mxu0 0.0
    %773 = vmatpush1.msra.mxu0 %v212
    %774 = vmatprep.subr.mxu0 0.0
    %775 = vmatpush1.msra.mxu0 %v213
    %776 = vmatprep.subr.mxu0 0.0
    %777 = vmatpush1.msra.mxu0 %v214
    %778 = vmatprep.subr.mxu0 0.0
    %779 = vmatpush1.msra.mxu0 %v215
    %780 = vmatprep.subr.mxu0 0.0
    %781 = vmatpush1.msra.mxu0 %v216
    %782 = vmatprep.subr.mxu0 0.0
    %783 = vmatpush1.msra.mxu0 %v217
    %784 = vmatprep.subr.mxu0 0.0
    %785 = vmatpush1.msra.mxu0 %v218
    %786 = vmatprep.subr.mxu0 0.0
    %787 = vmatpush1.msra.mxu0 %v219
    %788 = vmatprep.subr.mxu0 0.0
    %789 = vmatpush1.msra.mxu0 %v220
    %790 = vmatprep.subr.mxu0 0.0
    %791 = vmatpush1.msra.mxu0 %v221
    %792 = vmatprep.subr.mxu0 0.0
    %793 = vmatpush1.msra.mxu0 %v222
    %794 = vmatprep.subr.mxu0 0.0
    %795 = vmatpush1.msra.mxu0 %v223
    %796 = vmatprep.subr.mxu0 0.0
    %797 = vmatpush1.msra.mxu0 %v224
    %798 = vmatprep.mubr.f32.mxu0 %v350
    %799 = vmatmul.mubr.f32.gmra.mrb[0].mxu0 %v348
    %v800 = vpop.f32.mrb[0].mxu0
    %v801 = vadd.f32 %v731, %v800
    %v802 = vpop.f32.mrb[0].mxu0
    %803 = vdwg.mxu0
    %804 = vmatprep.subr.mxu0 0.0
    %805 = vmatpush1.msra.mxu0 %v225
    %806 = vmatprep.subr.mxu0 0.0
    %807 = vmatpush1.msra.mxu0 %v226
    %808 = vmatprep.subr.mxu0 0.0
    %809 = vmatpush1.msra.mxu0 %v227
    %810 = vmatprep.subr.mxu0 0.0
    %811 = vmatpush1.msra.mxu0 %v228
    %812 = vmatprep.subr.mxu0 0.0
    %813 = vmatpush1.msra.mxu0 %v229
    %814 = vmatprep.subr.mxu0 0.0
    %815 = vmatpush1.msra.mxu0 %v230
    %816 = vmatprep.subr.mxu0 0.0
    %817 = vmatpush1.msra.mxu0 %v231
    %818 = vmatprep.subr.mxu0 0.0
    %819 = vmatpush1.msra.mxu0 %v232
    %820 = vmatprep.subr.mxu0 0.0
    %821 = vmatpush1.msra.mxu0 %v233
    %822 = vmatprep.subr.mxu0 0.0
    %823 = vmatpush1.msra.mxu0 %v234
    %824 = vmatprep.subr.mxu0 0.0
    %825 = vmatpush1.msra.mxu0 %v235
    %826 = vmatprep.subr.mxu0 0.0
    %827 = vmatpush1.msra.mxu0 %v236
    %828 = vmatprep.subr.mxu0 0.0
    %829 = vmatpush1.msra.mxu0 %v237
    %830 = vmatprep.subr.mxu0 0.0
    %831 = vmatpush1.msra.mxu0 %v238
    %832 = vmatprep.subr.mxu0 0.0
    %833 = vmatpush1.msra.mxu0 %v239
    %834 = vmatprep.subr.mxu0 0.0
    %835 = vmatpush1.msra.mxu0 %v240
    %836 = vmatprep.subr.mxu0 0.0
    %837 = vmatpush1.msra.mxu0 %v241
    %838 = vmatprep.subr.mxu0 0.0
    %839 = vmatpush1.msra.mxu0 %v242
    %840 = vmatprep.subr.mxu0 0.0
    %841 = vmatpush1.msra.mxu0 %v243
    %842 = vmatprep.subr.mxu0 0.0
    %843 = vmatpush1.msra.mxu0 %v244
    %844 = vmatprep.subr.mxu0 0.0
    %845 = vmatpush1.msra.mxu0 %v245
    %846 = vmatprep.subr.mxu0 0.0
    %847 = vmatpush1.msra.mxu0 %v246
    %848 = vmatprep.subr.mxu0 0.0
    %849 = vmatpush1.msra.mxu0 %v247
    %850 = vmatprep.subr.mxu0 0.0
    %851 = vmatpush1.msra.mxu0 %v248
    %852 = vmatprep.subr.mxu0 0.0
    %853 = vmatpush1.msra.mxu0 %v249
    %854 = vmatprep.subr.mxu0 0.0
    %855 = vmatpush1.msra.mxu0 %v250
    %856 = vmatprep.subr.mxu0 0.0
    %857 = vmatpush1.msra.mxu0 %v251
    %858 = vmatprep.subr.mxu0 0.0
    %859 = vmatpush1.msra.mxu0 %v252
    %860 = vmatprep.subr.mxu0 0.0
    %861 = vmatpush1.msra.mxu0 %v253
    %862 = vmatprep.subr.mxu0 0.0
    %863 = vmatpush1.msra.mxu0 %v254
    %864 = vmatprep.subr.mxu0 0.0
    %865 = vmatpush1.msra.mxu0 %v255
    %866 = vmatprep.subr.mxu0 0.0
    %867 = vmatpush1.msra.mxu0 %v256
    %868 = vmatprep.mubr.f32.mxu0 %v366
    %869 = vmatmul.mubr.f32.gmra.mrb[0].mxu0 %v358
    %v870 = vpop.f32.mrb[0].mxu0
    %v871 = vadd.f32 %v801, %v870
    %v872 = vpop.f32.mrb[0].mxu0
    %873 = vdwg.mxu0
    %874 = vmatprep.subr.mxu0 0.0
    %875 = vmatpush1.msra.mxu0 %v257
    %876 = vmatprep.subr.mxu0 0.0
    %877 = vmatpush1.msra.mxu0 %v258
    %878 = vmatprep.subr.mxu0 0.0
    %879 = vmatpush1.msra.mxu0 %v259
    %880 = vmatprep.subr.mxu0 0.0
    %881 = vmatpush1.msra.mxu0 %v260
    %882 = vmatprep.subr.mxu0 0.0
    %883 = vmatpush1.msra.mxu0 %v261
    %884 = vmatprep.subr.mxu0 0.0
    %885 = vmatpush1.msra.mxu0 %v262
    %886 = vmatprep.subr.mxu0 0.0
    %887 = vmatpush1.msra.mxu0 %v263
    %888 = vmatprep.subr.mxu0 0.0
    %889 = vmatpush1.msra.mxu0 %v264
    %890 = vmatprep.subr.mxu0 0.0
    %891 = vmatpush1.msra.mxu0 %v265
    %892 = vmatprep.subr.mxu0 0.0
    %893 = vmatpush1.msra.mxu0 %v266
    %894 = vmatprep.subr.mxu0 0.0
    %895 = vmatpush1.msra.mxu0 %v267
    %896 = vmatprep.subr.mxu0 0.0
    %897 = vmatpush1.msra.mxu0 %v268
    %898 = vmatprep.subr.mxu0 0.0
    %899 = vmatpush1.msra.mxu0 %v269
    %900 = vmatprep.subr.mxu0 0.0
    %901 = vmatpush1.msra.mxu0 %v270
    %902 = vmatprep.subr.mxu0 0.0
    %903 = vmatpush1.msra.mxu0 %v271
    %904 = vmatprep.subr.mxu0 0.0
    %905 = vmatpush1.msra.mxu0 %v272
    %906 = vmatprep.subr.mxu0 0.0
    %907 = vmatpush1.msra.mxu0 %v273
    %908 = vmatprep.subr.mxu0 0.0
    %909 = vmatpush1.msra.mxu0 %v274
    %910 = vmatprep.subr.mxu0 0.0
    %911 = vmatpush1.msra.mxu0 %v275
    %912 = vmatprep.subr.mxu0 0.0
    %913 = vmatpush1.msra.mxu0 %v276
    %914 = vmatprep.subr.mxu0 0.0
    %915 = vmatpush1.msra.mxu0 %v277
    %916 = vmatprep.subr.mxu0 0.0
    %917 = vmatpush1.msra.mxu0 %v278
    %918 = vmatprep.subr.mxu0 0.0
    %919 = vmatpush1.msra.mxu0 %v279
    %920 = vmatprep.subr.mxu0 0.0
    %921 = vmatpush1.msra.mxu0 %v280
    %922 = vmatprep.subr.mxu0 0.0
    %923 = vmatpush1.msra.mxu0 %v281
    %924 = vmatprep.subr.mxu0 0.0
    %925 = vmatpush1.msra.mxu0 %v282
    %926 = vmatprep.subr.mxu0 0.0
    %927 = vmatpush1.msra.mxu0 %v283
    %928 = vmatprep.subr.mxu0 0.0
    %929 = vmatpush1.msra.mxu0 %v284
    %930 = vmatprep.subr.mxu0 0.0
    %931 = vmatpush1.msra.mxu0 %v285
    %932 = vmatprep.subr.mxu0 0.0
    %933 = vmatpush1.msra.mxu0 %v286
    %934 = vmatprep.subr.mxu0 0.0
    %935 = vmatpush1.msra.mxu0 %v287
    %936 = vmatprep.subr.mxu0 0.0
    %937 = vmatpush1.msra.mxu0 %v288
    %938 = vmatprep.mubr.f32.mxu0 %v367
    %939 = vmatmul.mubr.f32.gmra.mrb[0].mxu0 %v365
    %v940 = vpop.f32.mrb[0].mxu0
    %v941 = vadd.f32 %v871, %v940
    %v942 = vpop.f32.mrb[0].mxu0
    %943 = vdwg.mxu0
    %944 = vst [vmem:[#allocation5] sm:$0x3] %v941
    // Predicated region
    $region18: #{cnn_forward.3} parent=1 // pred_check
      _
    $region19: #{cnn_forward.3} parent=1 // pred_check_branch
      %946 = sbr.rel (0) target = $region21
    $region20: #{cnn_forward.3} parent=1 // pred_region
      %s948 = ssub.s32 32, 32
      %949 = vsyncadd [#allocation4], %s948
      %s951 = sshll.u32 [#allocation5], 4
      %s952 = int_to_ptr.vmem [resolvable:$true] %s951
      %954 = dma.vmem_to_hbm [thread:$0]  %s952, 32, %s3, [#allocation4]
    $region21: #{cnn_forward.3} parent=1 // pred_fallthru
      _
    // Predicated region
    $region22: #{cnn_forward.3} parent=1 // pred_check
      _
    $region23: #{cnn_forward.3} parent=1 // pred_check_branch
      %956 = sbr.rel (0) target = $region25
    $region24: #{cnn_forward.3} parent=1 // pred_region
      %957 = dma.done [#allocation4], 32
    $region25: #{cnn_forward.3} parent=1 // pred_fallthru
      _
    %958 = vsyncpa [#allocation3], 1
    %959 = vsyncpa [#allocation4], 1

// kernel: cnn_forward.2
$region0: #{cnn_forward.2}
  #allocation0 [shape = 'u32[]', space=smem, size = 0x4, offset = 0x4, fixed_abs, tag = 'smem constant byte address 0x4 - core index']
  #allocation1 [shape = 'u32[144,128]{1,0:T(1,128)}', space=vmem, size = 0x12000, scoped, tag = 'internal scratch']
  #allocation2 [shape = 'f32[2,10,10,32]{3,2,1,0:T(8,128)}', space=vmem, size = 0x28000, scoped, tag = 'scratch operand']
  %s0 = inlined_call_operand.vmem [shape: f32[2,8,8,32], index: 0, kind: input, shape index: {}]
  %s1 = inlined_call_operand.hbm [shape: f32[27,32,32], index: 1, kind: input, shape index: {}]
  %s2 = inlined_call_operand.vmem [shape: f32[3,1,32], index: 2, kind: input, shape index: {}]
  %s3 = inlined_call_operand.vmem [shape: f32[2,64,32], index: 3, kind: output, shape index: {}]
  %s4 = sld [smem:[#allocation0]]
  $region26: #{cnn_forward.2} parent=0
    _
  %s6 = ssub.s32 1, %s4
  %s7 = scalar_select 0, %s6, %s4
  $region1: #{cnn_forward.2} parent=0
    #allocation3 [shape = 'u8[442368]{0}', space=vmem, size = 0x6c000, scoped, tag = 'input window, operand 1, single buffered']
    #allocation4 [shape = 's32[1]{0}', space=sflag, size = 0x4, scoped, tag = 'scoped memory for cnn_forward.2']
    %8 = vsyncpa [#allocation4], 0
    // Predicated region
    $region2: #{cnn_forward.2} parent=1 // pred_check
      _
    $region3: #{cnn_forward.2} parent=1 // pred_check_branch
      %10 = sbr.rel (0) target = $region5
    $region4: #{cnn_forward.2} parent=1 // pred_region
      _
    $region5: #{cnn_forward.2} parent=1 // pred_fallthru
      _
    // Predicated region
    $region6: #{cnn_forward.2} parent=1 // pred_check
      _
    $region7: #{cnn_forward.2} parent=1 // pred_check_branch
      %12 = sbr.rel (0) target = $region9
    $region8: #{cnn_forward.2} parent=1 // pred_region
      %s14 = ssub.s32 13824, 13824
      %15 = vsyncadd [#allocation4], %s14
      %s16 = sshll.u32 [#allocation3], 4
      %s17 = int_to_ptr.vmem [resolvable:$true] %s16
      %22 = dma.hbm_to_vmem [thread:$0]  %s1, 13824, %s17, [#allocation4], 128, 128, 8
    $region9: #{cnn_forward.2} parent=1 // pred_fallthru
      _
    // Predicated region
    $region10: #{cnn_forward.2} parent=1 // pred_check
      _
    $region11: #{cnn_forward.2} parent=1 // pred_check_branch
      %24 = sbr.rel (0) target = $region13
    $region12: #{cnn_forward.2} parent=1 // pred_region
      _
    $region13: #{cnn_forward.2} parent=1 // pred_fallthru
      _
    // Predicated region
    $region14: #{cnn_forward.2} parent=1 // pred_check
      _
    $region15: #{cnn_forward.2} parent=1 // pred_check_branch
      %26 = sbr.rel (0) target = $region17
    $region16: #{cnn_forward.2} parent=1 // pred_region
      %27 = dma.done [#allocation4], 13824
    $region17: #{cnn_forward.2} parent=1 // pred_fallthru
      _
    %vm28 = vcmask 261120
    %29 = vst.msk [vmem:[#allocation2] sm:$0xff] %vm28, 0.0
    %vm30 = vcmask 254976
    %31 = vst.msk [vmem:[#allocation2 + $0x8] sm:$0x3] %vm30, 0.0
    %32 = vst.msk [vmem:[#allocation2 + $0x10] sm:$0xff] %vm28, 0.0
    %33 = vst.msk [vmem:[#allocation2 + $0x18] sm:$0x3] %vm30, 0.0
    %34 = vst.msk [vmem:[#allocation2 + $0x20] sm:$0xff] %vm28, 0.0
    %35 = vst.msk [vmem:[#allocation2 + $0x28] sm:$0x3] %vm30, 0.0
    %36 = vst.msk [vmem:[#allocation2 + $0x30] sm:$0xff] %vm28, 0.0
    %37 = vst.msk [vmem:[#allocation2 + $0x38] sm:$0x3] %vm30, 0.0
    %38 = vst.msk [vmem:[#allocation2 + $0x40] sm:$0xff] %vm28, 0.0
    %39 = vst.msk [vmem:[#allocation2 + $0x48] sm:$0x3] %vm30, 0.0
    %40 = vst.msk [vmem:[#allocation2 + $0x50] sm:$0xff] %vm28, 0.0
    %41 = vst.msk [vmem:[#allocation2 + $0x58] sm:$0x3] %vm30, 0.0
    %42 = vst.msk [vmem:[#allocation2 + $0x60] sm:$0xff] %vm28, 0.0
    %43 = vst.msk [vmem:[#allocation2 + $0x68] sm:$0x3] %vm30, 0.0
    %44 = vst.msk [vmem:[#allocation2 + $0x70] sm:$0xff] %vm28, 0.0
    %45 = vst.msk [vmem:[#allocation2 + $0x78] sm:$0x3] %vm30, 0.0
    %46 = vst.msk [vmem:[#allocation2 + $0x80] sm:$0xff] %vm28, 0.0
    %47 = vst.msk [vmem:[#allocation2 + $0x88] sm:$0x3] %vm30, 0.0
    %48 = vst.msk [vmem:[#allocation2 + $0x90] sm:$0xff] %vm28, 0.0
    %49 = vst.msk [vmem:[#allocation2 + $0x98] sm:$0x3] %vm30, 0.0
    %50 = vst.msk [vmem:[#allocation2 + $0xa0] sm:$0xff] %vm28, 0.0
    %51 = vst.msk [vmem:[#allocation2 + $0xa8] sm:$0x3] %vm30, 0.0
    %52 = vst.msk [vmem:[#allocation2 + $0xb0] sm:$0xff] %vm28, 0.0
    %53 = vst.msk [vmem:[#allocation2 + $0xb8] sm:$0x3] %vm30, 0.0
    %54 = vst.msk [vmem:[#allocation2 + $0xc0] sm:$0xff] %vm28, 0.0
    %55 = vst.msk [vmem:[#allocation2 + $0xc8] sm:$0x3] %vm30, 0.0
    %56 = vst.msk [vmem:[#allocation2 + $0xd0] sm:$0xff] %vm28, 0.0
    %57 = vst.msk [vmem:[#allocation2 + $0xd8] sm:$0x3] %vm30, 0.0
    %58 = vst.msk [vmem:[#allocation2 + $0xe0] sm:$0xff] %vm28, 0.0
    %59 = vst.msk [vmem:[#allocation2 + $0xe8] sm:$0x3] %vm30, 0.0
    %60 = vst.msk [vmem:[#allocation2 + $0xf0] sm:$0xff] %vm28, 0.0
    %61 = vst.msk [vmem:[#allocation2 + $0xf8] sm:$0x3] %vm30, 0.0
    %62 = vst.msk [vmem:[#allocation2 + $0x100] sm:$0xff] %vm28, 0.0
    %63 = vst.msk [vmem:[#allocation2 + $0x108] sm:$0x3] %vm30, 0.0
    %64 = vst.msk [vmem:[#allocation2 + $0x110] sm:$0xff] %vm28, 0.0
    %65 = vst.msk [vmem:[#allocation2 + $0x118] sm:$0x3] %vm30, 0.0
    %66 = vst.msk [vmem:[#allocation2 + $0x120] sm:$0xff] %vm28, 0.0
    %67 = vst.msk [vmem:[#allocation2 + $0x128] sm:$0x3] %vm30, 0.0
    %68 = vst.msk [vmem:[#allocation2 + $0x130] sm:$0xff] %vm28, 0.0
    %69 = vst.msk [vmem:[#allocation2 + $0x138] sm:$0x3] %vm30, 0.0
    %v70 = vld [vmem:[%s0] sm:$0xff]
    %v71 = vld [vmem:[%s0 + $0x8] sm:$0xff]
    %v72 = vld [vmem:[%s0 + $0x10] sm:$0xff]
    %v73 = vld [vmem:[%s0 + $0x18] sm:$0xff]
    %v74 = vld [vmem:[%s0 + $0x20] sm:$0xff]
    %v75 = vld [vmem:[%s0 + $0x28] sm:$0xff]
    %v76 = vld [vmem:[%s0 + $0x30] sm:$0xff]
    %v77 = vld [vmem:[%s0 + $0x38] sm:$0xff]
    %v78 = vld [vmem:[%s0 + $0x40] sm:$0xff]
    %v79 = vld [vmem:[%s0 + $0x48] sm:$0xff]
    %v80 = vld [vmem:[%s0 + $0x50] sm:$0xff]
    %v81 = vld [vmem:[%s0 + $0x58] sm:$0xff]
    %v82 = vld [vmem:[%s0 + $0x60] sm:$0xff]
    %v83 = vld [vmem:[%s0 + $0x68] sm:$0xff]
    %v84 = vld [vmem:[%s0 + $0x70] sm:$0xff]
    %v85 = vld [vmem:[%s0 + $0x78] sm:$0xff]
    %s86 = scalar_lea.vmem [#allocation2], 16
    %87 = vst.msk [vmem:[%s86 + $0x1] sm:$0xff] %vm28, %v70
    %88 = vst.msk [vmem:[%s86 + $0x11] sm:$0xff] %vm28, %v71
    %89 = vst.msk [vmem:[%s86 + $0x21] sm:$0xff] %vm28, %v72
    %90 = vst.msk [vmem:[%s86 + $0x31] sm:$0xff] %vm28, %v73
    %91 = vst.msk [vmem:[%s86 + $0x41] sm:$0xff] %vm28, %v74
    %92 = vst.msk [vmem:[%s86 + $0x51] sm:$0xff] %vm28, %v75
    %93 = vst.msk [vmem:[%s86 + $0x61] sm:$0xff] %vm28, %v76
    %94 = vst.msk [vmem:[%s86 + $0x71] sm:$0xff] %vm28, %v77
    %95 = vst.msk [vmem:[%s86 + $0xa1] sm:$0xff] %vm28, %v78
    %96 = vst.msk [vmem:[%s86 + $0xb1] sm:$0xff] %vm28, %v79
    %97 = vst.msk [vmem:[%s86 + $0xc1] sm:$0xff] %vm28, %v80
    %98 = vst.msk [vmem:[%s86 + $0xd1] sm:$0xff] %vm28, %v81
    %99 = vst.msk [vmem:[%s86 + $0xe1] sm:$0xff] %vm28, %v82
    %100 = vst.msk [vmem:[%s86 + $0xf1] sm:$0xff] %vm28, %v83
    %101 = vst.msk [vmem:[%s86 + $0x101] sm:$0xff] %vm28, %v84
    %102 = vst.msk [vmem:[%s86 + $0x111] sm:$0xff] %vm28, %v85
    %v103 = vld [vmem:[#allocation2] sm:$0xff]
    %v104 = vld [vmem:[#allocation2 + $0x10] sm:$0xff]
    %v105 = vld [vmem:[#allocation2 + $0x20] sm:$0xff]
    %v106 = vld [vmem:[#allocation2 + $0x30] sm:$0xff]
    %v107 = vld [vmem:[#allocation2 + $0x40] sm:$0xff]
    %v108 = vld [vmem:[#allocation2 + $0x50] sm:$0xff]
    %v109 = vld [vmem:[#allocation2 + $0x60] sm:$0xff]
    %v110 = vld [vmem:[#allocation2 + $0x70] sm:$0xff]
    %v111 = vld [vmem:[#allocation2 + $0xa0] sm:$0xff]
    %v112 = vld [vmem:[#allocation2 + $0xb0] sm:$0xff]
    %v113 = vld [vmem:[#allocation2 + $0xc0] sm:$0xff]
    %v114 = vld [vmem:[#allocation2 + $0xd0] sm:$0xff]
    %v115 = vld [vmem:[#allocation2 + $0xe0] sm:$0xff]
    %v116 = vld [vmem:[#allocation2 + $0xf0] sm:$0xff]
    %v117 = vld [vmem:[#allocation2 + $0x100] sm:$0xff]
    %v118 = vld [vmem:[#allocation2 + $0x110] sm:$0xff]
    %v119 = vld [vmem:[#allocation3] sm:$0xff]
    %v120 = vld [vmem:[#allocation3 + $0x8] sm:$0xff]
    %v121 = vld [vmem:[#allocation3 + $0x10] sm:$0xff]
    %v122 = vld [vmem:[#allocation3 + $0x18] sm:$0xff]
    %v123 = vld [vmem:[#allocation2 + $0x1] sm:$0xff]
    %v124 = vld [vmem:[#allocation2 + $0x11] sm:$0xff]
    %v125 = vld [vmem:[#allocation2 + $0x21] sm:$0xff]
    %v126 = vld [vmem:[#allocation2 + $0x31] sm:$0xff]
    %v127 = vld [vmem:[#allocation2 + $0x41] sm:$0xff]
    %v128 = vld [vmem:[#allocation2 + $0x51] sm:$0xff]
    %v129 = vld [vmem:[#allocation2 + $0x61] sm:$0xff]
    %v130 = vld [vmem:[#allocation2 + $0x71] sm:$0xff]
    %v131 = vld [vmem:[#allocation2 + $0xa1] sm:$0xff]
    %v132 = vld [vmem:[#allocation2 + $0xb1] sm:$0xff]
    %v133 = vld [vmem:[#allocation2 + $0xc1] sm:$0xff]
    %v134 = vld [vmem:[#allocation2 + $0xd1] sm:$0xff]
    %v135 = vld [vmem:[#allocation2 + $0xe1] sm:$0xff]
    %v136 = vld [vmem:[#allocation2 + $0xf1] sm:$0xff]
    %v137 = vld [vmem:[#allocation2 + $0x101] sm:$0xff]
    %v138 = vld [vmem:[#allocation2 + $0x111] sm:$0xff]
    %s139 = scalar_lea.vmem [#allocation3], 32
    %v140 = vld [vmem:[%s139] sm:$0xff]
    %v141 = vld [vmem:[%s139 + $0x8] sm:$0xff]
    %v142 = vld [vmem:[%s139 + $0x10] sm:$0xff]
    %v143 = vld [vmem:[%s139 + $0x18] sm:$0xff]
    %v145 = vsel %vm28, %v123, 0
    %v148 = vsel %vm28, %v124, 0
    %v151 = vsel %vm28, %v125, 0
    %v154 = vsel %vm28, %v126, 0
    %v157 = vsel %vm28, %v127, 0
    %v160 = vsel %vm28, %v128, 0
    %v163 = vsel %vm28, %v129, 0
    %v166 = vsel %vm28, %v130, 0
    %v169 = vsel %vm28, %v131, 0
    %v172 = vsel %vm28, %v132, 0
    %v175 = vsel %vm28, %v133, 0
    %v178 = vsel %vm28, %v134, 0
    %v181 = vsel %vm28, %v135, 0
    %v184 = vsel %vm28, %v136, 0
    %v187 = vsel %vm28, %v137, 0
    %v190 = vsel %vm28, %v138, 0
    %192 = vmatprep.subr.mxu0 0.0
    %193 = vmatpush1.msra.mxu0 %v140
    %194 = vmatprep.subr.mxu0 0.0
    %195 = vmatpush1.msra.mxu0 %v141
    %196 = vmatprep.subr.mxu0 0.0
    %197 = vmatpush1.msra.mxu0 %v142
    %198 = vmatprep.subr.mxu0 0.0
    %199 = vmatpush1.msra.mxu0 %v143
    %200 = vmatprep.subr.mxu0 0.0
    %201 = vmatpush1.msra.mxu0 0.0
    %202 = vmatprep.subr.mxu0 0.0
    %203 = vmatpush1.msra.mxu0 0.0
    %204 = vmatprep.subr.mxu0 0.0
    %205 = vmatpush1.msra.mxu0 0.0
    %206 = vmatprep.subr.mxu0 0.0
    %207 = vmatpush1.msra.mxu0 0.0
    %208 = vmatprep.subr.mxu0 0.0
    %209 = vmatpush1.msra.mxu0 0.0
    %210 = vmatprep.subr.mxu0 0.0
    %211 = vmatpush1.msra.mxu0 0.0
    %212 = vmatprep.subr.mxu0 0.0
    %213 = vmatpush1.msra.mxu0 0.0
    %214 = vmatprep.subr.mxu0 0.0
    %215 = vmatpush1.msra.mxu0 0.0
    %216 = vmatprep.subr.mxu0 0.0
    %217 = vmatpush1.msra.mxu0 0.0
    %218 = vmatprep.subr.mxu0 0.0
    %219 = vmatpush1.msra.mxu0 0.0
    %220 = vmatprep.subr.mxu0 0.0
    %221 = vmatpush1.msra.mxu0 0.0
    %222 = vmatprep.subr.mxu0 0.0
    %223 = vmatpush1.msra.mxu0 0.0
    %224 = vmatprep.subr.mxu0 0.0
    %225 = vmatpush1.msra.mxu0 0.0
    %226 = vmatprep.subr.mxu0 0.0
    %227 = vmatpush1.msra.mxu0 0.0
    %228 = vmatprep.subr.mxu0 0.0
    %229 = vmatpush1.msra.mxu0 0.0
    %230 = vmatprep.subr.mxu0 0.0
    %231 = vmatpush1.msra.mxu0 0.0
    %232 = vmatprep.subr.mxu0 0.0
    %233 = vmatpush1.msra.mxu0 0.0
    %234 = vmatprep.subr.mxu0 0.0
    %235 = vmatpush1.msra.mxu0 0.0
    %236 = vmatprep.subr.mxu0 0.0
    %237 = vmatpush1.msra.mxu0 0.0
    %238 = vmatprep.subr.mxu0 0.0
    %239 = vmatpush1.msra.mxu0 0.0
    %240 = vmatprep.subr.mxu0 0.0
    %241 = vmatpush1.msra.mxu0 0.0
    %242 = vmatprep.subr.mxu0 0.0
    %243 = vmatpush1.msra.mxu0 0.0
    %244 = vmatprep.subr.mxu0 0.0
    %245 = vmatpush1.msra.mxu0 0.0
    %246 = vmatprep.subr.mxu0 0.0
    %247 = vmatpush1.msra.mxu0 0.0
    %248 = vmatprep.subr.mxu0 0.0
    %249 = vmatpush1.msra.mxu0 0.0
    %250 = vmatprep.subr.mxu0 0.0
    %251 = vmatpush1.msra.mxu0 0.0
    %252 = vmatprep.subr.mxu0 0.0
    %253 = vmatpush1.msra.mxu0 0.0
    %254 = vmatprep.subr.mxu0 0.0
    %255 = vmatpush1.msra.mxu0 0.0
    %256 = vmatprep.mubr.f32.mxu0 0.0
    %257 = vmatmul.mubr.f32.gmra.mrb[0].mxu0 %v145
    %v258 = vpop.f32.mrb[0].mxu0
    %v259 = vadd.f32 0.0, %v258
    %v260 = vpop.f32.mrb[0].mxu0
    %261 = vmatprep.mubr.f32.mxu0 0.0
    %262 = vmatmul.mubr.f32.gmra.mrb[0].mxu0 %v148
    %v263 = vpop.f32.mrb[0].mxu0
    %v264 = vadd.f32 0.0, %v263
    %v265 = vpop.f32.mrb[0].mxu0
    %266 = vmatprep.mubr.f32.mxu0 0.0
    %267 = vmatmul.mubr.f32.gmra.mrb[0].mxu0 %v151
    %v268 = vpop.f32.mrb[0].mxu0
    %v269 = vadd.f32 0.0, %v268
    %v270 = vpop.f32.mrb[0].mxu0
    %271 = vmatprep.mubr.f32.mxu0 0.0
    %272 = vmatmul.mubr.f32.gmra.mrb[0].mxu0 %v154
    %v273 = vpop.f32.mrb[0].mxu0
    %v274 = vadd.f32 0.0, %v273
    %v275 = vpop.f32.mrb[0].mxu0
    %276 = vmatprep.mubr.f32.mxu0 0.0
    %277 = vmatmul.mubr.f32.gmra.mrb[0].mxu0 %v157
    %v278 = vpop.f32.mrb[0].mxu0
    %v279 = vadd.f32 0.0, %v278
    %v280 = vpop.f32.mrb[0].mxu0
    %281 = vmatprep.mubr.f32.mxu0 0.0
    %282 = vmatmul.mubr.f32.gmra.mrb[0].mxu0 %v160
    %v283 = vpop.f32.mrb[0].mxu0
    %v284 = vadd.f32 0.0, %v283
    %v285 = vpop.f32.mrb[0].mxu0
    %286 = vmatprep.mubr.f32.mxu0 0.0
    %287 = vmatmul.mubr.f32.gmra.mrb[0].mxu0 %v163
    %v288 = vpop.f32.mrb[0].mxu0
    %v289 = vadd.f32 0.0, %v288
    %v290 = vpop.f32.mrb[0].mxu0
    %291 = vmatprep.mubr.f32.mxu0 0.0
    %292 = vmatmul.mubr.f32.gmra.mrb[0].mxu0 %v166
    %v293 = vpop.f32.mrb[0].mxu0
    %v294 = vadd.f32 0.0, %v293
    %v295 = vpop.f32.mrb[0].mxu0
    %296 = vmatprep.mubr.f32.mxu0 0.0
    %297 = vmatmul.mubr.f32.gmra.mrb[0].mxu0 %v169
    %v298 = vpop.f32.mrb[0].mxu0
    %v299 = vadd.f32 0.0, %v298
    %v300 = vpop.f32.mrb[0].mxu0
    %301 = vmatprep.mubr.f32.mxu0 0.0
    %302 = vmatmul.mubr.f32.gmra.mrb[0].mxu0 %v172
    %v303 = vpop.f32.mrb[0].mxu0
    %v304 = vadd.f32 0.0, %v303
    %v305 = vpop.f32.mrb[0].mxu0
    %306 = vmatprep.mubr.f32.mxu0 0.0
    %307 = vmatmul.mubr.f32.gmra.mrb[0].mxu0 %v175
    %v308 = vpop.f32.mrb[0].mxu0
    %v309 = vadd.f32 0.0, %v308
    %v310 = vpop.f32.mrb[0].mxu0
    %311 = vmatprep.mubr.f32.mxu0 0.0
    %312 = vmatmul.mubr.f32.gmra.mrb[0].mxu0 %v178
    %v313 = vpop.f32.mrb[0].mxu0
    %v314 = vadd.f32 0.0, %v313
    %v315 = vpop.f32.mrb[0].mxu0
    %316 = vmatprep.mubr.f32.mxu0 0.0
    %317 = vmatmul.mubr.f32.gmra.mrb[0].mxu0 %v181
    %v318 = vpop.f32.mrb[0].mxu0
    %v319 = vadd.f32 0.0, %v318
    %v320 = vpop.f32.mrb[0].mxu0
    %321 = vmatprep.mubr.f32.mxu0 0.0
    %322 = vmatmul.mubr.f32.gmra.mrb[0].mxu0 %v184
    %v323 = vpop.f32.mrb[0].mxu0
    %v324 = vadd.f32 0.0, %v323
    %v325 = vpop.f32.mrb[0].mxu0
    %326 = vmatprep.mubr.f32.mxu0 0.0
    %327 = vmatmul.mubr.f32.gmra.mrb[0].mxu0 %v187
    %v328 = vpop.f32.mrb[0].mxu0
    %v329 = vadd.f32 0.0, %v328
    %v330 = vpop.f32.mrb[0].mxu0
    %331 = vmatprep.mubr.f32.mxu0 0.0
    %332 = vmatmul.mubr.f32.gmra.mrb[0].mxu0 %v190
    %v333 = vpop.f32.mrb[0].mxu0
    %v334 = vadd.f32 0.0, %v333
    %v335 = vpop.f32.mrb[0].mxu0
    %336 = vdwg.mxu0
    %v338 = vsel %vm28, %v103, 0
    %v341 = vsel %vm28, %v104, 0
    %v344 = vsel %vm28, %v105, 0
    %v347 = vsel %vm28, %v106, 0
    %v350 = vsel %vm28, %v107, 0
    %v353 = vsel %vm28, %v108, 0
    %v356 = vsel %vm28, %v109, 0
    %v359 = vsel %vm28, %v110, 0
    %v362 = vsel %vm28, %v111, 0
    %v365 = vsel %vm28, %v112, 0
    %v368 = vsel %vm28, %v113, 0
    %v371 = vsel %vm28, %v114, 0
    %v374 = vsel %vm28, %v115, 0
    %v377 = vsel %vm28, %v116, 0
    %v380 = vsel %vm28, %v117, 0
    %v383 = vsel %vm28, %v118, 0
    %385 = vmatprep.subr.mxu0 0.0
    %386 = vmatpush1.msra.mxu0 %v119
    %387 = vmatprep.subr.mxu0 0.0
    %388 = vmatpush1.msra.mxu0 %v120
    %389 = vmatprep.subr.mxu0 0.0
    %390 = vmatpush1.msra.mxu0 %v121
    %391 = vmatprep.subr.mxu0 0.0
    %392 = vmatpush1.msra.mxu0 %v122
    %393 = vmatprep.subr.mxu0 0.0
    %394 = vmatpush1.msra.mxu0 0.0
    %395 = vmatprep.subr.mxu0 0.0
    %396 = vmatpush1.msra.mxu0 0.0
    %397 = vmatprep.subr.mxu0 0.0
    %398 = vmatpush1.msra.mxu0 0.0
    %399 = vmatprep.subr.mxu0 0.0
    %400 = vmatpush1.msra.mxu0 0.0
    %401 = vmatprep.subr.mxu0 0.0
    %402 = vmatpush1.msra.mxu0 0.0
    %403 = vmatprep.subr.mxu0 0.0
    %404 = vmatpush1.msra.mxu0 0.0
    %405 = vmatprep.subr.mxu0 0.0
    %406 = vmatpush1.msra.mxu0 0.0
    %407 = vmatprep.subr.mxu0 0.0
    %408 = vmatpush1.msra.mxu0 0.0
    %409 = vmatprep.subr.mxu0 0.0
    %410 = vmatpush1.msra.mxu0 0.0
    %411 = vmatprep.subr.mxu0 0.0
    %412 = vmatpush1.msra.mxu0 0.0
    %413 = vmatprep.subr.mxu0 0.0
    %414 = vmatpush1.msra.mxu0 0.0
    %415 = vmatprep.subr.mxu0 0.0
    %416 = vmatpush1.msra.mxu0 0.0
    %417 = vmatprep.subr.mxu0 0.0
    %418 = vmatpush1.msra.mxu0 0.0
    %419 = vmatprep.subr.mxu0 0.0
    %420 = vmatpush1.msra.mxu0 0.0
    %421 = vmatprep.subr.mxu0 0.0
    %422 = vmatpush1.msra.mxu0 0.0
    %423 = vmatprep.subr.mxu0 0.0
    %424 = vmatpush1.msra.mxu0 0.0
    %425 = vmatprep.subr.mxu0 0.0
    %426 = vmatpush1.msra.mxu0 0.0
    %427 = vmatprep.subr.mxu0 0.0
    %428 = vmatpush1.msra.mxu0 0.0
    %429 = vmatprep.subr.mxu0 0.0
    %430 = vmatpush1.msra.mxu0 0.0
    %431 = vmatprep.subr.mxu0 0.0
    %432 = vmatpush1.msra.mxu0 0.0
    %433 = vmatprep.subr.mxu0 0.0
    %434 = vmatpush1.msra.mxu0 0.0
    %435 = vmatprep.subr.mxu0 0.0
    %436 = vmatpush1.msra.mxu0 0.0
    %437 = vmatprep.subr.mxu0 0.0
    %438 = vmatpush1.msra.mxu0 0.0
    %439 = vmatprep.subr.mxu0 0.0
    %440 = vmatpush1.msra.mxu0 0.0
    %441 = vmatprep.subr.mxu0 0.0
    %442 = vmatpush1.msra.mxu0 0.0
    %443 = vmatprep.subr.mxu0 0.0
    %444 = vmatpush1.msra.mxu0 0.0
    %445 = vmatprep.subr.mxu0 0.0
    %446 = vmatpush1.msra.mxu0 0.0
    %447 = vmatprep.subr.mxu0 0.0
    %448 = vmatpush1.msra.mxu0 0.0
    %449 = vmatprep.mubr.f32.mxu0 0.0
    %450 = vmatmul.mubr.f32.gmra.mrb[0].mxu0 %v338
    %v451 = vpop.f32.mrb[0].mxu0
    %v452 = vadd.f32 %v259, %v451
    %v453 = vpop.f32.mrb[0].mxu0
    %454 = vmatprep.mubr.f32.mxu0 0.0
    %455 = vmatmul.mubr.f32.gmra.mrb[0].mxu0 %v341
    %v456 = vpop.f32.mrb[0].mxu0
    %v457 = vadd.f32 %v264, %v456
    %v458 = vpop.f32.mrb[0].mxu0
    %459 = vmatprep.mubr.f32.mxu0 0.0
    %460 = vmatmul.mubr.f32.gmra.mrb[0].mxu0 %v344
    %v461 = vpop.f32.mrb[0].mxu0
    %v462 = vadd.f32 %v269, %v461
    %v463 = vpop.f32.mrb[0].mxu0
    %464 = vmatprep.mubr.f32.mxu0 0.0
    %465 = vmatmul.mubr.f32.gmra.mrb[0].mxu0 %v347
    %v466 = vpop.f32.mrb[0].mxu0
    %v467 = vadd.f32 %v274, %v466
    %v468 = vpop.f32.mrb[0].mxu0
    %469 = vmatprep.mubr.f32.mxu0 0.0
    %470 = vmatmul.mubr.f32.gmra.mrb[0].mxu0 %v350
    %v471 = vpop.f32.mrb[0].mxu0
    %v472 = vadd.f32 %v279, %v471
    %v473 = vpop.f32.mrb[0].mxu0
    %474 = vmatprep.mubr.f32.mxu0 0.0
    %475 = vmatmul.mubr.f32.gmra.mrb[0].mxu0 %v353
    %v476 = vpop.f32.mrb[0].mxu0
    %v477 = vadd.f32 %v284, %v476
    %v478 = vpop.f32.mrb[0].mxu0
    %479 = vmatprep.mubr.f32.mxu0 0.0
    %480 = vmatmul.mubr.f32.gmra.mrb[0].mxu0 %v356
    %v481 = vpop.f32.mrb[0].mxu0
    %v482 = vadd.f32 %v289, %v481
    %v483 = vpop.f32.mrb[0].mxu0
    %484 = vmatprep.mubr.f32.mxu0 0.0
    %485 = vmatmul.mubr.f32.gmra.mrb[0].mxu0 %v359
    %v486 = vpop.f32.mrb[0].mxu0
    %v487 = vadd.f32 %v294, %v486
    %v488 = vpop.f32.mrb[0].mxu0
    %489 = vmatprep.mubr.f32.mxu0 0.0
    %490 = vmatmul.mubr.f32.gmra.mrb[0].mxu0 %v362
    %v491 = vpop.f32.mrb[0].mxu0
    %v492 = vadd.f32 %v299, %v491
    %v493 = vpop.f32.mrb[0].mxu0
    %494 = vmatprep.mubr.f32.mxu0 0.0
    %495 = vmatmul.mubr.f32.gmra.mrb[0].mxu0 %v365
    %v496 = vpop.f32.mrb[0].mxu0
    %v497 = vadd.f32 %v304, %v496
    %v498 = vpop.f32.mrb[0].mxu0
    %499 = vmatprep.mubr.f32.mxu0 0.0
    %500 = vmatmul.mubr.f32.gmra.mrb[0].mxu0 %v368
    %v501 = vpop.f32.mrb[0].mxu0
    %v502 = vadd.f32 %v309, %v501
    %v503 = vpop.f32.mrb[0].mxu0
    %504 = vmatprep.mubr.f32.mxu0 0.0
    %505 = vmatmul.mubr.f32.gmra.mrb[0].mxu0 %v371
    %v506 = vpop.f32.mrb[0].mxu0
    %v507 = vadd.f32 %v314, %v506
    %v508 = vpop.f32.mrb[0].mxu0
    %509 = vmatprep.mubr.f32.mxu0 0.0
    %510 = vmatmul.mubr.f32.gmra.mrb[0].mxu0 %v374
    %v511 = vpop.f32.mrb[0].mxu0
    %v512 = vadd.f32 %v319, %v511
    %v513 = vpop.f32.mrb[0].mxu0
    %514 = vmatprep.mubr.f32.mxu0 0.0
    %515 = vmatmul.mubr.f32.gmra.mrb[0].mxu0 %v377
    %v516 = vpop.f32.mrb[0].mxu0
    %v517 = vadd.f32 %v324, %v516
    %v518 = vpop.f32.mrb[0].mxu0
    %519 = vmatprep.mubr.f32.mxu0 0.0
    %520 = vmatmul.mubr.f32.gmra.mrb[0].mxu0 %v380
    %v521 = vpop.f32.mrb[0].mxu0
    %v522 = vadd.f32 %v329, %v521
    %v523 = vpop.f32.mrb[0].mxu0
    %524 = vmatprep.mubr.f32.mxu0 0.0
    %525 = vmatmul.mubr.f32.gmra.mrb[0].mxu0 %v383
    %v526 = vpop.f32.mrb[0].mxu0
    %v527 = vadd.f32 %v334, %v526
    %v528 = vpop.f32.mrb[0].mxu0
    %529 = vdwg.mxu0
    %v530 = vld [vmem:[#allocation2 + $0x2] sm:$0xff]
    %v531 = vld [vmem:[#allocation2 + $0x12] sm:$0xff]
    %v532 = vld [vmem:[#allocation2 + $0x22] sm:$0xff]
    %v533 = vld [vmem:[#allocation2 + $0x32] sm:$0xff]
    %v534 = vld [vmem:[#allocation2 + $0x42] sm:$0xff]
    %v535 = vld [vmem:[#allocation2 + $0x52] sm:$0xff]
    %v536 = vld [vmem:[#allocation2 + $0x62] sm:$0xff]
    %v537 = vld [vmem:[#allocation2 + $0x72] sm:$0xff]
    %v538 = vld [vmem:[#allocation2 + $0xa2] sm:$0xff]
    %v539 = vld [vmem:[#allocation2 + $0xb2] sm:$0xff]
    %v540 = vld [vmem:[#allocation2 + $0xc2] sm:$0xff]
    %v541 = vld [vmem:[#allocation2 + $0xd2] sm:$0xff]
    %v542 = vld [vmem:[#allocation2 + $0xe2] sm:$0xff]
    %v543 = vld [vmem:[#allocation2 + $0xf2] sm:$0xff]
    %v544 = vld [vmem:[#allocation2 + $0x102] sm:$0xff]
    %v545 = vld [vmem:[#allocation2 + $0x112] sm:$0xff]
    %s546 = scalar_lea.vmem [#allocation3], 64
    %v547 = vld [vmem:[%s546] sm:$0xff]
    %v548 = vld [vmem:[%s546 + $0x8] sm:$0xff]
    %v549 = vld [vmem:[%s546 + $0x10] sm:$0xff]
    %v550 = vld [vmem:[%s546 + $0x18] sm:$0xff]
    %v552 = vsel %vm28, %v530, 0
    %v555 = vsel %vm28, %v531, 0
    %v558 = vsel %vm28, %v532, 0
    %v561 = vsel %vm28, %v533, 0
    %v564 = vsel %vm28, %v534, 0
    %v567 = vsel %vm28, %v535, 0
    %v570 = vsel %vm28, %v536, 0
    %v573 = vsel %vm28, %v537, 0
    %v576 = vsel %vm28, %v538, 0
    %v579 = vsel %vm28, %v539, 0
    %v582 = vsel %vm28, %v540, 0
    %v585 = vsel %vm28, %v541, 0
    %v588 = vsel %vm28, %v542, 0
    %v591 = vsel %vm28, %v543, 0
    %v594 = vsel %vm28, %v544, 0
    %v597 = vsel %vm28, %v545, 0
    %599 = vmatprep.subr.mxu0 0.0
    %600 = vmatpush1.msra.mxu0 %v547
    %601 = vmatprep.subr.mxu0 0.0
    %602 = vmatpush1.msra.mxu0 %v548
    %603 = vmatprep.subr.mxu0 0.0
    %604 = vmatpush1.msra.mxu0 %v549
    %605 = vmatprep.subr.mxu0 0.0
    %606 = vmatpush1.msra.mxu0 %v550
    %607 = vmatprep.subr.mxu0 0.0
    %608 = vmatpush1.msra.mxu0 0.0
    %609 = vmatprep.subr.mxu0 0.0
    %610 = vmatpush1.msra.mxu0 0.0
    %611 = vmatprep.subr.mxu0 0.0
    %612 = vmatpush1.msra.mxu0 0.0
    %613 = vmatprep.subr.mxu0 0.0
    %614 = vmatpush1.msra.mxu0 0.0
    %615 = vmatprep.subr.mxu0 0.0
    %616 = vmatpush1.msra.mxu0 0.0
    %617 = vmatprep.subr.mxu0 0.0
    %618 = vmatpush1.msra.mxu0 0.0
    %619 = vmatprep.subr.mxu0 0.0
    %620 = vmatpush1.msra.mxu0 0.0
    %621 = vmatprep.subr.mxu0 0.0
    %622 = vmatpush1.msra.mxu0 0.0
    %623 = vmatprep.subr.mxu0 0.0
    %624 = vmatpush1.msra.mxu0 0.0
    %625 = vmatprep.subr.mxu0 0.0
    %626 = vmatpush1.msra.mxu0 0.0
    %627 = vmatprep.subr.mxu0 0.0
    %628 = vmatpush1.msra.mxu0 0.0
    %629 = vmatprep.subr.mxu0 0.0
    %630 = vmatpush1.msra.mxu0 0.0
    %631 = vmatprep.subr.mxu0 0.0
    %632 = vmatpush1.msra.mxu0 0.0
    %633 = vmatprep.subr.mxu0 0.0
    %634 = vmatpush1.msra.mxu0 0.0
    %635 = vmatprep.subr.mxu0 0.0
    %636 = vmatpush1.msra.mxu0 0.0
    %637 = vmatprep.subr.mxu0 0.0
    %638 = vmatpush1.msra.mxu0 0.0
    %639 = vmatprep.subr.mxu0 0.0
    %640 = vmatpush1.msra.mxu0 0.0
    %641 = vmatprep.subr.mxu0 0.0
    %642 = vmatpush1.msra.mxu0 0.0
    %643 = vmatprep.subr.mxu0 0.0
    %644 = vmatpush1.msra.mxu0 0.0
    %645 = vmatprep.subr.mxu0 0.0
    %646 = vmatpush1.msra.mxu0 0.0
    %647 = vmatprep.subr.mxu0 0.0
    %648 = vmatpush1.msra.mxu0 0.0
    %649 = vmatprep.subr.mxu0 0.0
    %650 = vmatpush1.msra.mxu0 0.0
    %651 = vmatprep.subr.mxu0 0.0
    %652 = vmatpush1.msra.mxu0 0.0
    %653 = vmatprep.subr.mxu0 0.0
    %654 = vmatpush1.msra.mxu0 0.0
    %655 = vmatprep.subr.mxu0 0.0
    %656 = vmatpush1.msra.mxu0 0.0
    %657 = vmatprep.subr.mxu0 0.0
    %658 = vmatpush1.msra.mxu0 0.0
    %659 = vmatprep.subr.mxu0 0.0
    %660 = vmatpush1.msra.mxu0 0.0
    %661 = vmatprep.subr.mxu0 0.0
    %662 = vmatpush1.msra.mxu0 0.0
    %663 = vmatprep.mubr.f32.mxu0 0.0
    %664 = vmatmul.mubr.f32.gmra.mrb[0].mxu0 %v552
    %v665 = vpop.f32.mrb[0].mxu0
    %v666 = vadd.f32 0.0, %v665
    %v667 = vpop.f32.mrb[0].mxu0
    %668 = vmatprep.mubr.f32.mxu0 0.0
    %669 = vmatmul.mubr.f32.gmra.mrb[0].mxu0 %v555
    %v670 = vpop.f32.mrb[0].mxu0
    %v671 = vadd.f32 0.0, %v670
    %v672 = vpop.f32.mrb[0].mxu0
    %673 = vmatprep.mubr.f32.mxu0 0.0
    %674 = vmatmul.mubr.f32.gmra.mrb[0].mxu0 %v558
    %v675 = vpop.f32.mrb[0].mxu0
    %v676 = vadd.f32 0.0, %v675
    %v677 = vpop.f32.mrb[0].mxu0
    %678 = vmatprep.mubr.f32.mxu0 0.0
    %679 = vmatmul.mubr.f32.gmra.mrb[0].mxu0 %v561
    %v680 = vpop.f32.mrb[0].mxu0
    %v681 = vadd.f32 0.0, %v680
    %v682 = vpop.f32.mrb[0].mxu0
    %683 = vmatprep.mubr.f32.mxu0 0.0
    %684 = vmatmul.mubr.f32.gmra.mrb[0].mxu0 %v564
    %v685 = vpop.f32.mrb[0].mxu0
    %v686 = vadd.f32 0.0, %v685
    %v687 = vpop.f32.mrb[0].mxu0
    %688 = vmatprep.mubr.f32.mxu0 0.0
    %689 = vmatmul.mubr.f32.gmra.mrb[0].mxu0 %v567
    %v690 = vpop.f32.mrb[0].mxu0
    %v691 = vadd.f32 0.0, %v690
    %v692 = vpop.f32.mrb[0].mxu0
    %693 = vmatprep.mubr.f32.mxu0 0.0
    %694 = vmatmul.mubr.f32.gmra.mrb[0].mxu0 %v570
    %v695 = vpop.f32.mrb[0].mxu0
    %v696 = vadd.f32 0.0, %v695
    %v697 = vpop.f32.mrb[0].mxu0
    %698 = vmatprep.mubr.f32.mxu0 0.0
    %699 = vmatmul.mubr.f32.gmra.mrb[0].mxu0 %v573
    %v700 = vpop.f32.mrb[0].mxu0
    %v701 = vadd.f32 0.0, %v700
    %v702 = vpop.f32.mrb[0].mxu0
    %703 = vmatprep.mubr.f32.mxu0 0.0
    %704 = vmatmul.mubr.f32.gmra.mrb[0].mxu0 %v576
    %v705 = vpop.f32.mrb[0].mxu0
    %v706 = vadd.f32 0.0, %v705
    %v707 = vpop.f32.mrb[0].mxu0
    %708 = vmatprep.mubr.f32.mxu0 0.0
    %709 = vmatmul.mubr.f32.gmra.mrb[0].mxu0 %v579
    %v710 = vpop.f32.mrb[0].mxu0
    %v711 = vadd.f32 0.0, %v710
    %v712 = vpop.f32.mrb[0].mxu0
    %713 = vmatprep.mubr.f32.mxu0 0.0
    %714 = vmatmul.mubr.f32.gmra.mrb[0].mxu0 %v582
    %v715 = vpop.f32.mrb[0].mxu0
    %v716 = vadd.f32 0.0, %v715
    %v717 = vpop.f32.mrb[0].mxu0
    %718 = vmatprep.mubr.f32.mxu0 0.0
    %719 = vmatmul.mubr.f32.gmra.mrb[0].mxu0 %v585
    %v720 = vpop.f32.mrb[0].mxu0
    %v721 = vadd.f32 0.0, %v720
    %v722 = vpop.f32.mrb[0].mxu0
    %723 = vmatprep.mubr.f32.mxu0 0.0
    %724 = vmatmul.mubr.f32.gmra.mrb[0].mxu0 %v588
    %v725 = vpop.f32.mrb[0].mxu0
    %v726 = vadd.f32 0.0, %v725
    %v727 = vpop.f32.mrb[0].mxu0
    %728 = vmatprep.mubr.f32.mxu0 0.0
    %729 = vmatmul.mubr.f32.gmra.mrb[0].mxu0 %v591
    %v730 = vpop.f32.mrb[0].mxu0
    %v731 = vadd.f32 0.0, %v730
    %v732 = vpop.f32.mrb[0].mxu0
    %733 = vmatprep.mubr.f32.mxu0 0.0
    %734 = vmatmul.mubr.f32.gmra.mrb[0].mxu0 %v594
    %v735 = vpop.f32.mrb[0].mxu0
    %v736 = vadd.f32 0.0, %v735
    %v737 = vpop.f32.mrb[0].mxu0
    %738 = vmatprep.mubr.f32.mxu0 0.0
    %739 = vmatmul.mubr.f32.gmra.mrb[0].mxu0 %v597
    %v740 = vpop.f32.mrb[0].mxu0
    %v741 = vadd.f32 0.0, %v740
    %v742 = vpop.f32.mrb[0].mxu0
    %743 = vdwg.mxu0
    %v744 = vadd.f32 %v452, %v666
    %v745 = vadd.f32 %v457, %v671
    %v746 = vadd.f32 %v462, %v676
    %v747 = vadd.f32 %v467, %v681
    %v748 = vadd.f32 %v472, %v686
    %v749 = vadd.f32 %v477, %v691
    %v750 = vadd.f32 %v482, %v696
    %v751 = vadd.f32 %v487, %v701
    %v752 = vadd.f32 %v492, %v706
    %v753 = vadd.f32 %v497, %v711
    %v754 = vadd.f32 %v502, %v716
    %v755 = vadd.f32 %v507, %v721
    %v756 = vadd.f32 %v512, %v726
    %v757 = vadd.f32 %v517, %v731
    %v758 = vadd.f32 %v522, %v736
    %v759 = vadd.f32 %v527, %v741
    %v760 = vld [vmem:[%s86] sm:$0xff]
    %v761 = vld [vmem:[%s86 + $0x10] sm:$0xff]
    %v762 = vld [vmem:[%s86 + $0x20] sm:$0xff]
    %v763 = vld [vmem:[%s86 + $0x30] sm:$0xff]
    %v764 = vld [vmem:[%s86 + $0x40] sm:$0xff]
    %v765 = vld [vmem:[%s86 + $0x50] sm:$0xff]
    %v766 = vld [vmem:[%s86 + $0x60] sm:$0xff]
    %v767 = vld [vmem:[%s86 + $0x70] sm:$0xff]
    %v768 = vld [vmem:[%s86 + $0xa0] sm:$0xff]
    %v769 = vld [vmem:[%s86 + $0xb0] sm:$0xff]
    %v770 = vld [vmem:[%s86 + $0xc0] sm:$0xff]
    %v771 = vld [vmem:[%s86 + $0xd0] sm:$0xff]
    %v772 = vld [vmem:[%s86 + $0xe0] sm:$0xff]
    %v773 = vld [vmem:[%s86 + $0xf0] sm:$0xff]
    %v774 = vld [vmem:[%s86 + $0x100] sm:$0xff]
    %v775 = vld [vmem:[%s86 + $0x110] sm:$0xff]
    %s776 = scalar_lea.vmem [#allocation3], 96
    %v777 = vld [vmem:[%s776] sm:$0xff]
    %v778 = vld [vmem:[%s776 + $0x8] sm:$0xff]
    %v779 = vld [vmem:[%s776 + $0x10] sm:$0xff]
    %v780 = vld [vmem:[%s776 + $0x18] sm:$0xff]
    %v782 = vsel %vm28, %v760, 0
    %v785 = vsel %vm28, %v761, 0
    %v788 = vsel %vm28, %v762, 0
    %v791 = vsel %vm28, %v763, 0
    %v794 = vsel %vm28, %v764, 0
    %v797 = vsel %vm28, %v765, 0
    %v800 = vsel %vm28, %v766, 0
    %v803 = vsel %vm28, %v767, 0
    %v806 = vsel %vm28, %v768, 0
    %v809 = vsel %vm28, %v769, 0
    %v812 = vsel %vm28, %v770, 0
    %v815 = vsel %vm28, %v771, 0
    %v818 = vsel %vm28, %v772, 0
    %v821 = vsel %vm28, %v773, 0
    %v824 = vsel %vm28, %v774, 0
    %v827 = vsel %vm28, %v775, 0
    %829 = vmatprep.subr.mxu0 0.0
    %830 = vmatpush1.msra.mxu0 %v777
    %831 = vmatprep.subr.mxu0 0.0
    %832 = vmatpush1.msra.mxu0 %v778
    %833 = vmatprep.subr.mxu0 0.0
    %834 = vmatpush1.msra.mxu0 %v779
    %835 = vmatprep.subr.mxu0 0.0
    %836 = vmatpush1.msra.mxu0 %v780
    %837 = vmatprep.subr.mxu0 0.0
    %838 = vmatpush1.msra.mxu0 0.0
    %839 = vmatprep.subr.mxu0 0.0
    %840 = vmatpush1.msra.mxu0 0.0
    %841 = vmatprep.subr.mxu0 0.0
    %842 = vmatpush1.msra.mxu0 0.0
    %843 = vmatprep.subr.mxu0 0.0
    %844 = vmatpush1.msra.mxu0 0.0
    %845 = vmatprep.subr.mxu0 0.0
    %846 = vmatpush1.msra.mxu0 0.0
    %847 = vmatprep.subr.mxu0 0.0
    %848 = vmatpush1.msra.mxu0 0.0
    %849 = vmatprep.subr.mxu0 0.0
    %850 = vmatpush1.msra.mxu0 0.0
    %851 = vmatprep.subr.mxu0 0.0
    %852 = vmatpush1.msra.mxu0 0.0
    %853 = vmatprep.subr.mxu0 0.0
    %854 = vmatpush1.msra.mxu0 0.0
    %855 = vmatprep.subr.mxu0 0.0
    %856 = vmatpush1.msra.mxu0 0.0
    %857 = vmatprep.subr.mxu0 0.0
    %858 = vmatpush1.msra.mxu0 0.0
    %859 = vmatprep.subr.mxu0 0.0
    %860 = vmatpush1.msra.mxu0 0.0
    %861 = vmatprep.subr.mxu0 0.0
    %862 = vmatpush1.msra.mxu0 0.0
    %863 = vmatprep.subr.mxu0 0.0
    %864 = vmatpush1.msra.mxu0 0.0
    %865 = vmatprep.subr.mxu0 0.0
    %866 = vmatpush1.msra.mxu0 0.0
    %867 = vmatprep.subr.mxu0 0.0
    %868 = vmatpush1.msra.mxu0 0.0
    %869 = vmatprep.subr.mxu0 0.0
    %870 = vmatpush1.msra.mxu0 0.0
    %871 = vmatprep.subr.mxu0 0.0
    %872 = vmatpush1.msra.mxu0 0.0
    %873 = vmatprep.subr.mxu0 0.0
    %874 = vmatpush1.msra.mxu0 0.0
    %875 = vmatprep.subr.mxu0 0.0
    %876 = vmatpush1.msra.mxu0 0.0
    %877 = vmatprep.subr.mxu0 0.0
    %878 = vmatpush1.msra.mxu0 0.0
    %879 = vmatprep.subr.mxu0 0.0
    %880 = vmatpush1.msra.mxu0 0.0
    %881 = vmatprep.subr.mxu0 0.0
    %882 = vmatpush1.msra.mxu0 0.0
    %883 = vmatprep.subr.mxu0 0.0
    %884 = vmatpush1.msra.mxu0 0.0
    %885 = vmatprep.subr.mxu0 0.0
    %886 = vmatpush1.msra.mxu0 0.0
    %887 = vmatprep.subr.mxu0 0.0
    %888 = vmatpush1.msra.mxu0 0.0
    %889 = vmatprep.subr.mxu0 0.0
    %890 = vmatpush1.msra.mxu0 0.0
    %891 = vmatprep.subr.mxu0 0.0
    %892 = vmatpush1.msra.mxu0 0.0
    %893 = vmatprep.mubr.f32.mxu0 0.0
    %894 = vmatmul.mubr.f32.gmra.mrb[0].mxu0 %v782
    %v895 = vpop.f32.mrb[0].mxu0
    %v896 = vadd.f32 0.0, %v895
    %v897 = vpop.f32.mrb[0].mxu0
    %898 = vmatprep.mubr.f32.mxu0 0.0
    %899 = vmatmul.mubr.f32.gmra.mrb[0].mxu0 %v785
    %v900 = vpop.f32.mrb[0].mxu0
    %v901 = vadd.f32 0.0, %v900
    %v902 = vpop.f32.mrb[0].mxu0
    %903 = vmatprep.mubr.f32.mxu0 0.0
    %904 = vmatmul.mubr.f32.gmra.mrb[0].mxu0 %v788
    %v905 = vpop.f32.mrb[0].mxu0
    %v906 = vadd.f32 0.0, %v905
    %v907 = vpop.f32.mrb[0].mxu0
    %908 = vmatprep.mubr.f32.mxu0 0.0
    %909 = vmatmul.mubr.f32.gmra.mrb[0].mxu0 %v791
    %v910 = vpop.f32.mrb[0].mxu0
    %v911 = vadd.f32 0.0, %v910
    %v912 = vpop.f32.mrb[0].mxu0
    %913 = vmatprep.mubr.f32.mxu0 0.0
    %914 = vmatmul.mubr.f32.gmra.mrb[0].mxu0 %v794
    %v915 = vpop.f32.mrb[0].mxu0
    %v916 = vadd.f32 0.0, %v915
    %v917 = vpop.f32.mrb[0].mxu0
    %918 = vmatprep.mubr.f32.mxu0 0.0
    %919 = vmatmul.mubr.f32.gmra.mrb[0].mxu0 %v797
    %v920 = vpop.f32.mrb[0].mxu0
    %v921 = vadd.f32 0.0, %v920
    %v922 = vpop.f32.mrb[0].mxu0
    %923 = vmatprep.mubr.f32.mxu0 0.0
    %924 = vmatmul.mubr.f32.gmra.mrb[0].mxu0 %v800
    %v925 = vpop.f32.mrb[0].mxu0
    %v926 = vadd.f32 0.0, %v925
    %v927 = vpop.f32.mrb[0].mxu0
    %928 = vmatprep.mubr.f32.mxu0 0.0
    %929 = vmatmul.mubr.f32.gmra.mrb[0].mxu0 %v803
    %v930 = vpop.f32.mrb[0].mxu0
    %v931 = vadd.f32 0.0, %v930
    %v932 = vpop.f32.mrb[0].mxu0
    %933 = vmatprep.mubr.f32.mxu0 0.0
    %934 = vmatmul.mubr.f32.gmra.mrb[0].mxu0 %v806
    %v935 = vpop.f32.mrb[0].mxu0
    %v936 = vadd.f32 0.0, %v935
    %v937 = vpop.f32.mrb[0].mxu0
    %938 = vmatprep.mubr.f32.mxu0 0.0
    %939 = vmatmul.mubr.f32.gmra.mrb[0].mxu0 %v809
    %v940 = vpop.f32.mrb[0].mxu0
    %v941 = vadd.f32 0.0, %v940
    %v942 = vpop.f32.mrb[0].mxu0
    %943 = vmatprep.mubr.f32.mxu0 0.0
    %944 = vmatmul.mubr.f32.gmra.mrb[0].mxu0 %v812
    %v945 = vpop.f32.mrb[0].mxu0
    %v946 = vadd.f32 0.0, %v945
    %v947 = vpop.f32.mrb[0].mxu0
    %948 = vmatprep.mubr.f32.mxu0 0.0
    %949 = vmatmul.mubr.f32.gmra.mrb[0].mxu0 %v815
    %v950 = vpop.f32.mrb[0].mxu0
    %v951 = vadd.f32 0.0, %v950
    %v952 = vpop.f32.mrb[0].mxu0
    %953 = vmatprep.mubr.f32.mxu0 0.0
    %954 = vmatmul.mubr.f32.gmra.mrb[0].mxu0 %v818
    %v955 = vpop.f32.mrb[0].mxu0
    %v956 = vadd.f32 0.0, %v955
    %v957 = vpop.f32.mrb[0].mxu0
    %958 = vmatprep.mubr.f32.mxu0 0.0
    %959 = vmatmul.mubr.f32.gmra.mrb[0].mxu0 %v821
    %v960 = vpop.f32.mrb[0].mxu0
    %v961 = vadd.f32 0.0, %v960
    %v962 = vpop.f32.mrb[0].mxu0
    %963 = vmatprep.mubr.f32.mxu0 0.0
    %964 = vmatmul.mubr.f32.gmra.mrb[0].mxu0 %v824
    %v965 = vpop.f32.mrb[0].mxu0
    %v966 = vadd.f32 0.0, %v965
    %v967 = vpop.f32.mrb[0].mxu0
    %968 = vmatprep.mubr.f32.mxu0 0.0
    %969 = vmatmul.mubr.f32.gmra.mrb[0].mxu0 %v827
    %v970 = vpop.f32.mrb[0].mxu0
    %v971 = vadd.f32 0.0, %v970
    %v972 = vpop.f32.mrb[0].mxu0
    %973 = vdwg.mxu0
    %v974 = vadd.f32 %v744, %v896
    %v975 = vadd.f32 %v745, %v901
    %v976 = vadd.f32 %v746, %v906
    %v977 = vadd.f32 %v747, %v911
    %v978 = vadd.f32 %v748, %v916
    %v979 = vadd.f32 %v749, %v921
    %v980 = vadd.f32 %v750, %v926
    %v981 = vadd.f32 %v751, %v931
    %v982 = vadd.f32 %v752, %v936
    %v983 = vadd.f32 %v753, %v941
    %v984 = vadd.f32 %v754, %v946
    %v985 = vadd.f32 %v755, %v951
    %v986 = vadd.f32 %v756, %v956
    %v987 = vadd.f32 %v757, %v961
    %v988 = vadd.f32 %v758, %v966
    %v989 = vadd.f32 %v759, %v971
    %v990 = vld [vmem:[%s86 + $0x1] sm:$0xff]
    %v991 = vld [vmem:[%s86 + $0x11] sm:$0xff]
    %v992 = vld [vmem:[%s86 + $0x21] sm:$0xff]
    %v993 = vld [vmem:[%s86 + $0x31] sm:$0xff]
    %v994 = vld [vmem:[%s86 + $0x41] sm:$0xff]
    %v995 = vld [vmem:[%s86 + $0x51] sm:$0xff]
    %v996 = vld [vmem:[%s86 + $0x61] sm:$0xff]
    %v997 = vld [vmem:[%s86 + $0x71] sm:$0xff]
    %v998 = vld [vmem:[%s86 + $0xa1] sm:$0xff]
    %v999 = vld [vmem:[%s86 + $0xb1] sm:$0xff]
    %v1000 = vld [vmem:[%s86 + $0xc1] sm:$0xff]
    %v1001 = vld [vmem:[%s86 + $0xd1] sm:$0xff]
    %v1002 = vld [vmem:[%s86 + $0xe1] sm:$0xff]
    %v1003 = vld [vmem:[%s86 + $0xf1] sm:$0xff]
    %v1004 = vld [vmem:[%s86 + $0x101] sm:$0xff]
    %v1005 = vld [vmem:[%s86 + $0x111] sm:$0xff]
    %s1006 = scalar_lea.vmem [#allocation3], 128
    %v1007 = vld [vmem:[%s1006] sm:$0xff]
    %v1008 = vld [vmem:[%s1006 + $0x8] sm:$0xff]
    %v1009 = vld [vmem:[%s1006 + $0x10] sm:$0xff]
    %v1010 = vld [vmem:[%s1006 + $0x18] sm:$0xff]
    %v1012 = vsel %vm28, %v990, 0
    %v1015 = vsel %vm28, %v991, 0
    %v1018 = vsel %vm28, %v992, 0
    %v1021 = vsel %vm28, %v993, 0
    %v1024 = vsel %vm28, %v994, 0
    %v1027 = vsel %vm28, %v995, 0
    %v1030 = vsel %vm28, %v996, 0
    %v1033 = vsel %vm28, %v997, 0
    %v1036 = vsel %vm28, %v998, 0
    %v1039 = vsel %vm28, %v999, 0
    %v1042 = vsel %vm28, %v1000, 0
    %v1045 = vsel %vm28, %v1001, 0
    %v1048 = vsel %vm28, %v1002, 0
    %v1051 = vsel %vm28, %v1003, 0
    %v1054 = vsel %vm28, %v1004, 0
    %v1057 = vsel %vm28, %v1005, 0
    %1059 = vmatprep.subr.mxu0 0.0
    %1060 = vmatpush1.msra.mxu0 %v1007
    %1061 = vmatprep.subr.mxu0 0.0
    %1062 = vmatpush1.msra.mxu0 %v1008
    %1063 = vmatprep.subr.mxu0 0.0
    %1064 = vmatpush1.msra.mxu0 %v1009
    %1065 = vmatprep.subr.mxu0 0.0
    %1066 = vmatpush1.msra.mxu0 %v1010
    %1067 = vmatprep.subr.mxu0 0.0
    %1068 = vmatpush1.msra.mxu0 0.0
    %1069 = vmatprep.subr.mxu0 0.0
    %1070 = vmatpush1.msra.mxu0 0.0
    %1071 = vmatprep.subr.mxu0 0.0
    %1072 = vmatpush1.msra.mxu0 0.0
    %1073 = vmatprep.subr.mxu0 0.0
    %1074 = vmatpush1.msra.mxu0 0.0
    %1075 = vmatprep.subr.mxu0 0.0
    %1076 = vmatpush1.msra.mxu0 0.0
    %1077 = vmatprep.subr.mxu0 0.0
    %1078 = vmatpush1.msra.mxu0 0.0
    %1079 = vmatprep.subr.mxu0 0.0
    %1080 = vmatpush1.msra.mxu0 0.0
    %1081 = vmatprep.subr.mxu0 0.0
    %1082 = vmatpush1.msra.mxu0 0.0
    %1083 = vmatprep.subr.mxu0 0.0
    %1084 = vmatpush1.msra.mxu0 0.0
    %1085 = vmatprep.subr.mxu0 0.0
    %1086 = vmatpush1.msra.mxu0 0.0
    %1087 = vmatprep.subr.mxu0 0.0
    %1088 = vmatpush1.msra.mxu0 0.0
    %1089 = vmatprep.subr.mxu0 0.0
    %1090 = vmatpush1.msra.mxu0 0.0
    %1091 = vmatprep.subr.mxu0 0.0
    %1092 = vmatpush1.msra.mxu0 0.0
    %1093 = vmatprep.subr.mxu0 0.0
    %1094 = vmatpush1.msra.mxu0 0.0
    %1095 = vmatprep.subr.mxu0 0.0
    %1096 = vmatpush1.msra.mxu0 0.0
    %1097 = vmatprep.subr.mxu0 0.0
    %1098 = vmatpush1.msra.mxu0 0.0
    %1099 = vmatprep.subr.mxu0 0.0
    %1100 = vmatpush1.msra.mxu0 0.0
    %1101 = vmatprep.subr.mxu0 0.0
    %1102 = vmatpush1.msra.mxu0 0.0
    %1103 = vmatprep.subr.mxu0 0.0
    %1104 = vmatpush1.msra.mxu0 0.0
    %1105 = vmatprep.subr.mxu0 0.0
    %1106 = vmatpush1.msra.mxu0 0.0
    %1107 = vmatprep.subr.mxu0 0.0
    %1108 = vmatpush1.msra.mxu0 0.0
    %1109 = vmatprep.subr.mxu0 0.0
    %1110 = vmatpush1.msra.mxu0 0.0
    %1111 = vmatprep.subr.mxu0 0.0
    %1112 = vmatpush1.msra.mxu0 0.0
    %1113 = vmatprep.subr.mxu0 0.0
    %1114 = vmatpush1.msra.mxu0 0.0
    %1115 = vmatprep.subr.mxu0 0.0
    %1116 = vmatpush1.msra.mxu0 0.0
    %1117 = vmatprep.subr.mxu0 0.0
    %1118 = vmatpush1.msra.mxu0 0.0
    %1119 = vmatprep.subr.mxu0 0.0
    %1120 = vmatpush1.msra.mxu0 0.0
    %1121 = vmatprep.subr.mxu0 0.0
    %1122 = vmatpush1.msra.mxu0 0.0
    %1123 = vmatprep.mubr.f32.mxu0 0.0
    %1124 = vmatmul.mubr.f32.gmra.mrb[0].mxu0 %v1012
    %v1125 = vpop.f32.mrb[0].mxu0
    %v1126 = vadd.f32 0.0, %v1125
    %v1127 = vpop.f32.mrb[0].mxu0
    %1128 = vmatprep.mubr.f32.mxu0 0.0
    %1129 = vmatmul.mubr.f32.gmra.mrb[0].mxu0 %v1015
    %v1130 = vpop.f32.mrb[0].mxu0
    %v1131 = vadd.f32 0.0, %v1130
    %v1132 = vpop.f32.mrb[0].mxu0
    %1133 = vmatprep.mubr.f32.mxu0 0.0
    %1134 = vmatmul.mubr.f32.gmra.mrb[0].mxu0 %v1018
    %v1135 = vpop.f32.mrb[0].mxu0
    %v1136 = vadd.f32 0.0, %v1135
    %v1137 = vpop.f32.mrb[0].mxu0
    %1138 = vmatprep.mubr.f32.mxu0 0.0
    %1139 = vmatmul.mubr.f32.gmra.mrb[0].mxu0 %v1021
    %v1140 = vpop.f32.mrb[0].mxu0
    %v1141 = vadd.f32 0.0, %v1140
    %v1142 = vpop.f32.mrb[0].mxu0
    %1143 = vmatprep.mubr.f32.mxu0 0.0
    %1144 = vmatmul.mubr.f32.gmra.mrb[0].mxu0 %v1024
    %v1145 = vpop.f32.mrb[0].mxu0
    %v1146 = vadd.f32 0.0, %v1145
    %v1147 = vpop.f32.mrb[0].mxu0
    %1148 = vmatprep.mubr.f32.mxu0 0.0
    %1149 = vmatmul.mubr.f32.gmra.mrb[0].mxu0 %v1027
    %v1150 = vpop.f32.mrb[0].mxu0
    %v1151 = vadd.f32 0.0, %v1150
    %v1152 = vpop.f32.mrb[0].mxu0
    %1153 = vmatprep.mubr.f32.mxu0 0.0
    %1154 = vmatmul.mubr.f32.gmra.mrb[0].mxu0 %v1030
    %v1155 = vpop.f32.mrb[0].mxu0
    %v1156 = vadd.f32 0.0, %v1155
    %v1157 = vpop.f32.mrb[0].mxu0
    %1158 = vmatprep.mubr.f32.mxu0 0.0
    %1159 = vmatmul.mubr.f32.gmra.mrb[0].mxu0 %v1033
    %v1160 = vpop.f32.mrb[0].mxu0
    %v1161 = vadd.f32 0.0, %v1160
    %v1162 = vpop.f32.mrb[0].mxu0
    %1163 = vmatprep.mubr.f32.mxu0 0.0
    %1164 = vmatmul.mubr.f32.gmra.mrb[0].mxu0 %v1036
    %v1165 = vpop.f32.mrb[0].mxu0
    %v1166 = vadd.f32 0.0, %v1165
    %v1167 = vpop.f32.mrb[0].mxu0
    %1168 = vmatprep.mubr.f32.mxu0 0.0
    %1169 = vmatmul.mubr.f32.gmra.mrb[0].mxu0 %v1039
    %v1170 = vpop.f32.mrb[0].mxu0
    %v1171 = vadd.f32 0.0, %v1170
    %v1172 = vpop.f32.mrb[0].mxu0
    %1173 = vmatprep.mubr.f32.mxu0 0.0
    %1174 = vmatmul.mubr.f32.gmra.mrb[0].mxu0 %v1042
    %v1175 = vpop.f32.mrb[0].mxu0
    %v1176 = vadd.f32 0.0, %v1175
    %v1177 = vpop.f32.mrb[0].mxu0
    %1178 = vmatprep.mubr.f32.mxu0 0.0
    %1179 = vmatmul.mubr.f32.gmra.mrb[0].mxu0 %v1045
    %v1180 = vpop.f32.mrb[0].mxu0
    %v1181 = vadd.f32 0.0, %v1180
    %v1182 = vpop.f32.mrb[0].mxu0
    %1183 = vmatprep.mubr.f32.mxu0 0.0
    %1184 = vmatmul.mubr.f32.gmra.mrb[0].mxu0 %v1048
    %v1185 = vpop.f32.mrb[0].mxu0
    %v1186 = vadd.f32 0.0, %v1185
    %v1187 = vpop.f32.mrb[0].mxu0
    %1188 = vmatprep.mubr.f32.mxu0 0.0
    %1189 = vmatmul.mubr.f32.gmra.mrb[0].mxu0 %v1051
    %v1190 = vpop.f32.mrb[0].mxu0
    %v1191 = vadd.f32 0.0, %v1190
    %v1192 = vpop.f32.mrb[0].mxu0
    %1193 = vmatprep.mubr.f32.mxu0 0.0
    %1194 = vmatmul.mubr.f32.gmra.mrb[0].mxu0 %v1054
    %v1195 = vpop.f32.mrb[0].mxu0
    %v1196 = vadd.f32 0.0, %v1195
    %v1197 = vpop.f32.mrb[0].mxu0
    %1198 = vmatprep.mubr.f32.mxu0 0.0
    %1199 = vmatmul.mubr.f32.gmra.mrb[0].mxu0 %v1057
    %v1200 = vpop.f32.mrb[0].mxu0
    %v1201 = vadd.f32 0.0, %v1200
    %v1202 = vpop.f32.mrb[0].mxu0
    %1203 = vdwg.mxu0
    %v1204 = vadd.f32 %v974, %v1126
    %v1205 = vadd.f32 %v975, %v1131
    %v1206 = vadd.f32 %v976, %v1136
    %v1207 = vadd.f32 %v977, %v1141
    %v1208 = vadd.f32 %v978, %v1146
    %v1209 = vadd.f32 %v979, %v1151
    %v1210 = vadd.f32 %v980, %v1156
    %v1211 = vadd.f32 %v981, %v1161
    %v1212 = vadd.f32 %v982, %v1166
    %v1213 = vadd.f32 %v983, %v1171
    %v1214 = vadd.f32 %v984, %v1176
    %v1215 = vadd.f32 %v985, %v1181
    %v1216 = vadd.f32 %v986, %v1186
    %v1217 = vadd.f32 %v987, %v1191
    %v1218 = vadd.f32 %v988, %v1196
    %v1219 = vadd.f32 %v989, %v1201
    %v1220 = vld [vmem:[%s86 + $0x2] sm:$0xff]
    %v1221 = vld [vmem:[%s86 + $0x12] sm:$0xff]
    %v1222 = vld [vmem:[%s86 + $0x22] sm:$0xff]
    %v1223 = vld [vmem:[%s86 + $0x32] sm:$0xff]
    %v1224 = vld [vmem:[%s86 + $0x42] sm:$0xff]
    %v1225 = vld [vmem:[%s86 + $0x52] sm:$0xff]
    %v1226 = vld [vmem:[%s86 + $0x62] sm:$0xff]
    %v1227 = vld [vmem:[%s86 + $0x72] sm:$0xff]
    %v1228 = vld [vmem:[%s86 + $0xa2] sm:$0xff]
    %v1229 = vld [vmem:[%s86 + $0xb2] sm:$0xff]
    %v1230 = vld [vmem:[%s86 + $0xc2] sm:$0xff]
    %v1231 = vld [vmem:[%s86 + $0xd2] sm:$0xff]
    %v1232 = vld [vmem:[%s86 + $0xe2] sm:$0xff]
    %v1233 = vld [vmem:[%s86 + $0xf2] sm:$0xff]
    %v1234 = vld [vmem:[%s86 + $0x102] sm:$0xff]
    %v1235 = vld [vmem:[%s86 + $0x112] sm:$0xff]
    %s1236 = scalar_lea.vmem [#allocation3], 160
    %v1237 = vld [vmem:[%s1236] sm:$0xff]
    %v1238 = vld [vmem:[%s1236 + $0x8] sm:$0xff]
    %v1239 = vld [vmem:[%s1236 + $0x10] sm:$0xff]
    %v1240 = vld [vmem:[%s1236 + $0x18] sm:$0xff]
    %v1242 = vsel %vm28, %v1220, 0
    %v1245 = vsel %vm28, %v1221, 0
    %v1248 = vsel %vm28, %v1222, 0
    %v1251 = vsel %vm28, %v1223, 0
    %v1254 = vsel %vm28, %v1224, 0
    %v1257 = vsel %vm28, %v1225, 0
    %v1260 = vsel %vm28, %v1226, 0
    %v1263 = vsel %vm28, %v1227, 0
    %v1266 = vsel %vm28, %v1228, 0
    %v1269 = vsel %vm28, %v1229, 0
    %v1272 = vsel %vm28, %v1230, 0
    %v1275 = vsel %vm28, %v1231, 0
    %v1278 = vsel %vm28, %v1232, 0
    %v1281 = vsel %vm28, %v1233, 0
    %v1284 = vsel %vm28, %v1234, 0
    %v1287 = vsel %vm28, %v1235, 0
    %1289 = vmatprep.subr.mxu0 0.0
    %1290 = vmatpush1.msra.mxu0 %v1237
    %1291 = vmatprep.subr.mxu0 0.0
    %1292 = vmatpush1.msra.mxu0 %v1238
    %1293 = vmatprep.subr.mxu0 0.0
    %1294 = vmatpush1.msra.mxu0 %v1239
    %1295 = vmatprep.subr.mxu0 0.0
    %1296 = vmatpush1.msra.mxu0 %v1240
    %1297 = vmatprep.subr.mxu0 0.0
    %1298 = vmatpush1.msra.mxu0 0.0
    %1299 = vmatprep.subr.mxu0 0.0
    %1300 = vmatpush1.msra.mxu0 0.0
    %1301 = vmatprep.subr.mxu0 0.0
    %1302 = vmatpush1.msra.mxu0 0.0
    %1303 = vmatprep.subr.mxu0 0.0
    %1304 = vmatpush1.msra.mxu0 0.0
    %1305 = vmatprep.subr.mxu0 0.0
    %1306 = vmatpush1.msra.mxu0 0.0
    %1307 = vmatprep.subr.mxu0 0.0
    %1308 = vmatpush1.msra.mxu0 0.0
    %1309 = vmatprep.subr.mxu0 0.0
    %1310 = vmatpush1.msra.mxu0 0.0
    %1311 = vmatprep.subr.mxu0 0.0
    %1312 = vmatpush1.msra.mxu0 0.0
    %1313 = vmatprep.subr.mxu0 0.0
    %1314 = vmatpush1.msra.mxu0 0.0
    %1315 = vmatprep.subr.mxu0 0.0
    %1316 = vmatpush1.msra.mxu0 0.0
    %1317 = vmatprep.subr.mxu0 0.0
    %1318 = vmatpush1.msra.mxu0 0.0
    %1319 = vmatprep.subr.mxu0 0.0
    %1320 = vmatpush1.msra.mxu0 0.0
    %1321 = vmatprep.subr.mxu0 0.0
    %1322 = vmatpush1.msra.mxu0 0.0
    %1323 = vmatprep.subr.mxu0 0.0
    %1324 = vmatpush1.msra.mxu0 0.0
    %1325 = vmatprep.subr.mxu0 0.0
    %1326 = vmatpush1.msra.mxu0 0.0
    %1327 = vmatprep.subr.mxu0 0.0
    %1328 = vmatpush1.msra.mxu0 0.0
    %1329 = vmatprep.subr.mxu0 0.0
    %1330 = vmatpush1.msra.mxu0 0.0
    %1331 = vmatprep.subr.mxu0 0.0
    %1332 = vmatpush1.msra.mxu0 0.0
    %1333 = vmatprep.subr.mxu0 0.0
    %1334 = vmatpush1.msra.mxu0 0.0
    %1335 = vmatprep.subr.mxu0 0.0
    %1336 = vmatpush1.msra.mxu0 0.0
    %1337 = vmatprep.subr.mxu0 0.0
    %1338 = vmatpush1.msra.mxu0 0.0
    %1339 = vmatprep.subr.mxu0 0.0
    %1340 = vmatpush1.msra.mxu0 0.0
    %1341 = vmatprep.subr.mxu0 0.0
    %1342 = vmatpush1.msra.mxu0 0.0
    %1343 = vmatprep.subr.mxu0 0.0
    %1344 = vmatpush1.msra.mxu0 0.0
    %1345 = vmatprep.subr.mxu0 0.0
    %1346 = vmatpush1.msra.mxu0 0.0
    %1347 = vmatprep.subr.mxu0 0.0
    %1348 = vmatpush1.msra.mxu0 0.0
    %1349 = vmatprep.subr.mxu0 0.0
    %1350 = vmatpush1.msra.mxu0 0.0
    %1351 = vmatprep.subr.mxu0 0.0
    %1352 = vmatpush1.msra.mxu0 0.0
    %1353 = vmatprep.mubr.f32.mxu0 0.0
    %1354 = vmatmul.mubr.f32.gmra.mrb[0].mxu0 %v1242
    %v1355 = vpop.f32.mrb[0].mxu0
    %v1356 = vadd.f32 0.0, %v1355
    %v1357 = vpop.f32.mrb[0].mxu0
    %1358 = vmatprep.mubr.f32.mxu0 0.0
    %1359 = vmatmul.mubr.f32.gmra.mrb[0].mxu0 %v1245
    %v1360 = vpop.f32.mrb[0].mxu0
    %v1361 = vadd.f32 0.0, %v1360
    %v1362 = vpop.f32.mrb[0].mxu0
    %1363 = vmatprep.mubr.f32.mxu0 0.0
    %1364 = vmatmul.mubr.f32.gmra.mrb[0].mxu0 %v1248
    %v1365 = vpop.f32.mrb[0].mxu0
    %v1366 = vadd.f32 0.0, %v1365
    %v1367 = vpop.f32.mrb[0].mxu0
    %1368 = vmatprep.mubr.f32.mxu0 0.0
    %1369 = vmatmul.mubr.f32.gmra.mrb[0].mxu0 %v1251
    %v1370 = vpop.f32.mrb[0].mxu0
    %v1371 = vadd.f32 0.0, %v1370
    %v1372 = vpop.f32.mrb[0].mxu0
    %1373 = vmatprep.mubr.f32.mxu0 0.0
    %1374 = vmatmul.mubr.f32.gmra.mrb[0].mxu0 %v1254
    %v1375 = vpop.f32.mrb[0].mxu0
    %v1376 = vadd.f32 0.0, %v1375
    %v1377 = vpop.f32.mrb[0].mxu0
    %1378 = vmatprep.mubr.f32.mxu0 0.0
    %1379 = vmatmul.mubr.f32.gmra.mrb[0].mxu0 %v1257
    %v1380 = vpop.f32.mrb[0].mxu0
    %v1381 = vadd.f32 0.0, %v1380
    %v1382 = vpop.f32.mrb[0].mxu0
    %1383 = vmatprep.mubr.f32.mxu0 0.0
    %1384 = vmatmul.mubr.f32.gmra.mrb[0].mxu0 %v1260
    %v1385 = vpop.f32.mrb[0].mxu0
    %v1386 = vadd.f32 0.0, %v1385
    %v1387 = vpop.f32.mrb[0].mxu0
    %1388 = vmatprep.mubr.f32.mxu0 0.0
    %1389 = vmatmul.mubr.f32.gmra.mrb[0].mxu0 %v1263
    %v1390 = vpop.f32.mrb[0].mxu0
    %v1391 = vadd.f32 0.0, %v1390
    %v1392 = vpop.f32.mrb[0].mxu0
    %1393 = vmatprep.mubr.f32.mxu0 0.0
    %1394 = vmatmul.mubr.f32.gmra.mrb[0].mxu0 %v1266
    %v1395 = vpop.f32.mrb[0].mxu0
    %v1396 = vadd.f32 0.0, %v1395
    %v1397 = vpop.f32.mrb[0].mxu0
    %1398 = vmatprep.mubr.f32.mxu0 0.0
    %1399 = vmatmul.mubr.f32.gmra.mrb[0].mxu0 %v1269
    %v1400 = vpop.f32.mrb[0].mxu0
    %v1401 = vadd.f32 0.0, %v1400
    %v1402 = vpop.f32.mrb[0].mxu0
    %1403 = vmatprep.mubr.f32.mxu0 0.0
    %1404 = vmatmul.mubr.f32.gmra.mrb[0].mxu0 %v1272
    %v1405 = vpop.f32.mrb[0].mxu0
    %v1406 = vadd.f32 0.0, %v1405
    %v1407 = vpop.f32.mrb[0].mxu0
    %1408 = vmatprep.mubr.f32.mxu0 0.0
    %1409 = vmatmul.mubr.f32.gmra.mrb[0].mxu0 %v1275
    %v1410 = vpop.f32.mrb[0].mxu0
    %v1411 = vadd.f32 0.0, %v1410
    %v1412 = vpop.f32.mrb[0].mxu0
    %1413 = vmatprep.mubr.f32.mxu0 0.0
    %1414 = vmatmul.mubr.f32.gmra.mrb[0].mxu0 %v1278
    %v1415 = vpop.f32.mrb[0].mxu0
    %v1416 = vadd.f32 0.0, %v1415
    %v1417 = vpop.f32.mrb[0].mxu0
    %1418 = vmatprep.mubr.f32.mxu0 0.0
    %1419 = vmatmul.mubr.f32.gmra.mrb[0].mxu0 %v1281
    %v1420 = vpop.f32.mrb[0].mxu0
    %v1421 = vadd.f32 0.0, %v1420
    %v1422 = vpop.f32.mrb[0].mxu0
    %1423 = vmatprep.mubr.f32.mxu0 0.0
    %1424 = vmatmul.mubr.f32.gmra.mrb[0].mxu0 %v1284
    %v1425 = vpop.f32.mrb[0].mxu0
    %v1426 = vadd.f32 0.0, %v1425
    %v1427 = vpop.f32.mrb[0].mxu0
    %1428 = vmatprep.mubr.f32.mxu0 0.0
    %1429 = vmatmul.mubr.f32.gmra.mrb[0].mxu0 %v1287
    %v1430 = vpop.f32.mrb[0].mxu0
    %v1431 = vadd.f32 0.0, %v1430
    %v1432 = vpop.f32.mrb[0].mxu0
    %1433 = vdwg.mxu0
    %v1434 = vadd.f32 %v1204, %v1356
    %v1435 = vadd.f32 %v1205, %v1361
    %v1436 = vadd.f32 %v1206, %v1366
    %v1437 = vadd.f32 %v1207, %v1371
    %v1438 = vadd.f32 %v1208, %v1376
    %v1439 = vadd.f32 %v1209, %v1381
    %v1440 = vadd.f32 %v1210, %v1386
    %v1441 = vadd.f32 %v1211, %v1391
    %v1442 = vadd.f32 %v1212, %v1396
    %v1443 = vadd.f32 %v1213, %v1401
    %v1444 = vadd.f32 %v1214, %v1406
    %v1445 = vadd.f32 %v1215, %v1411
    %v1446 = vadd.f32 %v1216, %v1416
    %v1447 = vadd.f32 %v1217, %v1421
    %v1448 = vadd.f32 %v1218, %v1426
    %v1449 = vadd.f32 %v1219, %v1431
    %s1450 = scalar_lea.vmem [#allocation2], 32
    %v1451 = vld [vmem:[%s1450] sm:$0xff]
    %v1452 = vld [vmem:[%s1450 + $0x10] sm:$0xff]
    %v1453 = vld [vmem:[%s1450 + $0x20] sm:$0xff]
    %v1454 = vld [vmem:[%s1450 + $0x30] sm:$0xff]
    %v1455 = vld [vmem:[%s1450 + $0x40] sm:$0xff]
    %v1456 = vld [vmem:[%s1450 + $0x50] sm:$0xff]
    %v1457 = vld [vmem:[%s1450 + $0x60] sm:$0xff]
    %v1458 = vld [vmem:[%s1450 + $0x70] sm:$0xff]
    %v1459 = vld [vmem:[%s1450 + $0xa0] sm:$0xff]
    %v1460 = vld [vmem:[%s1450 + $0xb0] sm:$0xff]
    %v1461 = vld [vmem:[%s1450 + $0xc0] sm:$0xff]
    %v1462 = vld [vmem:[%s1450 + $0xd0] sm:$0xff]
    %v1463 = vld [vmem:[%s1450 + $0xe0] sm:$0xff]
    %v1464 = vld [vmem:[%s1450 + $0xf0] sm:$0xff]
    %v1465 = vld [vmem:[%s1450 + $0x100] sm:$0xff]
    %v1466 = vld [vmem:[%s1450 + $0x110] sm:$0xff]
    %s1467 = scalar_lea.vmem [#allocation3], 192
    %v1468 = vld [vmem:[%s1467] sm:$0xff]
    %v1469 = vld [vmem:[%s1467 + $0x8] sm:$0xff]
    %v1470 = vld [vmem:[%s1467 + $0x10] sm:$0xff]
    %v1471 = vld [vmem:[%s1467 + $0x18] sm:$0xff]
    %v1473 = vsel %vm28, %v1451, 0
    %v1476 = vsel %vm28, %v1452, 0
    %v1479 = vsel %vm28, %v1453, 0
    %v1482 = vsel %vm28, %v1454, 0
    %v1485 = vsel %vm28, %v1455, 0
    %v1488 = vsel %vm28, %v1456, 0
    %v1491 = vsel %vm28, %v1457, 0
    %v1494 = vsel %vm28, %v1458, 0
    %v1497 = vsel %vm28, %v1459, 0
    %v1500 = vsel %vm28, %v1460, 0
    %v1503 = vsel %vm28, %v1461, 0
    %v1506 = vsel %vm28, %v1462, 0
    %v1509 = vsel %vm28, %v1463, 0
    %v1512 = vsel %vm28, %v1464, 0
    %v1515 = vsel %vm28, %v1465, 0
    %v1518 = vsel %vm28, %v1466, 0
    %1520 = vmatprep.subr.mxu0 0.0
    %1521 = vmatpush1.msra.mxu0 %v1468
    %1522 = vmatprep.subr.mxu0 0.0
    %1523 = vmatpush1.msra.mxu0 %v1469
    %1524 = vmatprep.subr.mxu0 0.0
    %1525 = vmatpush1.msra.mxu0 %v1470
    %1526 = vmatprep.subr.mxu0 0.0
    %1527 = vmatpush1.msra.mxu0 %v1471
    %1528 = vmatprep.subr.mxu0 0.0
    %1529 = vmatpush1.msra.mxu0 0.0
    %1530 = vmatprep.subr.mxu0 0.0
    %1531 = vmatpush1.msra.mxu0 0.0
    %1532 = vmatprep.subr.mxu0 0.0
    %1533 = vmatpush1.msra.mxu0 0.0
    %1534 = vmatprep.subr.mxu0 0.0
    %1535 = vmatpush1.msra.mxu0 0.0
    %1536 = vmatprep.subr.mxu0 0.0
    %1537 = vmatpush1.msra.mxu0 0.0
    %1538 = vmatprep.subr.mxu0 0.0
    %1539 = vmatpush1.msra.mxu0 0.0
    %1540 = vmatprep.subr.mxu0 0.0
    %1541 = vmatpush1.msra.mxu0 0.0
    %1542 = vmatprep.subr.mxu0 0.0
    %1543 = vmatpush1.msra.mxu0 0.0
    %1544 = vmatprep.subr.mxu0 0.0
    %1545 = vmatpush1.msra.mxu0 0.0
    %1546 = vmatprep.subr.mxu0 0.0
    %1547 = vmatpush1.msra.mxu0 0.0
    %1548 = vmatprep.subr.mxu0 0.0
    %1549 = vmatpush1.msra.mxu0 0.0
    %1550 = vmatprep.subr.mxu0 0.0
    %1551 = vmatpush1.msra.mxu0 0.0
    %1552 = vmatprep.subr.mxu0 0.0
    %1553 = vmatpush1.msra.mxu0 0.0
    %1554 = vmatprep.subr.mxu0 0.0
    %1555 = vmatpush1.msra.mxu0 0.0
    %1556 = vmatprep.subr.mxu0 0.0
    %1557 = vmatpush1.msra.mxu0 0.0
    %1558 = vmatprep.subr.mxu0 0.0
    %1559 = vmatpush1.msra.mxu0 0.0
    %1560 = vmatprep.subr.mxu0 0.0
    %1561 = vmatpush1.msra.mxu0 0.0
    %1562 = vmatprep.subr.mxu0 0.0
    %1563 = vmatpush1.msra.mxu0 0.0
    %1564 = vmatprep.subr.mxu0 0.0
    %1565 = vmatpush1.msra.mxu0 0.0
    %1566 = vmatprep.subr.mxu0 0.0
    %1567 = vmatpush1.msra.mxu0 0.0
    %1568 = vmatprep.subr.mxu0 0.0
    %1569 = vmatpush1.msra.mxu0 0.0
    %1570 = vmatprep.subr.mxu0 0.0
    %1571 = vmatpush1.msra.mxu0 0.0
    %1572 = vmatprep.subr.mxu0 0.0
    %1573 = vmatpush1.msra.mxu0 0.0
    %1574 = vmatprep.subr.mxu0 0.0
    %1575 = vmatpush1.msra.mxu0 0.0
    %1576 = vmatprep.subr.mxu0 0.0
    %1577 = vmatpush1.msra.mxu0 0.0
    %1578 = vmatprep.subr.mxu0 0.0
    %1579 = vmatpush1.msra.mxu0 0.0
    %1580 = vmatprep.subr.mxu0 0.0
    %1581 = vmatpush1.msra.mxu0 0.0
    %1582 = vmatprep.subr.mxu0 0.0
    %1583 = vmatpush1.msra.mxu0 0.0
    %1584 = vmatprep.mubr.f32.mxu0 0.0
    %1585 = vmatmul.mubr.f32.gmra.mrb[0].mxu0 %v1473
    %v1586 = vpop.f32.mrb[0].mxu0
    %v1587 = vadd.f32 0.0, %v1586
    %v1588 = vpop.f32.mrb[0].mxu0
    %1589 = vmatprep.mubr.f32.mxu0 0.0
    %1590 = vmatmul.mubr.f32.gmra.mrb[0].mxu0 %v1476
    %v1591 = vpop.f32.mrb[0].mxu0
    %v1592 = vadd.f32 0.0, %v1591
    %v1593 = vpop.f32.mrb[0].mxu0
    %1594 = vmatprep.mubr.f32.mxu0 0.0
    %1595 = vmatmul.mubr.f32.gmra.mrb[0].mxu0 %v1479
    %v1596 = vpop.f32.mrb[0].mxu0
    %v1597 = vadd.f32 0.0, %v1596
    %v1598 = vpop.f32.mrb[0].mxu0
    %1599 = vmatprep.mubr.f32.mxu0 0.0
    %1600 = vmatmul.mubr.f32.gmra.mrb[0].mxu0 %v1482
    %v1601 = vpop.f32.mrb[0].mxu0
    %v1602 = vadd.f32 0.0, %v1601
    %v1603 = vpop.f32.mrb[0].mxu0
    %1604 = vmatprep.mubr.f32.mxu0 0.0
    %1605 = vmatmul.mubr.f32.gmra.mrb[0].mxu0 %v1485
    %v1606 = vpop.f32.mrb[0].mxu0
    %v1607 = vadd.f32 0.0, %v1606
    %v1608 = vpop.f32.mrb[0].mxu0
    %1609 = vmatprep.mubr.f32.mxu0 0.0
    %1610 = vmatmul.mubr.f32.gmra.mrb[0].mxu0 %v1488
    %v1611 = vpop.f32.mrb[0].mxu0
    %v1612 = vadd.f32 0.0, %v1611
    %v1613 = vpop.f32.mrb[0].mxu0
    %1614 = vmatprep.mubr.f32.mxu0 0.0
    %1615 = vmatmul.mubr.f32.gmra.mrb[0].mxu0 %v1491
    %v1616 = vpop.f32.mrb[0].mxu0
    %v1617 = vadd.f32 0.0, %v1616
    %v1618 = vpop.f32.mrb[0].mxu0
    %1619 = vmatprep.mubr.f32.mxu0 0.0
    %1620 = vmatmul.mubr.f32.gmra.mrb[0].mxu0 %v1494
    %v1621 = vpop.f32.mrb[0].mxu0
    %v1622 = vadd.f32 0.0, %v1621
    %v1623 = vpop.f32.mrb[0].mxu0
    %1624 = vmatprep.mubr.f32.mxu0 0.0
    %1625 = vmatmul.mubr.f32.gmra.mrb[0].mxu0 %v1497
    %v1626 = vpop.f32.mrb[0].mxu0
    %v1627 = vadd.f32 0.0, %v1626
    %v1628 = vpop.f32.mrb[0].mxu0
    %1629 = vmatprep.mubr.f32.mxu0 0.0
    %1630 = vmatmul.mubr.f32.gmra.mrb[0].mxu0 %v1500
    %v1631 = vpop.f32.mrb[0].mxu0
    %v1632 = vadd.f32 0.0, %v1631
    %v1633 = vpop.f32.mrb[0].mxu0
    %1634 = vmatprep.mubr.f32.mxu0 0.0
    %1635 = vmatmul.mubr.f32.gmra.mrb[0].mxu0 %v1503
    %v1636 = vpop.f32.mrb[0].mxu0
    %v1637 = vadd.f32 0.0, %v1636
    %v1638 = vpop.f32.mrb[0].mxu0
    %1639 = vmatprep.mubr.f32.mxu0 0.0
    %1640 = vmatmul.mubr.f32.gmra.mrb[0].mxu0 %v1506
    %v1641 = vpop.f32.mrb[0].mxu0
    %v1642 = vadd.f32 0.0, %v1641
    %v1643 = vpop.f32.mrb[0].mxu0
    %1644 = vmatprep.mubr.f32.mxu0 0.0
    %1645 = vmatmul.mubr.f32.gmra.mrb[0].mxu0 %v1509
    %v1646 = vpop.f32.mrb[0].mxu0
    %v1647 = vadd.f32 0.0, %v1646
    %v1648 = vpop.f32.mrb[0].mxu0
    %1649 = vmatprep.mubr.f32.mxu0 0.0
    %1650 = vmatmul.mubr.f32.gmra.mrb[0].mxu0 %v1512
    %v1651 = vpop.f32.mrb[0].mxu0
    %v1652 = vadd.f32 0.0, %v1651
    %v1653 = vpop.f32.mrb[0].mxu0
    %1654 = vmatprep.mubr.f32.mxu0 0.0
    %1655 = vmatmul.mubr.f32.gmra.mrb[0].mxu0 %v1515
    %v1656 = vpop.f32.mrb[0].mxu0
    %v1657 = vadd.f32 0.0, %v1656
    %v1658 = vpop.f32.mrb[0].mxu0
    %1659 = vmatprep.mubr.f32.mxu0 0.0
    %1660 = vmatmul.mubr.f32.gmra.mrb[0].mxu0 %v1518
    %v1661 = vpop.f32.mrb[0].mxu0
    %v1662 = vadd.f32 0.0, %v1661
    %v1663 = vpop.f32.mrb[0].mxu0
    %1664 = vdwg.mxu0
    %v1665 = vadd.f32 %v1434, %v1587
    %v1666 = vadd.f32 %v1435, %v1592
    %v1667 = vadd.f32 %v1436, %v1597
    %v1668 = vadd.f32 %v1437, %v1602
    %v1669 = vadd.f32 %v1438, %v1607
    %v1670 = vadd.f32 %v1439, %v1612
    %v1671 = vadd.f32 %v1440, %v1617
    %v1672 = vadd.f32 %v1441, %v1622
    %v1673 = vadd.f32 %v1442, %v1627
    %v1674 = vadd.f32 %v1443, %v1632
    %v1675 = vadd.f32 %v1444, %v1637
    %v1676 = vadd.f32 %v1445, %v1642
    %v1677 = vadd.f32 %v1446, %v1647
    %v1678 = vadd.f32 %v1447, %v1652
    %v1679 = vadd.f32 %v1448, %v1657
    %v1680 = vadd.f32 %v1449, %v1662
    %v1681 = vld [vmem:[%s1450 + $0x1] sm:$0xff]
    %v1682 = vld [vmem:[%s1450 + $0x11] sm:$0xff]
    %v1683 = vld [vmem:[%s1450 + $0x21] sm:$0xff]
    %v1684 = vld [vmem:[%s1450 + $0x31] sm:$0xff]
    %v1685 = vld [vmem:[%s1450 + $0x41] sm:$0xff]
    %v1686 = vld [vmem:[%s1450 + $0x51] sm:$0xff]
    %v1687 = vld [vmem:[%s1450 + $0x61] sm:$0xff]
    %v1688 = vld [vmem:[%s1450 + $0x71] sm:$0xff]
    %v1689 = vld [vmem:[%s1450 + $0xa1] sm:$0xff]
    %v1690 = vld [vmem:[%s1450 + $0xb1] sm:$0xff]
    %v1691 = vld [vmem:[%s1450 + $0xc1] sm:$0xff]
    %v1692 = vld [vmem:[%s1450 + $0xd1] sm:$0xff]
    %v1693 = vld [vmem:[%s1450 + $0xe1] sm:$0xff]
    %v1694 = vld [vmem:[%s1450 + $0xf1] sm:$0xff]
    %v1695 = vld [vmem:[%s1450 + $0x101] sm:$0xff]
    %v1696 = vld [vmem:[%s1450 + $0x111] sm:$0xff]
    %s1697 = scalar_lea.vmem [#allocation3], 224
    %v1698 = vld [vmem:[%s1697] sm:$0xff]
    %v1699 = vld [vmem:[%s1697 + $0x8] sm:$0xff]
    %v1700 = vld [vmem:[%s1697 + $0x10] sm:$0xff]
    %v1701 = vld [vmem:[%s1697 + $0x18] sm:$0xff]
    %v1703 = vsel %vm28, %v1681, 0
    %v1706 = vsel %vm28, %v1682, 0
    %v1709 = vsel %vm28, %v1683, 0
    %v1712 = vsel %vm28, %v1684, 0
    %v1715 = vsel %vm28, %v1685, 0
    %v1718 = vsel %vm28, %v1686, 0
    %v1721 = vsel %vm28, %v1687, 0
    %v1724 = vsel %vm28, %v1688, 0
    %v1727 = vsel %vm28, %v1689, 0
    %v1730 = vsel %vm28, %v1690, 0
    %v1733 = vsel %vm28, %v1691, 0
    %v1736 = vsel %vm28, %v1692, 0
    %v1739 = vsel %vm28, %v1693, 0
    %v1742 = vsel %vm28, %v1694, 0
    %v1745 = vsel %vm28, %v1695, 0
    %v1748 = vsel %vm28, %v1696, 0
    %1750 = vmatprep.subr.mxu0 0.0
    %1751 = vmatpush1.msra.mxu0 %v1698
    %1752 = vmatprep.subr.mxu0 0.0
    %1753 = vmatpush1.msra.mxu0 %v1699
    %1754 = vmatprep.subr.mxu0 0.0
    %1755 = vmatpush1.msra.mxu0 %v1700
    %1756 = vmatprep.subr.mxu0 0.0
    %1757 = vmatpush1.msra.mxu0 %v1701
    %1758 = vmatprep.subr.mxu0 0.0
    %1759 = vmatpush1.msra.mxu0 0.0
    %1760 = vmatprep.subr.mxu0 0.0
    %1761 = vmatpush1.msra.mxu0 0.0
    %1762 = vmatprep.subr.mxu0 0.0
    %1763 = vmatpush1.msra.mxu0 0.0
    %1764 = vmatprep.subr.mxu0 0.0
    %1765 = vmatpush1.msra.mxu0 0.0
    %1766 = vmatprep.subr.mxu0 0.0
    %1767 = vmatpush1.msra.mxu0 0.0
    %1768 = vmatprep.subr.mxu0 0.0
    %1769 = vmatpush1.msra.mxu0 0.0
    %1770 = vmatprep.subr.mxu0 0.0
    %1771 = vmatpush1.msra.mxu0 0.0
    %1772 = vmatprep.subr.mxu0 0.0
    %1773 = vmatpush1.msra.mxu0 0.0
    %1774 = vmatprep.subr.mxu0 0.0
    %1775 = vmatpush1.msra.mxu0 0.0
    %1776 = vmatprep.subr.mxu0 0.0
    %1777 = vmatpush1.msra.mxu0 0.0
    %1778 = vmatprep.subr.mxu0 0.0
    %1779 = vmatpush1.msra.mxu0 0.0
    %1780 = vmatprep.subr.mxu0 0.0
    %1781 = vmatpush1.msra.mxu0 0.0
    %1782 = vmatprep.subr.mxu0 0.0
    %1783 = vmatpush1.msra.mxu0 0.0
    %1784 = vmatprep.subr.mxu0 0.0
    %1785 = vmatpush1.msra.mxu0 0.0
    %1786 = vmatprep.subr.mxu0 0.0
    %1787 = vmatpush1.msra.mxu0 0.0
    %1788 = vmatprep.subr.mxu0 0.0
    %1789 = vmatpush1.msra.mxu0 0.0
    %1790 = vmatprep.subr.mxu0 0.0
    %1791 = vmatpush1.msra.mxu0 0.0
    %1792 = vmatprep.subr.mxu0 0.0
    %1793 = vmatpush1.msra.mxu0 0.0
    %1794 = vmatprep.subr.mxu0 0.0
    %1795 = vmatpush1.msra.mxu0 0.0
    %1796 = vmatprep.subr.mxu0 0.0
    %1797 = vmatpush1.msra.mxu0 0.0
    %1798 = vmatprep.subr.mxu0 0.0
    %1799 = vmatpush1.msra.mxu0 0.0
    %1800 = vmatprep.subr.mxu0 0.0
    %1801 = vmatpush1.msra.mxu0 0.0
    %1802 = vmatprep.subr.mxu0 0.0
    %1803 = vmatpush1.msra.mxu0 0.0
    %1804 = vmatprep.subr.mxu0 0.0
    %1805 = vmatpush1.msra.mxu0 0.0
    %1806 = vmatprep.subr.mxu0 0.0
    %1807 = vmatpush1.msra.mxu0 0.0
    %1808 = vmatprep.subr.mxu0 0.0
    %1809 = vmatpush1.msra.mxu0 0.0
    %1810 = vmatprep.subr.mxu0 0.0
    %1811 = vmatpush1.msra.mxu0 0.0
    %1812 = vmatprep.subr.mxu0 0.0
    %1813 = vmatpush1.msra.mxu0 0.0
    %1814 = vmatprep.mubr.f32.mxu0 0.0
    %1815 = vmatmul.mubr.f32.gmra.mrb[0].mxu0 %v1703
    %v1816 = vpop.f32.mrb[0].mxu0
    %v1817 = vadd.f32 0.0, %v1816
    %v1818 = vpop.f32.mrb[0].mxu0
    %1819 = vmatprep.mubr.f32.mxu0 0.0
    %1820 = vmatmul.mubr.f32.gmra.mrb[0].mxu0 %v1706
    %v1821 = vpop.f32.mrb[0].mxu0
    %v1822 = vadd.f32 0.0, %v1821
    %v1823 = vpop.f32.mrb[0].mxu0
    %1824 = vmatprep.mubr.f32.mxu0 0.0
    %1825 = vmatmul.mubr.f32.gmra.mrb[0].mxu0 %v1709
    %v1826 = vpop.f32.mrb[0].mxu0
    %v1827 = vadd.f32 0.0, %v1826
    %v1828 = vpop.f32.mrb[0].mxu0
    %1829 = vmatprep.mubr.f32.mxu0 0.0
    %1830 = vmatmul.mubr.f32.gmra.mrb[0].mxu0 %v1712
    %v1831 = vpop.f32.mrb[0].mxu0
    %v1832 = vadd.f32 0.0, %v1831
    %v1833 = vpop.f32.mrb[0].mxu0
    %1834 = vmatprep.mubr.f32.mxu0 0.0
    %1835 = vmatmul.mubr.f32.gmra.mrb[0].mxu0 %v1715
    %v1836 = vpop.f32.mrb[0].mxu0
    %v1837 = vadd.f32 0.0, %v1836
    %v1838 = vpop.f32.mrb[0].mxu0
    %1839 = vmatprep.mubr.f32.mxu0 0.0
    %1840 = vmatmul.mubr.f32.gmra.mrb[0].mxu0 %v1718
    %v1841 = vpop.f32.mrb[0].mxu0
    %v1842 = vadd.f32 0.0, %v1841
    %v1843 = vpop.f32.mrb[0].mxu0
    %1844 = vmatprep.mubr.f32.mxu0 0.0
    %1845 = vmatmul.mubr.f32.gmra.mrb[0].mxu0 %v1721
    %v1846 = vpop.f32.mrb[0].mxu0
    %v1847 = vadd.f32 0.0, %v1846
    %v1848 = vpop.f32.mrb[0].mxu0
    %1849 = vmatprep.mubr.f32.mxu0 0.0
    %1850 = vmatmul.mubr.f32.gmra.mrb[0].mxu0 %v1724
    %v1851 = vpop.f32.mrb[0].mxu0
    %v1852 = vadd.f32 0.0, %v1851
    %v1853 = vpop.f32.mrb[0].mxu0
    %1854 = vmatprep.mubr.f32.mxu0 0.0
    %1855 = vmatmul.mubr.f32.gmra.mrb[0].mxu0 %v1727
    %v1856 = vpop.f32.mrb[0].mxu0
    %v1857 = vadd.f32 0.0, %v1856
    %v1858 = vpop.f32.mrb[0].mxu0
    %1859 = vmatprep.mubr.f32.mxu0 0.0
    %1860 = vmatmul.mubr.f32.gmra.mrb[0].mxu0 %v1730
    %v1861 = vpop.f32.mrb[0].mxu0
    %v1862 = vadd.f32 0.0, %v1861
    %v1863 = vpop.f32.mrb[0].mxu0
    %1864 = vmatprep.mubr.f32.mxu0 0.0
    %1865 = vmatmul.mubr.f32.gmra.mrb[0].mxu0 %v1733
    %v1866 = vpop.f32.mrb[0].mxu0
    %v1867 = vadd.f32 0.0, %v1866
    %v1868 = vpop.f32.mrb[0].mxu0
    %1869 = vmatprep.mubr.f32.mxu0 0.0
    %1870 = vmatmul.mubr.f32.gmra.mrb[0].mxu0 %v1736
    %v1871 = vpop.f32.mrb[0].mxu0
    %v1872 = vadd.f32 0.0, %v1871
    %v1873 = vpop.f32.mrb[0].mxu0
    %1874 = vmatprep.mubr.f32.mxu0 0.0
    %1875 = vmatmul.mubr.f32.gmra.mrb[0].mxu0 %v1739
    %v1876 = vpop.f32.mrb[0].mxu0
    %v1877 = vadd.f32 0.0, %v1876
    %v1878 = vpop.f32.mrb[0].mxu0
    %1879 = vmatprep.mubr.f32.mxu0 0.0
    %1880 = vmatmul.mubr.f32.gmra.mrb[0].mxu0 %v1742
    %v1881 = vpop.f32.mrb[0].mxu0
    %v1882 = vadd.f32 0.0, %v1881
    %v1883 = vpop.f32.mrb[0].mxu0
    %1884 = vmatprep.mubr.f32.mxu0 0.0
    %1885 = vmatmul.mubr.f32.gmra.mrb[0].mxu0 %v1745
    %v1886 = vpop.f32.mrb[0].mxu0
    %v1887 = vadd.f32 0.0, %v1886
    %v1888 = vpop.f32.mrb[0].mxu0
    %1889 = vmatprep.mubr.f32.mxu0 0.0
    %1890 = vmatmul.mubr.f32.gmra.mrb[0].mxu0 %v1748
    %v1891 = vpop.f32.mrb[0].mxu0
    %v1892 = vadd.f32 0.0, %v1891
    %v1893 = vpop.f32.mrb[0].mxu0
    %1894 = vdwg.mxu0
    %v1895 = vadd.f32 %v1665, %v1817
    %v1896 = vadd.f32 %v1666, %v1822
    %v1897 = vadd.f32 %v1667, %v1827
    %v1898 = vadd.f32 %v1668, %v1832
    %v1899 = vadd.f32 %v1669, %v1837
    %v1900 = vadd.f32 %v1670, %v1842
    %v1901 = vadd.f32 %v1671, %v1847
    %v1902 = vadd.f32 %v1672, %v1852
    %v1903 = vadd.f32 %v1673, %v1857
    %v1904 = vadd.f32 %v1674, %v1862
    %v1905 = vadd.f32 %v1675, %v1867
    %v1906 = vadd.f32 %v1676, %v1872
    %v1907 = vadd.f32 %v1677, %v1877
    %v1908 = vadd.f32 %v1678, %v1882
    %v1909 = vadd.f32 %v1679, %v1887
    %v1910 = vadd.f32 %v1680, %v1892
    %v1911 = vld [vmem:[%s1450 + $0x2] sm:$0xff]
    %v1912 = vld [vmem:[%s1450 + $0x12] sm:$0xff]
    %v1913 = vld [vmem:[%s1450 + $0x22] sm:$0xff]
    %v1914 = vld [vmem:[%s1450 + $0x32] sm:$0xff]
    %v1915 = vld [vmem:[%s1450 + $0x42] sm:$0xff]
    %v1916 = vld [vmem:[%s1450 + $0x52] sm:$0xff]
    %v1917 = vld [vmem:[%s1450 + $0x62] sm:$0xff]
    %v1918 = vld [vmem:[%s1450 + $0x72] sm:$0xff]
    %v1919 = vld [vmem:[%s1450 + $0xa2] sm:$0xff]
    %v1920 = vld [vmem:[%s1450 + $0xb2] sm:$0xff]
    %v1921 = vld [vmem:[%s1450 + $0xc2] sm:$0xff]
    %v1922 = vld [vmem:[%s1450 + $0xd2] sm:$0xff]
    %v1923 = vld [vmem:[%s1450 + $0xe2] sm:$0xff]
    %v1924 = vld [vmem:[%s1450 + $0xf2] sm:$0xff]
    %v1925 = vld [vmem:[%s1450 + $0x102] sm:$0xff]
    %v1926 = vld [vmem:[%s1450 + $0x112] sm:$0xff]
    %s1927 = scalar_lea.vmem [#allocation3], 256
    %v1928 = vld [vmem:[%s1927] sm:$0xff]
    %v1929 = vld [vmem:[%s1927 + $0x8] sm:$0xff]
    %v1930 = vld [vmem:[%s1927 + $0x10] sm:$0xff]
    %v1931 = vld [vmem:[%s1927 + $0x18] sm:$0xff]
    %v1933 = vsel %vm28, %v1911, 0
    %v1936 = vsel %vm28, %v1912, 0
    %v1939 = vsel %vm28, %v1913, 0
    %v1942 = vsel %vm28, %v1914, 0
    %v1945 = vsel %vm28, %v1915, 0
    %v1948 = vsel %vm28, %v1916, 0
    %v1951 = vsel %vm28, %v1917, 0
    %v1954 = vsel %vm28, %v1918, 0
    %v1957 = vsel %vm28, %v1919, 0
    %v1960 = vsel %vm28, %v1920, 0
    %v1963 = vsel %vm28, %v1921, 0
    %v1966 = vsel %vm28, %v1922, 0
    %v1969 = vsel %vm28, %v1923, 0
    %v1972 = vsel %vm28, %v1924, 0
    %v1975 = vsel %vm28, %v1925, 0
    %v1978 = vsel %vm28, %v1926, 0
    %1980 = vmatprep.subr.mxu0 0.0
    %1981 = vmatpush1.msra.mxu0 %v1928
    %1982 = vmatprep.subr.mxu0 0.0
    %1983 = vmatpush1.msra.mxu0 %v1929
    %1984 = vmatprep.subr.mxu0 0.0
    %1985 = vmatpush1.msra.mxu0 %v1930
    %1986 = vmatprep.subr.mxu0 0.0
    %1987 = vmatpush1.msra.mxu0 %v1931
    %1988 = vmatprep.subr.mxu0 0.0
    %1989 = vmatpush1.msra.mxu0 0.0
    %1990 = vmatprep.subr.mxu0 0.0
    %1991 = vmatpush1.msra.mxu0 0.0
    %1992 = vmatprep.subr.mxu0 0.0
    %1993 = vmatpush1.msra.mxu0 0.0
    %1994 = vmatprep.subr.mxu0 0.0
    %1995 = vmatpush1.msra.mxu0 0.0
    %1996 = vmatprep.subr.mxu0 0.0
    %1997 = vmatpush1.msra.mxu0 0.0
    %1998 = vmatprep.subr.mxu0 0.0
    %1999 = vmatpush1.msra.mxu0 0.0
    %2000 = vmatprep.subr.mxu0 0.0
    %2001 = vmatpush1.msra.mxu0 0.0
    %2002 = vmatprep.subr.mxu0 0.0
    %2003 = vmatpush1.msra.mxu0 0.0
    %2004 = vmatprep.subr.mxu0 0.0
    %2005 = vmatpush1.msra.mxu0 0.0
    %2006 = vmatprep.subr.mxu0 0.0
    %2007 = vmatpush1.msra.mxu0 0.0
    %2008 = vmatprep.subr.mxu0 0.0
    %2009 = vmatpush1.msra.mxu0 0.0
    %2010 = vmatprep.subr.mxu0 0.0
    %2011 = vmatpush1.msra.mxu0 0.0
    %2012 = vmatprep.subr.mxu0 0.0
    %2013 = vmatpush1.msra.mxu0 0.0
    %2014 = vmatprep.subr.mxu0 0.0
    %2015 = vmatpush1.msra.mxu0 0.0
    %2016 = vmatprep.subr.mxu0 0.0
    %2017 = vmatpush1.msra.mxu0 0.0
    %2018 = vmatprep.subr.mxu0 0.0
    %2019 = vmatpush1.msra.mxu0 0.0
    %2020 = vmatprep.subr.mxu0 0.0
    %2021 = vmatpush1.msra.mxu0 0.0
    %2022 = vmatprep.subr.mxu0 0.0
    %2023 = vmatpush1.msra.mxu0 0.0
    %2024 = vmatprep.subr.mxu0 0.0
    %2025 = vmatpush1.msra.mxu0 0.0
    %2026 = vmatprep.subr.mxu0 0.0
    %2027 = vmatpush1.msra.mxu0 0.0
    %2028 = vmatprep.subr.mxu0 0.0
    %2029 = vmatpush1.msra.mxu0 0.0
    %2030 = vmatprep.subr.mxu0 0.0
    %2031 = vmatpush1.msra.mxu0 0.0
    %2032 = vmatprep.subr.mxu0 0.0
    %2033 = vmatpush1.msra.mxu0 0.0
    %2034 = vmatprep.subr.mxu0 0.0
    %2035 = vmatpush1.msra.mxu0 0.0
    %2036 = vmatprep.subr.mxu0 0.0
    %2037 = vmatpush1.msra.mxu0 0.0
    %2038 = vmatprep.subr.mxu0 0.0
    %2039 = vmatpush1.msra.mxu0 0.0
    %2040 = vmatprep.subr.mxu0 0.0
    %2041 = vmatpush1.msra.mxu0 0.0
    %2042 = vmatprep.subr.mxu0 0.0
    %2043 = vmatpush1.msra.mxu0 0.0
    %2044 = vmatprep.mubr.f32.mxu0 0.0
    %2045 = vmatmul.mubr.f32.gmra.mrb[0].mxu0 %v1933
    %v2046 = vpop.f32.mrb[0].mxu0
    %v2047 = vadd.f32 0.0, %v2046
    %v2048 = vpop.f32.mrb[0].mxu0
    %2049 = vmatprep.mubr.f32.mxu0 0.0
    %2050 = vmatmul.mubr.f32.gmra.mrb[0].mxu0 %v1936
    %v2051 = vpop.f32.mrb[0].mxu0
    %v2052 = vadd.f32 0.0, %v2051
    %v2053 = vpop.f32.mrb[0].mxu0
    %2054 = vmatprep.mubr.f32.mxu0 0.0
    %2055 = vmatmul.mubr.f32.gmra.mrb[0].mxu0 %v1939
    %v2056 = vpop.f32.mrb[0].mxu0
    %v2057 = vadd.f32 0.0, %v2056
    %v2058 = vpop.f32.mrb[0].mxu0
    %2059 = vmatprep.mubr.f32.mxu0 0.0
    %2060 = vmatmul.mubr.f32.gmra.mrb[0].mxu0 %v1942
    %v2061 = vpop.f32.mrb[0].mxu0
    %v2062 = vadd.f32 0.0, %v2061
    %v2063 = vpop.f32.mrb[0].mxu0
    %2064 = vmatprep.mubr.f32.mxu0 0.0
    %2065 = vmatmul.mubr.f32.gmra.mrb[0].mxu0 %v1945
    %v2066 = vpop.f32.mrb[0].mxu0
    %v2067 = vadd.f32 0.0, %v2066
    %v2068 = vpop.f32.mrb[0].mxu0
    %2069 = vmatprep.mubr.f32.mxu0 0.0
    %2070 = vmatmul.mubr.f32.gmra.mrb[0].mxu0 %v1948
    %v2071 = vpop.f32.mrb[0].mxu0
    %v2072 = vadd.f32 0.0, %v2071
    %v2073 = vpop.f32.mrb[0].mxu0
    %2074 = vmatprep.mubr.f32.mxu0 0.0
    %2075 = vmatmul.mubr.f32.gmra.mrb[0].mxu0 %v1951
    %v2076 = vpop.f32.mrb[0].mxu0
    %v2077 = vadd.f32 0.0, %v2076
    %v2078 = vpop.f32.mrb[0].mxu0
    %2079 = vmatprep.mubr.f32.mxu0 0.0
    %2080 = vmatmul.mubr.f32.gmra.mrb[0].mxu0 %v1954
    %v2081 = vpop.f32.mrb[0].mxu0
    %v2082 = vadd.f32 0.0, %v2081
    %v2083 = vpop.f32.mrb[0].mxu0
    %2084 = vmatprep.mubr.f32.mxu0 0.0
    %2085 = vmatmul.mubr.f32.gmra.mrb[0].mxu0 %v1957
    %v2086 = vpop.f32.mrb[0].mxu0
    %v2087 = vadd.f32 0.0, %v2086
    %v2088 = vpop.f32.mrb[0].mxu0
    %2089 = vmatprep.mubr.f32.mxu0 0.0
    %2090 = vmatmul.mubr.f32.gmra.mrb[0].mxu0 %v1960
    %v2091 = vpop.f32.mrb[0].mxu0
    %v2092 = vadd.f32 0.0, %v2091
    %v2093 = vpop.f32.mrb[0].mxu0
    %2094 = vmatprep.mubr.f32.mxu0 0.0
    %2095 = vmatmul.mubr.f32.gmra.mrb[0].mxu0 %v1963
    %v2096 = vpop.f32.mrb[0].mxu0
    %v2097 = vadd.f32 0.0, %v2096
    %v2098 = vpop.f32.mrb[0].mxu0
    %2099 = vmatprep.mubr.f32.mxu0 0.0
    %2100 = vmatmul.mubr.f32.gmra.mrb[0].mxu0 %v1966
    %v2101 = vpop.f32.mrb[0].mxu0
    %v2102 = vadd.f32 0.0, %v2101
    %v2103 = vpop.f32.mrb[0].mxu0
    %2104 = vmatprep.mubr.f32.mxu0 0.0
    %2105 = vmatmul.mubr.f32.gmra.mrb[0].mxu0 %v1969
    %v2106 = vpop.f32.mrb[0].mxu0
    %v2107 = vadd.f32 0.0, %v2106
    %v2108 = vpop.f32.mrb[0].mxu0
    %2109 = vmatprep.mubr.f32.mxu0 0.0
    %2110 = vmatmul.mubr.f32.gmra.mrb[0].mxu0 %v1972
    %v2111 = vpop.f32.mrb[0].mxu0
    %v2112 = vadd.f32 0.0, %v2111
    %v2113 = vpop.f32.mrb[0].mxu0
    %2114 = vmatprep.mubr.f32.mxu0 0.0
    %2115 = vmatmul.mubr.f32.gmra.mrb[0].mxu0 %v1975
    %v2116 = vpop.f32.mrb[0].mxu0
    %v2117 = vadd.f32 0.0, %v2116
    %v2118 = vpop.f32.mrb[0].mxu0
    %2119 = vmatprep.mubr.f32.mxu0 0.0
    %2120 = vmatmul.mubr.f32.gmra.mrb[0].mxu0 %v1978
    %v2121 = vpop.f32.mrb[0].mxu0
    %v2122 = vadd.f32 0.0, %v2121
    %v2123 = vpop.f32.mrb[0].mxu0
    %2124 = vdwg.mxu0
    %v2125 = vadd.f32 %v1895, %v2047
    %v2126 = vadd.f32 %v1896, %v2052
    %v2127 = vadd.f32 %v1897, %v2057
    %v2128 = vadd.f32 %v1898, %v2062
    %v2129 = vadd.f32 %v1899, %v2067
    %v2130 = vadd.f32 %v1900, %v2072
    %v2131 = vadd.f32 %v1901, %v2077
    %v2132 = vadd.f32 %v1902, %v2082
    %v2133 = vadd.f32 %v1903, %v2087
    %v2134 = vadd.f32 %v1904, %v2092
    %v2135 = vadd.f32 %v1905, %v2097
    %v2136 = vadd.f32 %v1906, %v2102
    %v2137 = vadd.f32 %v1907, %v2107
    %v2138 = vadd.f32 %v1908, %v2112
    %v2139 = vadd.f32 %v1909, %v2117
    %v2140 = vadd.f32 %v1910, %v2122
    %v2141 = vld [vmem:[%s2] sm:$0x1]
    %v2143 = vlaneseq
    %v2144 = vshrl.u32 %v2143, 7
    %v2145 = vsub.s32 0, %v2144
    %v2146 = vrot.slane %v2141, %v2145
    %v2148 = vadd.f32 %v2125, %v2146
    %v2149 = vadd.f32 %v2126, %v2146
    %v2150 = vadd.f32 %v2127, %v2146
    %v2151 = vadd.f32 %v2128, %v2146
    %v2152 = vadd.f32 %v2129, %v2146
    %v2153 = vadd.f32 %v2130, %v2146
    %v2154 = vadd.f32 %v2131, %v2146
    %v2155 = vadd.f32 %v2132, %v2146
    %v2156 = vadd.f32 %v2133, %v2146
    %v2157 = vadd.f32 %v2134, %v2146
    %v2158 = vadd.f32 %v2135, %v2146
    %v2159 = vadd.f32 %v2136, %v2146
    %v2160 = vadd.f32 %v2137, %v2146
    %v2161 = vadd.f32 %v2138, %v2146
    %v2162 = vadd.f32 %v2139, %v2146
    %v2163 = vadd.f32 %v2140, %v2146
    %v2164 = vmax.f32 %v2148, 0.0
    %v2165 = vmax.f32 %v2149, 0.0
    %v2166 = vmax.f32 %v2150, 0.0
    %v2167 = vmax.f32 %v2151, 0.0
    %v2168 = vmax.f32 %v2152, 0.0
    %v2169 = vmax.f32 %v2153, 0.0
    %v2170 = vmax.f32 %v2154, 0.0
    %v2171 = vmax.f32 %v2155, 0.0
    %v2172 = vmax.f32 %v2156, 0.0
    %v2173 = vmax.f32 %v2157, 0.0
    %v2174 = vmax.f32 %v2158, 0.0
    %v2175 = vmax.f32 %v2159, 0.0
    %v2176 = vmax.f32 %v2160, 0.0
    %v2177 = vmax.f32 %v2161, 0.0
    %v2178 = vmax.f32 %v2162, 0.0
    %v2179 = vmax.f32 %v2163, 0.0
    %2180 = vst.msk [vmem:[%s86 + $0x1] sm:$0xff] %vm28, %v2164
    %2181 = vst.msk [vmem:[%s86 + $0x11] sm:$0xff] %vm28, %v2165
    %2182 = vst.msk [vmem:[%s86 + $0x21] sm:$0xff] %vm28, %v2166
    %2183 = vst.msk [vmem:[%s86 + $0x31] sm:$0xff] %vm28, %v2167
    %2184 = vst.msk [vmem:[%s86 + $0x41] sm:$0xff] %vm28, %v2168
    %2185 = vst.msk [vmem:[%s86 + $0x51] sm:$0xff] %vm28, %v2169
    %2186 = vst.msk [vmem:[%s86 + $0x61] sm:$0xff] %vm28, %v2170
    %2187 = vst.msk [vmem:[%s86 + $0x71] sm:$0xff] %vm28, %v2171
    %2188 = vst.msk [vmem:[%s86 + $0xa1] sm:$0xff] %vm28, %v2172
    %2189 = vst.msk [vmem:[%s86 + $0xb1] sm:$0xff] %vm28, %v2173
    %2190 = vst.msk [vmem:[%s86 + $0xc1] sm:$0xff] %vm28, %v2174
    %2191 = vst.msk [vmem:[%s86 + $0xd1] sm:$0xff] %vm28, %v2175
    %2192 = vst.msk [vmem:[%s86 + $0xe1] sm:$0xff] %vm28, %v2176
    %2193 = vst.msk [vmem:[%s86 + $0xf1] sm:$0xff] %vm28, %v2177
    %2194 = vst.msk [vmem:[%s86 + $0x101] sm:$0xff] %vm28, %v2178
    %2195 = vst.msk [vmem:[%s86 + $0x111] sm:$0xff] %vm28, %v2179
    %v2196 = vld [vmem:[#allocation2] sm:$0xff]
    %v2197 = vld [vmem:[#allocation2 + $0x10] sm:$0xff]
    %v2198 = vld [vmem:[#allocation2 + $0x20] sm:$0xff]
    %v2199 = vld [vmem:[#allocation2 + $0x30] sm:$0xff]
    %v2200 = vld [vmem:[#allocation2 + $0x40] sm:$0xff]
    %v2201 = vld [vmem:[#allocation2 + $0x50] sm:$0xff]
    %v2202 = vld [vmem:[#allocation2 + $0x60] sm:$0xff]
    %v2203 = vld [vmem:[#allocation2 + $0x70] sm:$0xff]
    %v2204 = vld [vmem:[#allocation2 + $0xa0] sm:$0xff]
    %v2205 = vld [vmem:[#allocation2 + $0xb0] sm:$0xff]
    %v2206 = vld [vmem:[#allocation2 + $0xc0] sm:$0xff]
    %v2207 = vld [vmem:[#allocation2 + $0xd0] sm:$0xff]
    %v2208 = vld [vmem:[#allocation2 + $0xe0] sm:$0xff]
    %v2209 = vld [vmem:[#allocation2 + $0xf0] sm:$0xff]
    %v2210 = vld [vmem:[#allocation2 + $0x100] sm:$0xff]
    %v2211 = vld [vmem:[#allocation2 + $0x110] sm:$0xff]
    %s2212 = scalar_lea.vmem [#allocation3], 288
    %v2213 = vld [vmem:[%s2212] sm:$0xff]
    %v2214 = vld [vmem:[%s2212 + $0x8] sm:$0xff]
    %v2215 = vld [vmem:[%s2212 + $0x10] sm:$0xff]
    %v2216 = vld [vmem:[%s2212 + $0x18] sm:$0xff]
    %v2217 = vld [vmem:[#allocation2 + $0x1] sm:$0xff]
    %v2218 = vld [vmem:[#allocation2 + $0x11] sm:$0xff]
    %v2219 = vld [vmem:[#allocation2 + $0x21] sm:$0xff]
    %v2220 = vld [vmem:[#allocation2 + $0x31] sm:$0xff]
    %v2221 = vld [vmem:[#allocation2 + $0x41] sm:$0xff]
    %v2222 = vld [vmem:[#allocation2 + $0x51] sm:$0xff]
    %v2223 = vld [vmem:[#allocation2 + $0x61] sm:$0xff]
    %v2224 = vld [vmem:[#allocation2 + $0x71] sm:$0xff]
    %v2225 = vld [vmem:[#allocation2 + $0xa1] sm:$0xff]
    %v2226 = vld [vmem:[#allocation2 + $0xb1] sm:$0xff]
    %v2227 = vld [vmem:[#allocation2 + $0xc1] sm:$0xff]
    %v2228 = vld [vmem:[#allocation2 + $0xd1] sm:$0xff]
    %v2229 = vld [vmem:[#allocation2 + $0xe1] sm:$0xff]
    %v2230 = vld [vmem:[#allocation2 + $0xf1] sm:$0xff]
    %v2231 = vld [vmem:[#allocation2 + $0x101] sm:$0xff]
    %v2232 = vld [vmem:[#allocation2 + $0x111] sm:$0xff]
    %s2233 = scalar_lea.vmem [#allocation3], 320
    %v2234 = vld [vmem:[%s2233] sm:$0xff]
    %v2235 = vld [vmem:[%s2233 + $0x8] sm:$0xff]
    %v2236 = vld [vmem:[%s2233 + $0x10] sm:$0xff]
    %v2237 = vld [vmem:[%s2233 + $0x18] sm:$0xff]
    %v2239 = vsel %vm28, %v2217, 0
    %v2242 = vsel %vm28, %v2218, 0
    %v2245 = vsel %vm28, %v2219, 0
    %v2248 = vsel %vm28, %v2220, 0
    %v2251 = vsel %vm28, %v2221, 0
    %v2254 = vsel %vm28, %v2222, 0
    %v2257 = vsel %vm28, %v2223, 0
    %v2260 = vsel %vm28, %v2224, 0
    %v2263 = vsel %vm28, %v2225, 0
    %v2266 = vsel %vm28, %v2226, 0
    %v2269 = vsel %vm28, %v2227, 0
    %v2272 = vsel %vm28, %v2228, 0
    %v2275 = vsel %vm28, %v2229, 0
    %v2278 = vsel %vm28, %v2230, 0
    %v2281 = vsel %vm28, %v2231, 0
    %v2284 = vsel %vm28, %v2232, 0
    %2286 = vmatprep.subr.mxu0 0.0
    %2287 = vmatpush1.msra.mxu0 %v2234
    %2288 = vmatprep.subr.mxu0 0.0
    %2289 = vmatpush1.msra.mxu0 %v2235
    %2290 = vmatprep.subr.mxu0 0.0
    %2291 = vmatpush1.msra.mxu0 %v2236
    %2292 = vmatprep.subr.mxu0 0.0
    %2293 = vmatpush1.msra.mxu0 %v2237
    %2294 = vmatprep.subr.mxu0 0.0
    %2295 = vmatpush1.msra.mxu0 0.0
    %2296 = vmatprep.subr.mxu0 0.0
    %2297 = vmatpush1.msra.mxu0 0.0
    %2298 = vmatprep.subr.mxu0 0.0
    %2299 = vmatpush1.msra.mxu0 0.0
    %2300 = vmatprep.subr.mxu0 0.0
    %2301 = vmatpush1.msra.mxu0 0.0
    %2302 = vmatprep.subr.mxu0 0.0
    %2303 = vmatpush1.msra.mxu0 0.0
    %2304 = vmatprep.subr.mxu0 0.0
    %2305 = vmatpush1.msra.mxu0 0.0
    %2306 = vmatprep.subr.mxu0 0.0
    %2307 = vmatpush1.msra.mxu0 0.0
    %2308 = vmatprep.subr.mxu0 0.0
    %2309 = vmatpush1.msra.mxu0 0.0
    %2310 = vmatprep.subr.mxu0 0.0
    %2311 = vmatpush1.msra.mxu0 0.0
    %2312 = vmatprep.subr.mxu0 0.0
    %2313 = vmatpush1.msra.mxu0 0.0
    %2314 = vmatprep.subr.mxu0 0.0
    %2315 = vmatpush1.msra.mxu0 0.0
    %2316 = vmatprep.subr.mxu0 0.0
    %2317 = vmatpush1.msra.mxu0 0.0
    %2318 = vmatprep.subr.mxu0 0.0
    %2319 = vmatpush1.msra.mxu0 0.0
    %2320 = vmatprep.subr.mxu0 0.0
    %2321 = vmatpush1.msra.mxu0 0.0
    %2322 = vmatprep.subr.mxu0 0.0
    %2323 = vmatpush1.msra.mxu0 0.0
    %2324 = vmatprep.subr.mxu0 0.0
    %2325 = vmatpush1.msra.mxu0 0.0
    %2326 = vmatprep.subr.mxu0 0.0
    %2327 = vmatpush1.msra.mxu0 0.0
    %2328 = vmatprep.subr.mxu0 0.0
    %2329 = vmatpush1.msra.mxu0 0.0
    %2330 = vmatprep.subr.mxu0 0.0
    %2331 = vmatpush1.msra.mxu0 0.0
    %2332 = vmatprep.subr.mxu0 0.0
    %2333 = vmatpush1.msra.mxu0 0.0
    %2334 = vmatprep.subr.mxu0 0.0
    %2335 = vmatpush1.msra.mxu0 0.0
    %2336 = vmatprep.subr.mxu0 0.0
    %2337 = vmatpush1.msra.mxu0 0.0
    %2338 = vmatprep.subr.mxu0 0.0
    %2339 = vmatpush1.msra.mxu0 0.0
    %2340 = vmatprep.subr.mxu0 0.0
    %2341 = vmatpush1.msra.mxu0 0.0
    %2342 = vmatprep.subr.mxu0 0.0
    %2343 = vmatpush1.msra.mxu0 0.0
    %2344 = vmatprep.subr.mxu0 0.0
    %2345 = vmatpush1.msra.mxu0 0.0
    %2346 = vmatprep.subr.mxu0 0.0
    %2347 = vmatpush1.msra.mxu0 0.0
    %2348 = vmatprep.subr.mxu0 0.0
    %2349 = vmatpush1.msra.mxu0 0.0
    %2350 = vmatprep.mubr.f32.mxu0 0.0
    %2351 = vmatmul.mubr.f32.gmra.mrb[0].mxu0 %v2239
    %v2352 = vpop.f32.mrb[0].mxu0
    %v2353 = vadd.f32 0.0, %v2352
    %v2354 = vpop.f32.mrb[0].mxu0
    %2355 = vmatprep.mubr.f32.mxu0 0.0
    %2356 = vmatmul.mubr.f32.gmra.mrb[0].mxu0 %v2242
    %v2357 = vpop.f32.mrb[0].mxu0
    %v2358 = vadd.f32 0.0, %v2357
    %v2359 = vpop.f32.mrb[0].mxu0
    %2360 = vmatprep.mubr.f32.mxu0 0.0
    %2361 = vmatmul.mubr.f32.gmra.mrb[0].mxu0 %v2245
    %v2362 = vpop.f32.mrb[0].mxu0
    %v2363 = vadd.f32 0.0, %v2362
    %v2364 = vpop.f32.mrb[0].mxu0
    %2365 = vmatprep.mubr.f32.mxu0 0.0
    %2366 = vmatmul.mubr.f32.gmra.mrb[0].mxu0 %v2248
    %v2367 = vpop.f32.mrb[0].mxu0
    %v2368 = vadd.f32 0.0, %v2367
    %v2369 = vpop.f32.mrb[0].mxu0
    %2370 = vmatprep.mubr.f32.mxu0 0.0
    %2371 = vmatmul.mubr.f32.gmra.mrb[0].mxu0 %v2251
    %v2372 = vpop.f32.mrb[0].mxu0
    %v2373 = vadd.f32 0.0, %v2372
    %v2374 = vpop.f32.mrb[0].mxu0
    %2375 = vmatprep.mubr.f32.mxu0 0.0
    %2376 = vmatmul.mubr.f32.gmra.mrb[0].mxu0 %v2254
    %v2377 = vpop.f32.mrb[0].mxu0
    %v2378 = vadd.f32 0.0, %v2377
    %v2379 = vpop.f32.mrb[0].mxu0
    %2380 = vmatprep.mubr.f32.mxu0 0.0
    %2381 = vmatmul.mubr.f32.gmra.mrb[0].mxu0 %v2257
    %v2382 = vpop.f32.mrb[0].mxu0
    %v2383 = vadd.f32 0.0, %v2382
    %v2384 = vpop.f32.mrb[0].mxu0
    %2385 = vmatprep.mubr.f32.mxu0 0.0
    %2386 = vmatmul.mubr.f32.gmra.mrb[0].mxu0 %v2260
    %v2387 = vpop.f32.mrb[0].mxu0
    %v2388 = vadd.f32 0.0, %v2387
    %v2389 = vpop.f32.mrb[0].mxu0
    %2390 = vmatprep.mubr.f32.mxu0 0.0
    %2391 = vmatmul.mubr.f32.gmra.mrb[0].mxu0 %v2263
    %v2392 = vpop.f32.mrb[0].mxu0
    %v2393 = vadd.f32 0.0, %v2392
    %v2394 = vpop.f32.mrb[0].mxu0
    %2395 = vmatprep.mubr.f32.mxu0 0.0
    %2396 = vmatmul.mubr.f32.gmra.mrb[0].mxu0 %v2266
    %v2397 = vpop.f32.mrb[0].mxu0
    %v2398 = vadd.f32 0.0, %v2397
    %v2399 = vpop.f32.mrb[0].mxu0
    %2400 = vmatprep.mubr.f32.mxu0 0.0
    %2401 = vmatmul.mubr.f32.gmra.mrb[0].mxu0 %v2269
    %v2402 = vpop.f32.mrb[0].mxu0
    %v2403 = vadd.f32 0.0, %v2402
    %v2404 = vpop.f32.mrb[0].mxu0
    %2405 = vmatprep.mubr.f32.mxu0 0.0
    %2406 = vmatmul.mubr.f32.gmra.mrb[0].mxu0 %v2272
    %v2407 = vpop.f32.mrb[0].mxu0
    %v2408 = vadd.f32 0.0, %v2407
    %v2409 = vpop.f32.mrb[0].mxu0
    %2410 = vmatprep.mubr.f32.mxu0 0.0
    %2411 = vmatmul.mubr.f32.gmra.mrb[0].mxu0 %v2275
    %v2412 = vpop.f32.mrb[0].mxu0
    %v2413 = vadd.f32 0.0, %v2412
    %v2414 = vpop.f32.mrb[0].mxu0
    %2415 = vmatprep.mubr.f32.mxu0 0.0
    %2416 = vmatmul.mubr.f32.gmra.mrb[0].mxu0 %v2278
    %v2417 = vpop.f32.mrb[0].mxu0
    %v2418 = vadd.f32 0.0, %v2417
    %v2419 = vpop.f32.mrb[0].mxu0
    %2420 = vmatprep.mubr.f32.mxu0 0.0
    %2421 = vmatmul.mubr.f32.gmra.mrb[0].mxu0 %v2281
    %v2422 = vpop.f32.mrb[0].mxu0
    %v2423 = vadd.f32 0.0, %v2422
    %v2424 = vpop.f32.mrb[0].mxu0
    %2425 = vmatprep.mubr.f32.mxu0 0.0
    %2426 = vmatmul.mubr.f32.gmra.mrb[0].mxu0 %v2284
    %v2427 = vpop.f32.mrb[0].mxu0
    %v2428 = vadd.f32 0.0, %v2427
    %v2429 = vpop.f32.mrb[0].mxu0
    %2430 = vdwg.mxu0
    %v2432 = vsel %vm28, %v2196, 0
    %v2435 = vsel %vm28, %v2197, 0
    %v2438 = vsel %vm28, %v2198, 0
    %v2441 = vsel %vm28, %v2199, 0
    %v2444 = vsel %vm28, %v2200, 0
    %v2447 = vsel %vm28, %v2201, 0
    %v2450 = vsel %vm28, %v2202, 0
    %v2453 = vsel %vm28, %v2203, 0
    %v2456 = vsel %vm28, %v2204, 0
    %v2459 = vsel %vm28, %v2205, 0
    %v2462 = vsel %vm28, %v2206, 0
    %v2465 = vsel %vm28, %v2207, 0
    %v2468 = vsel %vm28, %v2208, 0
    %v2471 = vsel %vm28, %v2209, 0
    %v2474 = vsel %vm28, %v2210, 0
    %v2477 = vsel %vm28, %v2211, 0
    %2479 = vmatprep.subr.mxu0 0.0
    %2480 = vmatpush1.msra.mxu0 %v2213
    %2481 = vmatprep.subr.mxu0 0.0
    %2482 = vmatpush1.msra.mxu0 %v2214
    %2483 = vmatprep.subr.mxu0 0.0
    %2484 = vmatpush1.msra.mxu0 %v2215
    %2485 = vmatprep.subr.mxu0 0.0
    %2486 = vmatpush1.msra.mxu0 %v2216
    %2487 = vmatprep.subr.mxu0 0.0
    %2488 = vmatpush1.msra.mxu0 0.0
    %2489 = vmatprep.subr.mxu0 0.0
    %2490 = vmatpush1.msra.mxu0 0.0
    %2491 = vmatprep.subr.mxu0 0.0
    %2492 = vmatpush1.msra.mxu0 0.0
    %2493 = vmatprep.subr.mxu0 0.0
    %2494 = vmatpush1.msra.mxu0 0.0
    %2495 = vmatprep.subr.mxu0 0.0
    %2496 = vmatpush1.msra.mxu0 0.0
    %2497 = vmatprep.subr.mxu0 0.0
    %2498 = vmatpush1.msra.mxu0 0.0
    %2499 = vmatprep.subr.mxu0 0.0
    %2500 = vmatpush1.msra.mxu0 0.0
    %2501 = vmatprep.subr.mxu0 0.0
    %2502 = vmatpush1.msra.mxu0 0.0
    %2503 = vmatprep.subr.mxu0 0.0
    %2504 = vmatpush1.msra.mxu0 0.0
    %2505 = vmatprep.subr.mxu0 0.0
    %2506 = vmatpush1.msra.mxu0 0.0
    %2507 = vmatprep.subr.mxu0 0.0
    %2508 = vmatpush1.msra.mxu0 0.0
    %2509 = vmatprep.subr.mxu0 0.0
    %2510 = vmatpush1.msra.mxu0 0.0
    %2511 = vmatprep.subr.mxu0 0.0
    %2512 = vmatpush1.msra.mxu0 0.0
    %2513 = vmatprep.subr.mxu0 0.0
    %2514 = vmatpush1.msra.mxu0 0.0
    %2515 = vmatprep.subr.mxu0 0.0
    %2516 = vmatpush1.msra.mxu0 0.0
    %2517 = vmatprep.subr.mxu0 0.0
    %2518 = vmatpush1.msra.mxu0 0.0
    %2519 = vmatprep.subr.mxu0 0.0
    %2520 = vmatpush1.msra.mxu0 0.0
    %2521 = vmatprep.subr.mxu0 0.0
    %2522 = vmatpush1.msra.mxu0 0.0
    %2523 = vmatprep.subr.mxu0 0.0
    %2524 = vmatpush1.msra.mxu0 0.0
    %2525 = vmatprep.subr.mxu0 0.0
    %2526 = vmatpush1.msra.mxu0 0.0
    %2527 = vmatprep.subr.mxu0 0.0
    %2528 = vmatpush1.msra.mxu0 0.0
    %2529 = vmatprep.subr.mxu0 0.0
    %2530 = vmatpush1.msra.mxu0 0.0
    %2531 = vmatprep.subr.mxu0 0.0
    %2532 = vmatpush1.msra.mxu0 0.0
    %2533 = vmatprep.subr.mxu0 0.0
    %2534 = vmatpush1.msra.mxu0 0.0
    %2535 = vmatprep.subr.mxu0 0.0
    %2536 = vmatpush1.msra.mxu0 0.0
    %2537 = vmatprep.subr.mxu0 0.0
    %2538 = vmatpush1.msra.mxu0 0.0
    %2539 = vmatprep.subr.mxu0 0.0
    %2540 = vmatpush1.msra.mxu0 0.0
    %2541 = vmatprep.subr.mxu0 0.0
    %2542 = vmatpush1.msra.mxu0 0.0
    %2543 = vmatprep.mubr.f32.mxu0 0.0
    %2544 = vmatmul.mubr.f32.gmra.mrb[0].mxu0 %v2432
    %v2545 = vpop.f32.mrb[0].mxu0
    %v2546 = vadd.f32 %v2353, %v2545
    %v2547 = vpop.f32.mrb[0].mxu0
    %2548 = vmatprep.mubr.f32.mxu0 0.0
    %2549 = vmatmul.mubr.f32.gmra.mrb[0].mxu0 %v2435
    %v2550 = vpop.f32.mrb[0].mxu0
    %v2551 = vadd.f32 %v2358, %v2550
    %v2552 = vpop.f32.mrb[0].mxu0
    %2553 = vmatprep.mubr.f32.mxu0 0.0
    %2554 = vmatmul.mubr.f32.gmra.mrb[0].mxu0 %v2438
    %v2555 = vpop.f32.mrb[0].mxu0
    %v2556 = vadd.f32 %v2363, %v2555
    %v2557 = vpop.f32.mrb[0].mxu0
    %2558 = vmatprep.mubr.f32.mxu0 0.0
    %2559 = vmatmul.mubr.f32.gmra.mrb[0].mxu0 %v2441
    %v2560 = vpop.f32.mrb[0].mxu0
    %v2561 = vadd.f32 %v2368, %v2560
    %v2562 = vpop.f32.mrb[0].mxu0
    %2563 = vmatprep.mubr.f32.mxu0 0.0
    %2564 = vmatmul.mubr.f32.gmra.mrb[0].mxu0 %v2444
    %v2565 = vpop.f32.mrb[0].mxu0
    %v2566 = vadd.f32 %v2373, %v2565
    %v2567 = vpop.f32.mrb[0].mxu0
    %2568 = vmatprep.mubr.f32.mxu0 0.0
    %2569 = vmatmul.mubr.f32.gmra.mrb[0].mxu0 %v2447
    %v2570 = vpop.f32.mrb[0].mxu0
    %v2571 = vadd.f32 %v2378, %v2570
    %v2572 = vpop.f32.mrb[0].mxu0
    %2573 = vmatprep.mubr.f32.mxu0 0.0
    %2574 = vmatmul.mubr.f32.gmra.mrb[0].mxu0 %v2450
    %v2575 = vpop.f32.mrb[0].mxu0
    %v2576 = vadd.f32 %v2383, %v2575
    %v2577 = vpop.f32.mrb[0].mxu0
    %2578 = vmatprep.mubr.f32.mxu0 0.0
    %2579 = vmatmul.mubr.f32.gmra.mrb[0].mxu0 %v2453
    %v2580 = vpop.f32.mrb[0].mxu0
    %v2581 = vadd.f32 %v2388, %v2580
    %v2582 = vpop.f32.mrb[0].mxu0
    %2583 = vmatprep.mubr.f32.mxu0 0.0
    %2584 = vmatmul.mubr.f32.gmra.mrb[0].mxu0 %v2456
    %v2585 = vpop.f32.mrb[0].mxu0
    %v2586 = vadd.f32 %v2393, %v2585
    %v2587 = vpop.f32.mrb[0].mxu0
    %2588 = vmatprep.mubr.f32.mxu0 0.0
    %2589 = vmatmul.mubr.f32.gmra.mrb[0].mxu0 %v2459
    %v2590 = vpop.f32.mrb[0].mxu0
    %v2591 = vadd.f32 %v2398, %v2590
    %v2592 = vpop.f32.mrb[0].mxu0
    %2593 = vmatprep.mubr.f32.mxu0 0.0
    %2594 = vmatmul.mubr.f32.gmra.mrb[0].mxu0 %v2462
    %v2595 = vpop.f32.mrb[0].mxu0
    %v2596 = vadd.f32 %v2403, %v2595
    %v2597 = vpop.f32.mrb[0].mxu0
    %2598 = vmatprep.mubr.f32.mxu0 0.0
    %2599 = vmatmul.mubr.f32.gmra.mrb[0].mxu0 %v2465
    %v2600 = vpop.f32.mrb[0].mxu0
    %v2601 = vadd.f32 %v2408, %v2600
    %v2602 = vpop.f32.mrb[0].mxu0
    %2603 = vmatprep.mubr.f32.mxu0 0.0
    %2604 = vmatmul.mubr.f32.gmra.mrb[0].mxu0 %v2468
    %v2605 = vpop.f32.mrb[0].mxu0
    %v2606 = vadd.f32 %v2413, %v2605
    %v2607 = vpop.f32.mrb[0].mxu0
    %2608 = vmatprep.mubr.f32.mxu0 0.0
    %2609 = vmatmul.mubr.f32.gmra.mrb[0].mxu0 %v2471
    %v2610 = vpop.f32.mrb[0].mxu0
    %v2611 = vadd.f32 %v2418, %v2610
    %v2612 = vpop.f32.mrb[0].mxu0
    %2613 = vmatprep.mubr.f32.mxu0 0.0
    %2614 = vmatmul.mubr.f32.gmra.mrb[0].mxu0 %v2474
    %v2615 = vpop.f32.mrb[0].mxu0
    %v2616 = vadd.f32 %v2423, %v2615
    %v2617 = vpop.f32.mrb[0].mxu0
    %2618 = vmatprep.mubr.f32.mxu0 0.0
    %2619 = vmatmul.mubr.f32.gmra.mrb[0].mxu0 %v2477
    %v2620 = vpop.f32.mrb[0].mxu0
    %v2621 = vadd.f32 %v2428, %v2620
    %v2622 = vpop.f32.mrb[0].mxu0
    %2623 = vdwg.mxu0
    %v2624 = vld [vmem:[#allocation2 + $0x2] sm:$0xff]
    %v2625 = vld [vmem:[#allocation2 + $0x12] sm:$0xff]
    %v2626 = vld [vmem:[#allocation2 + $0x22] sm:$0xff]
    %v2627 = vld [vmem:[#allocation2 + $0x32] sm:$0xff]
    %v2628 = vld [vmem:[#allocation2 + $0x42] sm:$0xff]
    %v2629 = vld [vmem:[#allocation2 + $0x52] sm:$0xff]
    %v2630 = vld [vmem:[#allocation2 + $0x62] sm:$0xff]
    %v2631 = vld [vmem:[#allocation2 + $0x72] sm:$0xff]
    %v2632 = vld [vmem:[#allocation2 + $0xa2] sm:$0xff]
    %v2633 = vld [vmem:[#allocation2 + $0xb2] sm:$0xff]
    %v2634 = vld [vmem:[#allocation2 + $0xc2] sm:$0xff]
    %v2635 = vld [vmem:[#allocation2 + $0xd2] sm:$0xff]
    %v2636 = vld [vmem:[#allocation2 + $0xe2] sm:$0xff]
    %v2637 = vld [vmem:[#allocation2 + $0xf2] sm:$0xff]
    %v2638 = vld [vmem:[#allocation2 + $0x102] sm:$0xff]
    %v2639 = vld [vmem:[#allocation2 + $0x112] sm:$0xff]
    %s2640 = scalar_lea.vmem [#allocation3], 352
    %v2641 = vld [vmem:[%s2640] sm:$0xff]
    %v2642 = vld [vmem:[%s2640 + $0x8] sm:$0xff]
    %v2643 = vld [vmem:[%s2640 + $0x10] sm:$0xff]
    %v2644 = vld [vmem:[%s2640 + $0x18] sm:$0xff]
    %v2646 = vsel %vm28, %v2624, 0
    %v2649 = vsel %vm28, %v2625, 0
    %v2652 = vsel %vm28, %v2626, 0
    %v2655 = vsel %vm28, %v2627, 0
    %v2658 = vsel %vm28, %v2628, 0
    %v2661 = vsel %vm28, %v2629, 0
    %v2664 = vsel %vm28, %v2630, 0
    %v2667 = vsel %vm28, %v2631, 0
    %v2670 = vsel %vm28, %v2632, 0
    %v2673 = vsel %vm28, %v2633, 0
    %v2676 = vsel %vm28, %v2634, 0
    %v2679 = vsel %vm28, %v2635, 0
    %v2682 = vsel %vm28, %v2636, 0
    %v2685 = vsel %vm28, %v2637, 0
    %v2688 = vsel %vm28, %v2638, 0
    %v2691 = vsel %vm28, %v2639, 0
    %2693 = vmatprep.subr.mxu0 0.0
    %2694 = vmatpush1.msra.mxu0 %v2641
    %2695 = vmatprep.subr.mxu0 0.0
    %2696 = vmatpush1.msra.mxu0 %v2642
    %2697 = vmatprep.subr.mxu0 0.0
    %2698 = vmatpush1.msra.mxu0 %v2643
    %2699 = vmatprep.subr.mxu0 0.0
    %2700 = vmatpush1.msra.mxu0 %v2644
    %2701 = vmatprep.subr.mxu0 0.0
    %2702 = vmatpush1.msra.mxu0 0.0
    %2703 = vmatprep.subr.mxu0 0.0
    %2704 = vmatpush1.msra.mxu0 0.0
    %2705 = vmatprep.subr.mxu0 0.0
    %2706 = vmatpush1.msra.mxu0 0.0
    %2707 = vmatprep.subr.mxu0 0.0
    %2708 = vmatpush1.msra.mxu0 0.0
    %2709 = vmatprep.subr.mxu0 0.0
    %2710 = vmatpush1.msra.mxu0 0.0
    %2711 = vmatprep.subr.mxu0 0.0
    %2712 = vmatpush1.msra.mxu0 0.0
    %2713 = vmatprep.subr.mxu0 0.0
    %2714 = vmatpush1.msra.mxu0 0.0
    %2715 = vmatprep.subr.mxu0 0.0
    %2716 = vmatpush1.msra.mxu0 0.0
    %2717 = vmatprep.subr.mxu0 0.0
    %2718 = vmatpush1.msra.mxu0 0.0
    %2719 = vmatprep.subr.mxu0 0.0
    %2720 = vmatpush1.msra.mxu0 0.0
    %2721 = vmatprep.subr.mxu0 0.0
    %2722 = vmatpush1.msra.mxu0 0.0
    %2723 = vmatprep.subr.mxu0 0.0
    %2724 = vmatpush1.msra.mxu0 0.0
    %2725 = vmatprep.subr.mxu0 0.0
    %2726 = vmatpush1.msra.mxu0 0.0
    %2727 = vmatprep.subr.mxu0 0.0
    %2728 = vmatpush1.msra.mxu0 0.0
    %2729 = vmatprep.subr.mxu0 0.0
    %2730 = vmatpush1.msra.mxu0 0.0
    %2731 = vmatprep.subr.mxu0 0.0
    %2732 = vmatpush1.msra.mxu0 0.0
    %2733 = vmatprep.subr.mxu0 0.0
    %2734 = vmatpush1.msra.mxu0 0.0
    %2735 = vmatprep.subr.mxu0 0.0
    %2736 = vmatpush1.msra.mxu0 0.0
    %2737 = vmatprep.subr.mxu0 0.0
    %2738 = vmatpush1.msra.mxu0 0.0
    %2739 = vmatprep.subr.mxu0 0.0
    %2740 = vmatpush1.msra.mxu0 0.0
    %2741 = vmatprep.subr.mxu0 0.0
    %2742 = vmatpush1.msra.mxu0 0.0
    %2743 = vmatprep.subr.mxu0 0.0
    %2744 = vmatpush1.msra.mxu0 0.0
    %2745 = vmatprep.subr.mxu0 0.0
    %2746 = vmatpush1.msra.mxu0 0.0
    %2747 = vmatprep.subr.mxu0 0.0
    %2748 = vmatpush1.msra.mxu0 0.0
    %2749 = vmatprep.subr.mxu0 0.0
    %2750 = vmatpush1.msra.mxu0 0.0
    %2751 = vmatprep.subr.mxu0 0.0
    %2752 = vmatpush1.msra.mxu0 0.0
    %2753 = vmatprep.subr.mxu0 0.0
    %2754 = vmatpush1.msra.mxu0 0.0
    %2755 = vmatprep.subr.mxu0 0.0
    %2756 = vmatpush1.msra.mxu0 0.0
    %2757 = vmatprep.mubr.f32.mxu0 0.0
    %2758 = vmatmul.mubr.f32.gmra.mrb[0].mxu0 %v2646
    %v2759 = vpop.f32.mrb[0].mxu0
    %v2760 = vadd.f32 0.0, %v2759
    %v2761 = vpop.f32.mrb[0].mxu0
    %2762 = vmatprep.mubr.f32.mxu0 0.0
    %2763 = vmatmul.mubr.f32.gmra.mrb[0].mxu0 %v2649
    %v2764 = vpop.f32.mrb[0].mxu0
    %v2765 = vadd.f32 0.0, %v2764
    %v2766 = vpop.f32.mrb[0].mxu0
    %2767 = vmatprep.mubr.f32.mxu0 0.0
    %2768 = vmatmul.mubr.f32.gmra.mrb[0].mxu0 %v2652
    %v2769 = vpop.f32.mrb[0].mxu0
    %v2770 = vadd.f32 0.0, %v2769
    %v2771 = vpop.f32.mrb[0].mxu0
    %2772 = vmatprep.mubr.f32.mxu0 0.0
    %2773 = vmatmul.mubr.f32.gmra.mrb[0].mxu0 %v2655
    %v2774 = vpop.f32.mrb[0].mxu0
    %v2775 = vadd.f32 0.0, %v2774
    %v2776 = vpop.f32.mrb[0].mxu0
    %2777 = vmatprep.mubr.f32.mxu0 0.0
    %2778 = vmatmul.mubr.f32.gmra.mrb[0].mxu0 %v2658
    %v2779 = vpop.f32.mrb[0].mxu0
    %v2780 = vadd.f32 0.0, %v2779
    %v2781 = vpop.f32.mrb[0].mxu0
    %2782 = vmatprep.mubr.f32.mxu0 0.0
    %2783 = vmatmul.mubr.f32.gmra.mrb[0].mxu0 %v2661
    %v2784 = vpop.f32.mrb[0].mxu0
    %v2785 = vadd.f32 0.0, %v2784
    %v2786 = vpop.f32.mrb[0].mxu0
    %2787 = vmatprep.mubr.f32.mxu0 0.0
    %2788 = vmatmul.mubr.f32.gmra.mrb[0].mxu0 %v2664
    %v2789 = vpop.f32.mrb[0].mxu0
    %v2790 = vadd.f32 0.0, %v2789
    %v2791 = vpop.f32.mrb[0].mxu0
    %2792 = vmatprep.mubr.f32.mxu0 0.0
    %2793 = vmatmul.mubr.f32.gmra.mrb[0].mxu0 %v2667
    %v2794 = vpop.f32.mrb[0].mxu0
    %v2795 = vadd.f32 0.0, %v2794
    %v2796 = vpop.f32.mrb[0].mxu0
    %2797 = vmatprep.mubr.f32.mxu0 0.0
    %2798 = vmatmul.mubr.f32.gmra.mrb[0].mxu0 %v2670
    %v2799 = vpop.f32.mrb[0].mxu0
    %v2800 = vadd.f32 0.0, %v2799
    %v2801 = vpop.f32.mrb[0].mxu0
    %2802 = vmatprep.mubr.f32.mxu0 0.0
    %2803 = vmatmul.mubr.f32.gmra.mrb[0].mxu0 %v2673
    %v2804 = vpop.f32.mrb[0].mxu0
    %v2805 = vadd.f32 0.0, %v2804
    %v2806 = vpop.f32.mrb[0].mxu0
    %2807 = vmatprep.mubr.f32.mxu0 0.0
    %2808 = vmatmul.mubr.f32.gmra.mrb[0].mxu0 %v2676
    %v2809 = vpop.f32.mrb[0].mxu0
    %v2810 = vadd.f32 0.0, %v2809
    %v2811 = vpop.f32.mrb[0].mxu0
    %2812 = vmatprep.mubr.f32.mxu0 0.0
    %2813 = vmatmul.mubr.f32.gmra.mrb[0].mxu0 %v2679
    %v2814 = vpop.f32.mrb[0].mxu0
    %v2815 = vadd.f32 0.0, %v2814
    %v2816 = vpop.f32.mrb[0].mxu0
    %2817 = vmatprep.mubr.f32.mxu0 0.0
    %2818 = vmatmul.mubr.f32.gmra.mrb[0].mxu0 %v2682
    %v2819 = vpop.f32.mrb[0].mxu0
    %v2820 = vadd.f32 0.0, %v2819
    %v2821 = vpop.f32.mrb[0].mxu0
    %2822 = vmatprep.mubr.f32.mxu0 0.0
    %2823 = vmatmul.mubr.f32.gmra.mrb[0].mxu0 %v2685
    %v2824 = vpop.f32.mrb[0].mxu0
    %v2825 = vadd.f32 0.0, %v2824
    %v2826 = vpop.f32.mrb[0].mxu0
    %2827 = vmatprep.mubr.f32.mxu0 0.0
    %2828 = vmatmul.mubr.f32.gmra.mrb[0].mxu0 %v2688
    %v2829 = vpop.f32.mrb[0].mxu0
    %v2830 = vadd.f32 0.0, %v2829
    %v2831 = vpop.f32.mrb[0].mxu0
    %2832 = vmatprep.mubr.f32.mxu0 0.0
    %2833 = vmatmul.mubr.f32.gmra.mrb[0].mxu0 %v2691
    %v2834 = vpop.f32.mrb[0].mxu0
    %v2835 = vadd.f32 0.0, %v2834
    %v2836 = vpop.f32.mrb[0].mxu0
    %2837 = vdwg.mxu0
    %v2838 = vadd.f32 %v2546, %v2760
    %v2839 = vadd.f32 %v2551, %v2765
    %v2840 = vadd.f32 %v2556, %v2770
    %v2841 = vadd.f32 %v2561, %v2775
    %v2842 = vadd.f32 %v2566, %v2780
    %v2843 = vadd.f32 %v2571, %v2785
    %v2844 = vadd.f32 %v2576, %v2790
    %v2845 = vadd.f32 %v2581, %v2795
    %v2846 = vadd.f32 %v2586, %v2800
    %v2847 = vadd.f32 %v2591, %v2805
    %v2848 = vadd.f32 %v2596, %v2810
    %v2849 = vadd.f32 %v2601, %v2815
    %v2850 = vadd.f32 %v2606, %v2820
    %v2851 = vadd.f32 %v2611, %v2825
    %v2852 = vadd.f32 %v2616, %v2830
    %v2853 = vadd.f32 %v2621, %v2835
    %v2854 = vld [vmem:[%s86] sm:$0xff]
    %v2855 = vld [vmem:[%s86 + $0x10] sm:$0xff]
    %v2856 = vld [vmem:[%s86 + $0x20] sm:$0xff]
    %v2857 = vld [vmem:[%s86 + $0x30] sm:$0xff]
    %v2858 = vld [vmem:[%s86 + $0x40] sm:$0xff]
    %v2859 = vld [vmem:[%s86 + $0x50] sm:$0xff]
    %v2860 = vld [vmem:[%s86 + $0x60] sm:$0xff]
    %v2861 = vld [vmem:[%s86 + $0x70] sm:$0xff]
    %v2862 = vld [vmem:[%s86 + $0xa0] sm:$0xff]
    %v2863 = vld [vmem:[%s86 + $0xb0] sm:$0xff]
    %v2864 = vld [vmem:[%s86 + $0xc0] sm:$0xff]
    %v2865 = vld [vmem:[%s86 + $0xd0] sm:$0xff]
    %v2866 = vld [vmem:[%s86 + $0xe0] sm:$0xff]
    %v2867 = vld [vmem:[%s86 + $0xf0] sm:$0xff]
    %v2868 = vld [vmem:[%s86 + $0x100] sm:$0xff]
    %v2869 = vld [vmem:[%s86 + $0x110] sm:$0xff]
    %s2870 = scalar_lea.vmem [#allocation3], 384
    %v2871 = vld [vmem:[%s2870] sm:$0xff]
    %v2872 = vld [vmem:[%s2870 + $0x8] sm:$0xff]
    %v2873 = vld [vmem:[%s2870 + $0x10] sm:$0xff]
    %v2874 = vld [vmem:[%s2870 + $0x18] sm:$0xff]
    %v2876 = vsel %vm28, %v2854, 0
    %v2879 = vsel %vm28, %v2855, 0
    %v2882 = vsel %vm28, %v2856, 0
    %v2885 = vsel %vm28, %v2857, 0
    %v2888 = vsel %vm28, %v2858, 0
    %v2891 = vsel %vm28, %v2859, 0
    %v2894 = vsel %vm28, %v2860, 0
    %v2897 = vsel %vm28, %v2861, 0
    %v2900 = vsel %vm28, %v2862, 0
    %v2903 = vsel %vm28, %v2863, 0
    %v2906 = vsel %vm28, %v2864, 0
    %v2909 = vsel %vm28, %v2865, 0
    %v2912 = vsel %vm28, %v2866, 0
    %v2915 = vsel %vm28, %v2867, 0
    %v2918 = vsel %vm28, %v2868, 0
    %v2921 = vsel %vm28, %v2869, 0
    %2923 = vmatprep.subr.mxu0 0.0
    %2924 = vmatpush1.msra.mxu0 %v2871
    %2925 = vmatprep.subr.mxu0 0.0
    %2926 = vmatpush1.msra.mxu0 %v2872
    %2927 = vmatprep.subr.mxu0 0.0
    %2928 = vmatpush1.msra.mxu0 %v2873
    %2929 = vmatprep.subr.mxu0 0.0
    %2930 = vmatpush1.msra.mxu0 %v2874
    %2931 = vmatprep.subr.mxu0 0.0
    %2932 = vmatpush1.msra.mxu0 0.0
    %2933 = vmatprep.subr.mxu0 0.0
    %2934 = vmatpush1.msra.mxu0 0.0
    %2935 = vmatprep.subr.mxu0 0.0
    %2936 = vmatpush1.msra.mxu0 0.0
    %2937 = vmatprep.subr.mxu0 0.0
    %2938 = vmatpush1.msra.mxu0 0.0
    %2939 = vmatprep.subr.mxu0 0.0
    %2940 = vmatpush1.msra.mxu0 0.0
    %2941 = vmatprep.subr.mxu0 0.0
    %2942 = vmatpush1.msra.mxu0 0.0
    %2943 = vmatprep.subr.mxu0 0.0
    %2944 = vmatpush1.msra.mxu0 0.0
    %2945 = vmatprep.subr.mxu0 0.0
    %2946 = vmatpush1.msra.mxu0 0.0
    %2947 = vmatprep.subr.mxu0 0.0
    %2948 = vmatpush1.msra.mxu0 0.0
    %2949 = vmatprep.subr.mxu0 0.0
    %2950 = vmatpush1.msra.mxu0 0.0
    %2951 = vmatprep.subr.mxu0 0.0
    %2952 = vmatpush1.msra.mxu0 0.0
    %2953 = vmatprep.subr.mxu0 0.0
    %2954 = vmatpush1.msra.mxu0 0.0
    %2955 = vmatprep.subr.mxu0 0.0
    %2956 = vmatpush1.msra.mxu0 0.0
    %2957 = vmatprep.subr.mxu0 0.0
    %2958 = vmatpush1.msra.mxu0 0.0
    %2959 = vmatprep.subr.mxu0 0.0
    %2960 = vmatpush1.msra.mxu0 0.0
    %2961 = vmatprep.subr.mxu0 0.0
    %2962 = vmatpush1.msra.mxu0 0.0
    %2963 = vmatprep.subr.mxu0 0.0
    %2964 = vmatpush1.msra.mxu0 0.0
    %2965 = vmatprep.subr.mxu0 0.0
    %2966 = vmatpush1.msra.mxu0 0.0
    %2967 = vmatprep.subr.mxu0 0.0
    %2968 = vmatpush1.msra.mxu0 0.0
    %2969 = vmatprep.subr.mxu0 0.0
    %2970 = vmatpush1.msra.mxu0 0.0
    %2971 = vmatprep.subr.mxu0 0.0
    %2972 = vmatpush1.msra.mxu0 0.0
    %2973 = vmatprep.subr.mxu0 0.0
    %2974 = vmatpush1.msra.mxu0 0.0
    %2975 = vmatprep.subr.mxu0 0.0
    %2976 = vmatpush1.msra.mxu0 0.0
    %2977 = vmatprep.subr.mxu0 0.0
    %2978 = vmatpush1.msra.mxu0 0.0
    %2979 = vmatprep.subr.mxu0 0.0
    %2980 = vmatpush1.msra.mxu0 0.0
    %2981 = vmatprep.subr.mxu0 0.0
    %2982 = vmatpush1.msra.mxu0 0.0
    %2983 = vmatprep.subr.mxu0 0.0
    %2984 = vmatpush1.msra.mxu0 0.0
    %2985 = vmatprep.subr.mxu0 0.0
    %2986 = vmatpush1.msra.mxu0 0.0
    %2987 = vmatprep.mubr.f32.mxu0 0.0
    %2988 = vmatmul.mubr.f32.gmra.mrb[0].mxu0 %v2876
    %v2989 = vpop.f32.mrb[0].mxu0
    %v2990 = vadd.f32 0.0, %v2989
    %v2991 = vpop.f32.mrb[0].mxu0
    %2992 = vmatprep.mubr.f32.mxu0 0.0
    %2993 = vmatmul.mubr.f32.gmra.mrb[0].mxu0 %v2879
    %v2994 = vpop.f32.mrb[0].mxu0
    %v2995 = vadd.f32 0.0, %v2994
    %v2996 = vpop.f32.mrb[0].mxu0
    %2997 = vmatprep.mubr.f32.mxu0 0.0
    %2998 = vmatmul.mubr.f32.gmra.mrb[0].mxu0 %v2882
    %v2999 = vpop.f32.mrb[0].mxu0
    %v3000 = vadd.f32 0.0, %v2999
    %v3001 = vpop.f32.mrb[0].mxu0
    %3002 = vmatprep.mubr.f32.mxu0 0.0
    %3003 = vmatmul.mubr.f32.gmra.mrb[0].mxu0 %v2885
    %v3004 = vpop.f32.mrb[0].mxu0
    %v3005 = vadd.f32 0.0, %v3004
    %v3006 = vpop.f32.mrb[0].mxu0
    %3007 = vmatprep.mubr.f32.mxu0 0.0
    %3008 = vmatmul.mubr.f32.gmra.mrb[0].mxu0 %v2888
    %v3009 = vpop.f32.mrb[0].mxu0
    %v3010 = vadd.f32 0.0, %v3009
    %v3011 = vpop.f32.mrb[0].mxu0
    %3012 = vmatprep.mubr.f32.mxu0 0.0
    %3013 = vmatmul.mubr.f32.gmra.mrb[0].mxu0 %v2891
    %v3014 = vpop.f32.mrb[0].mxu0
    %v3015 = vadd.f32 0.0, %v3014
    %v3016 = vpop.f32.mrb[0].mxu0
    %3017 = vmatprep.mubr.f32.mxu0 0.0
    %3018 = vmatmul.mubr.f32.gmra.mrb[0].mxu0 %v2894
    %v3019 = vpop.f32.mrb[0].mxu0
    %v3020 = vadd.f32 0.0, %v3019
    %v3021 = vpop.f32.mrb[0].mxu0
    %3022 = vmatprep.mubr.f32.mxu0 0.0
    %3023 = vmatmul.mubr.f32.gmra.mrb[0].mxu0 %v2897
    %v3024 = vpop.f32.mrb[0].mxu0
    %v3025 = vadd.f32 0.0, %v3024
    %v3026 = vpop.f32.mrb[0].mxu0
    %3027 = vmatprep.mubr.f32.mxu0 0.0
    %3028 = vmatmul.mubr.f32.gmra.mrb[0].mxu0 %v2900
    %v3029 = vpop.f32.mrb[0].mxu0
    %v3030 = vadd.f32 0.0, %v3029
    %v3031 = vpop.f32.mrb[0].mxu0
    %3032 = vmatprep.mubr.f32.mxu0 0.0
    %3033 = vmatmul.mubr.f32.gmra.mrb[0].mxu0 %v2903
    %v3034 = vpop.f32.mrb[0].mxu0
    %v3035 = vadd.f32 0.0, %v3034
    %v3036 = vpop.f32.mrb[0].mxu0
    %3037 = vmatprep.mubr.f32.mxu0 0.0
    %3038 = vmatmul.mubr.f32.gmra.mrb[0].mxu0 %v2906
    %v3039 = vpop.f32.mrb[0].mxu0
    %v3040 = vadd.f32 0.0, %v3039
    %v3041 = vpop.f32.mrb[0].mxu0
    %3042 = vmatprep.mubr.f32.mxu0 0.0
    %3043 = vmatmul.mubr.f32.gmra.mrb[0].mxu0 %v2909
    %v3044 = vpop.f32.mrb[0].mxu0
    %v3045 = vadd.f32 0.0, %v3044
    %v3046 = vpop.f32.mrb[0].mxu0
    %3047 = vmatprep.mubr.f32.mxu0 0.0
    %3048 = vmatmul.mubr.f32.gmra.mrb[0].mxu0 %v2912
    %v3049 = vpop.f32.mrb[0].mxu0
    %v3050 = vadd.f32 0.0, %v3049
    %v3051 = vpop.f32.mrb[0].mxu0
    %3052 = vmatprep.mubr.f32.mxu0 0.0
    %3053 = vmatmul.mubr.f32.gmra.mrb[0].mxu0 %v2915
    %v3054 = vpop.f32.mrb[0].mxu0
    %v3055 = vadd.f32 0.0, %v3054
    %v3056 = vpop.f32.mrb[0].mxu0
    %3057 = vmatprep.mubr.f32.mxu0 0.0
    %3058 = vmatmul.mubr.f32.gmra.mrb[0].mxu0 %v2918
    %v3059 = vpop.f32.mrb[0].mxu0
    %v3060 = vadd.f32 0.0, %v3059
    %v3061 = vpop.f32.mrb[0].mxu0
    %3062 = vmatprep.mubr.f32.mxu0 0.0
    %3063 = vmatmul.mubr.f32.gmra.mrb[0].mxu0 %v2921
    %v3064 = vpop.f32.mrb[0].mxu0
    %v3065 = vadd.f32 0.0, %v3064
    %v3066 = vpop.f32.mrb[0].mxu0
    %3067 = vdwg.mxu0
    %v3068 = vadd.f32 %v2838, %v2990
    %v3069 = vadd.f32 %v2839, %v2995
    %v3070 = vadd.f32 %v2840, %v3000
    %v3071 = vadd.f32 %v2841, %v3005
    %v3072 = vadd.f32 %v2842, %v3010
    %v3073 = vadd.f32 %v2843, %v3015
    %v3074 = vadd.f32 %v2844, %v3020
    %v3075 = vadd.f32 %v2845, %v3025
    %v3076 = vadd.f32 %v2846, %v3030
    %v3077 = vadd.f32 %v2847, %v3035
    %v3078 = vadd.f32 %v2848, %v3040
    %v3079 = vadd.f32 %v2849, %v3045
    %v3080 = vadd.f32 %v2850, %v3050
    %v3081 = vadd.f32 %v2851, %v3055
    %v3082 = vadd.f32 %v2852, %v3060
    %v3083 = vadd.f32 %v2853, %v3065
    %v3084 = vld [vmem:[%s86 + $0x1] sm:$0xff]
    %v3085 = vld [vmem:[%s86 + $0x11] sm:$0xff]
    %v3086 = vld [vmem:[%s86 + $0x21] sm:$0xff]
    %v3087 = vld [vmem:[%s86 + $0x31] sm:$0xff]
    %v3088 = vld [vmem:[%s86 + $0x41] sm:$0xff]
    %v3089 = vld [vmem:[%s86 + $0x51] sm:$0xff]
    %v3090 = vld [vmem:[%s86 + $0x61] sm:$0xff]
    %v3091 = vld [vmem:[%s86 + $0x71] sm:$0xff]
    %v3092 = vld [vmem:[%s86 + $0xa1] sm:$0xff]
    %v3093 = vld [vmem:[%s86 + $0xb1] sm:$0xff]
    %v3094 = vld [vmem:[%s86 + $0xc1] sm:$0xff]
    %v3095 = vld [vmem:[%s86 + $0xd1] sm:$0xff]
    %v3096 = vld [vmem:[%s86 + $0xe1] sm:$0xff]
    %v3097 = vld [vmem:[%s86 + $0xf1] sm:$0xff]
    %v3098 = vld [vmem:[%s86 + $0x101] sm:$0xff]
    %v3099 = vld [vmem:[%s86 + $0x111] sm:$0xff]
    %s3100 = scalar_lea.vmem [#allocation3], 416
    %v3101 = vld [vmem:[%s3100] sm:$0xff]
    %v3102 = vld [vmem:[%s3100 + $0x8] sm:$0xff]
    %v3103 = vld [vmem:[%s3100 + $0x10] sm:$0xff]
    %v3104 = vld [vmem:[%s3100 + $0x18] sm:$0xff]
    %v3106 = vsel %vm28, %v3084, 0
    %v3109 = vsel %vm28, %v3085, 0
    %v3112 = vsel %vm28, %v3086, 0
    %v3115 = vsel %vm28, %v3087, 0
    %v3118 = vsel %vm28, %v3088, 0
    %v3121 = vsel %vm28, %v3089, 0
    %v3124 = vsel %vm28, %v3090, 0
    %v3127 = vsel %vm28, %v3091, 0
    %v3130 = vsel %vm28, %v3092, 0
    %v3133 = vsel %vm28, %v3093, 0
    %v3136 = vsel %vm28, %v3094, 0
    %v3139 = vsel %vm28, %v3095, 0
    %v3142 = vsel %vm28, %v3096, 0
    %v3145 = vsel %vm28, %v3097, 0
    %v3148 = vsel %vm28, %v3098, 0
    %v3151 = vsel %vm28, %v3099, 0
    %3153 = vmatprep.subr.mxu0 0.0
    %3154 = vmatpush1.msra.mxu0 %v3101
    %3155 = vmatprep.subr.mxu0 0.0
    %3156 = vmatpush1.msra.mxu0 %v3102
    %3157 = vmatprep.subr.mxu0 0.0
    %3158 = vmatpush1.msra.mxu0 %v3103
    %3159 = vmatprep.subr.mxu0 0.0
    %3160 = vmatpush1.msra.mxu0 %v3104
    %3161 = vmatprep.subr.mxu0 0.0
    %3162 = vmatpush1.msra.mxu0 0.0
    %3163 = vmatprep.subr.mxu0 0.0
    %3164 = vmatpush1.msra.mxu0 0.0
    %3165 = vmatprep.subr.mxu0 0.0
    %3166 = vmatpush1.msra.mxu0 0.0
    %3167 = vmatprep.subr.mxu0 0.0
    %3168 = vmatpush1.msra.mxu0 0.0
    %3169 = vmatprep.subr.mxu0 0.0
    %3170 = vmatpush1.msra.mxu0 0.0
    %3171 = vmatprep.subr.mxu0 0.0
    %3172 = vmatpush1.msra.mxu0 0.0
    %3173 = vmatprep.subr.mxu0 0.0
    %3174 = vmatpush1.msra.mxu0 0.0
    %3175 = vmatprep.subr.mxu0 0.0
    %3176 = vmatpush1.msra.mxu0 0.0
    %3177 = vmatprep.subr.mxu0 0.0
    %3178 = vmatpush1.msra.mxu0 0.0
    %3179 = vmatprep.subr.mxu0 0.0
    %3180 = vmatpush1.msra.mxu0 0.0
    %3181 = vmatprep.subr.mxu0 0.0
    %3182 = vmatpush1.msra.mxu0 0.0
    %3183 = vmatprep.subr.mxu0 0.0
    %3184 = vmatpush1.msra.mxu0 0.0
    %3185 = vmatprep.subr.mxu0 0.0
    %3186 = vmatpush1.msra.mxu0 0.0
    %3187 = vmatprep.subr.mxu0 0.0
    %3188 = vmatpush1.msra.mxu0 0.0
    %3189 = vmatprep.subr.mxu0 0.0
    %3190 = vmatpush1.msra.mxu0 0.0
    %3191 = vmatprep.subr.mxu0 0.0
    %3192 = vmatpush1.msra.mxu0 0.0
    %3193 = vmatprep.subr.mxu0 0.0
    %3194 = vmatpush1.msra.mxu0 0.0
    %3195 = vmatprep.subr.mxu0 0.0
    %3196 = vmatpush1.msra.mxu0 0.0
    %3197 = vmatprep.subr.mxu0 0.0
    %3198 = vmatpush1.msra.mxu0 0.0
    %3199 = vmatprep.subr.mxu0 0.0
    %3200 = vmatpush1.msra.mxu0 0.0
    %3201 = vmatprep.subr.mxu0 0.0
    %3202 = vmatpush1.msra.mxu0 0.0
    %3203 = vmatprep.subr.mxu0 0.0
    %3204 = vmatpush1.msra.mxu0 0.0
    %3205 = vmatprep.subr.mxu0 0.0
    %3206 = vmatpush1.msra.mxu0 0.0
    %3207 = vmatprep.subr.mxu0 0.0
    %3208 = vmatpush1.msra.mxu0 0.0
    %3209 = vmatprep.subr.mxu0 0.0
    %3210 = vmatpush1.msra.mxu0 0.0
    %3211 = vmatprep.subr.mxu0 0.0
    %3212 = vmatpush1.msra.mxu0 0.0
    %3213 = vmatprep.subr.mxu0 0.0
    %3214 = vmatpush1.msra.mxu0 0.0
    %3215 = vmatprep.subr.mxu0 0.0
    %3216 = vmatpush1.msra.mxu0 0.0
    %3217 = vmatprep.mubr.f32.mxu0 0.0
    %3218 = vmatmul.mubr.f32.gmra.mrb[0].mxu0 %v3106
    %v3219 = vpop.f32.mrb[0].mxu0
    %v3220 = vadd.f32 0.0, %v3219
    %v3221 = vpop.f32.mrb[0].mxu0
    %3222 = vmatprep.mubr.f32.mxu0 0.0
    %3223 = vmatmul.mubr.f32.gmra.mrb[0].mxu0 %v3109
    %v3224 = vpop.f32.mrb[0].mxu0
    %v3225 = vadd.f32 0.0, %v3224
    %v3226 = vpop.f32.mrb[0].mxu0
    %3227 = vmatprep.mubr.f32.mxu0 0.0
    %3228 = vmatmul.mubr.f32.gmra.mrb[0].mxu0 %v3112
    %v3229 = vpop.f32.mrb[0].mxu0
    %v3230 = vadd.f32 0.0, %v3229
    %v3231 = vpop.f32.mrb[0].mxu0
    %3232 = vmatprep.mubr.f32.mxu0 0.0
    %3233 = vmatmul.mubr.f32.gmra.mrb[0].mxu0 %v3115
    %v3234 = vpop.f32.mrb[0].mxu0
    %v3235 = vadd.f32 0.0, %v3234
    %v3236 = vpop.f32.mrb[0].mxu0
    %3237 = vmatprep.mubr.f32.mxu0 0.0
    %3238 = vmatmul.mubr.f32.gmra.mrb[0].mxu0 %v3118
    %v3239 = vpop.f32.mrb[0].mxu0
    %v3240 = vadd.f32 0.0, %v3239
    %v3241 = vpop.f32.mrb[0].mxu0
    %3242 = vmatprep.mubr.f32.mxu0 0.0
    %3243 = vmatmul.mubr.f32.gmra.mrb[0].mxu0 %v3121
    %v3244 = vpop.f32.mrb[0].mxu0
    %v3245 = vadd.f32 0.0, %v3244
    %v3246 = vpop.f32.mrb[0].mxu0
    %3247 = vmatprep.mubr.f32.mxu0 0.0
    %3248 = vmatmul.mubr.f32.gmra.mrb[0].mxu0 %v3124
    %v3249 = vpop.f32.mrb[0].mxu0
    %v3250 = vadd.f32 0.0, %v3249
    %v3251 = vpop.f32.mrb[0].mxu0
    %3252 = vmatprep.mubr.f32.mxu0 0.0
    %3253 = vmatmul.mubr.f32.gmra.mrb[0].mxu0 %v3127
    %v3254 = vpop.f32.mrb[0].mxu0
    %v3255 = vadd.f32 0.0, %v3254
    %v3256 = vpop.f32.mrb[0].mxu0
    %3257 = vmatprep.mubr.f32.mxu0 0.0
    %3258 = vmatmul.mubr.f32.gmra.mrb[0].mxu0 %v3130
    %v3259 = vpop.f32.mrb[0].mxu0
    %v3260 = vadd.f32 0.0, %v3259
    %v3261 = vpop.f32.mrb[0].mxu0
    %3262 = vmatprep.mubr.f32.mxu0 0.0
    %3263 = vmatmul.mubr.f32.gmra.mrb[0].mxu0 %v3133
    %v3264 = vpop.f32.mrb[0].mxu0
    %v3265 = vadd.f32 0.0, %v3264
    %v3266 = vpop.f32.mrb[0].mxu0
    %3267 = vmatprep.mubr.f32.mxu0 0.0
    %3268 = vmatmul.mubr.f32.gmra.mrb[0].mxu0 %v3136
    %v3269 = vpop.f32.mrb[0].mxu0
    %v3270 = vadd.f32 0.0, %v3269
    %v3271 = vpop.f32.mrb[0].mxu0
    %3272 = vmatprep.mubr.f32.mxu0 0.0
    %3273 = vmatmul.mubr.f32.gmra.mrb[0].mxu0 %v3139
    %v3274 = vpop.f32.mrb[0].mxu0
    %v3275 = vadd.f32 0.0, %v3274
    %v3276 = vpop.f32.mrb[0].mxu0
    %3277 = vmatprep.mubr.f32.mxu0 0.0
    %3278 = vmatmul.mubr.f32.gmra.mrb[0].mxu0 %v3142
    %v3279 = vpop.f32.mrb[0].mxu0
    %v3280 = vadd.f32 0.0, %v3279
    %v3281 = vpop.f32.mrb[0].mxu0
    %3282 = vmatprep.mubr.f32.mxu0 0.0
    %3283 = vmatmul.mubr.f32.gmra.mrb[0].mxu0 %v3145
    %v3284 = vpop.f32.mrb[0].mxu0
    %v3285 = vadd.f32 0.0, %v3284
    %v3286 = vpop.f32.mrb[0].mxu0
    %3287 = vmatprep.mubr.f32.mxu0 0.0
    %3288 = vmatmul.mubr.f32.gmra.mrb[0].mxu0 %v3148
    %v3289 = vpop.f32.mrb[0].mxu0
    %v3290 = vadd.f32 0.0, %v3289
    %v3291 = vpop.f32.mrb[0].mxu0
    %3292 = vmatprep.mubr.f32.mxu0 0.0
    %3293 = vmatmul.mubr.f32.gmra.mrb[0].mxu0 %v3151
    %v3294 = vpop.f32.mrb[0].mxu0
    %v3295 = vadd.f32 0.0, %v3294
    %v3296 = vpop.f32.mrb[0].mxu0
    %3297 = vdwg.mxu0
    %v3298 = vadd.f32 %v3068, %v3220
    %v3299 = vadd.f32 %v3069, %v3225
    %v3300 = vadd.f32 %v3070, %v3230
    %v3301 = vadd.f32 %v3071, %v3235
    %v3302 = vadd.f32 %v3072, %v3240
    %v3303 = vadd.f32 %v3073, %v3245
    %v3304 = vadd.f32 %v3074, %v3250
    %v3305 = vadd.f32 %v3075, %v3255
    %v3306 = vadd.f32 %v3076, %v3260
    %v3307 = vadd.f32 %v3077, %v3265
    %v3308 = vadd.f32 %v3078, %v3270
    %v3309 = vadd.f32 %v3079, %v3275
    %v3310 = vadd.f32 %v3080, %v3280
    %v3311 = vadd.f32 %v3081, %v3285
    %v3312 = vadd.f32 %v3082, %v3290
    %v3313 = vadd.f32 %v3083, %v3295
    %v3314 = vld [vmem:[%s86 + $0x2] sm:$0xff]
    %v3315 = vld [vmem:[%s86 + $0x12] sm:$0xff]
    %v3316 = vld [vmem:[%s86 + $0x22] sm:$0xff]
    %v3317 = vld [vmem:[%s86 + $0x32] sm:$0xff]
    %v3318 = vld [vmem:[%s86 + $0x42] sm:$0xff]
    %v3319 = vld [vmem:[%s86 + $0x52] sm:$0xff]
    %v3320 = vld [vmem:[%s86 + $0x62] sm:$0xff]
    %v3321 = vld [vmem:[%s86 + $0x72] sm:$0xff]
    %v3322 = vld [vmem:[%s86 + $0xa2] sm:$0xff]
    %v3323 = vld [vmem:[%s86 + $0xb2] sm:$0xff]
    %v3324 = vld [vmem:[%s86 + $0xc2] sm:$0xff]
    %v3325 = vld [vmem:[%s86 + $0xd2] sm:$0xff]
    %v3326 = vld [vmem:[%s86 + $0xe2] sm:$0xff]
    %v3327 = vld [vmem:[%s86 + $0xf2] sm:$0xff]
    %v3328 = vld [vmem:[%s86 + $0x102] sm:$0xff]
    %v3329 = vld [vmem:[%s86 + $0x112] sm:$0xff]
    %s3330 = scalar_lea.vmem [#allocation3], 448
    %v3331 = vld [vmem:[%s3330] sm:$0xff]
    %v3332 = vld [vmem:[%s3330 + $0x8] sm:$0xff]
    %v3333 = vld [vmem:[%s3330 + $0x10] sm:$0xff]
    %v3334 = vld [vmem:[%s3330 + $0x18] sm:$0xff]
    %v3336 = vsel %vm28, %v3314, 0
    %v3339 = vsel %vm28, %v3315, 0
    %v3342 = vsel %vm28, %v3316, 0
    %v3345 = vsel %vm28, %v3317, 0
    %v3348 = vsel %vm28, %v3318, 0
    %v3351 = vsel %vm28, %v3319, 0
    %v3354 = vsel %vm28, %v3320, 0
    %v3357 = vsel %vm28, %v3321, 0
    %v3360 = vsel %vm28, %v3322, 0
    %v3363 = vsel %vm28, %v3323, 0
    %v3366 = vsel %vm28, %v3324, 0
    %v3369 = vsel %vm28, %v3325, 0
    %v3372 = vsel %vm28, %v3326, 0
    %v3375 = vsel %vm28, %v3327, 0
    %v3378 = vsel %vm28, %v3328, 0
    %v3381 = vsel %vm28, %v3329, 0
    %3383 = vmatprep.subr.mxu0 0.0
    %3384 = vmatpush1.msra.mxu0 %v3331
    %3385 = vmatprep.subr.mxu0 0.0
    %3386 = vmatpush1.msra.mxu0 %v3332
    %3387 = vmatprep.subr.mxu0 0.0
    %3388 = vmatpush1.msra.mxu0 %v3333
    %3389 = vmatprep.subr.mxu0 0.0
    %3390 = vmatpush1.msra.mxu0 %v3334
    %3391 = vmatprep.subr.mxu0 0.0
    %3392 = vmatpush1.msra.mxu0 0.0
    %3393 = vmatprep.subr.mxu0 0.0
    %3394 = vmatpush1.msra.mxu0 0.0
    %3395 = vmatprep.subr.mxu0 0.0
    %3396 = vmatpush1.msra.mxu0 0.0
    %3397 = vmatprep.subr.mxu0 0.0
    %3398 = vmatpush1.msra.mxu0 0.0
    %3399 = vmatprep.subr.mxu0 0.0
    %3400 = vmatpush1.msra.mxu0 0.0
    %3401 = vmatprep.subr.mxu0 0.0
    %3402 = vmatpush1.msra.mxu0 0.0
    %3403 = vmatprep.subr.mxu0 0.0
    %3404 = vmatpush1.msra.mxu0 0.0
    %3405 = vmatprep.subr.mxu0 0.0
    %3406 = vmatpush1.msra.mxu0 0.0
    %3407 = vmatprep.subr.mxu0 0.0
    %3408 = vmatpush1.msra.mxu0 0.0
    %3409 = vmatprep.subr.mxu0 0.0
    %3410 = vmatpush1.msra.mxu0 0.0
    %3411 = vmatprep.subr.mxu0 0.0
    %3412 = vmatpush1.msra.mxu0 0.0
    %3413 = vmatprep.subr.mxu0 0.0
    %3414 = vmatpush1.msra.mxu0 0.0
    %3415 = vmatprep.subr.mxu0 0.0
    %3416 = vmatpush1.msra.mxu0 0.0
    %3417 = vmatprep.subr.mxu0 0.0
    %3418 = vmatpush1.msra.mxu0 0.0
    %3419 = vmatprep.subr.mxu0 0.0
    %3420 = vmatpush1.msra.mxu0 0.0
    %3421 = vmatprep.subr.mxu0 0.0
    %3422 = vmatpush1.msra.mxu0 0.0
    %3423 = vmatprep.subr.mxu0 0.0
    %3424 = vmatpush1.msra.mxu0 0.0
    %3425 = vmatprep.subr.mxu0 0.0
    %3426 = vmatpush1.msra.mxu0 0.0
    %3427 = vmatprep.subr.mxu0 0.0
    %3428 = vmatpush1.msra.mxu0 0.0
    %3429 = vmatprep.subr.mxu0 0.0
    %3430 = vmatpush1.msra.mxu0 0.0
    %3431 = vmatprep.subr.mxu0 0.0
    %3432 = vmatpush1.msra.mxu0 0.0
    %3433 = vmatprep.subr.mxu0 0.0
    %3434 = vmatpush1.msra.mxu0 0.0
    %3435 = vmatprep.subr.mxu0 0.0
    %3436 = vmatpush1.msra.mxu0 0.0
    %3437 = vmatprep.subr.mxu0 0.0
    %3438 = vmatpush1.msra.mxu0 0.0
    %3439 = vmatprep.subr.mxu0 0.0
    %3440 = vmatpush1.msra.mxu0 0.0
    %3441 = vmatprep.subr.mxu0 0.0
    %3442 = vmatpush1.msra.mxu0 0.0
    %3443 = vmatprep.subr.mxu0 0.0
    %3444 = vmatpush1.msra.mxu0 0.0
    %3445 = vmatprep.subr.mxu0 0.0
    %3446 = vmatpush1.msra.mxu0 0.0
    %3447 = vmatprep.mubr.f32.mxu0 0.0
    %3448 = vmatmul.mubr.f32.gmra.mrb[0].mxu0 %v3336
    %v3449 = vpop.f32.mrb[0].mxu0
    %v3450 = vadd.f32 0.0, %v3449
    %v3451 = vpop.f32.mrb[0].mxu0
    %3452 = vmatprep.mubr.f32.mxu0 0.0
    %3453 = vmatmul.mubr.f32.gmra.mrb[0].mxu0 %v3339
    %v3454 = vpop.f32.mrb[0].mxu0
    %v3455 = vadd.f32 0.0, %v3454
    %v3456 = vpop.f32.mrb[0].mxu0
    %3457 = vmatprep.mubr.f32.mxu0 0.0
    %3458 = vmatmul.mubr.f32.gmra.mrb[0].mxu0 %v3342
    %v3459 = vpop.f32.mrb[0].mxu0
    %v3460 = vadd.f32 0.0, %v3459
    %v3461 = vpop.f32.mrb[0].mxu0
    %3462 = vmatprep.mubr.f32.mxu0 0.0
    %3463 = vmatmul.mubr.f32.gmra.mrb[0].mxu0 %v3345
    %v3464 = vpop.f32.mrb[0].mxu0
    %v3465 = vadd.f32 0.0, %v3464
    %v3466 = vpop.f32.mrb[0].mxu0
    %3467 = vmatprep.mubr.f32.mxu0 0.0
    %3468 = vmatmul.mubr.f32.gmra.mrb[0].mxu0 %v3348
    %v3469 = vpop.f32.mrb[0].mxu0
    %v3470 = vadd.f32 0.0, %v3469
    %v3471 = vpop.f32.mrb[0].mxu0
    %3472 = vmatprep.mubr.f32.mxu0 0.0
    %3473 = vmatmul.mubr.f32.gmra.mrb[0].mxu0 %v3351
    %v3474 = vpop.f32.mrb[0].mxu0
    %v3475 = vadd.f32 0.0, %v3474
    %v3476 = vpop.f32.mrb[0].mxu0
    %3477 = vmatprep.mubr.f32.mxu0 0.0
    %3478 = vmatmul.mubr.f32.gmra.mrb[0].mxu0 %v3354
    %v3479 = vpop.f32.mrb[0].mxu0
    %v3480 = vadd.f32 0.0, %v3479
    %v3481 = vpop.f32.mrb[0].mxu0
    %3482 = vmatprep.mubr.f32.mxu0 0.0
    %3483 = vmatmul.mubr.f32.gmra.mrb[0].mxu0 %v3357
    %v3484 = vpop.f32.mrb[0].mxu0
    %v3485 = vadd.f32 0.0, %v3484
    %v3486 = vpop.f32.mrb[0].mxu0
    %3487 = vmatprep.mubr.f32.mxu0 0.0
    %3488 = vmatmul.mubr.f32.gmra.mrb[0].mxu0 %v3360
    %v3489 = vpop.f32.mrb[0].mxu0
    %v3490 = vadd.f32 0.0, %v3489
    %v3491 = vpop.f32.mrb[0].mxu0
    %3492 = vmatprep.mubr.f32.mxu0 0.0
    %3493 = vmatmul.mubr.f32.gmra.mrb[0].mxu0 %v3363
    %v3494 = vpop.f32.mrb[0].mxu0
    %v3495 = vadd.f32 0.0, %v3494
    %v3496 = vpop.f32.mrb[0].mxu0
    %3497 = vmatprep.mubr.f32.mxu0 0.0
    %3498 = vmatmul.mubr.f32.gmra.mrb[0].mxu0 %v3366
    %v3499 = vpop.f32.mrb[0].mxu0
    %v3500 = vadd.f32 0.0, %v3499
    %v3501 = vpop.f32.mrb[0].mxu0
    %3502 = vmatprep.mubr.f32.mxu0 0.0
    %3503 = vmatmul.mubr.f32.gmra.mrb[0].mxu0 %v3369
    %v3504 = vpop.f32.mrb[0].mxu0
    %v3505 = vadd.f32 0.0, %v3504
    %v3506 = vpop.f32.mrb[0].mxu0
    %3507 = vmatprep.mubr.f32.mxu0 0.0
    %3508 = vmatmul.mubr.f32.gmra.mrb[0].mxu0 %v3372
    %v3509 = vpop.f32.mrb[0].mxu0
    %v3510 = vadd.f32 0.0, %v3509
    %v3511 = vpop.f32.mrb[0].mxu0
    %3512 = vmatprep.mubr.f32.mxu0 0.0
    %3513 = vmatmul.mubr.f32.gmra.mrb[0].mxu0 %v3375
    %v3514 = vpop.f32.mrb[0].mxu0
    %v3515 = vadd.f32 0.0, %v3514
    %v3516 = vpop.f32.mrb[0].mxu0
    %3517 = vmatprep.mubr.f32.mxu0 0.0
    %3518 = vmatmul.mubr.f32.gmra.mrb[0].mxu0 %v3378
    %v3519 = vpop.f32.mrb[0].mxu0
    %v3520 = vadd.f32 0.0, %v3519
    %v3521 = vpop.f32.mrb[0].mxu0
    %3522 = vmatprep.mubr.f32.mxu0 0.0
    %3523 = vmatmul.mubr.f32.gmra.mrb[0].mxu0 %v3381
    %v3524 = vpop.f32.mrb[0].mxu0
    %v3525 = vadd.f32 0.0, %v3524
    %v3526 = vpop.f32.mrb[0].mxu0
    %3527 = vdwg.mxu0
    %v3528 = vadd.f32 %v3298, %v3450
    %v3529 = vadd.f32 %v3299, %v3455
    %v3530 = vadd.f32 %v3300, %v3460
    %v3531 = vadd.f32 %v3301, %v3465
    %v3532 = vadd.f32 %v3302, %v3470
    %v3533 = vadd.f32 %v3303, %v3475
    %v3534 = vadd.f32 %v3304, %v3480
    %v3535 = vadd.f32 %v3305, %v3485
    %v3536 = vadd.f32 %v3306, %v3490
    %v3537 = vadd.f32 %v3307, %v3495
    %v3538 = vadd.f32 %v3308, %v3500
    %v3539 = vadd.f32 %v3309, %v3505
    %v3540 = vadd.f32 %v3310, %v3510
    %v3541 = vadd.f32 %v3311, %v3515
    %v3542 = vadd.f32 %v3312, %v3520
    %v3543 = vadd.f32 %v3313, %v3525
    %v3544 = vld [vmem:[%s1450] sm:$0xff]
    %v3545 = vld [vmem:[%s1450 + $0x10] sm:$0xff]
    %v3546 = vld [vmem:[%s1450 + $0x20] sm:$0xff]
    %v3547 = vld [vmem:[%s1450 + $0x30] sm:$0xff]
    %v3548 = vld [vmem:[%s1450 + $0x40] sm:$0xff]
    %v3549 = vld [vmem:[%s1450 + $0x50] sm:$0xff]
    %v3550 = vld [vmem:[%s1450 + $0x60] sm:$0xff]
    %v3551 = vld [vmem:[%s1450 + $0x70] sm:$0xff]
    %v3552 = vld [vmem:[%s1450 + $0xa0] sm:$0xff]
    %v3553 = vld [vmem:[%s1450 + $0xb0] sm:$0xff]
    %v3554 = vld [vmem:[%s1450 + $0xc0] sm:$0xff]
    %v3555 = vld [vmem:[%s1450 + $0xd0] sm:$0xff]
    %v3556 = vld [vmem:[%s1450 + $0xe0] sm:$0xff]
    %v3557 = vld [vmem:[%s1450 + $0xf0] sm:$0xff]
    %v3558 = vld [vmem:[%s1450 + $0x100] sm:$0xff]
    %v3559 = vld [vmem:[%s1450 + $0x110] sm:$0xff]
    %s3560 = scalar_lea.vmem [#allocation3], 480
    %v3561 = vld [vmem:[%s3560] sm:$0xff]
    %v3562 = vld [vmem:[%s3560 + $0x8] sm:$0xff]
    %v3563 = vld [vmem:[%s3560 + $0x10] sm:$0xff]
    %v3564 = vld [vmem:[%s3560 + $0x18] sm:$0xff]
    %v3566 = vsel %vm28, %v3544, 0
    %v3569 = vsel %vm28, %v3545, 0
    %v3572 = vsel %vm28, %v3546, 0
    %v3575 = vsel %vm28, %v3547, 0
    %v3578 = vsel %vm28, %v3548, 0
    %v3581 = vsel %vm28, %v3549, 0
    %v3584 = vsel %vm28, %v3550, 0
    %v3587 = vsel %vm28, %v3551, 0
    %v3590 = vsel %vm28, %v3552, 0
    %v3593 = vsel %vm28, %v3553, 0
    %v3596 = vsel %vm28, %v3554, 0
    %v3599 = vsel %vm28, %v3555, 0
    %v3602 = vsel %vm28, %v3556, 0
    %v3605 = vsel %vm28, %v3557, 0
    %v3608 = vsel %vm28, %v3558, 0
    %v3611 = vsel %vm28, %v3559, 0
    %3613 = vmatprep.subr.mxu0 0.0
    %3614 = vmatpush1.msra.mxu0 %v3561
    %3615 = vmatprep.subr.mxu0 0.0
    %3616 = vmatpush1.msra.mxu0 %v3562
    %3617 = vmatprep.subr.mxu0 0.0
    %3618 = vmatpush1.msra.mxu0 %v3563
    %3619 = vmatprep.subr.mxu0 0.0
    %3620 = vmatpush1.msra.mxu0 %v3564
    %3621 = vmatprep.subr.mxu0 0.0
    %3622 = vmatpush1.msra.mxu0 0.0
    %3623 = vmatprep.subr.mxu0 0.0
    %3624 = vmatpush1.msra.mxu0 0.0
    %3625 = vmatprep.subr.mxu0 0.0
    %3626 = vmatpush1.msra.mxu0 0.0
    %3627 = vmatprep.subr.mxu0 0.0
    %3628 = vmatpush1.msra.mxu0 0.0
    %3629 = vmatprep.subr.mxu0 0.0
    %3630 = vmatpush1.msra.mxu0 0.0
    %3631 = vmatprep.subr.mxu0 0.0
    %3632 = vmatpush1.msra.mxu0 0.0
    %3633 = vmatprep.subr.mxu0 0.0
    %3634 = vmatpush1.msra.mxu0 0.0
    %3635 = vmatprep.subr.mxu0 0.0
    %3636 = vmatpush1.msra.mxu0 0.0
    %3637 = vmatprep.subr.mxu0 0.0
    %3638 = vmatpush1.msra.mxu0 0.0
    %3639 = vmatprep.subr.mxu0 0.0
    %3640 = vmatpush1.msra.mxu0 0.0
    %3641 = vmatprep.subr.mxu0 0.0
    %3642 = vmatpush1.msra.mxu0 0.0
    %3643 = vmatprep.subr.mxu0 0.0
    %3644 = vmatpush1.msra.mxu0 0.0
    %3645 = vmatprep.subr.mxu0 0.0
    %3646 = vmatpush1.msra.mxu0 0.0
    %3647 = vmatprep.subr.mxu0 0.0
    %3648 = vmatpush1.msra.mxu0 0.0
    %3649 = vmatprep.subr.mxu0 0.0
    %3650 = vmatpush1.msra.mxu0 0.0
    %3651 = vmatprep.subr.mxu0 0.0
    %3652 = vmatpush1.msra.mxu0 0.0
    %3653 = vmatprep.subr.mxu0 0.0
    %3654 = vmatpush1.msra.mxu0 0.0
    %3655 = vmatprep.subr.mxu0 0.0
    %3656 = vmatpush1.msra.mxu0 0.0
    %3657 = vmatprep.subr.mxu0 0.0
    %3658 = vmatpush1.msra.mxu0 0.0
    %3659 = vmatprep.subr.mxu0 0.0
    %3660 = vmatpush1.msra.mxu0 0.0
    %3661 = vmatprep.subr.mxu0 0.0
    %3662 = vmatpush1.msra.mxu0 0.0
    %3663 = vmatprep.subr.mxu0 0.0
    %3664 = vmatpush1.msra.mxu0 0.0
    %3665 = vmatprep.subr.mxu0 0.0
    %3666 = vmatpush1.msra.mxu0 0.0
    %3667 = vmatprep.subr.mxu0 0.0
    %3668 = vmatpush1.msra.mxu0 0.0
    %3669 = vmatprep.subr.mxu0 0.0
    %3670 = vmatpush1.msra.mxu0 0.0
    %3671 = vmatprep.subr.mxu0 0.0
    %3672 = vmatpush1.msra.mxu0 0.0
    %3673 = vmatprep.subr.mxu0 0.0
    %3674 = vmatpush1.msra.mxu0 0.0
    %3675 = vmatprep.subr.mxu0 0.0
    %3676 = vmatpush1.msra.mxu0 0.0
    %3677 = vmatprep.mubr.f32.mxu0 0.0
    %3678 = vmatmul.mubr.f32.gmra.mrb[0].mxu0 %v3566
    %v3679 = vpop.f32.mrb[0].mxu0
    %v3680 = vadd.f32 0.0, %v3679
    %v3681 = vpop.f32.mrb[0].mxu0
    %3682 = vmatprep.mubr.f32.mxu0 0.0
    %3683 = vmatmul.mubr.f32.gmra.mrb[0].mxu0 %v3569
    %v3684 = vpop.f32.mrb[0].mxu0
    %v3685 = vadd.f32 0.0, %v3684
    %v3686 = vpop.f32.mrb[0].mxu0
    %3687 = vmatprep.mubr.f32.mxu0 0.0
    %3688 = vmatmul.mubr.f32.gmra.mrb[0].mxu0 %v3572
    %v3689 = vpop.f32.mrb[0].mxu0
    %v3690 = vadd.f32 0.0, %v3689
    %v3691 = vpop.f32.mrb[0].mxu0
    %3692 = vmatprep.mubr.f32.mxu0 0.0
    %3693 = vmatmul.mubr.f32.gmra.mrb[0].mxu0 %v3575
    %v3694 = vpop.f32.mrb[0].mxu0
    %v3695 = vadd.f32 0.0, %v3694
    %v3696 = vpop.f32.mrb[0].mxu0
    %3697 = vmatprep.mubr.f32.mxu0 0.0
    %3698 = vmatmul.mubr.f32.gmra.mrb[0].mxu0 %v3578
    %v3699 = vpop.f32.mrb[0].mxu0
    %v3700 = vadd.f32 0.0, %v3699
    %v3701 = vpop.f32.mrb[0].mxu0
    %3702 = vmatprep.mubr.f32.mxu0 0.0
    %3703 = vmatmul.mubr.f32.gmra.mrb[0].mxu0 %v3581
    %v3704 = vpop.f32.mrb[0].mxu0
    %v3705 = vadd.f32 0.0, %v3704
    %v3706 = vpop.f32.mrb[0].mxu0
    %3707 = vmatprep.mubr.f32.mxu0 0.0
    %3708 = vmatmul.mubr.f32.gmra.mrb[0].mxu0 %v3584
    %v3709 = vpop.f32.mrb[0].mxu0
    %v3710 = vadd.f32 0.0, %v3709
    %v3711 = vpop.f32.mrb[0].mxu0
    %3712 = vmatprep.mubr.f32.mxu0 0.0
    %3713 = vmatmul.mubr.f32.gmra.mrb[0].mxu0 %v3587
    %v3714 = vpop.f32.mrb[0].mxu0
    %v3715 = vadd.f32 0.0, %v3714
    %v3716 = vpop.f32.mrb[0].mxu0
    %3717 = vmatprep.mubr.f32.mxu0 0.0
    %3718 = vmatmul.mubr.f32.gmra.mrb[0].mxu0 %v3590
    %v3719 = vpop.f32.mrb[0].mxu0
    %v3720 = vadd.f32 0.0, %v3719
    %v3721 = vpop.f32.mrb[0].mxu0
    %3722 = vmatprep.mubr.f32.mxu0 0.0
    %3723 = vmatmul.mubr.f32.gmra.mrb[0].mxu0 %v3593
    %v3724 = vpop.f32.mrb[0].mxu0
    %v3725 = vadd.f32 0.0, %v3724
    %v3726 = vpop.f32.mrb[0].mxu0
    %3727 = vmatprep.mubr.f32.mxu0 0.0
    %3728 = vmatmul.mubr.f32.gmra.mrb[0].mxu0 %v3596
    %v3729 = vpop.f32.mrb[0].mxu0
    %v3730 = vadd.f32 0.0, %v3729
    %v3731 = vpop.f32.mrb[0].mxu0
    %3732 = vmatprep.mubr.f32.mxu0 0.0
    %3733 = vmatmul.mubr.f32.gmra.mrb[0].mxu0 %v3599
    %v3734 = vpop.f32.mrb[0].mxu0
    %v3735 = vadd.f32 0.0, %v3734
    %v3736 = vpop.f32.mrb[0].mxu0
    %3737 = vmatprep.mubr.f32.mxu0 0.0
    %3738 = vmatmul.mubr.f32.gmra.mrb[0].mxu0 %v3602
    %v3739 = vpop.f32.mrb[0].mxu0
    %v3740 = vadd.f32 0.0, %v3739
    %v3741 = vpop.f32.mrb[0].mxu0
    %3742 = vmatprep.mubr.f32.mxu0 0.0
    %3743 = vmatmul.mubr.f32.gmra.mrb[0].mxu0 %v3605
    %v3744 = vpop.f32.mrb[0].mxu0
    %v3745 = vadd.f32 0.0, %v3744
    %v3746 = vpop.f32.mrb[0].mxu0
    %3747 = vmatprep.mubr.f32.mxu0 0.0
    %3748 = vmatmul.mubr.f32.gmra.mrb[0].mxu0 %v3608
    %v3749 = vpop.f32.mrb[0].mxu0
    %v3750 = vadd.f32 0.0, %v3749
    %v3751 = vpop.f32.mrb[0].mxu0
    %3752 = vmatprep.mubr.f32.mxu0 0.0
    %3753 = vmatmul.mubr.f32.gmra.mrb[0].mxu0 %v3611
    %v3754 = vpop.f32.mrb[0].mxu0
    %v3755 = vadd.f32 0.0, %v3754
    %v3756 = vpop.f32.mrb[0].mxu0
    %3757 = vdwg.mxu0
    %v3758 = vadd.f32 %v3528, %v3680
    %v3759 = vadd.f32 %v3529, %v3685
    %v3760 = vadd.f32 %v3530, %v3690
    %v3761 = vadd.f32 %v3531, %v3695
    %v3762 = vadd.f32 %v3532, %v3700
    %v3763 = vadd.f32 %v3533, %v3705
    %v3764 = vadd.f32 %v3534, %v3710
    %v3765 = vadd.f32 %v3535, %v3715
    %v3766 = vadd.f32 %v3536, %v3720
    %v3767 = vadd.f32 %v3537, %v3725
    %v3768 = vadd.f32 %v3538, %v3730
    %v3769 = vadd.f32 %v3539, %v3735
    %v3770 = vadd.f32 %v3540, %v3740
    %v3771 = vadd.f32 %v3541, %v3745
    %v3772 = vadd.f32 %v3542, %v3750
    %v3773 = vadd.f32 %v3543, %v3755
    %v3774 = vld [vmem:[%s1450 + $0x1] sm:$0xff]
    %v3775 = vld [vmem:[%s1450 + $0x11] sm:$0xff]
    %v3776 = vld [vmem:[%s1450 + $0x21] sm:$0xff]
    %v3777 = vld [vmem:[%s1450 + $0x31] sm:$0xff]
    %v3778 = vld [vmem:[%s1450 + $0x41] sm:$0xff]
    %v3779 = vld [vmem:[%s1450 + $0x51] sm:$0xff]
    %v3780 = vld [vmem:[%s1450 + $0x61] sm:$0xff]
    %v3781 = vld [vmem:[%s1450 + $0x71] sm:$0xff]
    %v3782 = vld [vmem:[%s1450 + $0xa1] sm:$0xff]
    %v3783 = vld [vmem:[%s1450 + $0xb1] sm:$0xff]
    %v3784 = vld [vmem:[%s1450 + $0xc1] sm:$0xff]
    %v3785 = vld [vmem:[%s1450 + $0xd1] sm:$0xff]
    %v3786 = vld [vmem:[%s1450 + $0xe1] sm:$0xff]
    %v3787 = vld [vmem:[%s1450 + $0xf1] sm:$0xff]
    %v3788 = vld [vmem:[%s1450 + $0x101] sm:$0xff]
    %v3789 = vld [vmem:[%s1450 + $0x111] sm:$0xff]
    %s3790 = scalar_lea.vmem [#allocation3], 512
    %v3791 = vld [vmem:[%s3790] sm:$0xff]
    %v3792 = vld [vmem:[%s3790 + $0x8] sm:$0xff]
    %v3793 = vld [vmem:[%s3790 + $0x10] sm:$0xff]
    %v3794 = vld [vmem:[%s3790 + $0x18] sm:$0xff]
    %v3796 = vsel %vm28, %v3774, 0
    %v3799 = vsel %vm28, %v3775, 0
    %v3802 = vsel %vm28, %v3776, 0
    %v3805 = vsel %vm28, %v3777, 0
    %v3808 = vsel %vm28, %v3778, 0
    %v3811 = vsel %vm28, %v3779, 0
    %v3814 = vsel %vm28, %v3780, 0
    %v3817 = vsel %vm28, %v3781, 0
    %v3820 = vsel %vm28, %v3782, 0
    %v3823 = vsel %vm28, %v3783, 0
    %v3826 = vsel %vm28, %v3784, 0
    %v3829 = vsel %vm28, %v3785, 0
    %v3832 = vsel %vm28, %v3786, 0
    %v3835 = vsel %vm28, %v3787, 0
    %v3838 = vsel %vm28, %v3788, 0
    %v3841 = vsel %vm28, %v3789, 0
    %3843 = vmatprep.subr.mxu0 0.0
    %3844 = vmatpush1.msra.mxu0 %v3791
    %3845 = vmatprep.subr.mxu0 0.0
    %3846 = vmatpush1.msra.mxu0 %v3792
    %3847 = vmatprep.subr.mxu0 0.0
    %3848 = vmatpush1.msra.mxu0 %v3793
    %3849 = vmatprep.subr.mxu0 0.0
    %3850 = vmatpush1.msra.mxu0 %v3794
    %3851 = vmatprep.subr.mxu0 0.0
    %3852 = vmatpush1.msra.mxu0 0.0
    %3853 = vmatprep.subr.mxu0 0.0
    %3854 = vmatpush1.msra.mxu0 0.0
    %3855 = vmatprep.subr.mxu0 0.0
    %3856 = vmatpush1.msra.mxu0 0.0
    %3857 = vmatprep.subr.mxu0 0.0
    %3858 = vmatpush1.msra.mxu0 0.0
    %3859 = vmatprep.subr.mxu0 0.0
    %3860 = vmatpush1.msra.mxu0 0.0
    %3861 = vmatprep.subr.mxu0 0.0
    %3862 = vmatpush1.msra.mxu0 0.0
    %3863 = vmatprep.subr.mxu0 0.0
    %3864 = vmatpush1.msra.mxu0 0.0
    %3865 = vmatprep.subr.mxu0 0.0
    %3866 = vmatpush1.msra.mxu0 0.0
    %3867 = vmatprep.subr.mxu0 0.0
    %3868 = vmatpush1.msra.mxu0 0.0
    %3869 = vmatprep.subr.mxu0 0.0
    %3870 = vmatpush1.msra.mxu0 0.0
    %3871 = vmatprep.subr.mxu0 0.0
    %3872 = vmatpush1.msra.mxu0 0.0
    %3873 = vmatprep.subr.mxu0 0.0
    %3874 = vmatpush1.msra.mxu0 0.0
    %3875 = vmatprep.subr.mxu0 0.0
    %3876 = vmatpush1.msra.mxu0 0.0
    %3877 = vmatprep.subr.mxu0 0.0
    %3878 = vmatpush1.msra.mxu0 0.0
    %3879 = vmatprep.subr.mxu0 0.0
    %3880 = vmatpush1.msra.mxu0 0.0
    %3881 = vmatprep.subr.mxu0 0.0
    %3882 = vmatpush1.msra.mxu0 0.0
    %3883 = vmatprep.subr.mxu0 0.0
    %3884 = vmatpush1.msra.mxu0 0.0
    %3885 = vmatprep.subr.mxu0 0.0
    %3886 = vmatpush1.msra.mxu0 0.0
    %3887 = vmatprep.subr.mxu0 0.0
    %3888 = vmatpush1.msra.mxu0 0.0
    %3889 = vmatprep.subr.mxu0 0.0
    %3890 = vmatpush1.msra.mxu0 0.0
    %3891 = vmatprep.subr.mxu0 0.0
    %3892 = vmatpush1.msra.mxu0 0.0
    %3893 = vmatprep.subr.mxu0 0.0
    %3894 = vmatpush1.msra.mxu0 0.0
    %3895 = vmatprep.subr.mxu0 0.0
    %3896 = vmatpush1.msra.mxu0 0.0
    %3897 = vmatprep.subr.mxu0 0.0
    %3898 = vmatpush1.msra.mxu0 0.0
    %3899 = vmatprep.subr.mxu0 0.0
    %3900 = vmatpush1.msra.mxu0 0.0
    %3901 = vmatprep.subr.mxu0 0.0
    %3902 = vmatpush1.msra.mxu0 0.0
    %3903 = vmatprep.subr.mxu0 0.0
    %3904 = vmatpush1.msra.mxu0 0.0
    %3905 = vmatprep.subr.mxu0 0.0
    %3906 = vmatpush1.msra.mxu0 0.0
    %3907 = vmatprep.mubr.f32.mxu0 0.0
    %3908 = vmatmul.mubr.f32.gmra.mrb[0].mxu0 %v3796
    %v3909 = vpop.f32.mrb[0].mxu0
    %v3910 = vadd.f32 0.0, %v3909
    %v3911 = vpop.f32.mrb[0].mxu0
    %3912 = vmatprep.mubr.f32.mxu0 0.0
    %3913 = vmatmul.mubr.f32.gmra.mrb[0].mxu0 %v3799
    %v3914 = vpop.f32.mrb[0].mxu0
    %v3915 = vadd.f32 0.0, %v3914
    %v3916 = vpop.f32.mrb[0].mxu0
    %3917 = vmatprep.mubr.f32.mxu0 0.0
    %3918 = vmatmul.mubr.f32.gmra.mrb[0].mxu0 %v3802
    %v3919 = vpop.f32.mrb[0].mxu0
    %v3920 = vadd.f32 0.0, %v3919
    %v3921 = vpop.f32.mrb[0].mxu0
    %3922 = vmatprep.mubr.f32.mxu0 0.0
    %3923 = vmatmul.mubr.f32.gmra.mrb[0].mxu0 %v3805
    %v3924 = vpop.f32.mrb[0].mxu0
    %v3925 = vadd.f32 0.0, %v3924
    %v3926 = vpop.f32.mrb[0].mxu0
    %3927 = vmatprep.mubr.f32.mxu0 0.0
    %3928 = vmatmul.mubr.f32.gmra.mrb[0].mxu0 %v3808
    %v3929 = vpop.f32.mrb[0].mxu0
    %v3930 = vadd.f32 0.0, %v3929
    %v3931 = vpop.f32.mrb[0].mxu0
    %3932 = vmatprep.mubr.f32.mxu0 0.0
    %3933 = vmatmul.mubr.f32.gmra.mrb[0].mxu0 %v3811
    %v3934 = vpop.f32.mrb[0].mxu0
    %v3935 = vadd.f32 0.0, %v3934
    %v3936 = vpop.f32.mrb[0].mxu0
    %3937 = vmatprep.mubr.f32.mxu0 0.0
    %3938 = vmatmul.mubr.f32.gmra.mrb[0].mxu0 %v3814
    %v3939 = vpop.f32.mrb[0].mxu0
    %v3940 = vadd.f32 0.0, %v3939
    %v3941 = vpop.f32.mrb[0].mxu0
    %3942 = vmatprep.mubr.f32.mxu0 0.0
    %3943 = vmatmul.mubr.f32.gmra.mrb[0].mxu0 %v3817
    %v3944 = vpop.f32.mrb[0].mxu0
    %v3945 = vadd.f32 0.0, %v3944
    %v3946 = vpop.f32.mrb[0].mxu0
    %3947 = vmatprep.mubr.f32.mxu0 0.0
    %3948 = vmatmul.mubr.f32.gmra.mrb[0].mxu0 %v3820
    %v3949 = vpop.f32.mrb[0].mxu0
    %v3950 = vadd.f32 0.0, %v3949
    %v3951 = vpop.f32.mrb[0].mxu0
    %3952 = vmatprep.mubr.f32.mxu0 0.0
    %3953 = vmatmul.mubr.f32.gmra.mrb[0].mxu0 %v3823
    %v3954 = vpop.f32.mrb[0].mxu0
    %v3955 = vadd.f32 0.0, %v3954
    %v3956 = vpop.f32.mrb[0].mxu0
    %3957 = vmatprep.mubr.f32.mxu0 0.0
    %3958 = vmatmul.mubr.f32.gmra.mrb[0].mxu0 %v3826
    %v3959 = vpop.f32.mrb[0].mxu0
    %v3960 = vadd.f32 0.0, %v3959
    %v3961 = vpop.f32.mrb[0].mxu0
    %3962 = vmatprep.mubr.f32.mxu0 0.0
    %3963 = vmatmul.mubr.f32.gmra.mrb[0].mxu0 %v3829
    %v3964 = vpop.f32.mrb[0].mxu0
    %v3965 = vadd.f32 0.0, %v3964
    %v3966 = vpop.f32.mrb[0].mxu0
    %3967 = vmatprep.mubr.f32.mxu0 0.0
    %3968 = vmatmul.mubr.f32.gmra.mrb[0].mxu0 %v3832
    %v3969 = vpop.f32.mrb[0].mxu0
    %v3970 = vadd.f32 0.0, %v3969
    %v3971 = vpop.f32.mrb[0].mxu0
    %3972 = vmatprep.mubr.f32.mxu0 0.0
    %3973 = vmatmul.mubr.f32.gmra.mrb[0].mxu0 %v3835
    %v3974 = vpop.f32.mrb[0].mxu0
    %v3975 = vadd.f32 0.0, %v3974
    %v3976 = vpop.f32.mrb[0].mxu0
    %3977 = vmatprep.mubr.f32.mxu0 0.0
    %3978 = vmatmul.mubr.f32.gmra.mrb[0].mxu0 %v3838
    %v3979 = vpop.f32.mrb[0].mxu0
    %v3980 = vadd.f32 0.0, %v3979
    %v3981 = vpop.f32.mrb[0].mxu0
    %3982 = vmatprep.mubr.f32.mxu0 0.0
    %3983 = vmatmul.mubr.f32.gmra.mrb[0].mxu0 %v3841
    %v3984 = vpop.f32.mrb[0].mxu0
    %v3985 = vadd.f32 0.0, %v3984
    %v3986 = vpop.f32.mrb[0].mxu0
    %3987 = vdwg.mxu0
    %v3988 = vadd.f32 %v3758, %v3910
    %v3989 = vadd.f32 %v3759, %v3915
    %v3990 = vadd.f32 %v3760, %v3920
    %v3991 = vadd.f32 %v3761, %v3925
    %v3992 = vadd.f32 %v3762, %v3930
    %v3993 = vadd.f32 %v3763, %v3935
    %v3994 = vadd.f32 %v3764, %v3940
    %v3995 = vadd.f32 %v3765, %v3945
    %v3996 = vadd.f32 %v3766, %v3950
    %v3997 = vadd.f32 %v3767, %v3955
    %v3998 = vadd.f32 %v3768, %v3960
    %v3999 = vadd.f32 %v3769, %v3965
    %v4000 = vadd.f32 %v3770, %v3970
    %v4001 = vadd.f32 %v3771, %v3975
    %v4002 = vadd.f32 %v3772, %v3980
    %v4003 = vadd.f32 %v3773, %v3985
    %v4004 = vld [vmem:[%s1450 + $0x2] sm:$0xff]
    %v4005 = vld [vmem:[%s1450 + $0x12] sm:$0xff]
    %v4006 = vld [vmem:[%s1450 + $0x22] sm:$0xff]
    %v4007 = vld [vmem:[%s1450 + $0x32] sm:$0xff]
    %v4008 = vld [vmem:[%s1450 + $0x42] sm:$0xff]
    %v4009 = vld [vmem:[%s1450 + $0x52] sm:$0xff]
    %v4010 = vld [vmem:[%s1450 + $0x62] sm:$0xff]
    %v4011 = vld [vmem:[%s1450 + $0x72] sm:$0xff]
    %v4012 = vld [vmem:[%s1450 + $0xa2] sm:$0xff]
    %v4013 = vld [vmem:[%s1450 + $0xb2] sm:$0xff]
    %v4014 = vld [vmem:[%s1450 + $0xc2] sm:$0xff]
    %v4015 = vld [vmem:[%s1450 + $0xd2] sm:$0xff]
    %v4016 = vld [vmem:[%s1450 + $0xe2] sm:$0xff]
    %v4017 = vld [vmem:[%s1450 + $0xf2] sm:$0xff]
    %v4018 = vld [vmem:[%s1450 + $0x102] sm:$0xff]
    %v4019 = vld [vmem:[%s1450 + $0x112] sm:$0xff]
    %s4020 = scalar_lea.vmem [#allocation3], 544
    %v4021 = vld [vmem:[%s4020] sm:$0xff]
    %v4022 = vld [vmem:[%s4020 + $0x8] sm:$0xff]
    %v4023 = vld [vmem:[%s4020 + $0x10] sm:$0xff]
    %v4024 = vld [vmem:[%s4020 + $0x18] sm:$0xff]
    %v4026 = vsel %vm28, %v4004, 0
    %v4029 = vsel %vm28, %v4005, 0
    %v4032 = vsel %vm28, %v4006, 0
    %v4035 = vsel %vm28, %v4007, 0
    %v4038 = vsel %vm28, %v4008, 0
    %v4041 = vsel %vm28, %v4009, 0
    %v4044 = vsel %vm28, %v4010, 0
    %v4047 = vsel %vm28, %v4011, 0
    %v4050 = vsel %vm28, %v4012, 0
    %v4053 = vsel %vm28, %v4013, 0
    %v4056 = vsel %vm28, %v4014, 0
    %v4059 = vsel %vm28, %v4015, 0
    %v4062 = vsel %vm28, %v4016, 0
    %v4065 = vsel %vm28, %v4017, 0
    %v4068 = vsel %vm28, %v4018, 0
    %v4071 = vsel %vm28, %v4019, 0
    %4073 = vmatprep.subr.mxu0 0.0
    %4074 = vmatpush1.msra.mxu0 %v4021
    %4075 = vmatprep.subr.mxu0 0.0
    %4076 = vmatpush1.msra.mxu0 %v4022
    %4077 = vmatprep.subr.mxu0 0.0
    %4078 = vmatpush1.msra.mxu0 %v4023
    %4079 = vmatprep.subr.mxu0 0.0
    %4080 = vmatpush1.msra.mxu0 %v4024
    %4081 = vmatprep.subr.mxu0 0.0
    %4082 = vmatpush1.msra.mxu0 0.0
    %4083 = vmatprep.subr.mxu0 0.0
    %4084 = vmatpush1.msra.mxu0 0.0
    %4085 = vmatprep.subr.mxu0 0.0
    %4086 = vmatpush1.msra.mxu0 0.0
    %4087 = vmatprep.subr.mxu0 0.0
    %4088 = vmatpush1.msra.mxu0 0.0
    %4089 = vmatprep.subr.mxu0 0.0
    %4090 = vmatpush1.msra.mxu0 0.0
    %4091 = vmatprep.subr.mxu0 0.0
    %4092 = vmatpush1.msra.mxu0 0.0
    %4093 = vmatprep.subr.mxu0 0.0
    %4094 = vmatpush1.msra.mxu0 0.0
    %4095 = vmatprep.subr.mxu0 0.0
    %4096 = vmatpush1.msra.mxu0 0.0
    %4097 = vmatprep.subr.mxu0 0.0
    %4098 = vmatpush1.msra.mxu0 0.0
    %4099 = vmatprep.subr.mxu0 0.0
    %4100 = vmatpush1.msra.mxu0 0.0
    %4101 = vmatprep.subr.mxu0 0.0
    %4102 = vmatpush1.msra.mxu0 0.0
    %4103 = vmatprep.subr.mxu0 0.0
    %4104 = vmatpush1.msra.mxu0 0.0
    %4105 = vmatprep.subr.mxu0 0.0
    %4106 = vmatpush1.msra.mxu0 0.0
    %4107 = vmatprep.subr.mxu0 0.0
    %4108 = vmatpush1.msra.mxu0 0.0
    %4109 = vmatprep.subr.mxu0 0.0
    %4110 = vmatpush1.msra.mxu0 0.0
    %4111 = vmatprep.subr.mxu0 0.0
    %4112 = vmatpush1.msra.mxu0 0.0
    %4113 = vmatprep.subr.mxu0 0.0
    %4114 = vmatpush1.msra.mxu0 0.0
    %4115 = vmatprep.subr.mxu0 0.0
    %4116 = vmatpush1.msra.mxu0 0.0
    %4117 = vmatprep.subr.mxu0 0.0
    %4118 = vmatpush1.msra.mxu0 0.0
    %4119 = vmatprep.subr.mxu0 0.0
    %4120 = vmatpush1.msra.mxu0 0.0
    %4121 = vmatprep.subr.mxu0 0.0
    %4122 = vmatpush1.msra.mxu0 0.0
    %4123 = vmatprep.subr.mxu0 0.0
    %4124 = vmatpush1.msra.mxu0 0.0
    %4125 = vmatprep.subr.mxu0 0.0
    %4126 = vmatpush1.msra.mxu0 0.0
    %4127 = vmatprep.subr.mxu0 0.0
    %4128 = vmatpush1.msra.mxu0 0.0
    %4129 = vmatprep.subr.mxu0 0.0
    %4130 = vmatpush1.msra.mxu0 0.0
    %4131 = vmatprep.subr.mxu0 0.0
    %4132 = vmatpush1.msra.mxu0 0.0
    %4133 = vmatprep.subr.mxu0 0.0
    %4134 = vmatpush1.msra.mxu0 0.0
    %4135 = vmatprep.subr.mxu0 0.0
    %4136 = vmatpush1.msra.mxu0 0.0
    %4137 = vmatprep.mubr.f32.mxu0 0.0
    %4138 = vmatmul.mubr.f32.gmra.mrb[0].mxu0 %v4026
    %v4139 = vpop.f32.mrb[0].mxu0
    %v4140 = vadd.f32 0.0, %v4139
    %v4141 = vpop.f32.mrb[0].mxu0
    %4142 = vmatprep.mubr.f32.mxu0 0.0
    %4143 = vmatmul.mubr.f32.gmra.mrb[0].mxu0 %v4029
    %v4144 = vpop.f32.mrb[0].mxu0
    %v4145 = vadd.f32 0.0, %v4144
    %v4146 = vpop.f32.mrb[0].mxu0
    %4147 = vmatprep.mubr.f32.mxu0 0.0
    %4148 = vmatmul.mubr.f32.gmra.mrb[0].mxu0 %v4032
    %v4149 = vpop.f32.mrb[0].mxu0
    %v4150 = vadd.f32 0.0, %v4149
    %v4151 = vpop.f32.mrb[0].mxu0
    %4152 = vmatprep.mubr.f32.mxu0 0.0
    %4153 = vmatmul.mubr.f32.gmra.mrb[0].mxu0 %v4035
    %v4154 = vpop.f32.mrb[0].mxu0
    %v4155 = vadd.f32 0.0, %v4154
    %v4156 = vpop.f32.mrb[0].mxu0
    %4157 = vmatprep.mubr.f32.mxu0 0.0
    %4158 = vmatmul.mubr.f32.gmra.mrb[0].mxu0 %v4038
    %v4159 = vpop.f32.mrb[0].mxu0
    %v4160 = vadd.f32 0.0, %v4159
    %v4161 = vpop.f32.mrb[0].mxu0
    %4162 = vmatprep.mubr.f32.mxu0 0.0
    %4163 = vmatmul.mubr.f32.gmra.mrb[0].mxu0 %v4041
    %v4164 = vpop.f32.mrb[0].mxu0
    %v4165 = vadd.f32 0.0, %v4164
    %v4166 = vpop.f32.mrb[0].mxu0
    %4167 = vmatprep.mubr.f32.mxu0 0.0
    %4168 = vmatmul.mubr.f32.gmra.mrb[0].mxu0 %v4044
    %v4169 = vpop.f32.mrb[0].mxu0
    %v4170 = vadd.f32 0.0, %v4169
    %v4171 = vpop.f32.mrb[0].mxu0
    %4172 = vmatprep.mubr.f32.mxu0 0.0
    %4173 = vmatmul.mubr.f32.gmra.mrb[0].mxu0 %v4047
    %v4174 = vpop.f32.mrb[0].mxu0
    %v4175 = vadd.f32 0.0, %v4174
    %v4176 = vpop.f32.mrb[0].mxu0
    %4177 = vmatprep.mubr.f32.mxu0 0.0
    %4178 = vmatmul.mubr.f32.gmra.mrb[0].mxu0 %v4050
    %v4179 = vpop.f32.mrb[0].mxu0
    %v4180 = vadd.f32 0.0, %v4179
    %v4181 = vpop.f32.mrb[0].mxu0
    %4182 = vmatprep.mubr.f32.mxu0 0.0
    %4183 = vmatmul.mubr.f32.gmra.mrb[0].mxu0 %v4053
    %v4184 = vpop.f32.mrb[0].mxu0
    %v4185 = vadd.f32 0.0, %v4184
    %v4186 = vpop.f32.mrb[0].mxu0
    %4187 = vmatprep.mubr.f32.mxu0 0.0
    %4188 = vmatmul.mubr.f32.gmra.mrb[0].mxu0 %v4056
    %v4189 = vpop.f32.mrb[0].mxu0
    %v4190 = vadd.f32 0.0, %v4189
    %v4191 = vpop.f32.mrb[0].mxu0
    %4192 = vmatprep.mubr.f32.mxu0 0.0
    %4193 = vmatmul.mubr.f32.gmra.mrb[0].mxu0 %v4059
    %v4194 = vpop.f32.mrb[0].mxu0
    %v4195 = vadd.f32 0.0, %v4194
    %v4196 = vpop.f32.mrb[0].mxu0
    %4197 = vmatprep.mubr.f32.mxu0 0.0
    %4198 = vmatmul.mubr.f32.gmra.mrb[0].mxu0 %v4062
    %v4199 = vpop.f32.mrb[0].mxu0
    %v4200 = vadd.f32 0.0, %v4199
    %v4201 = vpop.f32.mrb[0].mxu0
    %4202 = vmatprep.mubr.f32.mxu0 0.0
    %4203 = vmatmul.mubr.f32.gmra.mrb[0].mxu0 %v4065
    %v4204 = vpop.f32.mrb[0].mxu0
    %v4205 = vadd.f32 0.0, %v4204
    %v4206 = vpop.f32.mrb[0].mxu0
    %4207 = vmatprep.mubr.f32.mxu0 0.0
    %4208 = vmatmul.mubr.f32.gmra.mrb[0].mxu0 %v4068
    %v4209 = vpop.f32.mrb[0].mxu0
    %v4210 = vadd.f32 0.0, %v4209
    %v4211 = vpop.f32.mrb[0].mxu0
    %4212 = vmatprep.mubr.f32.mxu0 0.0
    %4213 = vmatmul.mubr.f32.gmra.mrb[0].mxu0 %v4071
    %v4214 = vpop.f32.mrb[0].mxu0
    %v4215 = vadd.f32 0.0, %v4214
    %v4216 = vpop.f32.mrb[0].mxu0
    %4217 = vdwg.mxu0
    %v4218 = vadd.f32 %v3988, %v4140
    %v4219 = vadd.f32 %v3989, %v4145
    %v4220 = vadd.f32 %v3990, %v4150
    %v4221 = vadd.f32 %v3991, %v4155
    %v4222 = vadd.f32 %v3992, %v4160
    %v4223 = vadd.f32 %v3993, %v4165
    %v4224 = vadd.f32 %v3994, %v4170
    %v4225 = vadd.f32 %v3995, %v4175
    %v4226 = vadd.f32 %v3996, %v4180
    %v4227 = vadd.f32 %v3997, %v4185
    %v4228 = vadd.f32 %v3998, %v4190
    %v4229 = vadd.f32 %v3999, %v4195
    %v4230 = vadd.f32 %v4000, %v4200
    %v4231 = vadd.f32 %v4001, %v4205
    %v4232 = vadd.f32 %v4002, %v4210
    %v4233 = vadd.f32 %v4003, %v4215
    %s4234 = scalar_lea.vmem %s2, 1
    %v4235 = vld [vmem:[%s4234] sm:$0x1]
    %v4237 = vlaneseq
    %v4238 = vshrl.u32 %v4237, 7
    %v4239 = vsub.s32 0, %v4238
    %v4240 = vrot.slane %v4235, %v4239
    %v4242 = vadd.f32 %v4218, %v4240
    %v4243 = vadd.f32 %v4219, %v4240
    %v4244 = vadd.f32 %v4220, %v4240
    %v4245 = vadd.f32 %v4221, %v4240
    %v4246 = vadd.f32 %v4222, %v4240
    %v4247 = vadd.f32 %v4223, %v4240
    %v4248 = vadd.f32 %v4224, %v4240
    %v4249 = vadd.f32 %v4225, %v4240
    %v4250 = vadd.f32 %v4226, %v4240
    %v4251 = vadd.f32 %v4227, %v4240
    %v4252 = vadd.f32 %v4228, %v4240
    %v4253 = vadd.f32 %v4229, %v4240
    %v4254 = vadd.f32 %v4230, %v4240
    %v4255 = vadd.f32 %v4231, %v4240
    %v4256 = vadd.f32 %v4232, %v4240
    %v4257 = vadd.f32 %v4233, %v4240
    %v4258 = vmax.f32 %v4242, 0.0
    %v4259 = vmax.f32 %v4243, 0.0
    %v4260 = vmax.f32 %v4244, 0.0
    %v4261 = vmax.f32 %v4245, 0.0
    %v4262 = vmax.f32 %v4246, 0.0
    %v4263 = vmax.f32 %v4247, 0.0
    %v4264 = vmax.f32 %v4248, 0.0
    %v4265 = vmax.f32 %v4249, 0.0
    %v4266 = vmax.f32 %v4250, 0.0
    %v4267 = vmax.f32 %v4251, 0.0
    %v4268 = vmax.f32 %v4252, 0.0
    %v4269 = vmax.f32 %v4253, 0.0
    %v4270 = vmax.f32 %v4254, 0.0
    %v4271 = vmax.f32 %v4255, 0.0
    %v4272 = vmax.f32 %v4256, 0.0
    %v4273 = vmax.f32 %v4257, 0.0
    %4274 = vst.msk [vmem:[%s86 + $0x1] sm:$0xff] %vm28, %v4258
    %4275 = vst.msk [vmem:[%s86 + $0x11] sm:$0xff] %vm28, %v4259
    %4276 = vst.msk [vmem:[%s86 + $0x21] sm:$0xff] %vm28, %v4260
    %4277 = vst.msk [vmem:[%s86 + $0x31] sm:$0xff] %vm28, %v4261
    %4278 = vst.msk [vmem:[%s86 + $0x41] sm:$0xff] %vm28, %v4262
    %4279 = vst.msk [vmem:[%s86 + $0x51] sm:$0xff] %vm28, %v4263
    %4280 = vst.msk [vmem:[%s86 + $0x61] sm:$0xff] %vm28, %v4264
    %4281 = vst.msk [vmem:[%s86 + $0x71] sm:$0xff] %vm28, %v4265
    %4282 = vst.msk [vmem:[%s86 + $0xa1] sm:$0xff] %vm28, %v4266
    %4283 = vst.msk [vmem:[%s86 + $0xb1] sm:$0xff] %vm28, %v4267
    %4284 = vst.msk [vmem:[%s86 + $0xc1] sm:$0xff] %vm28, %v4268
    %4285 = vst.msk [vmem:[%s86 + $0xd1] sm:$0xff] %vm28, %v4269
    %4286 = vst.msk [vmem:[%s86 + $0xe1] sm:$0xff] %vm28, %v4270
    %4287 = vst.msk [vmem:[%s86 + $0xf1] sm:$0xff] %vm28, %v4271
    %4288 = vst.msk [vmem:[%s86 + $0x101] sm:$0xff] %vm28, %v4272
    %4289 = vst.msk [vmem:[%s86 + $0x111] sm:$0xff] %vm28, %v4273
    %v4290 = vld [vmem:[#allocation2] sm:$0xff]
    %v4291 = vld [vmem:[#allocation2 + $0x10] sm:$0xff]
    %v4292 = vld [vmem:[#allocation2 + $0x20] sm:$0xff]
    %v4293 = vld [vmem:[#allocation2 + $0x30] sm:$0xff]
    %v4294 = vld [vmem:[#allocation2 + $0x40] sm:$0xff]
    %v4295 = vld [vmem:[#allocation2 + $0x50] sm:$0xff]
    %v4296 = vld [vmem:[#allocation2 + $0x60] sm:$0xff]
    %v4297 = vld [vmem:[#allocation2 + $0x70] sm:$0xff]
    %v4298 = vld [vmem:[#allocation2 + $0xa0] sm:$0xff]
    %v4299 = vld [vmem:[#allocation2 + $0xb0] sm:$0xff]
    %v4300 = vld [vmem:[#allocation2 + $0xc0] sm:$0xff]
    %v4301 = vld [vmem:[#allocation2 + $0xd0] sm:$0xff]
    %v4302 = vld [vmem:[#allocation2 + $0xe0] sm:$0xff]
    %v4303 = vld [vmem:[#allocation2 + $0xf0] sm:$0xff]
    %v4304 = vld [vmem:[#allocation2 + $0x100] sm:$0xff]
    %v4305 = vld [vmem:[#allocation2 + $0x110] sm:$0xff]
    %s4306 = scalar_lea.vmem [#allocation3], 576
    %v4307 = vld [vmem:[%s4306] sm:$0xff]
    %v4308 = vld [vmem:[%s4306 + $0x8] sm:$0xff]
    %v4309 = vld [vmem:[%s4306 + $0x10] sm:$0xff]
    %v4310 = vld [vmem:[%s4306 + $0x18] sm:$0xff]
    %v4311 = vld [vmem:[#allocation2 + $0x1] sm:$0xff]
    %v4312 = vld [vmem:[#allocation2 + $0x11] sm:$0xff]
    %v4313 = vld [vmem:[#allocation2 + $0x21] sm:$0xff]
    %v4314 = vld [vmem:[#allocation2 + $0x31] sm:$0xff]
    %v4315 = vld [vmem:[#allocation2 + $0x41] sm:$0xff]
    %v4316 = vld [vmem:[#allocation2 + $0x51] sm:$0xff]
    %v4317 = vld [vmem:[#allocation2 + $0x61] sm:$0xff]
    %v4318 = vld [vmem:[#allocation2 + $0x71] sm:$0xff]
    %v4319 = vld [vmem:[#allocation2 + $0xa1] sm:$0xff]
    %v4320 = vld [vmem:[#allocation2 + $0xb1] sm:$0xff]
    %v4321 = vld [vmem:[#allocation2 + $0xc1] sm:$0xff]
    %v4322 = vld [vmem:[#allocation2 + $0xd1] sm:$0xff]
    %v4323 = vld [vmem:[#allocation2 + $0xe1] sm:$0xff]
    %v4324 = vld [vmem:[#allocation2 + $0xf1] sm:$0xff]
    %v4325 = vld [vmem:[#allocation2 + $0x101] sm:$0xff]
    %v4326 = vld [vmem:[#allocation2 + $0x111] sm:$0xff]
    %s4327 = scalar_lea.vmem [#allocation3], 608
    %v4328 = vld [vmem:[%s4327] sm:$0xff]
    %v4329 = vld [vmem:[%s4327 + $0x8] sm:$0xff]
    %v4330 = vld [vmem:[%s4327 + $0x10] sm:$0xff]
    %v4331 = vld [vmem:[%s4327 + $0x18] sm:$0xff]
    %v4333 = vsel %vm28, %v4311, 0
    %v4336 = vsel %vm28, %v4312, 0
    %v4339 = vsel %vm28, %v4313, 0
    %v4342 = vsel %vm28, %v4314, 0
    %v4345 = vsel %vm28, %v4315, 0
    %v4348 = vsel %vm28, %v4316, 0
    %v4351 = vsel %vm28, %v4317, 0
    %v4354 = vsel %vm28, %v4318, 0
    %v4357 = vsel %vm28, %v4319, 0
    %v4360 = vsel %vm28, %v4320, 0
    %v4363 = vsel %vm28, %v4321, 0
    %v4366 = vsel %vm28, %v4322, 0
    %v4369 = vsel %vm28, %v4323, 0
    %v4372 = vsel %vm28, %v4324, 0
    %v4375 = vsel %vm28, %v4325, 0
    %v4378 = vsel %vm28, %v4326, 0
    %4380 = vmatprep.subr.mxu0 0.0
    %4381 = vmatpush1.msra.mxu0 %v4328
    %4382 = vmatprep.subr.mxu0 0.0
    %4383 = vmatpush1.msra.mxu0 %v4329
    %4384 = vmatprep.subr.mxu0 0.0
    %4385 = vmatpush1.msra.mxu0 %v4330
    %4386 = vmatprep.subr.mxu0 0.0
    %4387 = vmatpush1.msra.mxu0 %v4331
    %4388 = vmatprep.subr.mxu0 0.0
    %4389 = vmatpush1.msra.mxu0 0.0
    %4390 = vmatprep.subr.mxu0 0.0
    %4391 = vmatpush1.msra.mxu0 0.0
    %4392 = vmatprep.subr.mxu0 0.0
    %4393 = vmatpush1.msra.mxu0 0.0
    %4394 = vmatprep.subr.mxu0 0.0
    %4395 = vmatpush1.msra.mxu0 0.0
    %4396 = vmatprep.subr.mxu0 0.0
    %4397 = vmatpush1.msra.mxu0 0.0
    %4398 = vmatprep.subr.mxu0 0.0
    %4399 = vmatpush1.msra.mxu0 0.0
    %4400 = vmatprep.subr.mxu0 0.0
    %4401 = vmatpush1.msra.mxu0 0.0
    %4402 = vmatprep.subr.mxu0 0.0
    %4403 = vmatpush1.msra.mxu0 0.0
    %4404 = vmatprep.subr.mxu0 0.0
    %4405 = vmatpush1.msra.mxu0 0.0
    %4406 = vmatprep.subr.mxu0 0.0
    %4407 = vmatpush1.msra.mxu0 0.0
    %4408 = vmatprep.subr.mxu0 0.0
    %4409 = vmatpush1.msra.mxu0 0.0
    %4410 = vmatprep.subr.mxu0 0.0
    %4411 = vmatpush1.msra.mxu0 0.0
    %4412 = vmatprep.subr.mxu0 0.0
    %4413 = vmatpush1.msra.mxu0 0.0
    %4414 = vmatprep.subr.mxu0 0.0
    %4415 = vmatpush1.msra.mxu0 0.0
    %4416 = vmatprep.subr.mxu0 0.0
    %4417 = vmatpush1.msra.mxu0 0.0
    %4418 = vmatprep.subr.mxu0 0.0
    %4419 = vmatpush1.msra.mxu0 0.0
    %4420 = vmatprep.subr.mxu0 0.0
    %4421 = vmatpush1.msra.mxu0 0.0
    %4422 = vmatprep.subr.mxu0 0.0
    %4423 = vmatpush1.msra.mxu0 0.0
    %4424 = vmatprep.subr.mxu0 0.0
    %4425 = vmatpush1.msra.mxu0 0.0
    %4426 = vmatprep.subr.mxu0 0.0
    %4427 = vmatpush1.msra.mxu0 0.0
    %4428 = vmatprep.subr.mxu0 0.0
    %4429 = vmatpush1.msra.mxu0 0.0
    %4430 = vmatprep.subr.mxu0 0.0
    %4431 = vmatpush1.msra.mxu0 0.0
    %4432 = vmatprep.subr.mxu0 0.0
    %4433 = vmatpush1.msra.mxu0 0.0
    %4434 = vmatprep.subr.mxu0 0.0
    %4435 = vmatpush1.msra.mxu0 0.0
    %4436 = vmatprep.subr.mxu0 0.0
    %4437 = vmatpush1.msra.mxu0 0.0
    %4438 = vmatprep.subr.mxu0 0.0
    %4439 = vmatpush1.msra.mxu0 0.0
    %4440 = vmatprep.subr.mxu0 0.0
    %4441 = vmatpush1.msra.mxu0 0.0
    %4442 = vmatprep.subr.mxu0 0.0
    %4443 = vmatpush1.msra.mxu0 0.0
    %4444 = vmatprep.mubr.f32.mxu0 0.0
    %4445 = vmatmul.mubr.f32.gmra.mrb[0].mxu0 %v4333
    %v4446 = vpop.f32.mrb[0].mxu0
    %v4447 = vadd.f32 0.0, %v4446
    %v4448 = vpop.f32.mrb[0].mxu0
    %4449 = vmatprep.mubr.f32.mxu0 0.0
    %4450 = vmatmul.mubr.f32.gmra.mrb[0].mxu0 %v4336
    %v4451 = vpop.f32.mrb[0].mxu0
    %v4452 = vadd.f32 0.0, %v4451
    %v4453 = vpop.f32.mrb[0].mxu0
    %4454 = vmatprep.mubr.f32.mxu0 0.0
    %4455 = vmatmul.mubr.f32.gmra.mrb[0].mxu0 %v4339
    %v4456 = vpop.f32.mrb[0].mxu0
    %v4457 = vadd.f32 0.0, %v4456
    %v4458 = vpop.f32.mrb[0].mxu0
    %4459 = vmatprep.mubr.f32.mxu0 0.0
    %4460 = vmatmul.mubr.f32.gmra.mrb[0].mxu0 %v4342
    %v4461 = vpop.f32.mrb[0].mxu0
    %v4462 = vadd.f32 0.0, %v4461
    %v4463 = vpop.f32.mrb[0].mxu0
    %4464 = vmatprep.mubr.f32.mxu0 0.0
    %4465 = vmatmul.mubr.f32.gmra.mrb[0].mxu0 %v4345
    %v4466 = vpop.f32.mrb[0].mxu0
    %v4467 = vadd.f32 0.0, %v4466
    %v4468 = vpop.f32.mrb[0].mxu0
    %4469 = vmatprep.mubr.f32.mxu0 0.0
    %4470 = vmatmul.mubr.f32.gmra.mrb[0].mxu0 %v4348
    %v4471 = vpop.f32.mrb[0].mxu0
    %v4472 = vadd.f32 0.0, %v4471
    %v4473 = vpop.f32.mrb[0].mxu0
    %4474 = vmatprep.mubr.f32.mxu0 0.0
    %4475 = vmatmul.mubr.f32.gmra.mrb[0].mxu0 %v4351
    %v4476 = vpop.f32.mrb[0].mxu0
    %v4477 = vadd.f32 0.0, %v4476
    %v4478 = vpop.f32.mrb[0].mxu0
    %4479 = vmatprep.mubr.f32.mxu0 0.0
    %4480 = vmatmul.mubr.f32.gmra.mrb[0].mxu0 %v4354
    %v4481 = vpop.f32.mrb[0].mxu0
    %v4482 = vadd.f32 0.0, %v4481
    %v4483 = vpop.f32.mrb[0].mxu0
    %4484 = vmatprep.mubr.f32.mxu0 0.0
    %4485 = vmatmul.mubr.f32.gmra.mrb[0].mxu0 %v4357
    %v4486 = vpop.f32.mrb[0].mxu0
    %v4487 = vadd.f32 0.0, %v4486
    %v4488 = vpop.f32.mrb[0].mxu0
    %4489 = vmatprep.mubr.f32.mxu0 0.0
    %4490 = vmatmul.mubr.f32.gmra.mrb[0].mxu0 %v4360
    %v4491 = vpop.f32.mrb[0].mxu0
    %v4492 = vadd.f32 0.0, %v4491
    %v4493 = vpop.f32.mrb[0].mxu0
    %4494 = vmatprep.mubr.f32.mxu0 0.0
    %4495 = vmatmul.mubr.f32.gmra.mrb[0].mxu0 %v4363
    %v4496 = vpop.f32.mrb[0].mxu0
    %v4497 = vadd.f32 0.0, %v4496
    %v4498 = vpop.f32.mrb[0].mxu0
    %4499 = vmatprep.mubr.f32.mxu0 0.0
    %4500 = vmatmul.mubr.f32.gmra.mrb[0].mxu0 %v4366
    %v4501 = vpop.f32.mrb[0].mxu0
    %v4502 = vadd.f32 0.0, %v4501
    %v4503 = vpop.f32.mrb[0].mxu0
    %4504 = vmatprep.mubr.f32.mxu0 0.0
    %4505 = vmatmul.mubr.f32.gmra.mrb[0].mxu0 %v4369
    %v4506 = vpop.f32.mrb[0].mxu0
    %v4507 = vadd.f32 0.0, %v4506
    %v4508 = vpop.f32.mrb[0].mxu0
    %4509 = vmatprep.mubr.f32.mxu0 0.0
    %4510 = vmatmul.mubr.f32.gmra.mrb[0].mxu0 %v4372
    %v4511 = vpop.f32.mrb[0].mxu0
    %v4512 = vadd.f32 0.0, %v4511
    %v4513 = vpop.f32.mrb[0].mxu0
    %4514 = vmatprep.mubr.f32.mxu0 0.0
    %4515 = vmatmul.mubr.f32.gmra.mrb[0].mxu0 %v4375
    %v4516 = vpop.f32.mrb[0].mxu0
    %v4517 = vadd.f32 0.0, %v4516
    %v4518 = vpop.f32.mrb[0].mxu0
    %4519 = vmatprep.mubr.f32.mxu0 0.0
    %4520 = vmatmul.mubr.f32.gmra.mrb[0].mxu0 %v4378
    %v4521 = vpop.f32.mrb[0].mxu0
    %v4522 = vadd.f32 0.0, %v4521
    %v4523 = vpop.f32.mrb[0].mxu0
    %4524 = vdwg.mxu0
    %v4526 = vsel %vm28, %v4290, 0
    %v4529 = vsel %vm28, %v4291, 0
    %v4532 = vsel %vm28, %v4292, 0
    %v4535 = vsel %vm28, %v4293, 0
    %v4538 = vsel %vm28, %v4294, 0
    %v4541 = vsel %vm28, %v4295, 0
    %v4544 = vsel %vm28, %v4296, 0
    %v4547 = vsel %vm28, %v4297, 0
    %v4550 = vsel %vm28, %v4298, 0
    %v4553 = vsel %vm28, %v4299, 0
    %v4556 = vsel %vm28, %v4300, 0
    %v4559 = vsel %vm28, %v4301, 0
    %v4562 = vsel %vm28, %v4302, 0
    %v4565 = vsel %vm28, %v4303, 0
    %v4568 = vsel %vm28, %v4304, 0
    %v4571 = vsel %vm28, %v4305, 0
    %4573 = vmatprep.subr.mxu0 0.0
    %4574 = vmatpush1.msra.mxu0 %v4307
    %4575 = vmatprep.subr.mxu0 0.0
    %4576 = vmatpush1.msra.mxu0 %v4308
    %4577 = vmatprep.subr.mxu0 0.0
    %4578 = vmatpush1.msra.mxu0 %v4309
    %4579 = vmatprep.subr.mxu0 0.0
    %4580 = vmatpush1.msra.mxu0 %v4310
    %4581 = vmatprep.subr.mxu0 0.0
    %4582 = vmatpush1.msra.mxu0 0.0
    %4583 = vmatprep.subr.mxu0 0.0
    %4584 = vmatpush1.msra.mxu0 0.0
    %4585 = vmatprep.subr.mxu0 0.0
    %4586 = vmatpush1.msra.mxu0 0.0
    %4587 = vmatprep.subr.mxu0 0.0
    %4588 = vmatpush1.msra.mxu0 0.0
    %4589 = vmatprep.subr.mxu0 0.0
    %4590 = vmatpush1.msra.mxu0 0.0
    %4591 = vmatprep.subr.mxu0 0.0
    %4592 = vmatpush1.msra.mxu0 0.0
    %4593 = vmatprep.subr.mxu0 0.0
    %4594 = vmatpush1.msra.mxu0 0.0
    %4595 = vmatprep.subr.mxu0 0.0
    %4596 = vmatpush1.msra.mxu0 0.0
    %4597 = vmatprep.subr.mxu0 0.0
    %4598 = vmatpush1.msra.mxu0 0.0
    %4599 = vmatprep.subr.mxu0 0.0
    %4600 = vmatpush1.msra.mxu0 0.0
    %4601 = vmatprep.subr.mxu0 0.0
    %4602 = vmatpush1.msra.mxu0 0.0
    %4603 = vmatprep.subr.mxu0 0.0
    %4604 = vmatpush1.msra.mxu0 0.0
    %4605 = vmatprep.subr.mxu0 0.0
    %4606 = vmatpush1.msra.mxu0 0.0
    %4607 = vmatprep.subr.mxu0 0.0
    %4608 = vmatpush1.msra.mxu0 0.0
    %4609 = vmatprep.subr.mxu0 0.0
    %4610 = vmatpush1.msra.mxu0 0.0
    %4611 = vmatprep.subr.mxu0 0.0
    %4612 = vmatpush1.msra.mxu0 0.0
    %4613 = vmatprep.subr.mxu0 0.0
    %4614 = vmatpush1.msra.mxu0 0.0
    %4615 = vmatprep.subr.mxu0 0.0
    %4616 = vmatpush1.msra.mxu0 0.0
    %4617 = vmatprep.subr.mxu0 0.0
    %4618 = vmatpush1.msra.mxu0 0.0
    %4619 = vmatprep.subr.mxu0 0.0
    %4620 = vmatpush1.msra.mxu0 0.0
    %4621 = vmatprep.subr.mxu0 0.0
    %4622 = vmatpush1.msra.mxu0 0.0
    %4623 = vmatprep.subr.mxu0 0.0
    %4624 = vmatpush1.msra.mxu0 0.0
    %4625 = vmatprep.subr.mxu0 0.0
    %4626 = vmatpush1.msra.mxu0 0.0
    %4627 = vmatprep.subr.mxu0 0.0
    %4628 = vmatpush1.msra.mxu0 0.0
    %4629 = vmatprep.subr.mxu0 0.0
    %4630 = vmatpush1.msra.mxu0 0.0
    %4631 = vmatprep.subr.mxu0 0.0
    %4632 = vmatpush1.msra.mxu0 0.0
    %4633 = vmatprep.subr.mxu0 0.0
    %4634 = vmatpush1.msra.mxu0 0.0
    %4635 = vmatprep.subr.mxu0 0.0
    %4636 = vmatpush1.msra.mxu0 0.0
    %4637 = vmatprep.mubr.f32.mxu0 0.0
    %4638 = vmatmul.mubr.f32.gmra.mrb[0].mxu0 %v4526
    %v4639 = vpop.f32.mrb[0].mxu0
    %v4640 = vadd.f32 %v4447, %v4639
    %v4641 = vpop.f32.mrb[0].mxu0
    %4642 = vmatprep.mubr.f32.mxu0 0.0
    %4643 = vmatmul.mubr.f32.gmra.mrb[0].mxu0 %v4529
    %v4644 = vpop.f32.mrb[0].mxu0
    %v4645 = vadd.f32 %v4452, %v4644
    %v4646 = vpop.f32.mrb[0].mxu0
    %4647 = vmatprep.mubr.f32.mxu0 0.0
    %4648 = vmatmul.mubr.f32.gmra.mrb[0].mxu0 %v4532
    %v4649 = vpop.f32.mrb[0].mxu0
    %v4650 = vadd.f32 %v4457, %v4649
    %v4651 = vpop.f32.mrb[0].mxu0
    %4652 = vmatprep.mubr.f32.mxu0 0.0
    %4653 = vmatmul.mubr.f32.gmra.mrb[0].mxu0 %v4535
    %v4654 = vpop.f32.mrb[0].mxu0
    %v4655 = vadd.f32 %v4462, %v4654
    %v4656 = vpop.f32.mrb[0].mxu0
    %4657 = vmatprep.mubr.f32.mxu0 0.0
    %4658 = vmatmul.mubr.f32.gmra.mrb[0].mxu0 %v4538
    %v4659 = vpop.f32.mrb[0].mxu0
    %v4660 = vadd.f32 %v4467, %v4659
    %v4661 = vpop.f32.mrb[0].mxu0
    %4662 = vmatprep.mubr.f32.mxu0 0.0
    %4663 = vmatmul.mubr.f32.gmra.mrb[0].mxu0 %v4541
    %v4664 = vpop.f32.mrb[0].mxu0
    %v4665 = vadd.f32 %v4472, %v4664
    %v4666 = vpop.f32.mrb[0].mxu0
    %4667 = vmatprep.mubr.f32.mxu0 0.0
    %4668 = vmatmul.mubr.f32.gmra.mrb[0].mxu0 %v4544
    %v4669 = vpop.f32.mrb[0].mxu0
    %v4670 = vadd.f32 %v4477, %v4669
    %v4671 = vpop.f32.mrb[0].mxu0
    %4672 = vmatprep.mubr.f32.mxu0 0.0
    %4673 = vmatmul.mubr.f32.gmra.mrb[0].mxu0 %v4547
    %v4674 = vpop.f32.mrb[0].mxu0
    %v4675 = vadd.f32 %v4482, %v4674
    %v4676 = vpop.f32.mrb[0].mxu0
    %4677 = vmatprep.mubr.f32.mxu0 0.0
    %4678 = vmatmul.mubr.f32.gmra.mrb[0].mxu0 %v4550
    %v4679 = vpop.f32.mrb[0].mxu0
    %v4680 = vadd.f32 %v4487, %v4679
    %v4681 = vpop.f32.mrb[0].mxu0
    %4682 = vmatprep.mubr.f32.mxu0 0.0
    %4683 = vmatmul.mubr.f32.gmra.mrb[0].mxu0 %v4553
    %v4684 = vpop.f32.mrb[0].mxu0
    %v4685 = vadd.f32 %v4492, %v4684
    %v4686 = vpop.f32.mrb[0].mxu0
    %4687 = vmatprep.mubr.f32.mxu0 0.0
    %4688 = vmatmul.mubr.f32.gmra.mrb[0].mxu0 %v4556
    %v4689 = vpop.f32.mrb[0].mxu0
    %v4690 = vadd.f32 %v4497, %v4689
    %v4691 = vpop.f32.mrb[0].mxu0
    %4692 = vmatprep.mubr.f32.mxu0 0.0
    %4693 = vmatmul.mubr.f32.gmra.mrb[0].mxu0 %v4559
    %v4694 = vpop.f32.mrb[0].mxu0
    %v4695 = vadd.f32 %v4502, %v4694
    %v4696 = vpop.f32.mrb[0].mxu0
    %4697 = vmatprep.mubr.f32.mxu0 0.0
    %4698 = vmatmul.mubr.f32.gmra.mrb[0].mxu0 %v4562
    %v4699 = vpop.f32.mrb[0].mxu0
    %v4700 = vadd.f32 %v4507, %v4699
    %v4701 = vpop.f32.mrb[0].mxu0
    %4702 = vmatprep.mubr.f32.mxu0 0.0
    %4703 = vmatmul.mubr.f32.gmra.mrb[0].mxu0 %v4565
    %v4704 = vpop.f32.mrb[0].mxu0
    %v4705 = vadd.f32 %v4512, %v4704
    %v4706 = vpop.f32.mrb[0].mxu0
    %4707 = vmatprep.mubr.f32.mxu0 0.0
    %4708 = vmatmul.mubr.f32.gmra.mrb[0].mxu0 %v4568
    %v4709 = vpop.f32.mrb[0].mxu0
    %v4710 = vadd.f32 %v4517, %v4709
    %v4711 = vpop.f32.mrb[0].mxu0
    %4712 = vmatprep.mubr.f32.mxu0 0.0
    %4713 = vmatmul.mubr.f32.gmra.mrb[0].mxu0 %v4571
    %v4714 = vpop.f32.mrb[0].mxu0
    %v4715 = vadd.f32 %v4522, %v4714
    %v4716 = vpop.f32.mrb[0].mxu0
    %4717 = vdwg.mxu0
    %v4718 = vld [vmem:[#allocation2 + $0x2] sm:$0xff]
    %v4719 = vld [vmem:[#allocation2 + $0x12] sm:$0xff]
    %v4720 = vld [vmem:[#allocation2 + $0x22] sm:$0xff]
    %v4721 = vld [vmem:[#allocation2 + $0x32] sm:$0xff]
    %v4722 = vld [vmem:[#allocation2 + $0x42] sm:$0xff]
    %v4723 = vld [vmem:[#allocation2 + $0x52] sm:$0xff]
    %v4724 = vld [vmem:[#allocation2 + $0x62] sm:$0xff]
    %v4725 = vld [vmem:[#allocation2 + $0x72] sm:$0xff]
    %v4726 = vld [vmem:[#allocation2 + $0xa2] sm:$0xff]
    %v4727 = vld [vmem:[#allocation2 + $0xb2] sm:$0xff]
    %v4728 = vld [vmem:[#allocation2 + $0xc2] sm:$0xff]
    %v4729 = vld [vmem:[#allocation2 + $0xd2] sm:$0xff]
    %v4730 = vld [vmem:[#allocation2 + $0xe2] sm:$0xff]
    %v4731 = vld [vmem:[#allocation2 + $0xf2] sm:$0xff]
    %v4732 = vld [vmem:[#allocation2 + $0x102] sm:$0xff]
    %v4733 = vld [vmem:[#allocation2 + $0x112] sm:$0xff]
    %s4734 = scalar_lea.vmem [#allocation3], 640
    %v4735 = vld [vmem:[%s4734] sm:$0xff]
    %v4736 = vld [vmem:[%s4734 + $0x8] sm:$0xff]
    %v4737 = vld [vmem:[%s4734 + $0x10] sm:$0xff]
    %v4738 = vld [vmem:[%s4734 + $0x18] sm:$0xff]
    %v4740 = vsel %vm28, %v4718, 0
    %v4743 = vsel %vm28, %v4719, 0
    %v4746 = vsel %vm28, %v4720, 0
    %v4749 = vsel %vm28, %v4721, 0
    %v4752 = vsel %vm28, %v4722, 0
    %v4755 = vsel %vm28, %v4723, 0
    %v4758 = vsel %vm28, %v4724, 0
    %v4761 = vsel %vm28, %v4725, 0
    %v4764 = vsel %vm28, %v4726, 0
    %v4767 = vsel %vm28, %v4727, 0
    %v4770 = vsel %vm28, %v4728, 0
    %v4773 = vsel %vm28, %v4729, 0
    %v4776 = vsel %vm28, %v4730, 0
    %v4779 = vsel %vm28, %v4731, 0
    %v4782 = vsel %vm28, %v4732, 0
    %v4785 = vsel %vm28, %v4733, 0
    %4787 = vmatprep.subr.mxu0 0.0
    %4788 = vmatpush1.msra.mxu0 %v4735
    %4789 = vmatprep.subr.mxu0 0.0
    %4790 = vmatpush1.msra.mxu0 %v4736
    %4791 = vmatprep.subr.mxu0 0.0
    %4792 = vmatpush1.msra.mxu0 %v4737
    %4793 = vmatprep.subr.mxu0 0.0
    %4794 = vmatpush1.msra.mxu0 %v4738
    %4795 = vmatprep.subr.mxu0 0.0
    %4796 = vmatpush1.msra.mxu0 0.0
    %4797 = vmatprep.subr.mxu0 0.0
    %4798 = vmatpush1.msra.mxu0 0.0
    %4799 = vmatprep.subr.mxu0 0.0
    %4800 = vmatpush1.msra.mxu0 0.0
    %4801 = vmatprep.subr.mxu0 0.0
    %4802 = vmatpush1.msra.mxu0 0.0
    %4803 = vmatprep.subr.mxu0 0.0
    %4804 = vmatpush1.msra.mxu0 0.0
    %4805 = vmatprep.subr.mxu0 0.0
    %4806 = vmatpush1.msra.mxu0 0.0
    %4807 = vmatprep.subr.mxu0 0.0
    %4808 = vmatpush1.msra.mxu0 0.0
    %4809 = vmatprep.subr.mxu0 0.0
    %4810 = vmatpush1.msra.mxu0 0.0
    %4811 = vmatprep.subr.mxu0 0.0
    %4812 = vmatpush1.msra.mxu0 0.0
    %4813 = vmatprep.subr.mxu0 0.0
    %4814 = vmatpush1.msra.mxu0 0.0
    %4815 = vmatprep.subr.mxu0 0.0
    %4816 = vmatpush1.msra.mxu0 0.0
    %4817 = vmatprep.subr.mxu0 0.0
    %4818 = vmatpush1.msra.mxu0 0.0
    %4819 = vmatprep.subr.mxu0 0.0
    %4820 = vmatpush1.msra.mxu0 0.0
    %4821 = vmatprep.subr.mxu0 0.0
    %4822 = vmatpush1.msra.mxu0 0.0
    %4823 = vmatprep.subr.mxu0 0.0
    %4824 = vmatpush1.msra.mxu0 0.0
    %4825 = vmatprep.subr.mxu0 0.0
    %4826 = vmatpush1.msra.mxu0 0.0
    %4827 = vmatprep.subr.mxu0 0.0
    %4828 = vmatpush1.msra.mxu0 0.0
    %4829 = vmatprep.subr.mxu0 0.0
    %4830 = vmatpush1.msra.mxu0 0.0
    %4831 = vmatprep.subr.mxu0 0.0
    %4832 = vmatpush1.msra.mxu0 0.0
    %4833 = vmatprep.subr.mxu0 0.0
    %4834 = vmatpush1.msra.mxu0 0.0
    %4835 = vmatprep.subr.mxu0 0.0
    %4836 = vmatpush1.msra.mxu0 0.0
    %4837 = vmatprep.subr.mxu0 0.0
    %4838 = vmatpush1.msra.mxu0 0.0
    %4839 = vmatprep.subr.mxu0 0.0
    %4840 = vmatpush1.msra.mxu0 0.0
    %4841 = vmatprep.subr.mxu0 0.0
    %4842 = vmatpush1.msra.mxu0 0.0
    %4843 = vmatprep.subr.mxu0 0.0
    %4844 = vmatpush1.msra.mxu0 0.0
    %4845 = vmatprep.subr.mxu0 0.0
    %4846 = vmatpush1.msra.mxu0 0.0
    %4847 = vmatprep.subr.mxu0 0.0
    %4848 = vmatpush1.msra.mxu0 0.0
    %4849 = vmatprep.subr.mxu0 0.0
    %4850 = vmatpush1.msra.mxu0 0.0
    %4851 = vmatprep.mubr.f32.mxu0 0.0
    %4852 = vmatmul.mubr.f32.gmra.mrb[0].mxu0 %v4740
    %v4853 = vpop.f32.mrb[0].mxu0
    %v4854 = vadd.f32 0.0, %v4853
    %v4855 = vpop.f32.mrb[0].mxu0
    %4856 = vmatprep.mubr.f32.mxu0 0.0
    %4857 = vmatmul.mubr.f32.gmra.mrb[0].mxu0 %v4743
    %v4858 = vpop.f32.mrb[0].mxu0
    %v4859 = vadd.f32 0.0, %v4858
    %v4860 = vpop.f32.mrb[0].mxu0
    %4861 = vmatprep.mubr.f32.mxu0 0.0
    %4862 = vmatmul.mubr.f32.gmra.mrb[0].mxu0 %v4746
    %v4863 = vpop.f32.mrb[0].mxu0
    %v4864 = vadd.f32 0.0, %v4863
    %v4865 = vpop.f32.mrb[0].mxu0
    %4866 = vmatprep.mubr.f32.mxu0 0.0
    %4867 = vmatmul.mubr.f32.gmra.mrb[0].mxu0 %v4749
    %v4868 = vpop.f32.mrb[0].mxu0
    %v4869 = vadd.f32 0.0, %v4868
    %v4870 = vpop.f32.mrb[0].mxu0
    %4871 = vmatprep.mubr.f32.mxu0 0.0
    %4872 = vmatmul.mubr.f32.gmra.mrb[0].mxu0 %v4752
    %v4873 = vpop.f32.mrb[0].mxu0
    %v4874 = vadd.f32 0.0, %v4873
    %v4875 = vpop.f32.mrb[0].mxu0
    %4876 = vmatprep.mubr.f32.mxu0 0.0
    %4877 = vmatmul.mubr.f32.gmra.mrb[0].mxu0 %v4755
    %v4878 = vpop.f32.mrb[0].mxu0
    %v4879 = vadd.f32 0.0, %v4878
    %v4880 = vpop.f32.mrb[0].mxu0
    %4881 = vmatprep.mubr.f32.mxu0 0.0
    %4882 = vmatmul.mubr.f32.gmra.mrb[0].mxu0 %v4758
    %v4883 = vpop.f32.mrb[0].mxu0
    %v4884 = vadd.f32 0.0, %v4883
    %v4885 = vpop.f32.mrb[0].mxu0
    %4886 = vmatprep.mubr.f32.mxu0 0.0
    %4887 = vmatmul.mubr.f32.gmra.mrb[0].mxu0 %v4761
    %v4888 = vpop.f32.mrb[0].mxu0
    %v4889 = vadd.f32 0.0, %v4888
    %v4890 = vpop.f32.mrb[0].mxu0
    %4891 = vmatprep.mubr.f32.mxu0 0.0
    %4892 = vmatmul.mubr.f32.gmra.mrb[0].mxu0 %v4764
    %v4893 = vpop.f32.mrb[0].mxu0
    %v4894 = vadd.f32 0.0, %v4893
    %v4895 = vpop.f32.mrb[0].mxu0
    %4896 = vmatprep.mubr.f32.mxu0 0.0
    %4897 = vmatmul.mubr.f32.gmra.mrb[0].mxu0 %v4767
    %v4898 = vpop.f32.mrb[0].mxu0
    %v4899 = vadd.f32 0.0, %v4898
    %v4900 = vpop.f32.mrb[0].mxu0
    %4901 = vmatprep.mubr.f32.mxu0 0.0
    %4902 = vmatmul.mubr.f32.gmra.mrb[0].mxu0 %v4770
    %v4903 = vpop.f32.mrb[0].mxu0
    %v4904 = vadd.f32 0.0, %v4903
    %v4905 = vpop.f32.mrb[0].mxu0
    %4906 = vmatprep.mubr.f32.mxu0 0.0
    %4907 = vmatmul.mubr.f32.gmra.mrb[0].mxu0 %v4773
    %v4908 = vpop.f32.mrb[0].mxu0
    %v4909 = vadd.f32 0.0, %v4908
    %v4910 = vpop.f32.mrb[0].mxu0
    %4911 = vmatprep.mubr.f32.mxu0 0.0
    %4912 = vmatmul.mubr.f32.gmra.mrb[0].mxu0 %v4776
    %v4913 = vpop.f32.mrb[0].mxu0
    %v4914 = vadd.f32 0.0, %v4913
    %v4915 = vpop.f32.mrb[0].mxu0
    %4916 = vmatprep.mubr.f32.mxu0 0.0
    %4917 = vmatmul.mubr.f32.gmra.mrb[0].mxu0 %v4779
    %v4918 = vpop.f32.mrb[0].mxu0
    %v4919 = vadd.f32 0.0, %v4918
    %v4920 = vpop.f32.mrb[0].mxu0
    %4921 = vmatprep.mubr.f32.mxu0 0.0
    %4922 = vmatmul.mubr.f32.gmra.mrb[0].mxu0 %v4782
    %v4923 = vpop.f32.mrb[0].mxu0
    %v4924 = vadd.f32 0.0, %v4923
    %v4925 = vpop.f32.mrb[0].mxu0
    %4926 = vmatprep.mubr.f32.mxu0 0.0
    %4927 = vmatmul.mubr.f32.gmra.mrb[0].mxu0 %v4785
    %v4928 = vpop.f32.mrb[0].mxu0
    %v4929 = vadd.f32 0.0, %v4928
    %v4930 = vpop.f32.mrb[0].mxu0
    %4931 = vdwg.mxu0
    %v4932 = vadd.f32 %v4640, %v4854
    %v4933 = vadd.f32 %v4645, %v4859
    %v4934 = vadd.f32 %v4650, %v4864
    %v4935 = vadd.f32 %v4655, %v4869
    %v4936 = vadd.f32 %v4660, %v4874
    %v4937 = vadd.f32 %v4665, %v4879
    %v4938 = vadd.f32 %v4670, %v4884
    %v4939 = vadd.f32 %v4675, %v4889
    %v4940 = vadd.f32 %v4680, %v4894
    %v4941 = vadd.f32 %v4685, %v4899
    %v4942 = vadd.f32 %v4690, %v4904
    %v4943 = vadd.f32 %v4695, %v4909
    %v4944 = vadd.f32 %v4700, %v4914
    %v4945 = vadd.f32 %v4705, %v4919
    %v4946 = vadd.f32 %v4710, %v4924
    %v4947 = vadd.f32 %v4715, %v4929
    %v4948 = vld [vmem:[%s86] sm:$0xff]
    %v4949 = vld [vmem:[%s86 + $0x10] sm:$0xff]
    %v4950 = vld [vmem:[%s86 + $0x20] sm:$0xff]
    %v4951 = vld [vmem:[%s86 + $0x30] sm:$0xff]
    %v4952 = vld [vmem:[%s86 + $0x40] sm:$0xff]
    %v4953 = vld [vmem:[%s86 + $0x50] sm:$0xff]
    %v4954 = vld [vmem:[%s86 + $0x60] sm:$0xff]
    %v4955 = vld [vmem:[%s86 + $0x70] sm:$0xff]
    %v4956 = vld [vmem:[%s86 + $0xa0] sm:$0xff]
    %v4957 = vld [vmem:[%s86 + $0xb0] sm:$0xff]
    %v4958 = vld [vmem:[%s86 + $0xc0] sm:$0xff]
    %v4959 = vld [vmem:[%s86 + $0xd0] sm:$0xff]
    %v4960 = vld [vmem:[%s86 + $0xe0] sm:$0xff]
    %v4961 = vld [vmem:[%s86 + $0xf0] sm:$0xff]
    %v4962 = vld [vmem:[%s86 + $0x100] sm:$0xff]
    %v4963 = vld [vmem:[%s86 + $0x110] sm:$0xff]
    %s4964 = scalar_lea.vmem [#allocation3], 672
    %v4965 = vld [vmem:[%s4964] sm:$0xff]
    %v4966 = vld [vmem:[%s4964 + $0x8] sm:$0xff]
    %v4967 = vld [vmem:[%s4964 + $0x10] sm:$0xff]
    %v4968 = vld [vmem:[%s4964 + $0x18] sm:$0xff]
    %v4970 = vsel %vm28, %v4948, 0
    %v4973 = vsel %vm28, %v4949, 0
    %v4976 = vsel %vm28, %v4950, 0
    %v4979 = vsel %vm28, %v4951, 0
    %v4982 = vsel %vm28, %v4952, 0
    %v4985 = vsel %vm28, %v4953, 0
    %v4988 = vsel %vm28, %v4954, 0
    %v4991 = vsel %vm28, %v4955, 0
    %v4994 = vsel %vm28, %v4956, 0
    %v4997 = vsel %vm28, %v4957, 0
    %v5000 = vsel %vm28, %v4958, 0
    %v5003 = vsel %vm28, %v4959, 0
    %v5006 = vsel %vm28, %v4960, 0
    %v5009 = vsel %vm28, %v4961, 0
    %v5012 = vsel %vm28, %v4962, 0
    %v5015 = vsel %vm28, %v4963, 0
    %5017 = vmatprep.subr.mxu0 0.0
    %5018 = vmatpush1.msra.mxu0 %v4965
    %5019 = vmatprep.subr.mxu0 0.0
    %5020 = vmatpush1.msra.mxu0 %v4966
    %5021 = vmatprep.subr.mxu0 0.0
    %5022 = vmatpush1.msra.mxu0 %v4967
    %5023 = vmatprep.subr.mxu0 0.0
    %5024 = vmatpush1.msra.mxu0 %v4968
    %5025 = vmatprep.subr.mxu0 0.0
    %5026 = vmatpush1.msra.mxu0 0.0
    %5027 = vmatprep.subr.mxu0 0.0
    %5028 = vmatpush1.msra.mxu0 0.0
    %5029 = vmatprep.subr.mxu0 0.0
    %5030 = vmatpush1.msra.mxu0 0.0
    %5031 = vmatprep.subr.mxu0 0.0
    %5032 = vmatpush1.msra.mxu0 0.0
    %5033 = vmatprep.subr.mxu0 0.0
    %5034 = vmatpush1.msra.mxu0 0.0
    %5035 = vmatprep.subr.mxu0 0.0
    %5036 = vmatpush1.msra.mxu0 0.0
    %5037 = vmatprep.subr.mxu0 0.0
    %5038 = vmatpush1.msra.mxu0 0.0
    %5039 = vmatprep.subr.mxu0 0.0
    %5040 = vmatpush1.msra.mxu0 0.0
    %5041 = vmatprep.subr.mxu0 0.0
    %5042 = vmatpush1.msra.mxu0 0.0
    %5043 = vmatprep.subr.mxu0 0.0
    %5044 = vmatpush1.msra.mxu0 0.0
    %5045 = vmatprep.subr.mxu0 0.0
    %5046 = vmatpush1.msra.mxu0 0.0
    %5047 = vmatprep.subr.mxu0 0.0
    %5048 = vmatpush1.msra.mxu0 0.0
    %5049 = vmatprep.subr.mxu0 0.0
    %5050 = vmatpush1.msra.mxu0 0.0
    %5051 = vmatprep.subr.mxu0 0.0
    %5052 = vmatpush1.msra.mxu0 0.0
    %5053 = vmatprep.subr.mxu0 0.0
    %5054 = vmatpush1.msra.mxu0 0.0
    %5055 = vmatprep.subr.mxu0 0.0
    %5056 = vmatpush1.msra.mxu0 0.0
    %5057 = vmatprep.subr.mxu0 0.0
    %5058 = vmatpush1.msra.mxu0 0.0
    %5059 = vmatprep.subr.mxu0 0.0
    %5060 = vmatpush1.msra.mxu0 0.0
    %5061 = vmatprep.subr.mxu0 0.0
    %5062 = vmatpush1.msra.mxu0 0.0
    %5063 = vmatprep.subr.mxu0 0.0
    %5064 = vmatpush1.msra.mxu0 0.0
    %5065 = vmatprep.subr.mxu0 0.0
    %5066 = vmatpush1.msra.mxu0 0.0
    %5067 = vmatprep.subr.mxu0 0.0
    %5068 = vmatpush1.msra.mxu0 0.0
    %5069 = vmatprep.subr.mxu0 0.0
    %5070 = vmatpush1.msra.mxu0 0.0
    %5071 = vmatprep.subr.mxu0 0.0
    %5072 = vmatpush1.msra.mxu0 0.0
    %5073 = vmatprep.subr.mxu0 0.0
    %5074 = vmatpush1.msra.mxu0 0.0
    %5075 = vmatprep.subr.mxu0 0.0
    %5076 = vmatpush1.msra.mxu0 0.0
    %5077 = vmatprep.subr.mxu0 0.0
    %5078 = vmatpush1.msra.mxu0 0.0
    %5079 = vmatprep.subr.mxu0 0.0
    %5080 = vmatpush1.msra.mxu0 0.0
    %5081 = vmatprep.mubr.f32.mxu0 0.0
    %5082 = vmatmul.mubr.f32.gmra.mrb[0].mxu0 %v4970
    %v5083 = vpop.f32.mrb[0].mxu0
    %v5084 = vadd.f32 0.0, %v5083
    %v5085 = vpop.f32.mrb[0].mxu0
    %5086 = vmatprep.mubr.f32.mxu0 0.0
    %5087 = vmatmul.mubr.f32.gmra.mrb[0].mxu0 %v4973
    %v5088 = vpop.f32.mrb[0].mxu0
    %v5089 = vadd.f32 0.0, %v5088
    %v5090 = vpop.f32.mrb[0].mxu0
    %5091 = vmatprep.mubr.f32.mxu0 0.0
    %5092 = vmatmul.mubr.f32.gmra.mrb[0].mxu0 %v4976
    %v5093 = vpop.f32.mrb[0].mxu0
    %v5094 = vadd.f32 0.0, %v5093
    %v5095 = vpop.f32.mrb[0].mxu0
    %5096 = vmatprep.mubr.f32.mxu0 0.0
    %5097 = vmatmul.mubr.f32.gmra.mrb[0].mxu0 %v4979
    %v5098 = vpop.f32.mrb[0].mxu0
    %v5099 = vadd.f32 0.0, %v5098
    %v5100 = vpop.f32.mrb[0].mxu0
    %5101 = vmatprep.mubr.f32.mxu0 0.0
    %5102 = vmatmul.mubr.f32.gmra.mrb[0].mxu0 %v4982
    %v5103 = vpop.f32.mrb[0].mxu0
    %v5104 = vadd.f32 0.0, %v5103
    %v5105 = vpop.f32.mrb[0].mxu0
    %5106 = vmatprep.mubr.f32.mxu0 0.0
    %5107 = vmatmul.mubr.f32.gmra.mrb[0].mxu0 %v4985
    %v5108 = vpop.f32.mrb[0].mxu0
    %v5109 = vadd.f32 0.0, %v5108
    %v5110 = vpop.f32.mrb[0].mxu0
    %5111 = vmatprep.mubr.f32.mxu0 0.0
    %5112 = vmatmul.mubr.f32.gmra.mrb[0].mxu0 %v4988
    %v5113 = vpop.f32.mrb[0].mxu0
    %v5114 = vadd.f32 0.0, %v5113
    %v5115 = vpop.f32.mrb[0].mxu0
    %5116 = vmatprep.mubr.f32.mxu0 0.0
    %5117 = vmatmul.mubr.f32.gmra.mrb[0].mxu0 %v4991
    %v5118 = vpop.f32.mrb[0].mxu0
    %v5119 = vadd.f32 0.0, %v5118
    %v5120 = vpop.f32.mrb[0].mxu0
    %5121 = vmatprep.mubr.f32.mxu0 0.0
    %5122 = vmatmul.mubr.f32.gmra.mrb[0].mxu0 %v4994
    %v5123 = vpop.f32.mrb[0].mxu0
    %v5124 = vadd.f32 0.0, %v5123
    %v5125 = vpop.f32.mrb[0].mxu0
    %5126 = vmatprep.mubr.f32.mxu0 0.0
    %5127 = vmatmul.mubr.f32.gmra.mrb[0].mxu0 %v4997
    %v5128 = vpop.f32.mrb[0].mxu0
    %v5129 = vadd.f32 0.0, %v5128
    %v5130 = vpop.f32.mrb[0].mxu0
    %5131 = vmatprep.mubr.f32.mxu0 0.0
    %5132 = vmatmul.mubr.f32.gmra.mrb[0].mxu0 %v5000
    %v5133 = vpop.f32.mrb[0].mxu0
    %v5134 = vadd.f32 0.0, %v5133
    %v5135 = vpop.f32.mrb[0].mxu0
    %5136 = vmatprep.mubr.f32.mxu0 0.0
    %5137 = vmatmul.mubr.f32.gmra.mrb[0].mxu0 %v5003
    %v5138 = vpop.f32.mrb[0].mxu0
    %v5139 = vadd.f32 0.0, %v5138
    %v5140 = vpop.f32.mrb[0].mxu0
    %5141 = vmatprep.mubr.f32.mxu0 0.0
    %5142 = vmatmul.mubr.f32.gmra.mrb[0].mxu0 %v5006
    %v5143 = vpop.f32.mrb[0].mxu0
    %v5144 = vadd.f32 0.0, %v5143
    %v5145 = vpop.f32.mrb[0].mxu0
    %5146 = vmatprep.mubr.f32.mxu0 0.0
    %5147 = vmatmul.mubr.f32.gmra.mrb[0].mxu0 %v5009
    %v5148 = vpop.f32.mrb[0].mxu0
    %v5149 = vadd.f32 0.0, %v5148
    %v5150 = vpop.f32.mrb[0].mxu0
    %5151 = vmatprep.mubr.f32.mxu0 0.0
    %5152 = vmatmul.mubr.f32.gmra.mrb[0].mxu0 %v5012
    %v5153 = vpop.f32.mrb[0].mxu0
    %v5154 = vadd.f32 0.0, %v5153
    %v5155 = vpop.f32.mrb[0].mxu0
    %5156 = vmatprep.mubr.f32.mxu0 0.0
    %5157 = vmatmul.mubr.f32.gmra.mrb[0].mxu0 %v5015
    %v5158 = vpop.f32.mrb[0].mxu0
    %v5159 = vadd.f32 0.0, %v5158
    %v5160 = vpop.f32.mrb[0].mxu0
    %5161 = vdwg.mxu0
    %v5162 = vadd.f32 %v4932, %v5084
    %v5163 = vadd.f32 %v4933, %v5089
    %v5164 = vadd.f32 %v4934, %v5094
    %v5165 = vadd.f32 %v4935, %v5099
    %v5166 = vadd.f32 %v4936, %v5104
    %v5167 = vadd.f32 %v4937, %v5109
    %v5168 = vadd.f32 %v4938, %v5114
    %v5169 = vadd.f32 %v4939, %v5119
    %v5170 = vadd.f32 %v4940, %v5124
    %v5171 = vadd.f32 %v4941, %v5129
    %v5172 = vadd.f32 %v4942, %v5134
    %v5173 = vadd.f32 %v4943, %v5139
    %v5174 = vadd.f32 %v4944, %v5144
    %v5175 = vadd.f32 %v4945, %v5149
    %v5176 = vadd.f32 %v4946, %v5154
    %v5177 = vadd.f32 %v4947, %v5159
    %v5178 = vld [vmem:[%s86 + $0x1] sm:$0xff]
    %v5179 = vld [vmem:[%s86 + $0x11] sm:$0xff]
    %v5180 = vld [vmem:[%s86 + $0x21] sm:$0xff]
    %v5181 = vld [vmem:[%s86 + $0x31] sm:$0xff]
    %v5182 = vld [vmem:[%s86 + $0x41] sm:$0xff]
    %v5183 = vld [vmem:[%s86 + $0x51] sm:$0xff]
    %v5184 = vld [vmem:[%s86 + $0x61] sm:$0xff]
    %v5185 = vld [vmem:[%s86 + $0x71] sm:$0xff]
    %v5186 = vld [vmem:[%s86 + $0xa1] sm:$0xff]
    %v5187 = vld [vmem:[%s86 + $0xb1] sm:$0xff]
    %v5188 = vld [vmem:[%s86 + $0xc1] sm:$0xff]
    %v5189 = vld [vmem:[%s86 + $0xd1] sm:$0xff]
    %v5190 = vld [vmem:[%s86 + $0xe1] sm:$0xff]
    %v5191 = vld [vmem:[%s86 + $0xf1] sm:$0xff]
    %v5192 = vld [vmem:[%s86 + $0x101] sm:$0xff]
    %v5193 = vld [vmem:[%s86 + $0x111] sm:$0xff]
    %s5194 = scalar_lea.vmem [#allocation3], 704
    %v5195 = vld [vmem:[%s5194] sm:$0xff]
    %v5196 = vld [vmem:[%s5194 + $0x8] sm:$0xff]
    %v5197 = vld [vmem:[%s5194 + $0x10] sm:$0xff]
    %v5198 = vld [vmem:[%s5194 + $0x18] sm:$0xff]
    %v5200 = vsel %vm28, %v5178, 0
    %v5203 = vsel %vm28, %v5179, 0
    %v5206 = vsel %vm28, %v5180, 0
    %v5209 = vsel %vm28, %v5181, 0
    %v5212 = vsel %vm28, %v5182, 0
    %v5215 = vsel %vm28, %v5183, 0
    %v5218 = vsel %vm28, %v5184, 0
    %v5221 = vsel %vm28, %v5185, 0
    %v5224 = vsel %vm28, %v5186, 0
    %v5227 = vsel %vm28, %v5187, 0
    %v5230 = vsel %vm28, %v5188, 0
    %v5233 = vsel %vm28, %v5189, 0
    %v5236 = vsel %vm28, %v5190, 0
    %v5239 = vsel %vm28, %v5191, 0
    %v5242 = vsel %vm28, %v5192, 0
    %v5245 = vsel %vm28, %v5193, 0
    %5247 = vmatprep.subr.mxu0 0.0
    %5248 = vmatpush1.msra.mxu0 %v5195
    %5249 = vmatprep.subr.mxu0 0.0
    %5250 = vmatpush1.msra.mxu0 %v5196
    %5251 = vmatprep.subr.mxu0 0.0
    %5252 = vmatpush1.msra.mxu0 %v5197
    %5253 = vmatprep.subr.mxu0 0.0
    %5254 = vmatpush1.msra.mxu0 %v5198
    %5255 = vmatprep.subr.mxu0 0.0
    %5256 = vmatpush1.msra.mxu0 0.0
    %5257 = vmatprep.subr.mxu0 0.0
    %5258 = vmatpush1.msra.mxu0 0.0
    %5259 = vmatprep.subr.mxu0 0.0
    %5260 = vmatpush1.msra.mxu0 0.0
    %5261 = vmatprep.subr.mxu0 0.0
    %5262 = vmatpush1.msra.mxu0 0.0
    %5263 = vmatprep.subr.mxu0 0.0
    %5264 = vmatpush1.msra.mxu0 0.0
    %5265 = vmatprep.subr.mxu0 0.0
    %5266 = vmatpush1.msra.mxu0 0.0
    %5267 = vmatprep.subr.mxu0 0.0
    %5268 = vmatpush1.msra.mxu0 0.0
    %5269 = vmatprep.subr.mxu0 0.0
    %5270 = vmatpush1.msra.mxu0 0.0
    %5271 = vmatprep.subr.mxu0 0.0
    %5272 = vmatpush1.msra.mxu0 0.0
    %5273 = vmatprep.subr.mxu0 0.0
    %5274 = vmatpush1.msra.mxu0 0.0
    %5275 = vmatprep.subr.mxu0 0.0
    %5276 = vmatpush1.msra.mxu0 0.0
    %5277 = vmatprep.subr.mxu0 0.0
    %5278 = vmatpush1.msra.mxu0 0.0
    %5279 = vmatprep.subr.mxu0 0.0
    %5280 = vmatpush1.msra.mxu0 0.0
    %5281 = vmatprep.subr.mxu0 0.0
    %5282 = vmatpush1.msra.mxu0 0.0
    %5283 = vmatprep.subr.mxu0 0.0
    %5284 = vmatpush1.msra.mxu0 0.0
    %5285 = vmatprep.subr.mxu0 0.0
    %5286 = vmatpush1.msra.mxu0 0.0
    %5287 = vmatprep.subr.mxu0 0.0
    %5288 = vmatpush1.msra.mxu0 0.0
    %5289 = vmatprep.subr.mxu0 0.0
    %5290 = vmatpush1.msra.mxu0 0.0
    %5291 = vmatprep.subr.mxu0 0.0
    %5292 = vmatpush1.msra.mxu0 0.0
    %5293 = vmatprep.subr.mxu0 0.0
    %5294 = vmatpush1.msra.mxu0 0.0
    %5295 = vmatprep.subr.mxu0 0.0
    %5296 = vmatpush1.msra.mxu0 0.0
    %5297 = vmatprep.subr.mxu0 0.0
    %5298 = vmatpush1.msra.mxu0 0.0
    %5299 = vmatprep.subr.mxu0 0.0
    %5300 = vmatpush1.msra.mxu0 0.0
    %5301 = vmatprep.subr.mxu0 0.0
    %5302 = vmatpush1.msra.mxu0 0.0
    %5303 = vmatprep.subr.mxu0 0.0
    %5304 = vmatpush1.msra.mxu0 0.0
    %5305 = vmatprep.subr.mxu0 0.0
    %5306 = vmatpush1.msra.mxu0 0.0
    %5307 = vmatprep.subr.mxu0 0.0
    %5308 = vmatpush1.msra.mxu0 0.0
    %5309 = vmatprep.subr.mxu0 0.0
    %5310 = vmatpush1.msra.mxu0 0.0
    %5311 = vmatprep.mubr.f32.mxu0 0.0
    %5312 = vmatmul.mubr.f32.gmra.mrb[0].mxu0 %v5200
    %v5313 = vpop.f32.mrb[0].mxu0
    %v5314 = vadd.f32 0.0, %v5313
    %v5315 = vpop.f32.mrb[0].mxu0
    %5316 = vmatprep.mubr.f32.mxu0 0.0
    %5317 = vmatmul.mubr.f32.gmra.mrb[0].mxu0 %v5203
    %v5318 = vpop.f32.mrb[0].mxu0
    %v5319 = vadd.f32 0.0, %v5318
    %v5320 = vpop.f32.mrb[0].mxu0
    %5321 = vmatprep.mubr.f32.mxu0 0.0
    %5322 = vmatmul.mubr.f32.gmra.mrb[0].mxu0 %v5206
    %v5323 = vpop.f32.mrb[0].mxu0
    %v5324 = vadd.f32 0.0, %v5323
    %v5325 = vpop.f32.mrb[0].mxu0
    %5326 = vmatprep.mubr.f32.mxu0 0.0
    %5327 = vmatmul.mubr.f32.gmra.mrb[0].mxu0 %v5209
    %v5328 = vpop.f32.mrb[0].mxu0
    %v5329 = vadd.f32 0.0, %v5328
    %v5330 = vpop.f32.mrb[0].mxu0
    %5331 = vmatprep.mubr.f32.mxu0 0.0
    %5332 = vmatmul.mubr.f32.gmra.mrb[0].mxu0 %v5212
    %v5333 = vpop.f32.mrb[0].mxu0
    %v5334 = vadd.f32 0.0, %v5333
    %v5335 = vpop.f32.mrb[0].mxu0
    %5336 = vmatprep.mubr.f32.mxu0 0.0
    %5337 = vmatmul.mubr.f32.gmra.mrb[0].mxu0 %v5215
    %v5338 = vpop.f32.mrb[0].mxu0
    %v5339 = vadd.f32 0.0, %v5338
    %v5340 = vpop.f32.mrb[0].mxu0
    %5341 = vmatprep.mubr.f32.mxu0 0.0
    %5342 = vmatmul.mubr.f32.gmra.mrb[0].mxu0 %v5218
    %v5343 = vpop.f32.mrb[0].mxu0
    %v5344 = vadd.f32 0.0, %v5343
    %v5345 = vpop.f32.mrb[0].mxu0
    %5346 = vmatprep.mubr.f32.mxu0 0.0
    %5347 = vmatmul.mubr.f32.gmra.mrb[0].mxu0 %v5221
    %v5348 = vpop.f32.mrb[0].mxu0
    %v5349 = vadd.f32 0.0, %v5348
    %v5350 = vpop.f32.mrb[0].mxu0
    %5351 = vmatprep.mubr.f32.mxu0 0.0
    %5352 = vmatmul.mubr.f32.gmra.mrb[0].mxu0 %v5224
    %v5353 = vpop.f32.mrb[0].mxu0
    %v5354 = vadd.f32 0.0, %v5353
    %v5355 = vpop.f32.mrb[0].mxu0
    %5356 = vmatprep.mubr.f32.mxu0 0.0
    %5357 = vmatmul.mubr.f32.gmra.mrb[0].mxu0 %v5227
    %v5358 = vpop.f32.mrb[0].mxu0
    %v5359 = vadd.f32 0.0, %v5358
    %v5360 = vpop.f32.mrb[0].mxu0
    %5361 = vmatprep.mubr.f32.mxu0 0.0
    %5362 = vmatmul.mubr.f32.gmra.mrb[0].mxu0 %v5230
    %v5363 = vpop.f32.mrb[0].mxu0
    %v5364 = vadd.f32 0.0, %v5363
    %v5365 = vpop.f32.mrb[0].mxu0
    %5366 = vmatprep.mubr.f32.mxu0 0.0
    %5367 = vmatmul.mubr.f32.gmra.mrb[0].mxu0 %v5233
    %v5368 = vpop.f32.mrb[0].mxu0
    %v5369 = vadd.f32 0.0, %v5368
    %v5370 = vpop.f32.mrb[0].mxu0
    %5371 = vmatprep.mubr.f32.mxu0 0.0
    %5372 = vmatmul.mubr.f32.gmra.mrb[0].mxu0 %v5236
    %v5373 = vpop.f32.mrb[0].mxu0
    %v5374 = vadd.f32 0.0, %v5373
    %v5375 = vpop.f32.mrb[0].mxu0
    %5376 = vmatprep.mubr.f32.mxu0 0.0
    %5377 = vmatmul.mubr.f32.gmra.mrb[0].mxu0 %v5239
    %v5378 = vpop.f32.mrb[0].mxu0
    %v5379 = vadd.f32 0.0, %v5378
    %v5380 = vpop.f32.mrb[0].mxu0
    %5381 = vmatprep.mubr.f32.mxu0 0.0
    %5382 = vmatmul.mubr.f32.gmra.mrb[0].mxu0 %v5242
    %v5383 = vpop.f32.mrb[0].mxu0
    %v5384 = vadd.f32 0.0, %v5383
    %v5385 = vpop.f32.mrb[0].mxu0
    %5386 = vmatprep.mubr.f32.mxu0 0.0
    %5387 = vmatmul.mubr.f32.gmra.mrb[0].mxu0 %v5245
    %v5388 = vpop.f32.mrb[0].mxu0
    %v5389 = vadd.f32 0.0, %v5388
    %v5390 = vpop.f32.mrb[0].mxu0
    %5391 = vdwg.mxu0
    %v5392 = vadd.f32 %v5162, %v5314
    %v5393 = vadd.f32 %v5163, %v5319
    %v5394 = vadd.f32 %v5164, %v5324
    %v5395 = vadd.f32 %v5165, %v5329
    %v5396 = vadd.f32 %v5166, %v5334
    %v5397 = vadd.f32 %v5167, %v5339
    %v5398 = vadd.f32 %v5168, %v5344
    %v5399 = vadd.f32 %v5169, %v5349
    %v5400 = vadd.f32 %v5170, %v5354
    %v5401 = vadd.f32 %v5171, %v5359
    %v5402 = vadd.f32 %v5172, %v5364
    %v5403 = vadd.f32 %v5173, %v5369
    %v5404 = vadd.f32 %v5174, %v5374
    %v5405 = vadd.f32 %v5175, %v5379
    %v5406 = vadd.f32 %v5176, %v5384
    %v5407 = vadd.f32 %v5177, %v5389
    %v5408 = vld [vmem:[%s86 + $0x2] sm:$0xff]
    %v5409 = vld [vmem:[%s86 + $0x12] sm:$0xff]
    %v5410 = vld [vmem:[%s86 + $0x22] sm:$0xff]
    %v5411 = vld [vmem:[%s86 + $0x32] sm:$0xff]
    %v5412 = vld [vmem:[%s86 + $0x42] sm:$0xff]
    %v5413 = vld [vmem:[%s86 + $0x52] sm:$0xff]
    %v5414 = vld [vmem:[%s86 + $0x62] sm:$0xff]
    %v5415 = vld [vmem:[%s86 + $0x72] sm:$0xff]
    %v5416 = vld [vmem:[%s86 + $0xa2] sm:$0xff]
    %v5417 = vld [vmem:[%s86 + $0xb2] sm:$0xff]
    %v5418 = vld [vmem:[%s86 + $0xc2] sm:$0xff]
    %v5419 = vld [vmem:[%s86 + $0xd2] sm:$0xff]
    %v5420 = vld [vmem:[%s86 + $0xe2] sm:$0xff]
    %v5421 = vld [vmem:[%s86 + $0xf2] sm:$0xff]
    %v5422 = vld [vmem:[%s86 + $0x102] sm:$0xff]
    %v5423 = vld [vmem:[%s86 + $0x112] sm:$0xff]
    %s5424 = scalar_lea.vmem [#allocation3], 736
    %v5425 = vld [vmem:[%s5424] sm:$0xff]
    %v5426 = vld [vmem:[%s5424 + $0x8] sm:$0xff]
    %v5427 = vld [vmem:[%s5424 + $0x10] sm:$0xff]
    %v5428 = vld [vmem:[%s5424 + $0x18] sm:$0xff]
    %v5430 = vsel %vm28, %v5408, 0
    %v5433 = vsel %vm28, %v5409, 0
    %v5436 = vsel %vm28, %v5410, 0
    %v5439 = vsel %vm28, %v5411, 0
    %v5442 = vsel %vm28, %v5412, 0
    %v5445 = vsel %vm28, %v5413, 0
    %v5448 = vsel %vm28, %v5414, 0
    %v5451 = vsel %vm28, %v5415, 0
    %v5454 = vsel %vm28, %v5416, 0
    %v5457 = vsel %vm28, %v5417, 0
    %v5460 = vsel %vm28, %v5418, 0
    %v5463 = vsel %vm28, %v5419, 0
    %v5466 = vsel %vm28, %v5420, 0
    %v5469 = vsel %vm28, %v5421, 0
    %v5472 = vsel %vm28, %v5422, 0
    %v5475 = vsel %vm28, %v5423, 0
    %5477 = vmatprep.subr.mxu0 0.0
    %5478 = vmatpush1.msra.mxu0 %v5425
    %5479 = vmatprep.subr.mxu0 0.0
    %5480 = vmatpush1.msra.mxu0 %v5426
    %5481 = vmatprep.subr.mxu0 0.0
    %5482 = vmatpush1.msra.mxu0 %v5427
    %5483 = vmatprep.subr.mxu0 0.0
    %5484 = vmatpush1.msra.mxu0 %v5428
    %5485 = vmatprep.subr.mxu0 0.0
    %5486 = vmatpush1.msra.mxu0 0.0
    %5487 = vmatprep.subr.mxu0 0.0
    %5488 = vmatpush1.msra.mxu0 0.0
    %5489 = vmatprep.subr.mxu0 0.0
    %5490 = vmatpush1.msra.mxu0 0.0
    %5491 = vmatprep.subr.mxu0 0.0
    %5492 = vmatpush1.msra.mxu0 0.0
    %5493 = vmatprep.subr.mxu0 0.0
    %5494 = vmatpush1.msra.mxu0 0.0
    %5495 = vmatprep.subr.mxu0 0.0
    %5496 = vmatpush1.msra.mxu0 0.0
    %5497 = vmatprep.subr.mxu0 0.0
    %5498 = vmatpush1.msra.mxu0 0.0
    %5499 = vmatprep.subr.mxu0 0.0
    %5500 = vmatpush1.msra.mxu0 0.0
    %5501 = vmatprep.subr.mxu0 0.0
    %5502 = vmatpush1.msra.mxu0 0.0
    %5503 = vmatprep.subr.mxu0 0.0
    %5504 = vmatpush1.msra.mxu0 0.0
    %5505 = vmatprep.subr.mxu0 0.0
    %5506 = vmatpush1.msra.mxu0 0.0
    %5507 = vmatprep.subr.mxu0 0.0
    %5508 = vmatpush1.msra.mxu0 0.0
    %5509 = vmatprep.subr.mxu0 0.0
    %5510 = vmatpush1.msra.mxu0 0.0
    %5511 = vmatprep.subr.mxu0 0.0
    %5512 = vmatpush1.msra.mxu0 0.0
    %5513 = vmatprep.subr.mxu0 0.0
    %5514 = vmatpush1.msra.mxu0 0.0
    %5515 = vmatprep.subr.mxu0 0.0
    %5516 = vmatpush1.msra.mxu0 0.0
    %5517 = vmatprep.subr.mxu0 0.0
    %5518 = vmatpush1.msra.mxu0 0.0
    %5519 = vmatprep.subr.mxu0 0.0
    %5520 = vmatpush1.msra.mxu0 0.0
    %5521 = vmatprep.subr.mxu0 0.0
    %5522 = vmatpush1.msra.mxu0 0.0
    %5523 = vmatprep.subr.mxu0 0.0
    %5524 = vmatpush1.msra.mxu0 0.0
    %5525 = vmatprep.subr.mxu0 0.0
    %5526 = vmatpush1.msra.mxu0 0.0
    %5527 = vmatprep.subr.mxu0 0.0
    %5528 = vmatpush1.msra.mxu0 0.0
    %5529 = vmatprep.subr.mxu0 0.0
    %5530 = vmatpush1.msra.mxu0 0.0
    %5531 = vmatprep.subr.mxu0 0.0
    %5532 = vmatpush1.msra.mxu0 0.0
    %5533 = vmatprep.subr.mxu0 0.0
    %5534 = vmatpush1.msra.mxu0 0.0
    %5535 = vmatprep.subr.mxu0 0.0
    %5536 = vmatpush1.msra.mxu0 0.0
    %5537 = vmatprep.subr.mxu0 0.0
    %5538 = vmatpush1.msra.mxu0 0.0
    %5539 = vmatprep.subr.mxu0 0.0
    %5540 = vmatpush1.msra.mxu0 0.0
    %5541 = vmatprep.mubr.f32.mxu0 0.0
    %5542 = vmatmul.mubr.f32.gmra.mrb[0].mxu0 %v5430
    %v5543 = vpop.f32.mrb[0].mxu0
    %v5544 = vadd.f32 0.0, %v5543
    %v5545 = vpop.f32.mrb[0].mxu0
    %5546 = vmatprep.mubr.f32.mxu0 0.0
    %5547 = vmatmul.mubr.f32.gmra.mrb[0].mxu0 %v5433
    %v5548 = vpop.f32.mrb[0].mxu0
    %v5549 = vadd.f32 0.0, %v5548
    %v5550 = vpop.f32.mrb[0].mxu0
    %5551 = vmatprep.mubr.f32.mxu0 0.0
    %5552 = vmatmul.mubr.f32.gmra.mrb[0].mxu0 %v5436
    %v5553 = vpop.f32.mrb[0].mxu0
    %v5554 = vadd.f32 0.0, %v5553
    %v5555 = vpop.f32.mrb[0].mxu0
    %5556 = vmatprep.mubr.f32.mxu0 0.0
    %5557 = vmatmul.mubr.f32.gmra.mrb[0].mxu0 %v5439
    %v5558 = vpop.f32.mrb[0].mxu0
    %v5559 = vadd.f32 0.0, %v5558
    %v5560 = vpop.f32.mrb[0].mxu0
    %5561 = vmatprep.mubr.f32.mxu0 0.0
    %5562 = vmatmul.mubr.f32.gmra.mrb[0].mxu0 %v5442
    %v5563 = vpop.f32.mrb[0].mxu0
    %v5564 = vadd.f32 0.0, %v5563
    %v5565 = vpop.f32.mrb[0].mxu0
    %5566 = vmatprep.mubr.f32.mxu0 0.0
    %5567 = vmatmul.mubr.f32.gmra.mrb[0].mxu0 %v5445
    %v5568 = vpop.f32.mrb[0].mxu0
    %v5569 = vadd.f32 0.0, %v5568
    %v5570 = vpop.f32.mrb[0].mxu0
    %5571 = vmatprep.mubr.f32.mxu0 0.0
    %5572 = vmatmul.mubr.f32.gmra.mrb[0].mxu0 %v5448
    %v5573 = vpop.f32.mrb[0].mxu0
    %v5574 = vadd.f32 0.0, %v5573
    %v5575 = vpop.f32.mrb[0].mxu0
    %5576 = vmatprep.mubr.f32.mxu0 0.0
    %5577 = vmatmul.mubr.f32.gmra.mrb[0].mxu0 %v5451
    %v5578 = vpop.f32.mrb[0].mxu0
    %v5579 = vadd.f32 0.0, %v5578
    %v5580 = vpop.f32.mrb[0].mxu0
    %5581 = vmatprep.mubr.f32.mxu0 0.0
    %5582 = vmatmul.mubr.f32.gmra.mrb[0].mxu0 %v5454
    %v5583 = vpop.f32.mrb[0].mxu0
    %v5584 = vadd.f32 0.0, %v5583
    %v5585 = vpop.f32.mrb[0].mxu0
    %5586 = vmatprep.mubr.f32.mxu0 0.0
    %5587 = vmatmul.mubr.f32.gmra.mrb[0].mxu0 %v5457
    %v5588 = vpop.f32.mrb[0].mxu0
    %v5589 = vadd.f32 0.0, %v5588
    %v5590 = vpop.f32.mrb[0].mxu0
    %5591 = vmatprep.mubr.f32.mxu0 0.0
    %5592 = vmatmul.mubr.f32.gmra.mrb[0].mxu0 %v5460
    %v5593 = vpop.f32.mrb[0].mxu0
    %v5594 = vadd.f32 0.0, %v5593
    %v5595 = vpop.f32.mrb[0].mxu0
    %5596 = vmatprep.mubr.f32.mxu0 0.0
    %5597 = vmatmul.mubr.f32.gmra.mrb[0].mxu0 %v5463
    %v5598 = vpop.f32.mrb[0].mxu0
    %v5599 = vadd.f32 0.0, %v5598
    %v5600 = vpop.f32.mrb[0].mxu0
    %5601 = vmatprep.mubr.f32.mxu0 0.0
    %5602 = vmatmul.mubr.f32.gmra.mrb[0].mxu0 %v5466
    %v5603 = vpop.f32.mrb[0].mxu0
    %v5604 = vadd.f32 0.0, %v5603
    %v5605 = vpop.f32.mrb[0].mxu0
    %5606 = vmatprep.mubr.f32.mxu0 0.0
    %5607 = vmatmul.mubr.f32.gmra.mrb[0].mxu0 %v5469
    %v5608 = vpop.f32.mrb[0].mxu0
    %v5609 = vadd.f32 0.0, %v5608
    %v5610 = vpop.f32.mrb[0].mxu0
    %5611 = vmatprep.mubr.f32.mxu0 0.0
    %5612 = vmatmul.mubr.f32.gmra.mrb[0].mxu0 %v5472
    %v5613 = vpop.f32.mrb[0].mxu0
    %v5614 = vadd.f32 0.0, %v5613
    %v5615 = vpop.f32.mrb[0].mxu0
    %5616 = vmatprep.mubr.f32.mxu0 0.0
    %5617 = vmatmul.mubr.f32.gmra.mrb[0].mxu0 %v5475
    %v5618 = vpop.f32.mrb[0].mxu0
    %v5619 = vadd.f32 0.0, %v5618
    %v5620 = vpop.f32.mrb[0].mxu0
    %5621 = vdwg.mxu0
    %v5622 = vadd.f32 %v5392, %v5544
    %v5623 = vadd.f32 %v5393, %v5549
    %v5624 = vadd.f32 %v5394, %v5554
    %v5625 = vadd.f32 %v5395, %v5559
    %v5626 = vadd.f32 %v5396, %v5564
    %v5627 = vadd.f32 %v5397, %v5569
    %v5628 = vadd.f32 %v5398, %v5574
    %v5629 = vadd.f32 %v5399, %v5579
    %v5630 = vadd.f32 %v5400, %v5584
    %v5631 = vadd.f32 %v5401, %v5589
    %v5632 = vadd.f32 %v5402, %v5594
    %v5633 = vadd.f32 %v5403, %v5599
    %v5634 = vadd.f32 %v5404, %v5604
    %v5635 = vadd.f32 %v5405, %v5609
    %v5636 = vadd.f32 %v5406, %v5614
    %v5637 = vadd.f32 %v5407, %v5619
    %v5638 = vld [vmem:[%s1450] sm:$0xff]
    %v5639 = vld [vmem:[%s1450 + $0x10] sm:$0xff]
    %v5640 = vld [vmem:[%s1450 + $0x20] sm:$0xff]
    %v5641 = vld [vmem:[%s1450 + $0x30] sm:$0xff]
    %v5642 = vld [vmem:[%s1450 + $0x40] sm:$0xff]
    %v5643 = vld [vmem:[%s1450 + $0x50] sm:$0xff]
    %v5644 = vld [vmem:[%s1450 + $0x60] sm:$0xff]
    %v5645 = vld [vmem:[%s1450 + $0x70] sm:$0xff]
    %v5646 = vld [vmem:[%s1450 + $0xa0] sm:$0xff]
    %v5647 = vld [vmem:[%s1450 + $0xb0] sm:$0xff]
    %v5648 = vld [vmem:[%s1450 + $0xc0] sm:$0xff]
    %v5649 = vld [vmem:[%s1450 + $0xd0] sm:$0xff]
    %v5650 = vld [vmem:[%s1450 + $0xe0] sm:$0xff]
    %v5651 = vld [vmem:[%s1450 + $0xf0] sm:$0xff]
    %v5652 = vld [vmem:[%s1450 + $0x100] sm:$0xff]
    %v5653 = vld [vmem:[%s1450 + $0x110] sm:$0xff]
    %s5654 = scalar_lea.vmem [#allocation3], 768
    %v5655 = vld [vmem:[%s5654] sm:$0xff]
    %v5656 = vld [vmem:[%s5654 + $0x8] sm:$0xff]
    %v5657 = vld [vmem:[%s5654 + $0x10] sm:$0xff]
    %v5658 = vld [vmem:[%s5654 + $0x18] sm:$0xff]
    %v5660 = vsel %vm28, %v5638, 0
    %v5663 = vsel %vm28, %v5639, 0
    %v5666 = vsel %vm28, %v5640, 0
    %v5669 = vsel %vm28, %v5641, 0
    %v5672 = vsel %vm28, %v5642, 0
    %v5675 = vsel %vm28, %v5643, 0
    %v5678 = vsel %vm28, %v5644, 0
    %v5681 = vsel %vm28, %v5645, 0
    %v5684 = vsel %vm28, %v5646, 0
    %v5687 = vsel %vm28, %v5647, 0
    %v5690 = vsel %vm28, %v5648, 0
    %v5693 = vsel %vm28, %v5649, 0
    %v5696 = vsel %vm28, %v5650, 0
    %v5699 = vsel %vm28, %v5651, 0
    %v5702 = vsel %vm28, %v5652, 0
    %v5705 = vsel %vm28, %v5653, 0
    %5707 = vmatprep.subr.mxu0 0.0
    %5708 = vmatpush1.msra.mxu0 %v5655
    %5709 = vmatprep.subr.mxu0 0.0
    %5710 = vmatpush1.msra.mxu0 %v5656
    %5711 = vmatprep.subr.mxu0 0.0
    %5712 = vmatpush1.msra.mxu0 %v5657
    %5713 = vmatprep.subr.mxu0 0.0
    %5714 = vmatpush1.msra.mxu0 %v5658
    %5715 = vmatprep.subr.mxu0 0.0
    %5716 = vmatpush1.msra.mxu0 0.0
    %5717 = vmatprep.subr.mxu0 0.0
    %5718 = vmatpush1.msra.mxu0 0.0
    %5719 = vmatprep.subr.mxu0 0.0
    %5720 = vmatpush1.msra.mxu0 0.0
    %5721 = vmatprep.subr.mxu0 0.0
    %5722 = vmatpush1.msra.mxu0 0.0
    %5723 = vmatprep.subr.mxu0 0.0
    %5724 = vmatpush1.msra.mxu0 0.0
    %5725 = vmatprep.subr.mxu0 0.0
    %5726 = vmatpush1.msra.mxu0 0.0
    %5727 = vmatprep.subr.mxu0 0.0
    %5728 = vmatpush1.msra.mxu0 0.0
    %5729 = vmatprep.subr.mxu0 0.0
    %5730 = vmatpush1.msra.mxu0 0.0
    %5731 = vmatprep.subr.mxu0 0.0
    %5732 = vmatpush1.msra.mxu0 0.0
    %5733 = vmatprep.subr.mxu0 0.0
    %5734 = vmatpush1.msra.mxu0 0.0
    %5735 = vmatprep.subr.mxu0 0.0
    %5736 = vmatpush1.msra.mxu0 0.0
    %5737 = vmatprep.subr.mxu0 0.0
    %5738 = vmatpush1.msra.mxu0 0.0
    %5739 = vmatprep.subr.mxu0 0.0
    %5740 = vmatpush1.msra.mxu0 0.0
    %5741 = vmatprep.subr.mxu0 0.0
    %5742 = vmatpush1.msra.mxu0 0.0
    %5743 = vmatprep.subr.mxu0 0.0
    %5744 = vmatpush1.msra.mxu0 0.0
    %5745 = vmatprep.subr.mxu0 0.0
    %5746 = vmatpush1.msra.mxu0 0.0
    %5747 = vmatprep.subr.mxu0 0.0
    %5748 = vmatpush1.msra.mxu0 0.0
    %5749 = vmatprep.subr.mxu0 0.0
    %5750 = vmatpush1.msra.mxu0 0.0
    %5751 = vmatprep.subr.mxu0 0.0
    %5752 = vmatpush1.msra.mxu0 0.0
    %5753 = vmatprep.subr.mxu0 0.0
    %5754 = vmatpush1.msra.mxu0 0.0
    %5755 = vmatprep.subr.mxu0 0.0
    %5756 = vmatpush1.msra.mxu0 0.0
    %5757 = vmatprep.subr.mxu0 0.0
    %5758 = vmatpush1.msra.mxu0 0.0
    %5759 = vmatprep.subr.mxu0 0.0
    %5760 = vmatpush1.msra.mxu0 0.0
    %5761 = vmatprep.subr.mxu0 0.0
    %5762 = vmatpush1.msra.mxu0 0.0
    %5763 = vmatprep.subr.mxu0 0.0
    %5764 = vmatpush1.msra.mxu0 0.0
    %5765 = vmatprep.subr.mxu0 0.0
    %5766 = vmatpush1.msra.mxu0 0.0
    %5767 = vmatprep.subr.mxu0 0.0
    %5768 = vmatpush1.msra.mxu0 0.0
    %5769 = vmatprep.subr.mxu0 0.0
    %5770 = vmatpush1.msra.mxu0 0.0
    %5771 = vmatprep.mubr.f32.mxu0 0.0
    %5772 = vmatmul.mubr.f32.gmra.mrb[0].mxu0 %v5660
    %v5773 = vpop.f32.mrb[0].mxu0
    %v5774 = vadd.f32 0.0, %v5773
    %v5775 = vpop.f32.mrb[0].mxu0
    %5776 = vmatprep.mubr.f32.mxu0 0.0
    %5777 = vmatmul.mubr.f32.gmra.mrb[0].mxu0 %v5663
    %v5778 = vpop.f32.mrb[0].mxu0
    %v5779 = vadd.f32 0.0, %v5778
    %v5780 = vpop.f32.mrb[0].mxu0
    %5781 = vmatprep.mubr.f32.mxu0 0.0
    %5782 = vmatmul.mubr.f32.gmra.mrb[0].mxu0 %v5666
    %v5783 = vpop.f32.mrb[0].mxu0
    %v5784 = vadd.f32 0.0, %v5783
    %v5785 = vpop.f32.mrb[0].mxu0
    %5786 = vmatprep.mubr.f32.mxu0 0.0
    %5787 = vmatmul.mubr.f32.gmra.mrb[0].mxu0 %v5669
    %v5788 = vpop.f32.mrb[0].mxu0
    %v5789 = vadd.f32 0.0, %v5788
    %v5790 = vpop.f32.mrb[0].mxu0
    %5791 = vmatprep.mubr.f32.mxu0 0.0
    %5792 = vmatmul.mubr.f32.gmra.mrb[0].mxu0 %v5672
    %v5793 = vpop.f32.mrb[0].mxu0
    %v5794 = vadd.f32 0.0, %v5793
    %v5795 = vpop.f32.mrb[0].mxu0
    %5796 = vmatprep.mubr.f32.mxu0 0.0
    %5797 = vmatmul.mubr.f32.gmra.mrb[0].mxu0 %v5675
    %v5798 = vpop.f32.mrb[0].mxu0
    %v5799 = vadd.f32 0.0, %v5798
    %v5800 = vpop.f32.mrb[0].mxu0
    %5801 = vmatprep.mubr.f32.mxu0 0.0
    %5802 = vmatmul.mubr.f32.gmra.mrb[0].mxu0 %v5678
    %v5803 = vpop.f32.mrb[0].mxu0
    %v5804 = vadd.f32 0.0, %v5803
    %v5805 = vpop.f32.mrb[0].mxu0
    %5806 = vmatprep.mubr.f32.mxu0 0.0
    %5807 = vmatmul.mubr.f32.gmra.mrb[0].mxu0 %v5681
    %v5808 = vpop.f32.mrb[0].mxu0
    %v5809 = vadd.f32 0.0, %v5808
    %v5810 = vpop.f32.mrb[0].mxu0
    %5811 = vmatprep.mubr.f32.mxu0 0.0
    %5812 = vmatmul.mubr.f32.gmra.mrb[0].mxu0 %v5684
    %v5813 = vpop.f32.mrb[0].mxu0
    %v5814 = vadd.f32 0.0, %v5813
    %v5815 = vpop.f32.mrb[0].mxu0
    %5816 = vmatprep.mubr.f32.mxu0 0.0
    %5817 = vmatmul.mubr.f32.gmra.mrb[0].mxu0 %v5687
    %v5818 = vpop.f32.mrb[0].mxu0
    %v5819 = vadd.f32 0.0, %v5818
    %v5820 = vpop.f32.mrb[0].mxu0
    %5821 = vmatprep.mubr.f32.mxu0 0.0
    %5822 = vmatmul.mubr.f32.gmra.mrb[0].mxu0 %v5690
    %v5823 = vpop.f32.mrb[0].mxu0
    %v5824 = vadd.f32 0.0, %v5823
    %v5825 = vpop.f32.mrb[0].mxu0
    %5826 = vmatprep.mubr.f32.mxu0 0.0
    %5827 = vmatmul.mubr.f32.gmra.mrb[0].mxu0 %v5693
    %v5828 = vpop.f32.mrb[0].mxu0
    %v5829 = vadd.f32 0.0, %v5828
    %v5830 = vpop.f32.mrb[0].mxu0
    %5831 = vmatprep.mubr.f32.mxu0 0.0
    %5832 = vmatmul.mubr.f32.gmra.mrb[0].mxu0 %v5696
    %v5833 = vpop.f32.mrb[0].mxu0
    %v5834 = vadd.f32 0.0, %v5833
    %v5835 = vpop.f32.mrb[0].mxu0
    %5836 = vmatprep.mubr.f32.mxu0 0.0
    %5837 = vmatmul.mubr.f32.gmra.mrb[0].mxu0 %v5699
    %v5838 = vpop.f32.mrb[0].mxu0
    %v5839 = vadd.f32 0.0, %v5838
    %v5840 = vpop.f32.mrb[0].mxu0
    %5841 = vmatprep.mubr.f32.mxu0 0.0
    %5842 = vmatmul.mubr.f32.gmra.mrb[0].mxu0 %v5702
    %v5843 = vpop.f32.mrb[0].mxu0
    %v5844 = vadd.f32 0.0, %v5843
    %v5845 = vpop.f32.mrb[0].mxu0
    %5846 = vmatprep.mubr.f32.mxu0 0.0
    %5847 = vmatmul.mubr.f32.gmra.mrb[0].mxu0 %v5705
    %v5848 = vpop.f32.mrb[0].mxu0
    %v5849 = vadd.f32 0.0, %v5848
    %v5850 = vpop.f32.mrb[0].mxu0
    %5851 = vdwg.mxu0
    %v5852 = vadd.f32 %v5622, %v5774
    %v5853 = vadd.f32 %v5623, %v5779
    %v5854 = vadd.f32 %v5624, %v5784
    %v5855 = vadd.f32 %v5625, %v5789
    %v5856 = vadd.f32 %v5626, %v5794
    %v5857 = vadd.f32 %v5627, %v5799
    %v5858 = vadd.f32 %v5628, %v5804
    %v5859 = vadd.f32 %v5629, %v5809
    %v5860 = vadd.f32 %v5630, %v5814
    %v5861 = vadd.f32 %v5631, %v5819
    %v5862 = vadd.f32 %v5632, %v5824
    %v5863 = vadd.f32 %v5633, %v5829
    %v5864 = vadd.f32 %v5634, %v5834
    %v5865 = vadd.f32 %v5635, %v5839
    %v5866 = vadd.f32 %v5636, %v5844
    %v5867 = vadd.f32 %v5637, %v5849
    %v5868 = vld [vmem:[%s1450 + $0x1] sm:$0xff]
    %v5869 = vld [vmem:[%s1450 + $0x11] sm:$0xff]
    %v5870 = vld [vmem:[%s1450 + $0x21] sm:$0xff]
    %v5871 = vld [vmem:[%s1450 + $0x31] sm:$0xff]
    %v5872 = vld [vmem:[%s1450 + $0x41] sm:$0xff]
    %v5873 = vld [vmem:[%s1450 + $0x51] sm:$0xff]
    %v5874 = vld [vmem:[%s1450 + $0x61] sm:$0xff]
    %v5875 = vld [vmem:[%s1450 + $0x71] sm:$0xff]
    %v5876 = vld [vmem:[%s1450 + $0xa1] sm:$0xff]
    %v5877 = vld [vmem:[%s1450 + $0xb1] sm:$0xff]
    %v5878 = vld [vmem:[%s1450 + $0xc1] sm:$0xff]
    %v5879 = vld [vmem:[%s1450 + $0xd1] sm:$0xff]
    %v5880 = vld [vmem:[%s1450 + $0xe1] sm:$0xff]
    %v5881 = vld [vmem:[%s1450 + $0xf1] sm:$0xff]
    %v5882 = vld [vmem:[%s1450 + $0x101] sm:$0xff]
    %v5883 = vld [vmem:[%s1450 + $0x111] sm:$0xff]
    %s5884 = scalar_lea.vmem [#allocation3], 800
    %v5885 = vld [vmem:[%s5884] sm:$0xff]
    %v5886 = vld [vmem:[%s5884 + $0x8] sm:$0xff]
    %v5887 = vld [vmem:[%s5884 + $0x10] sm:$0xff]
    %v5888 = vld [vmem:[%s5884 + $0x18] sm:$0xff]
    %v5890 = vsel %vm28, %v5868, 0
    %v5893 = vsel %vm28, %v5869, 0
    %v5896 = vsel %vm28, %v5870, 0
    %v5899 = vsel %vm28, %v5871, 0
    %v5902 = vsel %vm28, %v5872, 0
    %v5905 = vsel %vm28, %v5873, 0
    %v5908 = vsel %vm28, %v5874, 0
    %v5911 = vsel %vm28, %v5875, 0
    %v5914 = vsel %vm28, %v5876, 0
    %v5917 = vsel %vm28, %v5877, 0
    %v5920 = vsel %vm28, %v5878, 0
    %v5923 = vsel %vm28, %v5879, 0
    %v5926 = vsel %vm28, %v5880, 0
    %v5929 = vsel %vm28, %v5881, 0
    %v5932 = vsel %vm28, %v5882, 0
    %v5935 = vsel %vm28, %v5883, 0
    %5937 = vmatprep.subr.mxu0 0.0
    %5938 = vmatpush1.msra.mxu0 %v5885
    %5939 = vmatprep.subr.mxu0 0.0
    %5940 = vmatpush1.msra.mxu0 %v5886
    %5941 = vmatprep.subr.mxu0 0.0
    %5942 = vmatpush1.msra.mxu0 %v5887
    %5943 = vmatprep.subr.mxu0 0.0
    %5944 = vmatpush1.msra.mxu0 %v5888
    %5945 = vmatprep.subr.mxu0 0.0
    %5946 = vmatpush1.msra.mxu0 0.0
    %5947 = vmatprep.subr.mxu0 0.0
    %5948 = vmatpush1.msra.mxu0 0.0
    %5949 = vmatprep.subr.mxu0 0.0
    %5950 = vmatpush1.msra.mxu0 0.0
    %5951 = vmatprep.subr.mxu0 0.0
    %5952 = vmatpush1.msra.mxu0 0.0
    %5953 = vmatprep.subr.mxu0 0.0
    %5954 = vmatpush1.msra.mxu0 0.0
    %5955 = vmatprep.subr.mxu0 0.0
    %5956 = vmatpush1.msra.mxu0 0.0
    %5957 = vmatprep.subr.mxu0 0.0
    %5958 = vmatpush1.msra.mxu0 0.0
    %5959 = vmatprep.subr.mxu0 0.0
    %5960 = vmatpush1.msra.mxu0 0.0
    %5961 = vmatprep.subr.mxu0 0.0
    %5962 = vmatpush1.msra.mxu0 0.0
    %5963 = vmatprep.subr.mxu0 0.0
    %5964 = vmatpush1.msra.mxu0 0.0
    %5965 = vmatprep.subr.mxu0 0.0
    %5966 = vmatpush1.msra.mxu0 0.0
    %5967 = vmatprep.subr.mxu0 0.0
    %5968 = vmatpush1.msra.mxu0 0.0
    %5969 = vmatprep.subr.mxu0 0.0
    %5970 = vmatpush1.msra.mxu0 0.0
    %5971 = vmatprep.subr.mxu0 0.0
    %5972 = vmatpush1.msra.mxu0 0.0
    %5973 = vmatprep.subr.mxu0 0.0
    %5974 = vmatpush1.msra.mxu0 0.0
    %5975 = vmatprep.subr.mxu0 0.0
    %5976 = vmatpush1.msra.mxu0 0.0
    %5977 = vmatprep.subr.mxu0 0.0
    %5978 = vmatpush1.msra.mxu0 0.0
    %5979 = vmatprep.subr.mxu0 0.0
    %5980 = vmatpush1.msra.mxu0 0.0
    %5981 = vmatprep.subr.mxu0 0.0
    %5982 = vmatpush1.msra.mxu0 0.0
    %5983 = vmatprep.subr.mxu0 0.0
    %5984 = vmatpush1.msra.mxu0 0.0
    %5985 = vmatprep.subr.mxu0 0.0
    %5986 = vmatpush1.msra.mxu0 0.0
    %5987 = vmatprep.subr.mxu0 0.0
    %5988 = vmatpush1.msra.mxu0 0.0
    %5989 = vmatprep.subr.mxu0 0.0
    %5990 = vmatpush1.msra.mxu0 0.0
    %5991 = vmatprep.subr.mxu0 0.0
    %5992 = vmatpush1.msra.mxu0 0.0
    %5993 = vmatprep.subr.mxu0 0.0
    %5994 = vmatpush1.msra.mxu0 0.0
    %5995 = vmatprep.subr.mxu0 0.0
    %5996 = vmatpush1.msra.mxu0 0.0
    %5997 = vmatprep.subr.mxu0 0.0
    %5998 = vmatpush1.msra.mxu0 0.0
    %5999 = vmatprep.subr.mxu0 0.0
    %6000 = vmatpush1.msra.mxu0 0.0
    %6001 = vmatprep.mubr.f32.mxu0 0.0
    %6002 = vmatmul.mubr.f32.gmra.mrb[0].mxu0 %v5890
    %v6003 = vpop.f32.mrb[0].mxu0
    %v6004 = vadd.f32 0.0, %v6003
    %v6005 = vpop.f32.mrb[0].mxu0
    %6006 = vmatprep.mubr.f32.mxu0 0.0
    %6007 = vmatmul.mubr.f32.gmra.mrb[0].mxu0 %v5893
    %v6008 = vpop.f32.mrb[0].mxu0
    %v6009 = vadd.f32 0.0, %v6008
    %v6010 = vpop.f32.mrb[0].mxu0
    %6011 = vmatprep.mubr.f32.mxu0 0.0
    %6012 = vmatmul.mubr.f32.gmra.mrb[0].mxu0 %v5896
    %v6013 = vpop.f32.mrb[0].mxu0
    %v6014 = vadd.f32 0.0, %v6013
    %v6015 = vpop.f32.mrb[0].mxu0
    %6016 = vmatprep.mubr.f32.mxu0 0.0
    %6017 = vmatmul.mubr.f32.gmra.mrb[0].mxu0 %v5899
    %v6018 = vpop.f32.mrb[0].mxu0
    %v6019 = vadd.f32 0.0, %v6018
    %v6020 = vpop.f32.mrb[0].mxu0
    %6021 = vmatprep.mubr.f32.mxu0 0.0
    %6022 = vmatmul.mubr.f32.gmra.mrb[0].mxu0 %v5902
    %v6023 = vpop.f32.mrb[0].mxu0
    %v6024 = vadd.f32 0.0, %v6023
    %v6025 = vpop.f32.mrb[0].mxu0
    %6026 = vmatprep.mubr.f32.mxu0 0.0
    %6027 = vmatmul.mubr.f32.gmra.mrb[0].mxu0 %v5905
    %v6028 = vpop.f32.mrb[0].mxu0
    %v6029 = vadd.f32 0.0, %v6028
    %v6030 = vpop.f32.mrb[0].mxu0
    %6031 = vmatprep.mubr.f32.mxu0 0.0
    %6032 = vmatmul.mubr.f32.gmra.mrb[0].mxu0 %v5908
    %v6033 = vpop.f32.mrb[0].mxu0
    %v6034 = vadd.f32 0.0, %v6033
    %v6035 = vpop.f32.mrb[0].mxu0
    %6036 = vmatprep.mubr.f32.mxu0 0.0
    %6037 = vmatmul.mubr.f32.gmra.mrb[0].mxu0 %v5911
    %v6038 = vpop.f32.mrb[0].mxu0
    %v6039 = vadd.f32 0.0, %v6038
    %v6040 = vpop.f32.mrb[0].mxu0
    %6041 = vmatprep.mubr.f32.mxu0 0.0
    %6042 = vmatmul.mubr.f32.gmra.mrb[0].mxu0 %v5914
    %v6043 = vpop.f32.mrb[0].mxu0
    %v6044 = vadd.f32 0.0, %v6043
    %v6045 = vpop.f32.mrb[0].mxu0
    %6046 = vmatprep.mubr.f32.mxu0 0.0
    %6047 = vmatmul.mubr.f32.gmra.mrb[0].mxu0 %v5917
    %v6048 = vpop.f32.mrb[0].mxu0
    %v6049 = vadd.f32 0.0, %v6048
    %v6050 = vpop.f32.mrb[0].mxu0
    %6051 = vmatprep.mubr.f32.mxu0 0.0
    %6052 = vmatmul.mubr.f32.gmra.mrb[0].mxu0 %v5920
    %v6053 = vpop.f32.mrb[0].mxu0
    %v6054 = vadd.f32 0.0, %v6053
    %v6055 = vpop.f32.mrb[0].mxu0
    %6056 = vmatprep.mubr.f32.mxu0 0.0
    %6057 = vmatmul.mubr.f32.gmra.mrb[0].mxu0 %v5923
    %v6058 = vpop.f32.mrb[0].mxu0
    %v6059 = vadd.f32 0.0, %v6058
    %v6060 = vpop.f32.mrb[0].mxu0
    %6061 = vmatprep.mubr.f32.mxu0 0.0
    %6062 = vmatmul.mubr.f32.gmra.mrb[0].mxu0 %v5926
    %v6063 = vpop.f32.mrb[0].mxu0
    %v6064 = vadd.f32 0.0, %v6063
    %v6065 = vpop.f32.mrb[0].mxu0
    %6066 = vmatprep.mubr.f32.mxu0 0.0
    %6067 = vmatmul.mubr.f32.gmra.mrb[0].mxu0 %v5929
    %v6068 = vpop.f32.mrb[0].mxu0
    %v6069 = vadd.f32 0.0, %v6068
    %v6070 = vpop.f32.mrb[0].mxu0
    %6071 = vmatprep.mubr.f32.mxu0 0.0
    %6072 = vmatmul.mubr.f32.gmra.mrb[0].mxu0 %v5932
    %v6073 = vpop.f32.mrb[0].mxu0
    %v6074 = vadd.f32 0.0, %v6073
    %v6075 = vpop.f32.mrb[0].mxu0
    %6076 = vmatprep.mubr.f32.mxu0 0.0
    %6077 = vmatmul.mubr.f32.gmra.mrb[0].mxu0 %v5935
    %v6078 = vpop.f32.mrb[0].mxu0
    %v6079 = vadd.f32 0.0, %v6078
    %v6080 = vpop.f32.mrb[0].mxu0
    %6081 = vdwg.mxu0
    %v6082 = vadd.f32 %v5852, %v6004
    %v6083 = vadd.f32 %v5853, %v6009
    %v6084 = vadd.f32 %v5854, %v6014
    %v6085 = vadd.f32 %v5855, %v6019
    %v6086 = vadd.f32 %v5856, %v6024
    %v6087 = vadd.f32 %v5857, %v6029
    %v6088 = vadd.f32 %v5858, %v6034
    %v6089 = vadd.f32 %v5859, %v6039
    %v6090 = vadd.f32 %v5860, %v6044
    %v6091 = vadd.f32 %v5861, %v6049
    %v6092 = vadd.f32 %v5862, %v6054
    %v6093 = vadd.f32 %v5863, %v6059
    %v6094 = vadd.f32 %v5864, %v6064
    %v6095 = vadd.f32 %v5865, %v6069
    %v6096 = vadd.f32 %v5866, %v6074
    %v6097 = vadd.f32 %v5867, %v6079
    %v6098 = vld [vmem:[%s1450 + $0x2] sm:$0xff]
    %v6099 = vld [vmem:[%s1450 + $0x12] sm:$0xff]
    %v6100 = vld [vmem:[%s1450 + $0x22] sm:$0xff]
    %v6101 = vld [vmem:[%s1450 + $0x32] sm:$0xff]
    %v6102 = vld [vmem:[%s1450 + $0x42] sm:$0xff]
    %v6103 = vld [vmem:[%s1450 + $0x52] sm:$0xff]
    %v6104 = vld [vmem:[%s1450 + $0x62] sm:$0xff]
    %v6105 = vld [vmem:[%s1450 + $0x72] sm:$0xff]
    %v6106 = vld [vmem:[%s1450 + $0xa2] sm:$0xff]
    %v6107 = vld [vmem:[%s1450 + $0xb2] sm:$0xff]
    %v6108 = vld [vmem:[%s1450 + $0xc2] sm:$0xff]
    %v6109 = vld [vmem:[%s1450 + $0xd2] sm:$0xff]
    %v6110 = vld [vmem:[%s1450 + $0xe2] sm:$0xff]
    %v6111 = vld [vmem:[%s1450 + $0xf2] sm:$0xff]
    %v6112 = vld [vmem:[%s1450 + $0x102] sm:$0xff]
    %v6113 = vld [vmem:[%s1450 + $0x112] sm:$0xff]
    %s6114 = scalar_lea.vmem [#allocation3], 832
    %v6115 = vld [vmem:[%s6114] sm:$0xff]
    %v6116 = vld [vmem:[%s6114 + $0x8] sm:$0xff]
    %v6117 = vld [vmem:[%s6114 + $0x10] sm:$0xff]
    %v6118 = vld [vmem:[%s6114 + $0x18] sm:$0xff]
    %v6120 = vsel %vm28, %v6098, 0
    %v6123 = vsel %vm28, %v6099, 0
    %v6126 = vsel %vm28, %v6100, 0
    %v6129 = vsel %vm28, %v6101, 0
    %v6132 = vsel %vm28, %v6102, 0
    %v6135 = vsel %vm28, %v6103, 0
    %v6138 = vsel %vm28, %v6104, 0
    %v6141 = vsel %vm28, %v6105, 0
    %v6144 = vsel %vm28, %v6106, 0
    %v6147 = vsel %vm28, %v6107, 0
    %v6150 = vsel %vm28, %v6108, 0
    %v6153 = vsel %vm28, %v6109, 0
    %v6156 = vsel %vm28, %v6110, 0
    %v6159 = vsel %vm28, %v6111, 0
    %v6162 = vsel %vm28, %v6112, 0
    %v6165 = vsel %vm28, %v6113, 0
    %6167 = vmatprep.subr.mxu0 0.0
    %6168 = vmatpush1.msra.mxu0 %v6115
    %6169 = vmatprep.subr.mxu0 0.0
    %6170 = vmatpush1.msra.mxu0 %v6116
    %6171 = vmatprep.subr.mxu0 0.0
    %6172 = vmatpush1.msra.mxu0 %v6117
    %6173 = vmatprep.subr.mxu0 0.0
    %6174 = vmatpush1.msra.mxu0 %v6118
    %6175 = vmatprep.subr.mxu0 0.0
    %6176 = vmatpush1.msra.mxu0 0.0
    %6177 = vmatprep.subr.mxu0 0.0
    %6178 = vmatpush1.msra.mxu0 0.0
    %6179 = vmatprep.subr.mxu0 0.0
    %6180 = vmatpush1.msra.mxu0 0.0
    %6181 = vmatprep.subr.mxu0 0.0
    %6182 = vmatpush1.msra.mxu0 0.0
    %6183 = vmatprep.subr.mxu0 0.0
    %6184 = vmatpush1.msra.mxu0 0.0
    %6185 = vmatprep.subr.mxu0 0.0
    %6186 = vmatpush1.msra.mxu0 0.0
    %6187 = vmatprep.subr.mxu0 0.0
    %6188 = vmatpush1.msra.mxu0 0.0
    %6189 = vmatprep.subr.mxu0 0.0
    %6190 = vmatpush1.msra.mxu0 0.0
    %6191 = vmatprep.subr.mxu0 0.0
    %6192 = vmatpush1.msra.mxu0 0.0
    %6193 = vmatprep.subr.mxu0 0.0
    %6194 = vmatpush1.msra.mxu0 0.0
    %6195 = vmatprep.subr.mxu0 0.0
    %6196 = vmatpush1.msra.mxu0 0.0
    %6197 = vmatprep.subr.mxu0 0.0
    %6198 = vmatpush1.msra.mxu0 0.0
    %6199 = vmatprep.subr.mxu0 0.0
    %6200 = vmatpush1.msra.mxu0 0.0
    %6201 = vmatprep.subr.mxu0 0.0
    %6202 = vmatpush1.msra.mxu0 0.0
    %6203 = vmatprep.subr.mxu0 0.0
    %6204 = vmatpush1.msra.mxu0 0.0
    %6205 = vmatprep.subr.mxu0 0.0
    %6206 = vmatpush1.msra.mxu0 0.0
    %6207 = vmatprep.subr.mxu0 0.0
    %6208 = vmatpush1.msra.mxu0 0.0
    %6209 = vmatprep.subr.mxu0 0.0
    %6210 = vmatpush1.msra.mxu0 0.0
    %6211 = vmatprep.subr.mxu0 0.0
    %6212 = vmatpush1.msra.mxu0 0.0
    %6213 = vmatprep.subr.mxu0 0.0
    %6214 = vmatpush1.msra.mxu0 0.0
    %6215 = vmatprep.subr.mxu0 0.0
    %6216 = vmatpush1.msra.mxu0 0.0
    %6217 = vmatprep.subr.mxu0 0.0
    %6218 = vmatpush1.msra.mxu0 0.0
    %6219 = vmatprep.subr.mxu0 0.0
    %6220 = vmatpush1.msra.mxu0 0.0
    %6221 = vmatprep.subr.mxu0 0.0
    %6222 = vmatpush1.msra.mxu0 0.0
    %6223 = vmatprep.subr.mxu0 0.0
    %6224 = vmatpush1.msra.mxu0 0.0
    %6225 = vmatprep.subr.mxu0 0.0
    %6226 = vmatpush1.msra.mxu0 0.0
    %6227 = vmatprep.subr.mxu0 0.0
    %6228 = vmatpush1.msra.mxu0 0.0
    %6229 = vmatprep.subr.mxu0 0.0
    %6230 = vmatpush1.msra.mxu0 0.0
    %6231 = vmatprep.mubr.f32.mxu0 0.0
    %6232 = vmatmul.mubr.f32.gmra.mrb[0].mxu0 %v6120
    %v6233 = vpop.f32.mrb[0].mxu0
    %v6234 = vadd.f32 0.0, %v6233
    %v6235 = vpop.f32.mrb[0].mxu0
    %6236 = vmatprep.mubr.f32.mxu0 0.0
    %6237 = vmatmul.mubr.f32.gmra.mrb[0].mxu0 %v6123
    %v6238 = vpop.f32.mrb[0].mxu0
    %v6239 = vadd.f32 0.0, %v6238
    %v6240 = vpop.f32.mrb[0].mxu0
    %6241 = vmatprep.mubr.f32.mxu0 0.0
    %6242 = vmatmul.mubr.f32.gmra.mrb[0].mxu0 %v6126
    %v6243 = vpop.f32.mrb[0].mxu0
    %v6244 = vadd.f32 0.0, %v6243
    %v6245 = vpop.f32.mrb[0].mxu0
    %6246 = vmatprep.mubr.f32.mxu0 0.0
    %6247 = vmatmul.mubr.f32.gmra.mrb[0].mxu0 %v6129
    %v6248 = vpop.f32.mrb[0].mxu0
    %v6249 = vadd.f32 0.0, %v6248
    %v6250 = vpop.f32.mrb[0].mxu0
    %6251 = vmatprep.mubr.f32.mxu0 0.0
    %6252 = vmatmul.mubr.f32.gmra.mrb[0].mxu0 %v6132
    %v6253 = vpop.f32.mrb[0].mxu0
    %v6254 = vadd.f32 0.0, %v6253
    %v6255 = vpop.f32.mrb[0].mxu0
    %6256 = vmatprep.mubr.f32.mxu0 0.0
    %6257 = vmatmul.mubr.f32.gmra.mrb[0].mxu0 %v6135
    %v6258 = vpop.f32.mrb[0].mxu0
    %v6259 = vadd.f32 0.0, %v6258
    %v6260 = vpop.f32.mrb[0].mxu0
    %6261 = vmatprep.mubr.f32.mxu0 0.0
    %6262 = vmatmul.mubr.f32.gmra.mrb[0].mxu0 %v6138
    %v6263 = vpop.f32.mrb[0].mxu0
    %v6264 = vadd.f32 0.0, %v6263
    %v6265 = vpop.f32.mrb[0].mxu0
    %6266 = vmatprep.mubr.f32.mxu0 0.0
    %6267 = vmatmul.mubr.f32.gmra.mrb[0].mxu0 %v6141
    %v6268 = vpop.f32.mrb[0].mxu0
    %v6269 = vadd.f32 0.0, %v6268
    %v6270 = vpop.f32.mrb[0].mxu0
    %6271 = vmatprep.mubr.f32.mxu0 0.0
    %6272 = vmatmul.mubr.f32.gmra.mrb[0].mxu0 %v6144
    %v6273 = vpop.f32.mrb[0].mxu0
    %v6274 = vadd.f32 0.0, %v6273
    %v6275 = vpop.f32.mrb[0].mxu0
    %6276 = vmatprep.mubr.f32.mxu0 0.0
    %6277 = vmatmul.mubr.f32.gmra.mrb[0].mxu0 %v6147
    %v6278 = vpop.f32.mrb[0].mxu0
    %v6279 = vadd.f32 0.0, %v6278
    %v6280 = vpop.f32.mrb[0].mxu0
    %6281 = vmatprep.mubr.f32.mxu0 0.0
    %6282 = vmatmul.mubr.f32.gmra.mrb[0].mxu0 %v6150
    %v6283 = vpop.f32.mrb[0].mxu0
    %v6284 = vadd.f32 0.0, %v6283
    %v6285 = vpop.f32.mrb[0].mxu0
    %6286 = vmatprep.mubr.f32.mxu0 0.0
    %6287 = vmatmul.mubr.f32.gmra.mrb[0].mxu0 %v6153
    %v6288 = vpop.f32.mrb[0].mxu0
    %v6289 = vadd.f32 0.0, %v6288
    %v6290 = vpop.f32.mrb[0].mxu0
    %6291 = vmatprep.mubr.f32.mxu0 0.0
    %6292 = vmatmul.mubr.f32.gmra.mrb[0].mxu0 %v6156
    %v6293 = vpop.f32.mrb[0].mxu0
    %v6294 = vadd.f32 0.0, %v6293
    %v6295 = vpop.f32.mrb[0].mxu0
    %6296 = vmatprep.mubr.f32.mxu0 0.0
    %6297 = vmatmul.mubr.f32.gmra.mrb[0].mxu0 %v6159
    %v6298 = vpop.f32.mrb[0].mxu0
    %v6299 = vadd.f32 0.0, %v6298
    %v6300 = vpop.f32.mrb[0].mxu0
    %6301 = vmatprep.mubr.f32.mxu0 0.0
    %6302 = vmatmul.mubr.f32.gmra.mrb[0].mxu0 %v6162
    %v6303 = vpop.f32.mrb[0].mxu0
    %v6304 = vadd.f32 0.0, %v6303
    %v6305 = vpop.f32.mrb[0].mxu0
    %6306 = vmatprep.mubr.f32.mxu0 0.0
    %6307 = vmatmul.mubr.f32.gmra.mrb[0].mxu0 %v6165
    %v6308 = vpop.f32.mrb[0].mxu0
    %v6309 = vadd.f32 0.0, %v6308
    %v6310 = vpop.f32.mrb[0].mxu0
    %6311 = vdwg.mxu0
    %v6312 = vadd.f32 %v6082, %v6234
    %v6313 = vadd.f32 %v6083, %v6239
    %v6314 = vadd.f32 %v6084, %v6244
    %v6315 = vadd.f32 %v6085, %v6249
    %v6316 = vadd.f32 %v6086, %v6254
    %v6317 = vadd.f32 %v6087, %v6259
    %v6318 = vadd.f32 %v6088, %v6264
    %v6319 = vadd.f32 %v6089, %v6269
    %v6320 = vadd.f32 %v6090, %v6274
    %v6321 = vadd.f32 %v6091, %v6279
    %v6322 = vadd.f32 %v6092, %v6284
    %v6323 = vadd.f32 %v6093, %v6289
    %v6324 = vadd.f32 %v6094, %v6294
    %v6325 = vadd.f32 %v6095, %v6299
    %v6326 = vadd.f32 %v6096, %v6304
    %v6327 = vadd.f32 %v6097, %v6309
    %s6328 = scalar_lea.vmem %s2, 2
    %v6329 = vld [vmem:[%s6328] sm:$0x1]
    %v6331 = vlaneseq
    %v6332 = vshrl.u32 %v6331, 7
    %v6333 = vsub.s32 0, %v6332
    %v6334 = vrot.slane %v6329, %v6333
    %v6336 = vadd.f32 %v6312, %v6334
    %v6337 = vadd.f32 %v6313, %v6334
    %v6338 = vadd.f32 %v6314, %v6334
    %v6339 = vadd.f32 %v6315, %v6334
    %v6340 = vadd.f32 %v6316, %v6334
    %v6341 = vadd.f32 %v6317, %v6334
    %v6342 = vadd.f32 %v6318, %v6334
    %v6343 = vadd.f32 %v6319, %v6334
    %v6344 = vadd.f32 %v6320, %v6334
    %v6345 = vadd.f32 %v6321, %v6334
    %v6346 = vadd.f32 %v6322, %v6334
    %v6347 = vadd.f32 %v6323, %v6334
    %v6348 = vadd.f32 %v6324, %v6334
    %v6349 = vadd.f32 %v6325, %v6334
    %v6350 = vadd.f32 %v6326, %v6334
    %v6351 = vadd.f32 %v6327, %v6334
    %v6352 = vmax.f32 %v6336, 0.0
    %v6353 = vmax.f32 %v6337, 0.0
    %v6354 = vmax.f32 %v6338, 0.0
    %v6355 = vmax.f32 %v6339, 0.0
    %v6356 = vmax.f32 %v6340, 0.0
    %v6357 = vmax.f32 %v6341, 0.0
    %v6358 = vmax.f32 %v6342, 0.0
    %v6359 = vmax.f32 %v6343, 0.0
    %v6360 = vmax.f32 %v6344, 0.0
    %v6361 = vmax.f32 %v6345, 0.0
    %v6362 = vmax.f32 %v6346, 0.0
    %v6363 = vmax.f32 %v6347, 0.0
    %v6364 = vmax.f32 %v6348, 0.0
    %v6365 = vmax.f32 %v6349, 0.0
    %v6366 = vmax.f32 %v6350, 0.0
    %v6367 = vmax.f32 %v6351, 0.0
    %6368 = vst.msk [vmem:[%s3] sm:$0xff] %vm28, %v6352
    %6369 = vst.msk [vmem:[%s3 + $0x8] sm:$0xff] %vm28, %v6353
    %6370 = vst.msk [vmem:[%s3 + $0x10] sm:$0xff] %vm28, %v6354
    %6371 = vst.msk [vmem:[%s3 + $0x18] sm:$0xff] %vm28, %v6355
    %6372 = vst.msk [vmem:[%s3 + $0x20] sm:$0xff] %vm28, %v6356
    %6373 = vst.msk [vmem:[%s3 + $0x28] sm:$0xff] %vm28, %v6357
    %6374 = vst.msk [vmem:[%s3 + $0x30] sm:$0xff] %vm28, %v6358
    %6375 = vst.msk [vmem:[%s3 + $0x38] sm:$0xff] %vm28, %v6359
    %6376 = vst.msk [vmem:[%s3 + $0x40] sm:$0xff] %vm28, %v6360
    %6377 = vst.msk [vmem:[%s3 + $0x48] sm:$0xff] %vm28, %v6361
    %6378 = vst.msk [vmem:[%s3 + $0x50] sm:$0xff] %vm28, %v6362
    %6379 = vst.msk [vmem:[%s3 + $0x58] sm:$0xff] %vm28, %v6363
    %6380 = vst.msk [vmem:[%s3 + $0x60] sm:$0xff] %vm28, %v6364
    %6381 = vst.msk [vmem:[%s3 + $0x68] sm:$0xff] %vm28, %v6365
    %6382 = vst.msk [vmem:[%s3 + $0x70] sm:$0xff] %vm28, %v6366
    %6383 = vst.msk [vmem:[%s3 + $0x78] sm:$0xff] %vm28, %v6367
    // Predicated region
    $region18: #{cnn_forward.2} parent=1 // pred_check
      _
    $region19: #{cnn_forward.2} parent=1 // pred_check_branch
      %6385 = sbr.rel (0) target = $region21
    $region20: #{cnn_forward.2} parent=1 // pred_region
      _
    $region21: #{cnn_forward.2} parent=1 // pred_fallthru
      _
    // Predicated region
    $region22: #{cnn_forward.2} parent=1 // pred_check
      _
    $region23: #{cnn_forward.2} parent=1 // pred_check_branch
      %6387 = sbr.rel (0) target = $region25
    $region24: #{cnn_forward.2} parent=1 // pred_region
      _
    $region25: #{cnn_forward.2} parent=1 // pred_fallthru
      _
    %6388 = vsyncpa [#allocation4], 1

</llo_original>
